<compile_context>
chip_gen: v5e
topology: v5e:2x2
jax: 0.10.0
libtpu: 0.0.40
codegen_flags: <defaults>
</compile_context>

<pallas_src>
import functools

import jax
import jax.numpy as jnp
from jax import lax
from jax.experimental import pallas as pl
from jax.experimental.pallas import tpu as pltpu


def res_kernel(x_ref, w1_ref, b1_ref, w2_ref, b2_ref, w3_ref, b3_ref,
               o_ref, h1p_ref, *, add=True):
    _, H, W, C1 = x_ref.shape
    Cm = w1_ref.shape[1]
    C2 = w3_ref.shape[1]
    LH = 8                       # halo block width -> interior starts sublane-aligned

    # ---- cv1: 1x1 conv == per-pixel matmul (BN folded), SiLU in f32 ----
    x2d = x_ref[0].reshape(H * W, C1)                           # bf16 (H*W, C1)
    h1 = jnp.dot(x2d, w1_ref[...], preferred_element_type=jnp.float32)
    h1 = h1 + b1_ref[...]
    h1 = h1 * jax.nn.sigmoid(h1)                                # SiLU (f32, v5e-safe)

    # ---- stage h1 into the zero-halo bf16 scratch (input of cv2) ----
    # Halo-only memset, executed every grid step (megacore-safe); all stores
    # below are lane/sublane-aligned (col offsets 0, LH, LH+W; widths 8 / W).
    zcol = jnp.zeros((H + 2, LH, Cm), h1p_ref.dtype)
    h1p_ref[:, 0:LH, :] = zcol                                  # left halo block
    h1p_ref[:, LH + W:LH + W + LH, :] = zcol                    # right halo block
    zrow = jnp.zeros((1, W, Cm), h1p_ref.dtype)
    h1p_ref[0:1, LH:LH + W, :] = zrow                           # top halo row
    h1p_ref[H + 1:H + 2, LH:LH + W, :] = zrow                   # bottom halo row
    h1p_ref[1:H + 1, LH:LH + W, :] = (
        h1.astype(jnp.bfloat16).reshape(H, W, Cm))              # interior (aligned)

    # ---- cv2: 3x3 conv (pad=1) as 9 shifted matmuls, pure acc += dot chain ----
    acc = jnp.zeros((H * W, Cm), jnp.float32)
    for dr in range(3):
        for dc in range(3):
            win = h1p_ref[dr:dr + H, LH - 1 + dc:LH - 1 + dc + W, :]  # (H, W, Cm) bf16
            acc = acc + jnp.dot(win.reshape(H * W, Cm),
                                w2_ref[dr * 3 + dc],
                                preferred_element_type=jnp.float32)
    h2 = acc + b2_ref[...]
    h2 = h2 * jax.nn.sigmoid(h2)

    # ---- cv3: 1x1 conv (BN folded), SiLU ----
    h3 = jnp.dot(h2.astype(jnp.bfloat16), w3_ref[...],
                 preferred_element_type=jnp.float32)
    h3 = h3 + b3_ref[...]
    h3 = h3 * jax.nn.sigmoid(h3)

    # ---- residual add: re-read x here instead of holding it live above ----
    if add:
        h3 = h3 + x_ref[0].reshape(H * W, C1).astype(jnp.float32)

    o_ref[0] = h3.reshape(H, W, C2).astype(o_ref.dtype)


def res_forward(x, w1, b1, w2, b2, w3, b3, *, shortcut=True,
                out_dtype=jnp.bfloat16):
    """Fused Res block (inference semantics, BN folded).

    x : (B, H, W, C1) bf16  NHWC
    w1: (C1, Cm)      bf16  folded 1x1 conv
    b1: (1, Cm)       f32
    w2: (9, Cm, Cm)   bf16  folded 3x3 conv, taps in row-major (dr, dc) order
    b2: (1, Cm)       f32
    w3: (Cm, C2)      bf16  folded 1x1 conv
    b3: (1, C2)       f32
    returns (B, H, W, C2) `out_dtype` (bf16 by default to halve HBM writeback)
    """
    B, H, W, C1 = x.shape
    Cm = w1.shape[1]
    C2 = w3.shape[1]
    assert W % 8 == 0, "W must be a multiple of 8 for the aligned cv2 scratch"
    add = shortcut and (C1 == C2)

    kernel = functools.partial(res_kernel, add=add)

    return pl.pallas_call(
        kernel,
        out_shape=jax.ShapeDtypeStruct((B, H, W, C2), out_dtype),
        grid_spec=pltpu.PrefetchScalarGridSpec(
            num_scalar_prefetch=0,
            grid=(B,),
            in_specs=[
                pl.BlockSpec((1, H, W, C1), lambda b: (b, 0, 0, 0)),  # x image
                pl.BlockSpec((C1, Cm), lambda b: (0, 0)),             # w1 (resident)
                pl.BlockSpec((1, Cm), lambda b: (0, 0)),              # b1
                pl.BlockSpec((9, Cm, Cm), lambda b: (0, 0, 0)),       # w2 (resident)
                pl.BlockSpec((1, Cm), lambda b: (0, 0)),              # b2
                pl.BlockSpec((Cm, C2), lambda b: (0, 0)),             # w3 (resident)
                pl.BlockSpec((1, C2), lambda b: (0, 0)),              # b3
            ],
            out_specs=pl.BlockSpec((1, H, W, C2), lambda b: (b, 0, 0, 0)),
            # bf16 zero-halo scratch; interior lives at [1:H+1, 8:W+8, :].
            scratch_shapes=[pltpu.VMEM((H + 2, W + 16, Cm), jnp.bfloat16)],
        ),
        compiler_params=pltpu.CompilerParams(
            dimension_semantics=("parallel",)),
    )(x, w1, b1, w2, b2, w3, b3)


def _fold_bn(w_hwio, gamma, beta, mean, var, eps=1e-5):
    """Fold eval-mode BatchNorm2d into a bias-free conv: scale weights, emit bias."""
    scale = gamma / jnp.sqrt(var + eps)                 # (Cout,)
    return w_hwio * scale, beta - mean * scale


if __name__ == "__main__":
    # Small shapes consistent with Res(c1, c2, e=0.5); c1 == c2 so the shortcut
    # add is active.  c2 = 128 keeps the output store lane-dense.
    B, H, W = 2, 16, 16
    c1 = c2 = 128
    cm = int(c2 * 0.5)        # hidden width c_ = 64

    key = jax.random.PRNGKey(0)
    kx, *pk = jax.random.split(key, 16)

    x = jax.random.normal(kx, (B, H, W, c1), jnp.float32)

    def make_layer(keys, kh, kw, ci, co):
        kw_, kg, kb, km, kv = keys
        w = jax.random.normal(kw_, (kh, kw, ci, co), jnp.float32)
        w = w * (ci * kh * kw) ** -0.5
        gamma = 1.0 + 0.1 * jax.random.normal(kg, (co,), jnp.float32)
        beta = 0.1 * jax.random.normal(kb, (co,), jnp.float32)
        mean = 0.1 * jax.random.normal(km, (co,), jnp.float32)
        var = 0.5 + jnp.abs(jax.random.normal(kv, (co,), jnp.float32))
        return _fold_bn(w, gamma, beta, mean, var)

    w1f, b1f = make_layer(pk[0:5], 1, 1, c1, cm)      # cv1: 1x1
    w2f, b2f = make_layer(pk[5:10], 3, 3, cm, cm)     # cv2: 3x3
    w3f, b3f = make_layer(pk[10:15], 1, 1, cm, c2)    # cv3: 1x1

    # Kernel operands: bf16 activations/weights, f32 biases.
    x_bf = x.astype(jnp.bfloat16)
    w1k = w1f.reshape(c1, cm).astype(jnp.bfloat16)
    w2k = w2f.reshape(9, cm, cm).astype(jnp.bfloat16)   # (3,3,ci,co) -> (9,ci,co)
    w3k = w3f.reshape(cm, c2).astype(jnp.bfloat16)
    b1k = b1f.reshape(1, cm)
    b2k = b2f.reshape(1, cm)
    b3k = b3f.reshape(1, c2)

    out = res_forward(x_bf, w1k, b1k, w2k, b2k, w3k, b3k)
    out = jax.block_until_ready(out)
    assert out.shape == (B, H, W, c2)
    out_f32 = out.astype(jnp.float32)

    # ---- pure-JAX reference (lax conv), same bf16 rounding points ----
    def silu(v):
        return v * jax.nn.sigmoid(v)

    dn = ("NHWC", "HWIO", "NHWC")
    xf = x_bf.astype(jnp.float32)
    h1 = silu(lax.conv_general_dilated(
        xf, w1k.astype(jnp.float32).reshape(1, 1, c1, cm), (1, 1), "SAME",
        dimension_numbers=dn) + b1f)
    h1 = h1.astype(jnp.bfloat16).astype(jnp.float32)
    h2 = silu(lax.conv_general_dilated(
        h1, w2k.astype(jnp.float32).reshape(3, 3, cm, cm), (1, 1), "SAME",
        dimension_numbers=dn) + b2f)
    h2 = h2.astype(jnp.bfloat16).astype(jnp.float32)
    h3 = silu(lax.conv_general_dilated(
        h2, w3k.astype(jnp.float32).reshape(1, 1, cm, c2), (1, 1), "SAME",
        dimension_numbers=dn) + b3f)
    ref = xf + h3

    # Tolerance covers the bf16 output rounding (<= 1 ulp at these magnitudes).
    err = float(jnp.max(jnp.abs(out_f32 - ref)))
    assert jnp.allclose(out_f32, ref, atol=5e-2, rtol=2e-2), err

    print("KERNEL_OK")
</pallas_src>

<mosaic_0001>
module attributes {stable_mosaic.version = 11 : i64} {
  func.func @res_kernel(%arg0: i32, %arg1: memref<1x16x16x128xbf16, #tpu.memory_space<vmem>>, %arg2: memref<128x64xbf16, #tpu.memory_space<vmem>>, %arg3: memref<1x64xf32, #tpu.memory_space<vmem>>, %arg4: memref<9x64x64xbf16, #tpu.memory_space<vmem>>, %arg5: memref<1x64xf32, #tpu.memory_space<vmem>>, %arg6: memref<64x128xbf16, #tpu.memory_space<vmem>>, %arg7: memref<1x128xf32, #tpu.memory_space<vmem>>, %arg8: memref<1x16x16x128xbf16, #tpu.memory_space<vmem>>, %arg9: memref<18x32x64xbf16, #tpu.memory_space<vmem>>) attributes {dimension_semantics = [#tpu.dimension_semantics<parallel>], iteration_bounds = array<i64: 2>, scalar_prefetch = 0 : i64, scratch_operands = 1 : i64, tpu.core_type = #tpu.core_type<tc>, window_params = [{transform_indices = @transform_0, window_bounds = array<i64: 1, 16, 16, 128>}, {pipeline_mode = #tpu.pipeline_mode<synchronous>, transform_indices = @transform_1, window_bounds = array<i64: 128, 64>}, {pipeline_mode = #tpu.pipeline_mode<synchronous>, transform_indices = @transform_2, window_bounds = array<i64: 1, 64>}, {pipeline_mode = #tpu.pipeline_mode<synchronous>, transform_indices = @transform_3, window_bounds = array<i64: 9, 64, 64>}, {pipeline_mode = #tpu.pipeline_mode<synchronous>, transform_indices = @transform_4, window_bounds = array<i64: 1, 64>}, {pipeline_mode = #tpu.pipeline_mode<synchronous>, transform_indices = @transform_5, window_bounds = array<i64: 64, 128>}, {pipeline_mode = #tpu.pipeline_mode<synchronous>, transform_indices = @transform_6, window_bounds = array<i64: 1, 128>}, {transform_indices = @transform_7, window_bounds = array<i64: 1, 16, 16, 128>}]} {
    %c0 = arith.constant 0 : index
    %c0_0 = arith.constant 0 : index
    %c0_1 = arith.constant 0 : index
    %c0_2 = arith.constant 0 : index
    %0 = vector.load %arg1[%c0, %c0_0, %c0_1, %c0_2] : memref<1x16x16x128xbf16, #tpu.memory_space<vmem>>, vector<1x16x16x128xbf16>
    %1 = vector.shape_cast %0 : vector<1x16x16x128xbf16> to vector<16x16x128xbf16>
    %2 = vector.shape_cast %1 : vector<16x16x128xbf16> to vector<256x128xbf16>
    %c0_3 = arith.constant 0 : index
    %c0_4 = arith.constant 0 : index
    %3 = vector.load %arg2[%c0_3, %c0_4] : memref<128x64xbf16, #tpu.memory_space<vmem>>, vector<128x64xbf16>
    %cst = arith.constant dense<0.000000e+00> : vector<256x64xf32>
    %4 = tpu.matmul %2, %3, %cst {dimension_numbers = #tpu.dot_dimension_numbers<[1], [0], [0], [1], [0, 0, 1, 1], [], []>} : vector<256x128xbf16>, vector<128x64xbf16>, vector<256x64xf32> -> vector<256x64xf32>
    %c0_5 = arith.constant 0 : index
    %c0_6 = arith.constant 0 : index
    %5 = vector.load %arg3[%c0_5, %c0_6] : memref<1x64xf32, #tpu.memory_space<vmem>>, vector<1x64xf32>
    %6 = vector.broadcast %5 : vector<1x64xf32> to vector<256x64xf32>
    %7 = arith.addf %4, %6 : vector<256x64xf32>
    %8 = arith.negf %7 : vector<256x64xf32>
    %9 = math.exp %8 : vector<256x64xf32>
    %cst_7 = arith.constant 1.000000e+00 : f32
    %10 = vector.broadcast %cst_7 : f32 to vector<256x64xf32>
    %11 = arith.addf %10, %9 : vector<256x64xf32>
    %12 = arith.divf %10, %11 : vector<256x64xf32>
    %13 = arith.mulf %7, %12 : vector<256x64xf32>
    %cst_8 = arith.constant 0.000000e+00 : bf16
    %14 = vector.broadcast %cst_8 : bf16 to vector<18x8x64xbf16>
    %c0_9 = arith.constant 0 : index
    %c0_10 = arith.constant 0 : index
    %c0_11 = arith.constant 0 : index
    %15 = vector.load %arg9[%c0_9, %c0_10, %c0_11] : memref<18x32x64xbf16, #tpu.memory_space<vmem>>, vector<18x8x64xbf16>
    tpu.vector_store %arg9[%c0_9, %c0_10, %c0_11], %14 {strides = array<i32>} : memref<18x32x64xbf16, #tpu.memory_space<vmem>>, vector<18x8x64xbf16>,
    %c0_12 = arith.constant 0 : index
    %c24 = arith.constant 24 : index
    %c0_13 = arith.constant 0 : index
    %16 = vector.load %arg9[%c0_12, %c24, %c0_13] : memref<18x32x64xbf16, #tpu.memory_space<vmem>>, vector<18x8x64xbf16>
    tpu.vector_store %arg9[%c0_12, %c24, %c0_13], %14 {strides = array<i32>} : memref<18x32x64xbf16, #tpu.memory_space<vmem>>, vector<18x8x64xbf16>,
    %cst_14 = arith.constant 0.000000e+00 : bf16
    %17 = vector.broadcast %cst_14 : bf16 to vector<1x16x64xbf16>
    %c0_15 = arith.constant 0 : index
    %c8 = arith.constant 8 : index
    %c0_16 = arith.constant 0 : index
    %18 = vector.load %arg9[%c0_15, %c8, %c0_16] : memref<18x32x64xbf16, #tpu.memory_space<vmem>>, vector<1x16x64xbf16>
    tpu.vector_store %arg9[%c0_15, %c8, %c0_16], %17 {strides = array<i32>} : memref<18x32x64xbf16, #tpu.memory_space<vmem>>, vector<1x16x64xbf16>,
    %c17 = arith.constant 17 : index
    %c8_17 = arith.constant 8 : index
    %c0_18 = arith.constant 0 : index
    %19 = vector.load %arg9[%c17, %c8_17, %c0_18] : memref<18x32x64xbf16, #tpu.memory_space<vmem>>, vector<1x16x64xbf16>
    tpu.vector_store %arg9[%c17, %c8_17, %c0_18], %17 {strides = array<i32>} : memref<18x32x64xbf16, #tpu.memory_space<vmem>>, vector<1x16x64xbf16>,
    %20 = arith.truncf %13 : vector<256x64xf32> to vector<256x64xbf16>
    %21 = vector.shape_cast %20 : vector<256x64xbf16> to vector<16x16x64xbf16>
    %c1 = arith.constant 1 : index
    %c8_19 = arith.constant 8 : index
    %c0_20 = arith.constant 0 : index
    %22 = vector.load %arg9[%c1, %c8_19, %c0_20] : memref<18x32x64xbf16, #tpu.memory_space<vmem>>, vector<16x16x64xbf16>
    tpu.vector_store %arg9[%c1, %c8_19, %c0_20], %21 {strides = array<i32>} : memref<18x32x64xbf16, #tpu.memory_space<vmem>>, vector<16x16x64xbf16>,
    %cst_21 = arith.constant 0.000000e+00 : f32
    %23 = vector.broadcast %cst_21 : f32 to vector<256x64xf32>
    %c0_22 = arith.constant 0 : index
    %c7 = arith.constant 7 : index
    %c0_23 = arith.constant 0 : index
    %24 = vector.load %arg9[%c0_22, %c7, %c0_23] : memref<18x32x64xbf16, #tpu.memory_space<vmem>>, vector<16x16x64xbf16>
    %25 = vector.shape_cast %24 : vector<16x16x64xbf16> to vector<256x64xbf16>
    %c0_24 = arith.constant 0 : index
    %c0_25 = arith.constant 0 : index
    %c0_26 = arith.constant 0 : index
    %26 = vector.load %arg4[%c0_24, %c0_25, %c0_26] : memref<9x64x64xbf16, #tpu.memory_space<vmem>>, vector<1x64x64xbf16>
    %27 = vector.shape_cast %26 : vector<1x64x64xbf16> to vector<64x64xbf16>
    %cst_27 = arith.constant dense<0.000000e+00> : vector<256x64xf32>
    %28 = tpu.matmul %25, %27, %cst_27 {dimension_numbers = #tpu.dot_dimension_numbers<[1], [0], [0], [1], [0, 0, 1, 1], [], []>} : vector<256x64xbf16>, vector<64x64xbf16>, vector<256x64xf32> -> vector<256x64xf32>
    %29 = arith.addf %23, %28 : vector<256x64xf32>
    %c0_28 = arith.constant 0 : index
    %c8_29 = arith.constant 8 : index
    %c0_30 = arith.constant 0 : index
    %30 = vector.load %arg9[%c0_28, %c8_29, %c0_30] : memref<18x32x64xbf16, #tpu.memory_space<vmem>>, vector<16x16x64xbf16>
    %31 = vector.shape_cast %30 : vector<16x16x64xbf16> to vector<256x64xbf16>
    %c1_31 = arith.constant 1 : index
    %c0_32 = arith.constant 0 : index
    %c0_33 = arith.constant 0 : index
    %32 = vector.load %arg4[%c1_31, %c0_32, %c0_33] : memref<9x64x64xbf16, #tpu.memory_space<vmem>>, vector<1x64x64xbf16>
    %33 = vector.shape_cast %32 : vector<1x64x64xbf16> to vector<64x64xbf16>
    %cst_34 = arith.constant dense<0.000000e+00> : vector<256x64xf32>
    %34 = tpu.matmul %31, %33, %cst_34 {dimension_numbers = #tpu.dot_dimension_numbers<[1], [0], [0], [1], [0, 0, 1, 1], [], []>} : vector<256x64xbf16>, vector<64x64xbf16>, vector<256x64xf32> -> vector<256x64xf32>
    %35 = arith.addf %29, %34 : vector<256x64xf32>
    %c0_35 = arith.constant 0 : index
    %c9 = arith.constant 9 : index
    %c0_36 = arith.constant 0 : index
    %36 = vector.load %arg9[%c0_35, %c9, %c0_36] : memref<18x32x64xbf16, #tpu.memory_space<vmem>>, vector<16x16x64xbf16>
    %37 = vector.shape_cast %36 : vector<16x16x64xbf16> to vector<256x64xbf16>
    %c2 = arith.constant 2 : index
    %c0_37 = arith.constant 0 : index
    %c0_38 = arith.constant 0 : index
    %38 = vector.load %arg4[%c2, %c0_37, %c0_38] : memref<9x64x64xbf16, #tpu.memory_space<vmem>>, vector<1x64x64xbf16>
    %39 = vector.shape_cast %38 : vector<1x64x64xbf16> to vector<64x64xbf16>
    %cst_39 = arith.constant dense<0.000000e+00> : vector<256x64xf32>
    %40 = tpu.matmul %37, %39, %cst_39 {dimension_numbers = #tpu.dot_dimension_numbers<[1], [0], [0], [1], [0, 0, 1, 1], [], []>} : vector<256x64xbf16>, vector<64x64xbf16>, vector<256x64xf32> -> vector<256x64xf32>
    %41 = arith.addf %35, %40 : vector<256x64xf32>
    %c1_40 = arith.constant 1 : index
    %c7_41 = arith.constant 7 : index
    %c0_42 = arith.constant 0 : index
    %42 = vector.load %arg9[%c1_40, %c7_41, %c0_42] : memref<18x32x64xbf16, #tpu.memory_space<vmem>>, vector<16x16x64xbf16>
    %43 = vector.shape_cast %42 : vector<16x16x64xbf16> to vector<256x64xbf16>
    %c3 = arith.constant 3 : index
    %c0_43 = arith.constant 0 : index
    %c0_44 = arith.constant 0 : index
    %44 = vector.load %arg4[%c3, %c0_43, %c0_44] : memref<9x64x64xbf16, #tpu.memory_space<vmem>>, vector<1x64x64xbf16>
    %45 = vector.shape_cast %44 : vector<1x64x64xbf16> to vector<64x64xbf16>
    %cst_45 = arith.constant dense<0.000000e+00> : vector<256x64xf32>
    %46 = tpu.matmul %43, %45, %cst_45 {dimension_numbers = #tpu.dot_dimension_numbers<[1], [0], [0], [1], [0, 0, 1, 1], [], []>} : vector<256x64xbf16>, vector<64x64xbf16>, vector<256x64xf32> -> vector<256x64xf32>
    %47 = arith.addf %41, %46 : vector<256x64xf32>
    %c1_46 = arith.constant 1 : index
    %c8_47 = arith.constant 8 : index
    %c0_48 = arith.constant 0 : index
    %48 = vector.load %arg9[%c1_46, %c8_47, %c0_48] : memref<18x32x64xbf16, #tpu.memory_space<vmem>>, vector<16x16x64xbf16>
    %49 = vector.shape_cast %48 : vector<16x16x64xbf16> to vector<256x64xbf16>
    %c4 = arith.constant 4 : index
    %c0_49 = arith.constant 0 : index
    %c0_50 = arith.constant 0 : index
    %50 = vector.load %arg4[%c4, %c0_49, %c0_50] : memref<9x64x64xbf16, #tpu.memory_space<vmem>>, vector<1x64x64xbf16>
    %51 = vector.shape_cast %50 : vector<1x64x64xbf16> to vector<64x64xbf16>
    %cst_51 = arith.constant dense<0.000000e+00> : vector<256x64xf32>
    %52 = tpu.matmul %49, %51, %cst_51 {dimension_numbers = #tpu.dot_dimension_numbers<[1], [0], [0], [1], [0, 0, 1, 1], [], []>} : vector<256x64xbf16>, vector<64x64xbf16>, vector<256x64xf32> -> vector<256x64xf32>
    %53 = arith.addf %47, %52 : vector<256x64xf32>
    %c1_52 = arith.constant 1 : index
    %c9_53 = arith.constant 9 : index
    %c0_54 = arith.constant 0 : index
    %54 = vector.load %arg9[%c1_52, %c9_53, %c0_54] : memref<18x32x64xbf16, #tpu.memory_space<vmem>>, vector<16x16x64xbf16>
    %55 = vector.shape_cast %54 : vector<16x16x64xbf16> to vector<256x64xbf16>
    %c5 = arith.constant 5 : index
    %c0_55 = arith.constant 0 : index
    %c0_56 = arith.constant 0 : index
    %56 = vector.load %arg4[%c5, %c0_55, %c0_56] : memref<9x64x64xbf16, #tpu.memory_space<vmem>>, vector<1x64x64xbf16>
    %57 = vector.shape_cast %56 : vector<1x64x64xbf16> to vector<64x64xbf16>
    %cst_57 = arith.constant dense<0.000000e+00> : vector<256x64xf32>
    %58 = tpu.matmul %55, %57, %cst_57 {dimension_numbers = #tpu.dot_dimension_numbers<[1], [0], [0], [1], [0, 0, 1, 1], [], []>} : vector<256x64xbf16>, vector<64x64xbf16>, vector<256x64xf32> -> vector<256x64xf32>
    %59 = arith.addf %53, %58 : vector<256x64xf32>
    %c2_58 = arith.constant 2 : index
    %c7_59 = arith.constant 7 : index
    %c0_60 = arith.constant 0 : index
    %60 = vector.load %arg9[%c2_58, %c7_59, %c0_60] : memref<18x32x64xbf16, #tpu.memory_space<vmem>>, vector<16x16x64xbf16>
    %61 = vector.shape_cast %60 : vector<16x16x64xbf16> to vector<256x64xbf16>
    %c6 = arith.constant 6 : index
    %c0_61 = arith.constant 0 : index
    %c0_62 = arith.constant 0 : index
    %62 = vector.load %arg4[%c6, %c0_61, %c0_62] : memref<9x64x64xbf16, #tpu.memory_space<vmem>>, vector<1x64x64xbf16>
    %63 = vector.shape_cast %62 : vector<1x64x64xbf16> to vector<64x64xbf16>
    %cst_63 = arith.constant dense<0.000000e+00> : vector<256x64xf32>
    %64 = tpu.matmul %61, %63, %cst_63 {dimension_numbers = #tpu.dot_dimension_numbers<[1], [0], [0], [1], [0, 0, 1, 1], [], []>} : vector<256x64xbf16>, vector<64x64xbf16>, vector<256x64xf32> -> vector<256x64xf32>
    %65 = arith.addf %59, %64 : vector<256x64xf32>
    %c2_64 = arith.constant 2 : index
    %c8_65 = arith.constant 8 : index
    %c0_66 = arith.constant 0 : index
    %66 = vector.load %arg9[%c2_64, %c8_65, %c0_66] : memref<18x32x64xbf16, #tpu.memory_space<vmem>>, vector<16x16x64xbf16>
    %67 = vector.shape_cast %66 : vector<16x16x64xbf16> to vector<256x64xbf16>
    %c7_67 = arith.constant 7 : index
    %c0_68 = arith.constant 0 : index
    %c0_69 = arith.constant 0 : index
    %68 = vector.load %arg4[%c7_67, %c0_68, %c0_69] : memref<9x64x64xbf16, #tpu.memory_space<vmem>>, vector<1x64x64xbf16>
    %69 = vector.shape_cast %68 : vector<1x64x64xbf16> to vector<64x64xbf16>
    %cst_70 = arith.constant dense<0.000000e+00> : vector<256x64xf32>
    %70 = tpu.matmul %67, %69, %cst_70 {dimension_numbers = #tpu.dot_dimension_numbers<[1], [0], [0], [1], [0, 0, 1, 1], [], []>} : vector<256x64xbf16>, vector<64x64xbf16>, vector<256x64xf32> -> vector<256x64xf32>
    %71 = arith.addf %65, %70 : vector<256x64xf32>
    %c2_71 = arith.constant 2 : index
    %c9_72 = arith.constant 9 : index
    %c0_73 = arith.constant 0 : index
    %72 = vector.load %arg9[%c2_71, %c9_72, %c0_73] : memref<18x32x64xbf16, #tpu.memory_space<vmem>>, vector<16x16x64xbf16>
    %73 = vector.shape_cast %72 : vector<16x16x64xbf16> to vector<256x64xbf16>
    %c8_74 = arith.constant 8 : index
    %c0_75 = arith.constant 0 : index
    %c0_76 = arith.constant 0 : index
    %74 = vector.load %arg4[%c8_74, %c0_75, %c0_76] : memref<9x64x64xbf16, #tpu.memory_space<vmem>>, vector<1x64x64xbf16>
    %75 = vector.shape_cast %74 : vector<1x64x64xbf16> to vector<64x64xbf16>
    %cst_77 = arith.constant dense<0.000000e+00> : vector<256x64xf32>
    %76 = tpu.matmul %73, %75, %cst_77 {dimension_numbers = #tpu.dot_dimension_numbers<[1], [0], [0], [1], [0, 0, 1, 1], [], []>} : vector<256x64xbf16>, vector<64x64xbf16>, vector<256x64xf32> -> vector<256x64xf32>
    %77 = arith.addf %71, %76 : vector<256x64xf32>
    %c0_78 = arith.constant 0 : index
    %c0_79 = arith.constant 0 : index
    %78 = vector.load %arg5[%c0_78, %c0_79] : memref<1x64xf32, #tpu.memory_space<vmem>>, vector<1x64xf32>
    %79 = vector.broadcast %78 : vector<1x64xf32> to vector<256x64xf32>
    %80 = arith.addf %77, %79 : vector<256x64xf32>
    %81 = arith.negf %80 : vector<256x64xf32>
    %82 = math.exp %81 : vector<256x64xf32>
    %cst_80 = arith.constant 1.000000e+00 : f32
    %83 = vector.broadcast %cst_80 : f32 to vector<256x64xf32>
    %84 = arith.addf %83, %82 : vector<256x64xf32>
    %85 = arith.divf %83, %84 : vector<256x64xf32>
    %86 = arith.mulf %80, %85 : vector<256x64xf32>
    %87 = arith.truncf %86 : vector<256x64xf32> to vector<256x64xbf16>
    %c0_81 = arith.constant 0 : index
    %c0_82 = arith.constant 0 : index
    %88 = vector.load %arg6[%c0_81, %c0_82] : memref<64x128xbf16, #tpu.memory_space<vmem>>, vector<64x128xbf16>
    %cst_83 = arith.constant dense<0.000000e+00> : vector<256x128xf32>
    %89 = tpu.matmul %87, %88, %cst_83 {dimension_numbers = #tpu.dot_dimension_numbers<[1], [0], [0], [1], [0, 0, 1, 1], [], []>} : vector<256x64xbf16>, vector<64x128xbf16>, vector<256x128xf32> -> vector<256x128xf32>
    %c0_84 = arith.constant 0 : index
    %c0_85 = arith.constant 0 : index
    %90 = vector.load %arg7[%c0_84, %c0_85] : memref<1x128xf32, #tpu.memory_space<vmem>>, vector<1x128xf32>
    %91 = vector.broadcast %90 : vector<1x128xf32> to vector<256x128xf32>
    %92 = arith.addf %89, %91 : vector<256x128xf32>
    %93 = arith.negf %92 : vector<256x128xf32>
    %94 = math.exp %93 : vector<256x128xf32>
    %cst_86 = arith.constant 1.000000e+00 : f32
    %95 = vector.broadcast %cst_86 : f32 to vector<256x128xf32>
    %96 = arith.addf %95, %94 : vector<256x128xf32>
    %97 = arith.divf %95, %96 : vector<256x128xf32>
    %98 = arith.mulf %92, %97 : vector<256x128xf32>
    %c0_87 = arith.constant 0 : index
    %c0_88 = arith.constant 0 : index
    %c0_89 = arith.constant 0 : index
    %c0_90 = arith.constant 0 : index
    %99 = vector.load %arg1[%c0_87, %c0_88, %c0_89, %c0_90] : memref<1x16x16x128xbf16, #tpu.memory_space<vmem>>, vector<1x16x16x128xbf16>
    %100 = vector.shape_cast %99 : vector<1x16x16x128xbf16> to vector<16x16x128xbf16>
    %101 = vector.shape_cast %100 : vector<16x16x128xbf16> to vector<256x128xbf16>
    %102 = arith.extf %101 : vector<256x128xbf16> to vector<256x128xf32>
    %103 = arith.addf %98, %102 : vector<256x128xf32>
    %104 = vector.shape_cast %103 : vector<256x128xf32> to vector<16x16x128xf32>
    %105 = arith.truncf %104 : vector<16x16x128xf32> to vector<16x16x128xbf16>
    %c0_91 = arith.constant 0 : index
    %c0_92 = arith.constant 0 : index
    %c0_93 = arith.constant 0 : index
    %c0_94 = arith.constant 0 : index
    %106 = vector.load %arg8[%c0_91, %c0_92, %c0_93, %c0_94] : memref<1x16x16x128xbf16, #tpu.memory_space<vmem>>, vector<1x16x16x128xbf16>
    %107 = vector.shape_cast %106 : vector<1x16x16x128xbf16> to vector<16x16x128xbf16>
    %108 = vector.shape_cast %105 : vector<16x16x128xbf16> to vector<1x16x16x128xbf16>
    tpu.vector_store %arg8[%c0_91, %c0_92, %c0_93, %c0_94], %108 {strides = array<i32>} : memref<1x16x16x128xbf16, #tpu.memory_space<vmem>>, vector<1x16x16x128xbf16>,
    return
  }
  func.func @transform_0(%arg0: i32) -> (i32, i32, i32, i32) {
    %c0_i32 = arith.constant 0 : i32
    %c0_i32_0 = arith.constant 0 : i32
    %c0_i32_1 = arith.constant 0 : i32
    %c0_i32_2 = arith.constant 0 : i32
    return %arg0, %c0_i32, %c0_i32_0, %c0_i32_1 : i32, i32, i32, i32
  }
  func.func @transform_1(%arg0: i32) -> (i32, i32) {
    %c0_i32 = arith.constant 0 : i32
    %c0_i32_0 = arith.constant 0 : i32
    %c0_i32_1 = arith.constant 0 : i32
    return %c0_i32, %c0_i32_0 : i32, i32
  }
  func.func @transform_2(%arg0: i32) -> (i32, i32) {
    %c0_i32 = arith.constant 0 : i32
    %c0_i32_0 = arith.constant 0 : i32
    %c0_i32_1 = arith.constant 0 : i32
    return %c0_i32, %c0_i32_0 : i32, i32
  }
  func.func @transform_3(%arg0: i32) -> (i32, i32, i32) {
    %c0_i32 = arith.constant 0 : i32
    %c0_i32_0 = arith.constant 0 : i32
    %c0_i32_1 = arith.constant 0 : i32
    %c0_i32_2 = arith.constant 0 : i32
    return %c0_i32, %c0_i32_0, %c0_i32_1 : i32, i32, i32
  }
  func.func @transform_4(%arg0: i32) -> (i32, i32) {
    %c0_i32 = arith.constant 0 : i32
    %c0_i32_0 = arith.constant 0 : i32
    %c0_i32_1 = arith.constant 0 : i32
    return %c0_i32, %c0_i32_0 : i32, i32
  }
  func.func @transform_5(%arg0: i32) -> (i32, i32) {
    %c0_i32 = arith.constant 0 : i32
    %c0_i32_0 = arith.constant 0 : i32
    %c0_i32_1 = arith.constant 0 : i32
    return %c0_i32, %c0_i32_0 : i32, i32
  }
  func.func @transform_6(%arg0: i32) -> (i32, i32) {
    %c0_i32 = arith.constant 0 : i32
    %c0_i32_0 = arith.constant 0 : i32
    %c0_i32_1 = arith.constant 0 : i32
    return %c0_i32, %c0_i32_0 : i32, i32
  }
  func.func @transform_7(%arg0: i32) -> (i32, i32, i32, i32) {
    %c0_i32 = arith.constant 0 : i32
    %c0_i32_0 = arith.constant 0 : i32
    %c0_i32_1 = arith.constant 0 : i32
    %c0_i32_2 = arith.constant 0 : i32
    return %arg0, %c0_i32, %c0_i32_0, %c0_i32_1 : i32, i32, i32, i32
  }
}

</mosaic_0001>

<llo_original>
// kernel: tpu_custom_call.1
$region0: #{tpu_custom_call.1}
  #allocation0 [shape = 'u32[]', space=smem, size = 0x4, offset = 0x4, fixed_abs, tag = 'smem constant byte address 0x4 - core index']
  #allocation1 [shape = 'u32[72,128]{1,0:T(1,128)}', space=vmem, size = 0x9000, scoped, tag = 'internal scratch']
  #allocation2 [shape = 'bf16[18,32,64]{2,1,0:T(8,128)(2,1)}', space=vmem, size = 0x24000, scoped, tag = 'scratch operand']
  %s0 = inlined_call_operand.hbm [shape: bf16[2,16,16,128], index: 0, kind: input, shape index: {}]
  %s1 = inlined_call_operand.vmem [shape: bf16[128,64], index: 1, kind: input, shape index: {}]
  %s2 = inlined_call_operand.vmem [shape: f32[1,64], index: 2, kind: input, shape index: {}]
  %s3 = inlined_call_operand.hbm [shape: bf16[9,64,64], index: 3, kind: input, shape index: {}]
  %s4 = inlined_call_operand.vmem [shape: f32[1,64], index: 4, kind: input, shape index: {}]
  %s5 = inlined_call_operand.vmem [shape: bf16[64,128], index: 5, kind: input, shape index: {}]
  %s6 = inlined_call_operand.vmem [shape: f32[1,128], index: 6, kind: input, shape index: {}]
  %s7 = inlined_call_operand.hbm [shape: bf16[2,16,16,128], index: 7, kind: output, shape index: {}]
  %s8 = sld [smem:[#allocation0]]
  $region69: #{tpu_custom_call.1} parent=0
    _
  %s10 = ssub.s32 1, %s8
  %s11 = scalar_select 0, %s10, %s8
  $region1: #{tpu_custom_call.1} parent=0
    #allocation3 [shape = 'u8[131072]{0}', space=vmem, size = 0x20000, scoped, tag = 'input window, operand 0']
    #allocation4 [shape = 's32[2]{0}', space=sflag, size = 0x8, scoped, tag = 'scoped memory for tpu_custom_call.1']
    #allocation5 [shape = 's32[2]{0}', space=sflag, size = 0x8, scoped, tag = 'scoped memory for tpu_custom_call.1']
    #allocation6 [shape = 'u8[147456]{0}', space=vmem, size = 0x24000, scoped, tag = 'input window, operand 3, single buffered']
    #allocation7 [shape = 's32[1]{0}', space=sflag, size = 0x4, scoped, tag = 'scoped memory for tpu_custom_call.1']
    #allocation8 [shape = 'u8[131072]{0}', space=vmem, size = 0x20000, scoped, tag = 'output window, operand 0']
    %12 = vsyncpa [#allocation4], 0
    %s13 = scalar_lea.sflag [#allocation4], 1
    %14 = vsyncpa %s13, 0
    %15 = vsyncpa [#allocation7], 0
    %16 = vsyncpa [#allocation5], 0
    %s17 = scalar_lea.sflag [#allocation5], 1
    %18 = vsyncpa %s17, 0
    loop: start=0, step=1, limit=4
    $region2: #{tpu_custom_call.1} parent=1 // loop_pre_header
      _
    $region3: #{tpu_custom_call.1} parent=1 // loop_header
      %s20 = sphi 0, %s24
      %p21 = scmp.ge.s32.totalorder %s20, 4
      %s30 = sphi 0, %s32
      %s33 = sphi 0, %s30
      %s34 = sphi 0, %s33
      %s50 = sphi 0, %s34
      %s54 = sphi 0, %s54
      %s56 = sphi 0, %s54
      %s57 = sphi 0, %s56
      %s71 = sphi 0, %s57
      %s75 = sphi 0, %s75
      %s77 = sphi 0, %s75
      %s78 = sphi 0, %s77
      %s92 = sphi 0, %s78
      %s96 = sphi 0, %s96
      %s98 = sphi 0, %s96
      %s99 = sphi 0, %s98
      %s113 = sphi 0, %s99
      %s117 = sphi 0, %s117
      %s119 = sphi 0, %s117
      %s120 = sphi 0, %s119
      %s134 = sphi 0, %s120
      %s138 = sphi 0, %s138
      %s140 = sphi 0, %s138
      %s141 = sphi 0, %s140
      %s155 = sphi 0, %s141
      %s159 = sphi 0, %s159
      %s161 = sphi 0, %s159
      %s162 = sphi 0, %s161
      %s176 = sphi 0, %s162
      %s182 = sphi 0, %s184
      %s185 = sphi 0, %s182
      %s186 = sphi 0, %s185
      %s202 = sphi 0, %s186
    $region4: #{tpu_custom_call.1} parent=1 // loop_header_branch
      %23 = sbr.rel (%p21) target = $region8
    $region5: #{tpu_custom_call.1} parent=1 // loop_body
      %s25 = ssub.s32 %s20, 1
      %s26 = ssub.s32 %s20, 2
      %s27 = sadd.s32 %s20, 1
      %s28 = ssub.s32 %s20, %s27
      %p29 = scmp.eq.s32.totalorder %s28, 0
      %s31 = sadd.s32 %s30, 1
      %s32 = scalar_select %p29, %s30, %s31
      %p35 = pneg %p29
      %p36 = scmp.eq.s32.totalorder %s20, 1
      %p37 = por %p35, %p36
      %p38 = scmp.ne.s32.totalorder %s30, %s33
      %p39 = scmp.eq.s32.totalorder %s20, 0
      %p40 = por %p38, %p39
      %p41 = scmp.ne.s32.totalorder %s30, %s33
      %p42 = scmp.eq.s32.totalorder %s25, 1
      %p43 = por %p41, %p42
      %p44 = scmp.ne.s32.totalorder %s33, %s34
      %p45 = scmp.eq.s32.totalorder %s25, 0
      %p46 = por %p44, %p45
      %p47 = scmp.ne.s32.totalorder %s33, %s34
      %p48 = scmp.eq.s32.totalorder %s26, 1
      %p49 = por %p47, %p48
      %p51 = scmp.ne.s32.totalorder %s34, %s50
      %p52 = scmp.eq.s32.totalorder %s26, 0
      %p53 = por %p51, %p52
      %s55 = sadd.s32 %s54, 1
      %p58 = scmp.eq.s32.totalorder %s20, 1
      %p59 = scmp.ne.s32.totalorder %s54, %s56
      %p60 = scmp.eq.s32.totalorder %s20, 0
      %p61 = por %p59, %p60
      %p62 = scmp.ne.s32.totalorder %s54, %s56
      %p63 = scmp.eq.s32.totalorder %s25, 1
      %p64 = por %p62, %p63
      %p65 = scmp.ne.s32.totalorder %s56, %s57
      %p66 = scmp.eq.s32.totalorder %s25, 0
      %p67 = por %p65, %p66
      %p68 = scmp.ne.s32.totalorder %s56, %s57
      %p69 = scmp.eq.s32.totalorder %s26, 1
      %p70 = por %p68, %p69
      %p72 = scmp.ne.s32.totalorder %s57, %s71
      %p73 = scmp.eq.s32.totalorder %s26, 0
      %p74 = por %p72, %p73
      %s76 = sadd.s32 %s75, 1
      %p79 = scmp.eq.s32.totalorder %s20, 1
      %p80 = scmp.ne.s32.totalorder %s75, %s77
      %p81 = scmp.eq.s32.totalorder %s20, 0
      %p82 = por %p80, %p81
      %p83 = scmp.ne.s32.totalorder %s75, %s77
      %p84 = scmp.eq.s32.totalorder %s25, 1
      %p85 = por %p83, %p84
      %p86 = scmp.ne.s32.totalorder %s77, %s78
      %p87 = scmp.eq.s32.totalorder %s25, 0
      %p88 = por %p86, %p87
      %p89 = scmp.ne.s32.totalorder %s77, %s78
      %p90 = scmp.eq.s32.totalorder %s26, 1
      %p91 = por %p89, %p90
      %p93 = scmp.ne.s32.totalorder %s78, %s92
      %p94 = scmp.eq.s32.totalorder %s26, 0
      %p95 = por %p93, %p94
      %s97 = sadd.s32 %s96, 1
      %p100 = scmp.eq.s32.totalorder %s20, 1
      %p101 = scmp.ne.s32.totalorder %s96, %s98
      %p102 = scmp.eq.s32.totalorder %s20, 0
      %p103 = por %p101, %p102
      %p104 = scmp.ne.s32.totalorder %s96, %s98
      %p105 = scmp.eq.s32.totalorder %s25, 1
      %p106 = por %p104, %p105
      %p107 = scmp.ne.s32.totalorder %s98, %s99
      %p108 = scmp.eq.s32.totalorder %s25, 0
      %p109 = por %p107, %p108
      %p110 = scmp.ne.s32.totalorder %s98, %s99
      %p111 = scmp.eq.s32.totalorder %s26, 1
      %p112 = por %p110, %p111
      %p114 = scmp.ne.s32.totalorder %s99, %s113
      %p115 = scmp.eq.s32.totalorder %s26, 0
      %p116 = por %p114, %p115
      %s118 = sadd.s32 %s117, 1
      %p121 = scmp.eq.s32.totalorder %s20, 1
      %p122 = scmp.ne.s32.totalorder %s117, %s119
      %p123 = scmp.eq.s32.totalorder %s20, 0
      %p124 = por %p122, %p123
      %p125 = scmp.ne.s32.totalorder %s117, %s119
      %p126 = scmp.eq.s32.totalorder %s25, 1
      %p127 = por %p125, %p126
      %p128 = scmp.ne.s32.totalorder %s119, %s120
      %p129 = scmp.eq.s32.totalorder %s25, 0
      %p130 = por %p128, %p129
      %p131 = scmp.ne.s32.totalorder %s119, %s120
      %p132 = scmp.eq.s32.totalorder %s26, 1
      %p133 = por %p131, %p132
      %p135 = scmp.ne.s32.totalorder %s120, %s134
      %p136 = scmp.eq.s32.totalorder %s26, 0
      %p137 = por %p135, %p136
      %s139 = sadd.s32 %s138, 1
      %p142 = scmp.eq.s32.totalorder %s20, 1
      %p143 = scmp.ne.s32.totalorder %s138, %s140
      %p144 = scmp.eq.s32.totalorder %s20, 0
      %p145 = por %p143, %p144
      %p146 = scmp.ne.s32.totalorder %s138, %s140
      %p147 = scmp.eq.s32.totalorder %s25, 1
      %p148 = por %p146, %p147
      %p149 = scmp.ne.s32.totalorder %s140, %s141
      %p150 = scmp.eq.s32.totalorder %s25, 0
      %p151 = por %p149, %p150
      %p152 = scmp.ne.s32.totalorder %s140, %s141
      %p153 = scmp.eq.s32.totalorder %s26, 1
      %p154 = por %p152, %p153
      %p156 = scmp.ne.s32.totalorder %s141, %s155
      %p157 = scmp.eq.s32.totalorder %s26, 0
      %p158 = por %p156, %p157
      %s160 = sadd.s32 %s159, 1
      %p163 = scmp.eq.s32.totalorder %s20, 1
      %p164 = scmp.ne.s32.totalorder %s159, %s161
      %p165 = scmp.eq.s32.totalorder %s20, 0
      %p166 = por %p164, %p165
      %p167 = scmp.ne.s32.totalorder %s159, %s161
      %p168 = scmp.eq.s32.totalorder %s25, 1
      %p169 = por %p167, %p168
      %p170 = scmp.ne.s32.totalorder %s161, %s162
      %p171 = scmp.eq.s32.totalorder %s25, 0
      %p172 = por %p170, %p171
      %p173 = scmp.ne.s32.totalorder %s161, %s162
      %p174 = scmp.eq.s32.totalorder %s26, 1
      %p175 = por %p173, %p174
      %p177 = scmp.ne.s32.totalorder %s162, %s176
      %p178 = scmp.eq.s32.totalorder %s26, 0
      %p179 = por %p177, %p178
      %s180 = ssub.s32 %s20, %s27
      %p181 = scmp.eq.s32.totalorder %s180, 0
      %s183 = sadd.s32 %s182, 1
      %s184 = scalar_select %p181, %s182, %s183
      %p187 = pneg %p181
      %p188 = scmp.eq.s32.totalorder %s20, 1
      %p189 = por %p187, %p188
      %p190 = scmp.ne.s32.totalorder %s182, %s185
      %p191 = scmp.eq.s32.totalorder %s20, 0
      %p192 = por %p190, %p191
      %p193 = scmp.ne.s32.totalorder %s182, %s185
      %p194 = scmp.eq.s32.totalorder %s25, 1
      %p195 = por %p193, %p194
      %p196 = scmp.ne.s32.totalorder %s185, %s186
      %p197 = scmp.eq.s32.totalorder %s25, 0
      %p198 = por %p196, %p197
      %p199 = scmp.ne.s32.totalorder %s185, %s186
      %p200 = scmp.eq.s32.totalorder %s26, 1
      %p201 = por %p199, %p200
      %p203 = scmp.ne.s32.totalorder %s186, %s202
      %p204 = scmp.eq.s32.totalorder %s26, 0
      %p205 = por %p203, %p204
      %p206 = scmp.le.s32.totalorder 1, %s20
      %p207 = scmp.lt.s32.totalorder %s20, 3
      %p208 = pnand %p206, %p207
      %p209 = pneg %p208
      // Predicated region
      $region9: #{tpu_custom_call.1} parent=5 // pred_check
        _
      $region10: #{tpu_custom_call.1} parent=5 // pred_check_branch
        %211 = sbr.rel (%p208) target = $region12
      $region11: #{tpu_custom_call.1} parent=5 // pred_region
        %s212 = ssub.s32 %s20, 1
        // Predicated region
        $region13: #{tpu_custom_call.1} parent=11 // pred_check
          %p213 = pneg %p67
        $region14: #{tpu_custom_call.1} parent=11 // pred_check_branch
          %215 = sbr.rel (%p213) target = $region16
        $region15: #{tpu_custom_call.1} parent=11 // pred_region
          _
        $region16: #{tpu_custom_call.1} parent=11 // pred_fallthru
          _
        // Predicated region
        $region17: #{tpu_custom_call.1} parent=11 // pred_check
          %p216 = pneg %p88
        $region18: #{tpu_custom_call.1} parent=11 // pred_check_branch
          %218 = sbr.rel (%p216) target = $region20
        $region19: #{tpu_custom_call.1} parent=11 // pred_region
          _
        $region20: #{tpu_custom_call.1} parent=11 // pred_fallthru
          _
        // Predicated region
        $region21: #{tpu_custom_call.1} parent=11 // pred_check
          %p219 = pneg %p109
        $region22: #{tpu_custom_call.1} parent=11 // pred_check_branch
          %221 = sbr.rel (%p219) target = $region24
        $region23: #{tpu_custom_call.1} parent=11 // pred_region
          %223 = vsyncadd [#allocation7], 0
          %s224 = sshll.u32 %s3, 4
          %s225 = int_to_ptr.hbm [resolvable:$true] %s224
          %s226 = sshll.u32 [#allocation6], 4
          %s227 = int_to_ptr.vmem [resolvable:$true] %s226
          %232 = dma.hbm_to_vmem [thread:$0]  %s225, 4608, %s227, [#allocation7], 64, 64, 4
        $region24: #{tpu_custom_call.1} parent=11 // pred_fallthru
          _
        // Predicated region
        $region25: #{tpu_custom_call.1} parent=11 // pred_check
          %p233 = pneg %p130
        $region26: #{tpu_custom_call.1} parent=11 // pred_check_branch
          %235 = sbr.rel (%p233) target = $region28
        $region27: #{tpu_custom_call.1} parent=11 // pred_region
          _
        $region28: #{tpu_custom_call.1} parent=11 // pred_fallthru
          _
        // Predicated region
        $region29: #{tpu_custom_call.1} parent=11 // pred_check
          %p236 = pneg %p151
        $region30: #{tpu_custom_call.1} parent=11 // pred_check_branch
          %238 = sbr.rel (%p236) target = $region32
        $region31: #{tpu_custom_call.1} parent=11 // pred_region
          _
        $region32: #{tpu_custom_call.1} parent=11 // pred_fallthru
          _
        // Predicated region
        $region33: #{tpu_custom_call.1} parent=11 // pred_check
          %p239 = pneg %p172
        $region34: #{tpu_custom_call.1} parent=11 // pred_check_branch
          %241 = sbr.rel (%p239) target = $region36
        $region35: #{tpu_custom_call.1} parent=11 // pred_region
          _
        $region36: #{tpu_custom_call.1} parent=11 // pred_fallthru
          _
      $region12: #{tpu_custom_call.1} parent=5 // pred_fallthru
        _
      %p242 = scmp.lt.s32.totalorder %s20, 2
      // Predicated region
      $region37: #{tpu_custom_call.1} parent=5 // pred_check
        %p243 = pneg %p242
      $region38: #{tpu_custom_call.1} parent=5 // pred_check_branch
        %245 = sbr.rel (%p243) target = $region40
      $region39: #{tpu_custom_call.1} parent=5 // pred_region
        // Predicated region
        $region41: #{tpu_custom_call.1} parent=39 // pred_check
          %p246 = pneg %p40
        $region42: #{tpu_custom_call.1} parent=39 // pred_check_branch
          %248 = sbr.rel (%p246) target = $region44
        $region43: #{tpu_custom_call.1} parent=39 // pred_region
          %s249 = sand.u32 %s30, 1
          %s250 = scalar_lea.sflag [#allocation4], %s249
          %s251 = sand.u32 %s30, 1
          %s252 = smul.addr %s251, 128
          %s253 = scalar_lea.vmem [#allocation3], %s252
          %255 = vsyncadd %s250, 0
          %s256 = smul.addr %s20, 32
          %s257 = smul.addr %s256, 4
          %s258 = scalar_lea.hbm %s0, %s257
          %s259 = sshll.u32 %s258, 4
          %s260 = int_to_ptr.hbm [resolvable:$true] %s259
          %s261 = sshll.u32 %s253, 4
          %s262 = int_to_ptr.vmem [resolvable:$true] %s261
          %267 = dma.hbm_to_vmem [thread:$0]  %s260, 2048, %s262, %s250, 64, 64, 4
        $region44: #{tpu_custom_call.1} parent=39 // pred_fallthru
          _
      $region40: #{tpu_custom_call.1} parent=5 // pred_fallthru
        _
      %p268 = scmp.le.s32.totalorder 1, %s20
      %p269 = scmp.lt.s32.totalorder %s20, 3
      %p270 = pnand %p268, %p269
      %p271 = pneg %p270
      // Predicated region
      $region45: #{tpu_custom_call.1} parent=5 // pred_check
        _
      $region46: #{tpu_custom_call.1} parent=5 // pred_check_branch
        %273 = sbr.rel (%p270) target = $region48
      $region47: #{tpu_custom_call.1} parent=5 // pred_region
        %s274 = ssub.s32 %s20, 1
        %s275 = sand.u32 %s33, 1
        %s276 = scalar_lea.sflag [#allocation4], %s275
        %s277 = sand.u32 %s33, 1
        %s278 = smul.addr %s277, 128
        %s279 = scalar_lea.vmem [#allocation3], %s278
        // Predicated region
        $region49: #{tpu_custom_call.1} parent=47 // pred_check
          %p280 = pneg %p46
        $region50: #{tpu_custom_call.1} parent=47 // pred_check_branch
          %282 = sbr.rel (%p280) target = $region52
        $region51: #{tpu_custom_call.1} parent=47 // pred_region
          %284 = dma.done %s276, 2048
        $region52: #{tpu_custom_call.1} parent=47 // pred_fallthru
          _
        // Predicated region
        $region53: #{tpu_custom_call.1} parent=47 // pred_check
          %p285 = pneg %p109
        $region54: #{tpu_custom_call.1} parent=47 // pred_check_branch
          %287 = sbr.rel (%p285) target = $region56
        $region55: #{tpu_custom_call.1} parent=47 // pred_region
          %289 = dma.done [#allocation7], 4608
        $region56: #{tpu_custom_call.1} parent=47 // pred_fallthru
          _
        %s290 = sand.u32 %s33, 1
        %s291 = scalar_lea.sflag [#allocation4], %s290
        %s292 = sand.u32 %s33, 1
        %s293 = smul.addr %s292, 128
        %s294 = scalar_lea.vmem [#allocation3], %s293
        %p295 = pneg %p46
        %p296 = pneg %p43
        %p297 = pneg %p67
        %p298 = pneg %p64
        %p299 = pneg %p88
        %p300 = pneg %p85
        %p301 = pneg %p109
        %p302 = pneg %p106
        %p303 = pneg %p130
        %p304 = pneg %p127
        %p305 = pneg %p151
        %p306 = pneg %p148
        %p307 = pneg %p172
        %p308 = pneg %p169
        %p309 = pneg %p198
        %p310 = pneg %p195
        %s311 = sand.u32 %s185, 1
        %s312 = scalar_lea.sflag [#allocation5], %s311
        %s313 = sand.u32 %s185, 1
        %s314 = smul.addr %s313, 128
        %s315 = scalar_lea.vmem [#allocation8], %s314
        %v317 = vld [vmem:[%s279] sm:$0xf]
        %v318 = vld [vmem:[%s279 + $0x4] sm:$0xf]
        %v319 = vld [vmem:[%s279 + $0x8] sm:$0xf]
        %v320 = vld [vmem:[%s279 + $0xc] sm:$0xf]
        %v321 = vld [vmem:[%s279 + $0x10] sm:$0xf]
        %v322 = vld [vmem:[%s279 + $0x14] sm:$0xf]
        %v323 = vld [vmem:[%s279 + $0x18] sm:$0xf]
        %v324 = vld [vmem:[%s279 + $0x1c] sm:$0xf]
        %v325 = vld [vmem:[%s279 + $0x20] sm:$0xf]
        %v326 = vld [vmem:[%s279 + $0x24] sm:$0xf]
        %v327 = vld [vmem:[%s279 + $0x28] sm:$0xf]
        %v328 = vld [vmem:[%s279 + $0x2c] sm:$0xf]
        %v329 = vld [vmem:[%s279 + $0x30] sm:$0xf]
        %v330 = vld [vmem:[%s279 + $0x34] sm:$0xf]
        %v331 = vld [vmem:[%s279 + $0x38] sm:$0xf]
        %v332 = vld [vmem:[%s279 + $0x3c] sm:$0xf]
        %v333 = vld [vmem:[%s279 + $0x40] sm:$0xf]
        %v334 = vld [vmem:[%s279 + $0x44] sm:$0xf]
        %v335 = vld [vmem:[%s279 + $0x48] sm:$0xf]
        %v336 = vld [vmem:[%s279 + $0x4c] sm:$0xf]
        %v337 = vld [vmem:[%s279 + $0x50] sm:$0xf]
        %v338 = vld [vmem:[%s279 + $0x54] sm:$0xf]
        %v339 = vld [vmem:[%s279 + $0x58] sm:$0xf]
        %v340 = vld [vmem:[%s279 + $0x5c] sm:$0xf]
        %v341 = vld [vmem:[%s279 + $0x60] sm:$0xf]
        %v342 = vld [vmem:[%s279 + $0x64] sm:$0xf]
        %v343 = vld [vmem:[%s279 + $0x68] sm:$0xf]
        %v344 = vld [vmem:[%s279 + $0x6c] sm:$0xf]
        %v345 = vld [vmem:[%s279 + $0x70] sm:$0xf]
        %v346 = vld [vmem:[%s279 + $0x74] sm:$0xf]
        %v347 = vld [vmem:[%s279 + $0x78] sm:$0xf]
        %v348 = vld [vmem:[%s279 + $0x7c] sm:$0xf]
        %v349 = vld [vmem:[%s1] sm:$0xf]
        %v350 = vld [vmem:[%s1 + $0x4] sm:$0xf]
        %v351 = vld [vmem:[%s1 + $0x8] sm:$0xf]
        %v352 = vld [vmem:[%s1 + $0xc] sm:$0xf]
        %v353 = vld [vmem:[%s1 + $0x10] sm:$0xf]
        %v354 = vld [vmem:[%s1 + $0x14] sm:$0xf]
        %v355 = vld [vmem:[%s1 + $0x18] sm:$0xf]
        %v356 = vld [vmem:[%s1 + $0x1c] sm:$0xf]
        %v357 = vld [vmem:[%s1 + $0x20] sm:$0xf]
        %v358 = vld [vmem:[%s1 + $0x24] sm:$0xf]
        %v359 = vld [vmem:[%s1 + $0x28] sm:$0xf]
        %v360 = vld [vmem:[%s1 + $0x2c] sm:$0xf]
        %v361 = vld [vmem:[%s1 + $0x30] sm:$0xf]
        %v362 = vld [vmem:[%s1 + $0x34] sm:$0xf]
        %v363 = vld [vmem:[%s1 + $0x38] sm:$0xf]
        %v364 = vld [vmem:[%s1 + $0x3c] sm:$0xf]
        %v365 = vld [vmem:[%s2] sm:$0x1]
        %v367 = vperm.slane %v365, 0
        %v401 = vunpack.c.l.b16 %v317
        %v402 = vunpack.c.l.b16 %v318
        %v403 = vunpack.c.l.b16 %v319
        %v404 = vunpack.c.l.b16 %v320
        %v405 = vunpack.c.l.b16 %v321
        %v406 = vunpack.c.l.b16 %v322
        %v407 = vunpack.c.l.b16 %v323
        %v408 = vunpack.c.l.b16 %v324
        %v409 = vunpack.c.l.b16 %v325
        %v410 = vunpack.c.l.b16 %v326
        %v411 = vunpack.c.l.b16 %v327
        %v412 = vunpack.c.l.b16 %v328
        %v413 = vunpack.c.l.b16 %v329
        %v414 = vunpack.c.l.b16 %v330
        %v415 = vunpack.c.l.b16 %v331
        %v416 = vunpack.c.l.b16 %v332
        %v417 = vunpack.c.l.b16 %v333
        %v418 = vunpack.c.l.b16 %v334
        %v419 = vunpack.c.l.b16 %v335
        %v420 = vunpack.c.l.b16 %v336
        %v421 = vunpack.c.l.b16 %v337
        %v422 = vunpack.c.l.b16 %v338
        %v423 = vunpack.c.l.b16 %v339
        %v424 = vunpack.c.l.b16 %v340
        %v425 = vunpack.c.l.b16 %v341
        %v426 = vunpack.c.l.b16 %v342
        %v427 = vunpack.c.l.b16 %v343
        %v428 = vunpack.c.l.b16 %v344
        %v429 = vunpack.c.l.b16 %v345
        %v430 = vunpack.c.l.b16 %v346
        %v431 = vunpack.c.l.b16 %v347
        %v432 = vunpack.c.l.b16 %v348
        %v433 = vpack.c.b16 %v402, %v401
        %v434 = vpack.c.b16 %v404, %v403
        %v435 = vpack.c.b16 %v406, %v405
        %v436 = vpack.c.b16 %v408, %v407
        %v437 = vpack.c.b16 %v410, %v409
        %v438 = vpack.c.b16 %v412, %v411
        %v439 = vpack.c.b16 %v414, %v413
        %v440 = vpack.c.b16 %v416, %v415
        %v441 = vpack.c.b16 %v418, %v417
        %v442 = vpack.c.b16 %v420, %v419
        %v443 = vpack.c.b16 %v422, %v421
        %v444 = vpack.c.b16 %v424, %v423
        %v445 = vpack.c.b16 %v426, %v425
        %v446 = vpack.c.b16 %v428, %v427
        %v447 = vpack.c.b16 %v430, %v429
        %v448 = vpack.c.b16 %v432, %v431
        %v481 = vunpack.c.l.b16 %v349
        %v482 = vunpack.c.l.b16 %v350
        %v483 = vunpack.c.l.b16 %v351
        %v484 = vunpack.c.l.b16 %v352
        %v485 = vunpack.c.l.b16 %v353
        %v486 = vunpack.c.l.b16 %v354
        %v487 = vunpack.c.l.b16 %v355
        %v488 = vunpack.c.l.b16 %v356
        %v489 = vunpack.c.l.b16 %v357
        %v490 = vunpack.c.l.b16 %v358
        %v491 = vunpack.c.l.b16 %v359
        %v492 = vunpack.c.l.b16 %v360
        %v493 = vunpack.c.l.b16 %v361
        %v494 = vunpack.c.l.b16 %v362
        %v495 = vunpack.c.l.b16 %v363
        %v496 = vunpack.c.l.b16 %v364
        %v497 = vpack.c.b16 %v482, %v481
        %v498 = vpack.c.b16 %v484, %v483
        %v499 = vpack.c.b16 %v486, %v485
        %v500 = vpack.c.b16 %v488, %v487
        %v501 = vpack.c.b16 %v490, %v489
        %v502 = vpack.c.b16 %v492, %v491
        %v503 = vpack.c.b16 %v494, %v493
        %v504 = vpack.c.b16 %v496, %v495
        %513 = vmatpush.bf16.msra.mxu0 %v504
        %514 = vmatpush.bf16.msra.mxu0 %v503
        %515 = vmatpush.bf16.msra.mxu0 %v502
        %516 = vmatpush.bf16.msra.mxu0 %v501
        %517 = vmatpush.bf16.msra.mxu0 %v500
        %518 = vmatpush.bf16.msra.mxu0 %v499
        %519 = vmatpush.bf16.msra.mxu0 %v498
        %520 = vmatpush.bf16.msra.mxu0 %v497
        %521 = vmatmul.bf16.gmra.mxu0 %v433
        %v522 = vpop.f32.mrf.mxu0
        %v523 = vadd.f32 %v367, %v522
        %v524 = vpop.f32.mrf.mxu0
        %v525 = vadd.f32 %v367, %v524
        %526 = vmatmul.bf16.gmra.mxu0 %v434
        %v527 = vpop.f32.mrf.mxu0
        %v528 = vadd.f32 %v367, %v527
        %v529 = vpop.f32.mrf.mxu0
        %v530 = vadd.f32 %v367, %v529
        %531 = vmatmul.bf16.gmra.mxu0 %v435
        %v532 = vpop.f32.mrf.mxu0
        %v533 = vadd.f32 %v367, %v532
        %v534 = vpop.f32.mrf.mxu0
        %v535 = vadd.f32 %v367, %v534
        %536 = vmatmul.bf16.gmra.mxu0 %v436
        %v537 = vpop.f32.mrf.mxu0
        %v538 = vadd.f32 %v367, %v537
        %v539 = vpop.f32.mrf.mxu0
        %v540 = vadd.f32 %v367, %v539
        %541 = vmatmul.bf16.gmra.mxu0 %v437
        %v542 = vpop.f32.mrf.mxu0
        %v543 = vadd.f32 %v367, %v542
        %v544 = vpop.f32.mrf.mxu0
        %v545 = vadd.f32 %v367, %v544
        %546 = vmatmul.bf16.gmra.mxu0 %v438
        %v547 = vpop.f32.mrf.mxu0
        %v548 = vadd.f32 %v367, %v547
        %v549 = vpop.f32.mrf.mxu0
        %v550 = vadd.f32 %v367, %v549
        %551 = vmatmul.bf16.gmra.mxu0 %v439
        %v552 = vpop.f32.mrf.mxu0
        %v553 = vadd.f32 %v367, %v552
        %v554 = vpop.f32.mrf.mxu0
        %v555 = vadd.f32 %v367, %v554
        %556 = vmatmul.bf16.gmra.mxu0 %v440
        %v557 = vpop.f32.mrf.mxu0
        %v558 = vadd.f32 %v367, %v557
        %v559 = vpop.f32.mrf.mxu0
        %v560 = vadd.f32 %v367, %v559
        %561 = vmatmul.bf16.gmra.mxu0 %v441
        %v562 = vpop.f32.mrf.mxu0
        %v563 = vadd.f32 %v367, %v562
        %v564 = vpop.f32.mrf.mxu0
        %v565 = vadd.f32 %v367, %v564
        %566 = vmatmul.bf16.gmra.mxu0 %v442
        %v567 = vpop.f32.mrf.mxu0
        %v568 = vadd.f32 %v367, %v567
        %v569 = vpop.f32.mrf.mxu0
        %v570 = vadd.f32 %v367, %v569
        %571 = vmatmul.bf16.gmra.mxu0 %v443
        %v572 = vpop.f32.mrf.mxu0
        %v573 = vadd.f32 %v367, %v572
        %v574 = vpop.f32.mrf.mxu0
        %v575 = vadd.f32 %v367, %v574
        %576 = vmatmul.bf16.gmra.mxu0 %v444
        %v577 = vpop.f32.mrf.mxu0
        %v578 = vadd.f32 %v367, %v577
        %v579 = vpop.f32.mrf.mxu0
        %v580 = vadd.f32 %v367, %v579
        %581 = vmatmul.bf16.gmra.mxu0 %v445
        %v582 = vpop.f32.mrf.mxu0
        %v583 = vadd.f32 %v367, %v582
        %v584 = vpop.f32.mrf.mxu0
        %v585 = vadd.f32 %v367, %v584
        %586 = vmatmul.bf16.gmra.mxu0 %v446
        %v587 = vpop.f32.mrf.mxu0
        %v588 = vadd.f32 %v367, %v587
        %v589 = vpop.f32.mrf.mxu0
        %v590 = vadd.f32 %v367, %v589
        %591 = vmatmul.bf16.gmra.mxu0 %v447
        %v592 = vpop.f32.mrf.mxu0
        %v593 = vadd.f32 %v367, %v592
        %v594 = vpop.f32.mrf.mxu0
        %v595 = vadd.f32 %v367, %v594
        %596 = vmatmul.bf16.gmra.mxu0 %v448
        %v597 = vpop.f32.mrf.mxu0
        %v598 = vadd.f32 %v367, %v597
        %v599 = vpop.f32.mrf.mxu0
        %v600 = vadd.f32 %v367, %v599
        %601 = vdwg.mxu0
        %v602 = vxor.u32 %v523, 2147483648
        %v603 = vxor.u32 %v525, 2147483648
        %v604 = vxor.u32 %v528, 2147483648
        %v605 = vxor.u32 %v530, 2147483648
        %v606 = vxor.u32 %v533, 2147483648
        %v607 = vxor.u32 %v535, 2147483648
        %v608 = vxor.u32 %v538, 2147483648
        %v609 = vxor.u32 %v540, 2147483648
        %v610 = vxor.u32 %v543, 2147483648
        %v611 = vxor.u32 %v545, 2147483648
        %v612 = vxor.u32 %v548, 2147483648
        %v613 = vxor.u32 %v550, 2147483648
        %v614 = vxor.u32 %v553, 2147483648
        %v615 = vxor.u32 %v555, 2147483648
        %v616 = vxor.u32 %v558, 2147483648
        %v617 = vxor.u32 %v560, 2147483648
        %v618 = vxor.u32 %v563, 2147483648
        %v619 = vxor.u32 %v565, 2147483648
        %v620 = vxor.u32 %v568, 2147483648
        %v621 = vxor.u32 %v570, 2147483648
        %v622 = vxor.u32 %v573, 2147483648
        %v623 = vxor.u32 %v575, 2147483648
        %v624 = vxor.u32 %v578, 2147483648
        %v625 = vxor.u32 %v580, 2147483648
        %v626 = vxor.u32 %v583, 2147483648
        %v627 = vxor.u32 %v585, 2147483648
        %v628 = vxor.u32 %v588, 2147483648
        %v629 = vxor.u32 %v590, 2147483648
        %v630 = vxor.u32 %v593, 2147483648
        %v631 = vxor.u32 %v595, 2147483648
        %v632 = vxor.u32 %v598, 2147483648
        %v633 = vxor.u32 %v600, 2147483648
        %v634 = vmul.f32 %v602, 1.442695
        %v635 = vpow.pop %v634
        %v636 = vmul.f32 %v603, 1.442695
        %v637 = vpow.pop %v636
        %v638 = vmul.f32 %v604, 1.442695
        %v639 = vpow.pop %v638
        %v640 = vmul.f32 %v605, 1.442695
        %v641 = vpow.pop %v640
        %v642 = vmul.f32 %v606, 1.442695
        %v643 = vpow.pop %v642
        %v644 = vmul.f32 %v607, 1.442695
        %v645 = vpow.pop %v644
        %v646 = vmul.f32 %v608, 1.442695
        %v647 = vpow.pop %v646
        %v648 = vmul.f32 %v609, 1.442695
        %v649 = vpow.pop %v648
        %v650 = vmul.f32 %v610, 1.442695
        %v651 = vpow.pop %v650
        %v652 = vmul.f32 %v611, 1.442695
        %v653 = vpow.pop %v652
        %v654 = vmul.f32 %v612, 1.442695
        %v655 = vpow.pop %v654
        %v656 = vmul.f32 %v613, 1.442695
        %v657 = vpow.pop %v656
        %v658 = vmul.f32 %v614, 1.442695
        %v659 = vpow.pop %v658
        %v660 = vmul.f32 %v615, 1.442695
        %v661 = vpow.pop %v660
        %v662 = vmul.f32 %v616, 1.442695
        %v663 = vpow.pop %v662
        %v664 = vmul.f32 %v617, 1.442695
        %v665 = vpow.pop %v664
        %v666 = vmul.f32 %v618, 1.442695
        %v667 = vpow.pop %v666
        %v668 = vmul.f32 %v619, 1.442695
        %v669 = vpow.pop %v668
        %v670 = vmul.f32 %v620, 1.442695
        %v671 = vpow.pop %v670
        %v672 = vmul.f32 %v621, 1.442695
        %v673 = vpow.pop %v672
        %v674 = vmul.f32 %v622, 1.442695
        %v675 = vpow.pop %v674
        %v676 = vmul.f32 %v623, 1.442695
        %v677 = vpow.pop %v676
        %v678 = vmul.f32 %v624, 1.442695
        %v679 = vpow.pop %v678
        %v680 = vmul.f32 %v625, 1.442695
        %v681 = vpow.pop %v680
        %v682 = vmul.f32 %v626, 1.442695
        %v683 = vpow.pop %v682
        %v684 = vmul.f32 %v627, 1.442695
        %v685 = vpow.pop %v684
        %v686 = vmul.f32 %v628, 1.442695
        %v687 = vpow.pop %v686
        %v688 = vmul.f32 %v629, 1.442695
        %v689 = vpow.pop %v688
        %v690 = vmul.f32 %v630, 1.442695
        %v691 = vpow.pop %v690
        %v692 = vmul.f32 %v631, 1.442695
        %v693 = vpow.pop %v692
        %v694 = vmul.f32 %v632, 1.442695
        %v695 = vpow.pop %v694
        %v696 = vmul.f32 %v633, 1.442695
        %v697 = vpow.pop %v696
        %v698 = vadd.f32 %v635, 1.0
        %v699 = vadd.f32 %v637, 1.0
        %v700 = vadd.f32 %v639, 1.0
        %v701 = vadd.f32 %v641, 1.0
        %v702 = vadd.f32 %v643, 1.0
        %v703 = vadd.f32 %v645, 1.0
        %v704 = vadd.f32 %v647, 1.0
        %v705 = vadd.f32 %v649, 1.0
        %v706 = vadd.f32 %v651, 1.0
        %v707 = vadd.f32 %v653, 1.0
        %v708 = vadd.f32 %v655, 1.0
        %v709 = vadd.f32 %v657, 1.0
        %v710 = vadd.f32 %v659, 1.0
        %v711 = vadd.f32 %v661, 1.0
        %v712 = vadd.f32 %v663, 1.0
        %v713 = vadd.f32 %v665, 1.0
        %v714 = vadd.f32 %v667, 1.0
        %v715 = vadd.f32 %v669, 1.0
        %v716 = vadd.f32 %v671, 1.0
        %v717 = vadd.f32 %v673, 1.0
        %v718 = vadd.f32 %v675, 1.0
        %v719 = vadd.f32 %v677, 1.0
        %v720 = vadd.f32 %v679, 1.0
        %v721 = vadd.f32 %v681, 1.0
        %v722 = vadd.f32 %v683, 1.0
        %v723 = vadd.f32 %v685, 1.0
        %v724 = vadd.f32 %v687, 1.0
        %v725 = vadd.f32 %v689, 1.0
        %v726 = vadd.f32 %v691, 1.0
        %v727 = vadd.f32 %v693, 1.0
        %v728 = vadd.f32 %v695, 1.0
        %v729 = vadd.f32 %v697, 1.0
        %v730 = vrcp.pop %v698
        %v731 = vmul.f32 %v698, %v730
        %v732 = vsub.f32 1.0, %v731
        %v733 = vmul.f32 %v730, %v732
        %v734 = vadd.f32 %v730, %v733
        %vm735 = vweird.f32 %v698
        %vm736 = vweird.f32 %v730
        %vm737 = vmor %vm735, %vm736
        %v738 = vsel %vm737, %v730, %v734
        %v739 = vand.u32 2147483647, %v698
        %vm740 = vcmp.eq.f32.partialorder %v739, 8.507059e+37
        %v741 = vand.u32 %v698, 2147483648
        %v742 = vor.u32 1.1754944e-38, %v741
        %v743 = vsel %vm740, %v742, %v738
        %v744 = vmul.f32 1.0, %v743
        %v745 = vrcp.pop %v699
        %v746 = vmul.f32 %v699, %v745
        %v747 = vsub.f32 1.0, %v746
        %v748 = vmul.f32 %v745, %v747
        %v749 = vadd.f32 %v745, %v748
        %vm750 = vweird.f32 %v699
        %vm751 = vweird.f32 %v745
        %vm752 = vmor %vm750, %vm751
        %v753 = vsel %vm752, %v745, %v749
        %v754 = vand.u32 2147483647, %v699
        %vm755 = vcmp.eq.f32.partialorder %v754, 8.507059e+37
        %v756 = vand.u32 %v699, 2147483648
        %v757 = vor.u32 1.1754944e-38, %v756
        %v758 = vsel %vm755, %v757, %v753
        %v759 = vmul.f32 1.0, %v758
        %v760 = vrcp.pop %v700
        %v761 = vmul.f32 %v700, %v760
        %v762 = vsub.f32 1.0, %v761
        %v763 = vmul.f32 %v760, %v762
        %v764 = vadd.f32 %v760, %v763
        %vm765 = vweird.f32 %v700
        %vm766 = vweird.f32 %v760
        %vm767 = vmor %vm765, %vm766
        %v768 = vsel %vm767, %v760, %v764
        %v769 = vand.u32 2147483647, %v700
        %vm770 = vcmp.eq.f32.partialorder %v769, 8.507059e+37
        %v771 = vand.u32 %v700, 2147483648
        %v772 = vor.u32 1.1754944e-38, %v771
        %v773 = vsel %vm770, %v772, %v768
        %v774 = vmul.f32 1.0, %v773
        %v775 = vrcp.pop %v701
        %v776 = vmul.f32 %v701, %v775
        %v777 = vsub.f32 1.0, %v776
        %v778 = vmul.f32 %v775, %v777
        %v779 = vadd.f32 %v775, %v778
        %vm780 = vweird.f32 %v701
        %vm781 = vweird.f32 %v775
        %vm782 = vmor %vm780, %vm781
        %v783 = vsel %vm782, %v775, %v779
        %v784 = vand.u32 2147483647, %v701
        %vm785 = vcmp.eq.f32.partialorder %v784, 8.507059e+37
        %v786 = vand.u32 %v701, 2147483648
        %v787 = vor.u32 1.1754944e-38, %v786
        %v788 = vsel %vm785, %v787, %v783
        %v789 = vmul.f32 1.0, %v788
        %v790 = vrcp.pop %v702
        %v791 = vmul.f32 %v702, %v790
        %v792 = vsub.f32 1.0, %v791
        %v793 = vmul.f32 %v790, %v792
        %v794 = vadd.f32 %v790, %v793
        %vm795 = vweird.f32 %v702
        %vm796 = vweird.f32 %v790
        %vm797 = vmor %vm795, %vm796
        %v798 = vsel %vm797, %v790, %v794
        %v799 = vand.u32 2147483647, %v702
        %vm800 = vcmp.eq.f32.partialorder %v799, 8.507059e+37
        %v801 = vand.u32 %v702, 2147483648
        %v802 = vor.u32 1.1754944e-38, %v801
        %v803 = vsel %vm800, %v802, %v798
        %v804 = vmul.f32 1.0, %v803
        %v805 = vrcp.pop %v703
        %v806 = vmul.f32 %v703, %v805
        %v807 = vsub.f32 1.0, %v806
        %v808 = vmul.f32 %v805, %v807
        %v809 = vadd.f32 %v805, %v808
        %vm810 = vweird.f32 %v703
        %vm811 = vweird.f32 %v805
        %vm812 = vmor %vm810, %vm811
        %v813 = vsel %vm812, %v805, %v809
        %v814 = vand.u32 2147483647, %v703
        %vm815 = vcmp.eq.f32.partialorder %v814, 8.507059e+37
        %v816 = vand.u32 %v703, 2147483648
        %v817 = vor.u32 1.1754944e-38, %v816
        %v818 = vsel %vm815, %v817, %v813
        %v819 = vmul.f32 1.0, %v818
        %v820 = vrcp.pop %v704
        %v821 = vmul.f32 %v704, %v820
        %v822 = vsub.f32 1.0, %v821
        %v823 = vmul.f32 %v820, %v822
        %v824 = vadd.f32 %v820, %v823
        %vm825 = vweird.f32 %v704
        %vm826 = vweird.f32 %v820
        %vm827 = vmor %vm825, %vm826
        %v828 = vsel %vm827, %v820, %v824
        %v829 = vand.u32 2147483647, %v704
        %vm830 = vcmp.eq.f32.partialorder %v829, 8.507059e+37
        %v831 = vand.u32 %v704, 2147483648
        %v832 = vor.u32 1.1754944e-38, %v831
        %v833 = vsel %vm830, %v832, %v828
        %v834 = vmul.f32 1.0, %v833
        %v835 = vrcp.pop %v705
        %v836 = vmul.f32 %v705, %v835
        %v837 = vsub.f32 1.0, %v836
        %v838 = vmul.f32 %v835, %v837
        %v839 = vadd.f32 %v835, %v838
        %vm840 = vweird.f32 %v705
        %vm841 = vweird.f32 %v835
        %vm842 = vmor %vm840, %vm841
        %v843 = vsel %vm842, %v835, %v839
        %v844 = vand.u32 2147483647, %v705
        %vm845 = vcmp.eq.f32.partialorder %v844, 8.507059e+37
        %v846 = vand.u32 %v705, 2147483648
        %v847 = vor.u32 1.1754944e-38, %v846
        %v848 = vsel %vm845, %v847, %v843
        %v849 = vmul.f32 1.0, %v848
        %v850 = vrcp.pop %v706
        %v851 = vmul.f32 %v706, %v850
        %v852 = vsub.f32 1.0, %v851
        %v853 = vmul.f32 %v850, %v852
        %v854 = vadd.f32 %v850, %v853
        %vm855 = vweird.f32 %v706
        %vm856 = vweird.f32 %v850
        %vm857 = vmor %vm855, %vm856
        %v858 = vsel %vm857, %v850, %v854
        %v859 = vand.u32 2147483647, %v706
        %vm860 = vcmp.eq.f32.partialorder %v859, 8.507059e+37
        %v861 = vand.u32 %v706, 2147483648
        %v862 = vor.u32 1.1754944e-38, %v861
        %v863 = vsel %vm860, %v862, %v858
        %v864 = vmul.f32 1.0, %v863
        %v865 = vrcp.pop %v707
        %v866 = vmul.f32 %v707, %v865
        %v867 = vsub.f32 1.0, %v866
        %v868 = vmul.f32 %v865, %v867
        %v869 = vadd.f32 %v865, %v868
        %vm870 = vweird.f32 %v707
        %vm871 = vweird.f32 %v865
        %vm872 = vmor %vm870, %vm871
        %v873 = vsel %vm872, %v865, %v869
        %v874 = vand.u32 2147483647, %v707
        %vm875 = vcmp.eq.f32.partialorder %v874, 8.507059e+37
        %v876 = vand.u32 %v707, 2147483648
        %v877 = vor.u32 1.1754944e-38, %v876
        %v878 = vsel %vm875, %v877, %v873
        %v879 = vmul.f32 1.0, %v878
        %v880 = vrcp.pop %v708
        %v881 = vmul.f32 %v708, %v880
        %v882 = vsub.f32 1.0, %v881
        %v883 = vmul.f32 %v880, %v882
        %v884 = vadd.f32 %v880, %v883
        %vm885 = vweird.f32 %v708
        %vm886 = vweird.f32 %v880
        %vm887 = vmor %vm885, %vm886
        %v888 = vsel %vm887, %v880, %v884
        %v889 = vand.u32 2147483647, %v708
        %vm890 = vcmp.eq.f32.partialorder %v889, 8.507059e+37
        %v891 = vand.u32 %v708, 2147483648
        %v892 = vor.u32 1.1754944e-38, %v891
        %v893 = vsel %vm890, %v892, %v888
        %v894 = vmul.f32 1.0, %v893
        %v895 = vrcp.pop %v709
        %v896 = vmul.f32 %v709, %v895
        %v897 = vsub.f32 1.0, %v896
        %v898 = vmul.f32 %v895, %v897
        %v899 = vadd.f32 %v895, %v898
        %vm900 = vweird.f32 %v709
        %vm901 = vweird.f32 %v895
        %vm902 = vmor %vm900, %vm901
        %v903 = vsel %vm902, %v895, %v899
        %v904 = vand.u32 2147483647, %v709
        %vm905 = vcmp.eq.f32.partialorder %v904, 8.507059e+37
        %v906 = vand.u32 %v709, 2147483648
        %v907 = vor.u32 1.1754944e-38, %v906
        %v908 = vsel %vm905, %v907, %v903
        %v909 = vmul.f32 1.0, %v908
        %v910 = vrcp.pop %v710
        %v911 = vmul.f32 %v710, %v910
        %v912 = vsub.f32 1.0, %v911
        %v913 = vmul.f32 %v910, %v912
        %v914 = vadd.f32 %v910, %v913
        %vm915 = vweird.f32 %v710
        %vm916 = vweird.f32 %v910
        %vm917 = vmor %vm915, %vm916
        %v918 = vsel %vm917, %v910, %v914
        %v919 = vand.u32 2147483647, %v710
        %vm920 = vcmp.eq.f32.partialorder %v919, 8.507059e+37
        %v921 = vand.u32 %v710, 2147483648
        %v922 = vor.u32 1.1754944e-38, %v921
        %v923 = vsel %vm920, %v922, %v918
        %v924 = vmul.f32 1.0, %v923
        %v925 = vrcp.pop %v711
        %v926 = vmul.f32 %v711, %v925
        %v927 = vsub.f32 1.0, %v926
        %v928 = vmul.f32 %v925, %v927
        %v929 = vadd.f32 %v925, %v928
        %vm930 = vweird.f32 %v711
        %vm931 = vweird.f32 %v925
        %vm932 = vmor %vm930, %vm931
        %v933 = vsel %vm932, %v925, %v929
        %v934 = vand.u32 2147483647, %v711
        %vm935 = vcmp.eq.f32.partialorder %v934, 8.507059e+37
        %v936 = vand.u32 %v711, 2147483648
        %v937 = vor.u32 1.1754944e-38, %v936
        %v938 = vsel %vm935, %v937, %v933
        %v939 = vmul.f32 1.0, %v938
        %v940 = vrcp.pop %v712
        %v941 = vmul.f32 %v712, %v940
        %v942 = vsub.f32 1.0, %v941
        %v943 = vmul.f32 %v940, %v942
        %v944 = vadd.f32 %v940, %v943
        %vm945 = vweird.f32 %v712
        %vm946 = vweird.f32 %v940
        %vm947 = vmor %vm945, %vm946
        %v948 = vsel %vm947, %v940, %v944
        %v949 = vand.u32 2147483647, %v712
        %vm950 = vcmp.eq.f32.partialorder %v949, 8.507059e+37
        %v951 = vand.u32 %v712, 2147483648
        %v952 = vor.u32 1.1754944e-38, %v951
        %v953 = vsel %vm950, %v952, %v948
        %v954 = vmul.f32 1.0, %v953
        %v955 = vrcp.pop %v713
        %v956 = vmul.f32 %v713, %v955
        %v957 = vsub.f32 1.0, %v956
        %v958 = vmul.f32 %v955, %v957
        %v959 = vadd.f32 %v955, %v958
        %vm960 = vweird.f32 %v713
        %vm961 = vweird.f32 %v955
        %vm962 = vmor %vm960, %vm961
        %v963 = vsel %vm962, %v955, %v959
        %v964 = vand.u32 2147483647, %v713
        %vm965 = vcmp.eq.f32.partialorder %v964, 8.507059e+37
        %v966 = vand.u32 %v713, 2147483648
        %v967 = vor.u32 1.1754944e-38, %v966
        %v968 = vsel %vm965, %v967, %v963
        %v969 = vmul.f32 1.0, %v968
        %v970 = vrcp.pop %v714
        %v971 = vmul.f32 %v714, %v970
        %v972 = vsub.f32 1.0, %v971
        %v973 = vmul.f32 %v970, %v972
        %v974 = vadd.f32 %v970, %v973
        %vm975 = vweird.f32 %v714
        %vm976 = vweird.f32 %v970
        %vm977 = vmor %vm975, %vm976
        %v978 = vsel %vm977, %v970, %v974
        %v979 = vand.u32 2147483647, %v714
        %vm980 = vcmp.eq.f32.partialorder %v979, 8.507059e+37
        %v981 = vand.u32 %v714, 2147483648
        %v982 = vor.u32 1.1754944e-38, %v981
        %v983 = vsel %vm980, %v982, %v978
        %v984 = vmul.f32 1.0, %v983
        %v985 = vrcp.pop %v715
        %v986 = vmul.f32 %v715, %v985
        %v987 = vsub.f32 1.0, %v986
        %v988 = vmul.f32 %v985, %v987
        %v989 = vadd.f32 %v985, %v988
        %vm990 = vweird.f32 %v715
        %vm991 = vweird.f32 %v985
        %vm992 = vmor %vm990, %vm991
        %v993 = vsel %vm992, %v985, %v989
        %v994 = vand.u32 2147483647, %v715
        %vm995 = vcmp.eq.f32.partialorder %v994, 8.507059e+37
        %v996 = vand.u32 %v715, 2147483648
        %v997 = vor.u32 1.1754944e-38, %v996
        %v998 = vsel %vm995, %v997, %v993
        %v999 = vmul.f32 1.0, %v998
        %v1000 = vrcp.pop %v716
        %v1001 = vmul.f32 %v716, %v1000
        %v1002 = vsub.f32 1.0, %v1001
        %v1003 = vmul.f32 %v1000, %v1002
        %v1004 = vadd.f32 %v1000, %v1003
        %vm1005 = vweird.f32 %v716
        %vm1006 = vweird.f32 %v1000
        %vm1007 = vmor %vm1005, %vm1006
        %v1008 = vsel %vm1007, %v1000, %v1004
        %v1009 = vand.u32 2147483647, %v716
        %vm1010 = vcmp.eq.f32.partialorder %v1009, 8.507059e+37
        %v1011 = vand.u32 %v716, 2147483648
        %v1012 = vor.u32 1.1754944e-38, %v1011
        %v1013 = vsel %vm1010, %v1012, %v1008
        %v1014 = vmul.f32 1.0, %v1013
        %v1015 = vrcp.pop %v717
        %v1016 = vmul.f32 %v717, %v1015
        %v1017 = vsub.f32 1.0, %v1016
        %v1018 = vmul.f32 %v1015, %v1017
        %v1019 = vadd.f32 %v1015, %v1018
        %vm1020 = vweird.f32 %v717
        %vm1021 = vweird.f32 %v1015
        %vm1022 = vmor %vm1020, %vm1021
        %v1023 = vsel %vm1022, %v1015, %v1019
        %v1024 = vand.u32 2147483647, %v717
        %vm1025 = vcmp.eq.f32.partialorder %v1024, 8.507059e+37
        %v1026 = vand.u32 %v717, 2147483648
        %v1027 = vor.u32 1.1754944e-38, %v1026
        %v1028 = vsel %vm1025, %v1027, %v1023
        %v1029 = vmul.f32 1.0, %v1028
        %v1030 = vrcp.pop %v718
        %v1031 = vmul.f32 %v718, %v1030
        %v1032 = vsub.f32 1.0, %v1031
        %v1033 = vmul.f32 %v1030, %v1032
        %v1034 = vadd.f32 %v1030, %v1033
        %vm1035 = vweird.f32 %v718
        %vm1036 = vweird.f32 %v1030
        %vm1037 = vmor %vm1035, %vm1036
        %v1038 = vsel %vm1037, %v1030, %v1034
        %v1039 = vand.u32 2147483647, %v718
        %vm1040 = vcmp.eq.f32.partialorder %v1039, 8.507059e+37
        %v1041 = vand.u32 %v718, 2147483648
        %v1042 = vor.u32 1.1754944e-38, %v1041
        %v1043 = vsel %vm1040, %v1042, %v1038
        %v1044 = vmul.f32 1.0, %v1043
        %v1045 = vrcp.pop %v719
        %v1046 = vmul.f32 %v719, %v1045
        %v1047 = vsub.f32 1.0, %v1046
        %v1048 = vmul.f32 %v1045, %v1047
        %v1049 = vadd.f32 %v1045, %v1048
        %vm1050 = vweird.f32 %v719
        %vm1051 = vweird.f32 %v1045
        %vm1052 = vmor %vm1050, %vm1051
        %v1053 = vsel %vm1052, %v1045, %v1049
        %v1054 = vand.u32 2147483647, %v719
        %vm1055 = vcmp.eq.f32.partialorder %v1054, 8.507059e+37
        %v1056 = vand.u32 %v719, 2147483648
        %v1057 = vor.u32 1.1754944e-38, %v1056
        %v1058 = vsel %vm1055, %v1057, %v1053
        %v1059 = vmul.f32 1.0, %v1058
        %v1060 = vrcp.pop %v720
        %v1061 = vmul.f32 %v720, %v1060
        %v1062 = vsub.f32 1.0, %v1061
        %v1063 = vmul.f32 %v1060, %v1062
        %v1064 = vadd.f32 %v1060, %v1063
        %vm1065 = vweird.f32 %v720
        %vm1066 = vweird.f32 %v1060
        %vm1067 = vmor %vm1065, %vm1066
        %v1068 = vsel %vm1067, %v1060, %v1064
        %v1069 = vand.u32 2147483647, %v720
        %vm1070 = vcmp.eq.f32.partialorder %v1069, 8.507059e+37
        %v1071 = vand.u32 %v720, 2147483648
        %v1072 = vor.u32 1.1754944e-38, %v1071
        %v1073 = vsel %vm1070, %v1072, %v1068
        %v1074 = vmul.f32 1.0, %v1073
        %v1075 = vrcp.pop %v721
        %v1076 = vmul.f32 %v721, %v1075
        %v1077 = vsub.f32 1.0, %v1076
        %v1078 = vmul.f32 %v1075, %v1077
        %v1079 = vadd.f32 %v1075, %v1078
        %vm1080 = vweird.f32 %v721
        %vm1081 = vweird.f32 %v1075
        %vm1082 = vmor %vm1080, %vm1081
        %v1083 = vsel %vm1082, %v1075, %v1079
        %v1084 = vand.u32 2147483647, %v721
        %vm1085 = vcmp.eq.f32.partialorder %v1084, 8.507059e+37
        %v1086 = vand.u32 %v721, 2147483648
        %v1087 = vor.u32 1.1754944e-38, %v1086
        %v1088 = vsel %vm1085, %v1087, %v1083
        %v1089 = vmul.f32 1.0, %v1088
        %v1090 = vrcp.pop %v722
        %v1091 = vmul.f32 %v722, %v1090
        %v1092 = vsub.f32 1.0, %v1091
        %v1093 = vmul.f32 %v1090, %v1092
        %v1094 = vadd.f32 %v1090, %v1093
        %vm1095 = vweird.f32 %v722
        %vm1096 = vweird.f32 %v1090
        %vm1097 = vmor %vm1095, %vm1096
        %v1098 = vsel %vm1097, %v1090, %v1094
        %v1099 = vand.u32 2147483647, %v722
        %vm1100 = vcmp.eq.f32.partialorder %v1099, 8.507059e+37
        %v1101 = vand.u32 %v722, 2147483648
        %v1102 = vor.u32 1.1754944e-38, %v1101
        %v1103 = vsel %vm1100, %v1102, %v1098
        %v1104 = vmul.f32 1.0, %v1103
        %v1105 = vrcp.pop %v723
        %v1106 = vmul.f32 %v723, %v1105
        %v1107 = vsub.f32 1.0, %v1106
        %v1108 = vmul.f32 %v1105, %v1107
        %v1109 = vadd.f32 %v1105, %v1108
        %vm1110 = vweird.f32 %v723
        %vm1111 = vweird.f32 %v1105
        %vm1112 = vmor %vm1110, %vm1111
        %v1113 = vsel %vm1112, %v1105, %v1109
        %v1114 = vand.u32 2147483647, %v723
        %vm1115 = vcmp.eq.f32.partialorder %v1114, 8.507059e+37
        %v1116 = vand.u32 %v723, 2147483648
        %v1117 = vor.u32 1.1754944e-38, %v1116
        %v1118 = vsel %vm1115, %v1117, %v1113
        %v1119 = vmul.f32 1.0, %v1118
        %v1120 = vrcp.pop %v724
        %v1121 = vmul.f32 %v724, %v1120
        %v1122 = vsub.f32 1.0, %v1121
        %v1123 = vmul.f32 %v1120, %v1122
        %v1124 = vadd.f32 %v1120, %v1123
        %vm1125 = vweird.f32 %v724
        %vm1126 = vweird.f32 %v1120
        %vm1127 = vmor %vm1125, %vm1126
        %v1128 = vsel %vm1127, %v1120, %v1124
        %v1129 = vand.u32 2147483647, %v724
        %vm1130 = vcmp.eq.f32.partialorder %v1129, 8.507059e+37
        %v1131 = vand.u32 %v724, 2147483648
        %v1132 = vor.u32 1.1754944e-38, %v1131
        %v1133 = vsel %vm1130, %v1132, %v1128
        %v1134 = vmul.f32 1.0, %v1133
        %v1135 = vrcp.pop %v725
        %v1136 = vmul.f32 %v725, %v1135
        %v1137 = vsub.f32 1.0, %v1136
        %v1138 = vmul.f32 %v1135, %v1137
        %v1139 = vadd.f32 %v1135, %v1138
        %vm1140 = vweird.f32 %v725
        %vm1141 = vweird.f32 %v1135
        %vm1142 = vmor %vm1140, %vm1141
        %v1143 = vsel %vm1142, %v1135, %v1139
        %v1144 = vand.u32 2147483647, %v725
        %vm1145 = vcmp.eq.f32.partialorder %v1144, 8.507059e+37
        %v1146 = vand.u32 %v725, 2147483648
        %v1147 = vor.u32 1.1754944e-38, %v1146
        %v1148 = vsel %vm1145, %v1147, %v1143
        %v1149 = vmul.f32 1.0, %v1148
        %v1150 = vrcp.pop %v726
        %v1151 = vmul.f32 %v726, %v1150
        %v1152 = vsub.f32 1.0, %v1151
        %v1153 = vmul.f32 %v1150, %v1152
        %v1154 = vadd.f32 %v1150, %v1153
        %vm1155 = vweird.f32 %v726
        %vm1156 = vweird.f32 %v1150
        %vm1157 = vmor %vm1155, %vm1156
        %v1158 = vsel %vm1157, %v1150, %v1154
        %v1159 = vand.u32 2147483647, %v726
        %vm1160 = vcmp.eq.f32.partialorder %v1159, 8.507059e+37
        %v1161 = vand.u32 %v726, 2147483648
        %v1162 = vor.u32 1.1754944e-38, %v1161
        %v1163 = vsel %vm1160, %v1162, %v1158
        %v1164 = vmul.f32 1.0, %v1163
        %v1165 = vrcp.pop %v727
        %v1166 = vmul.f32 %v727, %v1165
        %v1167 = vsub.f32 1.0, %v1166
        %v1168 = vmul.f32 %v1165, %v1167
        %v1169 = vadd.f32 %v1165, %v1168
        %vm1170 = vweird.f32 %v727
        %vm1171 = vweird.f32 %v1165
        %vm1172 = vmor %vm1170, %vm1171
        %v1173 = vsel %vm1172, %v1165, %v1169
        %v1174 = vand.u32 2147483647, %v727
        %vm1175 = vcmp.eq.f32.partialorder %v1174, 8.507059e+37
        %v1176 = vand.u32 %v727, 2147483648
        %v1177 = vor.u32 1.1754944e-38, %v1176
        %v1178 = vsel %vm1175, %v1177, %v1173
        %v1179 = vmul.f32 1.0, %v1178
        %v1180 = vrcp.pop %v728
        %v1181 = vmul.f32 %v728, %v1180
        %v1182 = vsub.f32 1.0, %v1181
        %v1183 = vmul.f32 %v1180, %v1182
        %v1184 = vadd.f32 %v1180, %v1183
        %vm1185 = vweird.f32 %v728
        %vm1186 = vweird.f32 %v1180
        %vm1187 = vmor %vm1185, %vm1186
        %v1188 = vsel %vm1187, %v1180, %v1184
        %v1189 = vand.u32 2147483647, %v728
        %vm1190 = vcmp.eq.f32.partialorder %v1189, 8.507059e+37
        %v1191 = vand.u32 %v728, 2147483648
        %v1192 = vor.u32 1.1754944e-38, %v1191
        %v1193 = vsel %vm1190, %v1192, %v1188
        %v1194 = vmul.f32 1.0, %v1193
        %v1195 = vrcp.pop %v729
        %v1196 = vmul.f32 %v729, %v1195
        %v1197 = vsub.f32 1.0, %v1196
        %v1198 = vmul.f32 %v1195, %v1197
        %v1199 = vadd.f32 %v1195, %v1198
        %vm1200 = vweird.f32 %v729
        %vm1201 = vweird.f32 %v1195
        %vm1202 = vmor %vm1200, %vm1201
        %v1203 = vsel %vm1202, %v1195, %v1199
        %v1204 = vand.u32 2147483647, %v729
        %vm1205 = vcmp.eq.f32.partialorder %v1204, 8.507059e+37
        %v1206 = vand.u32 %v729, 2147483648
        %v1207 = vor.u32 1.1754944e-38, %v1206
        %v1208 = vsel %vm1205, %v1207, %v1203
        %v1209 = vmul.f32 1.0, %v1208
        %v1210 = vmul.f32 %v523, %v744
        %v1211 = vmul.f32 %v525, %v759
        %v1212 = vmul.f32 %v528, %v774
        %v1213 = vmul.f32 %v530, %v789
        %v1214 = vmul.f32 %v533, %v804
        %v1215 = vmul.f32 %v535, %v819
        %v1216 = vmul.f32 %v538, %v834
        %v1217 = vmul.f32 %v540, %v849
        %v1218 = vmul.f32 %v543, %v864
        %v1219 = vmul.f32 %v545, %v879
        %v1220 = vmul.f32 %v548, %v894
        %v1221 = vmul.f32 %v550, %v909
        %v1222 = vmul.f32 %v553, %v924
        %v1223 = vmul.f32 %v555, %v939
        %v1224 = vmul.f32 %v558, %v954
        %v1225 = vmul.f32 %v560, %v969
        %v1226 = vmul.f32 %v563, %v984
        %v1227 = vmul.f32 %v565, %v999
        %v1228 = vmul.f32 %v568, %v1014
        %v1229 = vmul.f32 %v570, %v1029
        %v1230 = vmul.f32 %v573, %v1044
        %v1231 = vmul.f32 %v575, %v1059
        %v1232 = vmul.f32 %v578, %v1074
        %v1233 = vmul.f32 %v580, %v1089
        %v1234 = vmul.f32 %v583, %v1104
        %v1235 = vmul.f32 %v585, %v1119
        %v1236 = vmul.f32 %v588, %v1134
        %v1237 = vmul.f32 %v590, %v1149
        %v1238 = vmul.f32 %v593, %v1164
        %v1239 = vmul.f32 %v595, %v1179
        %v1240 = vmul.f32 %v598, %v1194
        %v1241 = vmul.f32 %v600, %v1209
        %vm1242 = vcmask 519168
        %1243 = vst.msk [vmem:[#allocation2] sm:$0xf] %vm1242, 0
        %1244 = vst.msk [vmem:[#allocation2 + $0x10] sm:$0xf] %vm1242, 0
        %1245 = vst.msk [vmem:[#allocation2 + $0x20] sm:$0xf] %vm1242, 0
        %1246 = vst.msk [vmem:[#allocation2 + $0x30] sm:$0xf] %vm1242, 0
        %1247 = vst.msk [vmem:[#allocation2 + $0x40] sm:$0xf] %vm1242, 0
        %1248 = vst.msk [vmem:[#allocation2 + $0x50] sm:$0xf] %vm1242, 0
        %1249 = vst.msk [vmem:[#allocation2 + $0x60] sm:$0xf] %vm1242, 0
        %1250 = vst.msk [vmem:[#allocation2 + $0x70] sm:$0xf] %vm1242, 0
        %1251 = vst.msk [vmem:[#allocation2 + $0x80] sm:$0xf] %vm1242, 0
        %1252 = vst.msk [vmem:[#allocation2 + $0x90] sm:$0xf] %vm1242, 0
        %1253 = vst.msk [vmem:[#allocation2 + $0xa0] sm:$0xf] %vm1242, 0
        %1254 = vst.msk [vmem:[#allocation2 + $0xb0] sm:$0xf] %vm1242, 0
        %1255 = vst.msk [vmem:[#allocation2 + $0xc0] sm:$0xf] %vm1242, 0
        %1256 = vst.msk [vmem:[#allocation2 + $0xd0] sm:$0xf] %vm1242, 0
        %1257 = vst.msk [vmem:[#allocation2 + $0xe0] sm:$0xf] %vm1242, 0
        %1258 = vst.msk [vmem:[#allocation2 + $0xf0] sm:$0xf] %vm1242, 0
        %1259 = vst.msk [vmem:[#allocation2 + $0x100] sm:$0xf] %vm1242, 0
        %1260 = vst.msk [vmem:[#allocation2 + $0x110] sm:$0xf] %vm1242, 0
        %1261 = vst.msk [vmem:[#allocation2 + $0xc] sm:$0xf] %vm1242, 0
        %1262 = vst.msk [vmem:[#allocation2 + $0x1c] sm:$0xf] %vm1242, 0
        %1263 = vst.msk [vmem:[#allocation2 + $0x2c] sm:$0xf] %vm1242, 0
        %1264 = vst.msk [vmem:[#allocation2 + $0x3c] sm:$0xf] %vm1242, 0
        %1265 = vst.msk [vmem:[#allocation2 + $0x4c] sm:$0xf] %vm1242, 0
        %1266 = vst.msk [vmem:[#allocation2 + $0x5c] sm:$0xf] %vm1242, 0
        %1267 = vst.msk [vmem:[#allocation2 + $0x6c] sm:$0xf] %vm1242, 0
        %1268 = vst.msk [vmem:[#allocation2 + $0x7c] sm:$0xf] %vm1242, 0
        %1269 = vst.msk [vmem:[#allocation2 + $0x8c] sm:$0xf] %vm1242, 0
        %1270 = vst.msk [vmem:[#allocation2 + $0x9c] sm:$0xf] %vm1242, 0
        %1271 = vst.msk [vmem:[#allocation2 + $0xac] sm:$0xf] %vm1242, 0
        %1272 = vst.msk [vmem:[#allocation2 + $0xbc] sm:$0xf] %vm1242, 0
        %1273 = vst.msk [vmem:[#allocation2 + $0xcc] sm:$0xf] %vm1242, 0
        %1274 = vst.msk [vmem:[#allocation2 + $0xdc] sm:$0xf] %vm1242, 0
        %1275 = vst.msk [vmem:[#allocation2 + $0xec] sm:$0xf] %vm1242, 0
        %1276 = vst.msk [vmem:[#allocation2 + $0xfc] sm:$0xf] %vm1242, 0
        %1277 = vst.msk [vmem:[#allocation2 + $0x10c] sm:$0xf] %vm1242, 0
        %1278 = vst.msk [vmem:[#allocation2 + $0x11c] sm:$0xf] %vm1242, 0
        %1279 = vst.msk [vmem:[#allocation2 + $0x4] sm:$0xf] %vm1242, 0
        %1280 = vst.msk [vmem:[#allocation2 + $0x8] sm:$0xf] %vm1242, 0
        %s1281 = scalar_lea.vmem [#allocation2], 272
        %1282 = vst.msk [vmem:[%s1281 + $0x4] sm:$0xf] %vm1242, 0
        %1283 = vst.msk [vmem:[%s1281 + $0x8] sm:$0xf] %vm1242, 0
        %v1284 = vpack.c.bf16 %v1210, %v1210
        %v1285 = vpack.c.bf16 %v1211, %v1211
        %v1286 = vpack.c.bf16 %v1212, %v1212
        %v1287 = vpack.c.bf16 %v1213, %v1213
        %v1288 = vpack.c.bf16 %v1214, %v1214
        %v1289 = vpack.c.bf16 %v1215, %v1215
        %v1290 = vpack.c.bf16 %v1216, %v1216
        %v1291 = vpack.c.bf16 %v1217, %v1217
        %v1292 = vpack.c.bf16 %v1218, %v1218
        %v1293 = vpack.c.bf16 %v1219, %v1219
        %v1294 = vpack.c.bf16 %v1220, %v1220
        %v1295 = vpack.c.bf16 %v1221, %v1221
        %v1296 = vpack.c.bf16 %v1222, %v1222
        %v1297 = vpack.c.bf16 %v1223, %v1223
        %v1298 = vpack.c.bf16 %v1224, %v1224
        %v1299 = vpack.c.bf16 %v1225, %v1225
        %v1300 = vpack.c.bf16 %v1226, %v1226
        %v1301 = vpack.c.bf16 %v1227, %v1227
        %v1302 = vpack.c.bf16 %v1228, %v1228
        %v1303 = vpack.c.bf16 %v1229, %v1229
        %v1304 = vpack.c.bf16 %v1230, %v1230
        %v1305 = vpack.c.bf16 %v1231, %v1231
        %v1306 = vpack.c.bf16 %v1232, %v1232
        %v1307 = vpack.c.bf16 %v1233, %v1233
        %v1308 = vpack.c.bf16 %v1234, %v1234
        %v1309 = vpack.c.bf16 %v1235, %v1235
        %v1310 = vpack.c.bf16 %v1236, %v1236
        %v1311 = vpack.c.bf16 %v1237, %v1237
        %v1312 = vpack.c.bf16 %v1238, %v1238
        %v1313 = vpack.c.bf16 %v1239, %v1239
        %v1314 = vpack.c.bf16 %v1240, %v1240
        %v1315 = vpack.c.bf16 %v1241, %v1241
        %s1316 = scalar_lea.vmem [#allocation2], 16
        %1317 = vst.msk [vmem:[%s1316 + $0x4] sm:$0xf] %vm1242, %v1284
        %1318 = vst.msk [vmem:[%s1316 + $0x8] sm:$0xf] %vm1242, %v1285
        %1319 = vst.msk [vmem:[%s1316 + $0x14] sm:$0xf] %vm1242, %v1286
        %1320 = vst.msk [vmem:[%s1316 + $0x18] sm:$0xf] %vm1242, %v1287
        %1321 = vst.msk [vmem:[%s1316 + $0x24] sm:$0xf] %vm1242, %v1288
        %1322 = vst.msk [vmem:[%s1316 + $0x28] sm:$0xf] %vm1242, %v1289
        %1323 = vst.msk [vmem:[%s1316 + $0x34] sm:$0xf] %vm1242, %v1290
        %1324 = vst.msk [vmem:[%s1316 + $0x38] sm:$0xf] %vm1242, %v1291
        %1325 = vst.msk [vmem:[%s1316 + $0x44] sm:$0xf] %vm1242, %v1292
        %1326 = vst.msk [vmem:[%s1316 + $0x48] sm:$0xf] %vm1242, %v1293
        %1327 = vst.msk [vmem:[%s1316 + $0x54] sm:$0xf] %vm1242, %v1294
        %1328 = vst.msk [vmem:[%s1316 + $0x58] sm:$0xf] %vm1242, %v1295
        %1329 = vst.msk [vmem:[%s1316 + $0x64] sm:$0xf] %vm1242, %v1296
        %1330 = vst.msk [vmem:[%s1316 + $0x68] sm:$0xf] %vm1242, %v1297
        %1331 = vst.msk [vmem:[%s1316 + $0x74] sm:$0xf] %vm1242, %v1298
        %1332 = vst.msk [vmem:[%s1316 + $0x78] sm:$0xf] %vm1242, %v1299
        %1333 = vst.msk [vmem:[%s1316 + $0x84] sm:$0xf] %vm1242, %v1300
        %1334 = vst.msk [vmem:[%s1316 + $0x88] sm:$0xf] %vm1242, %v1301
        %1335 = vst.msk [vmem:[%s1316 + $0x94] sm:$0xf] %vm1242, %v1302
        %1336 = vst.msk [vmem:[%s1316 + $0x98] sm:$0xf] %vm1242, %v1303
        %1337 = vst.msk [vmem:[%s1316 + $0xa4] sm:$0xf] %vm1242, %v1304
        %1338 = vst.msk [vmem:[%s1316 + $0xa8] sm:$0xf] %vm1242, %v1305
        %1339 = vst.msk [vmem:[%s1316 + $0xb4] sm:$0xf] %vm1242, %v1306
        %1340 = vst.msk [vmem:[%s1316 + $0xb8] sm:$0xf] %vm1242, %v1307
        %1341 = vst.msk [vmem:[%s1316 + $0xc4] sm:$0xf] %vm1242, %v1308
        %1342 = vst.msk [vmem:[%s1316 + $0xc8] sm:$0xf] %vm1242, %v1309
        %1343 = vst.msk [vmem:[%s1316 + $0xd4] sm:$0xf] %vm1242, %v1310
        %1344 = vst.msk [vmem:[%s1316 + $0xd8] sm:$0xf] %vm1242, %v1311
        %1345 = vst.msk [vmem:[%s1316 + $0xe4] sm:$0xf] %vm1242, %v1312
        %1346 = vst.msk [vmem:[%s1316 + $0xe8] sm:$0xf] %vm1242, %v1313
        %1347 = vst.msk [vmem:[%s1316 + $0xf4] sm:$0xf] %vm1242, %v1314
        %1348 = vst.msk [vmem:[%s1316 + $0xf8] sm:$0xf] %vm1242, %v1315
        %v1349 = vld [vmem:[#allocation2] sm:$0x8]
        %v1350 = vld [vmem:[#allocation2 + $0x4] sm:$0xf]
        %v1351 = vld [vmem:[#allocation2 + $0x8] sm:$0xf]
        %v1352 = vld [vmem:[#allocation2 + $0x10] sm:$0x8]
        %v1353 = vld [vmem:[#allocation2 + $0x14] sm:$0xf]
        %v1354 = vld [vmem:[#allocation2 + $0x18] sm:$0xf]
        %v1355 = vld [vmem:[#allocation2 + $0x20] sm:$0x8]
        %v1356 = vld [vmem:[#allocation2 + $0x24] sm:$0xf]
        %v1357 = vld [vmem:[#allocation2 + $0x28] sm:$0xf]
        %v1358 = vld [vmem:[#allocation2 + $0x30] sm:$0x8]
        %v1359 = vld [vmem:[#allocation2 + $0x34] sm:$0xf]
        %v1360 = vld [vmem:[#allocation2 + $0x38] sm:$0xf]
        %v1361 = vld [vmem:[#allocation2 + $0x40] sm:$0x8]
        %v1362 = vld [vmem:[#allocation2 + $0x44] sm:$0xf]
        %v1363 = vld [vmem:[#allocation2 + $0x48] sm:$0xf]
        %v1364 = vld [vmem:[#allocation2 + $0x50] sm:$0x8]
        %v1365 = vld [vmem:[#allocation2 + $0x54] sm:$0xf]
        %v1366 = vld [vmem:[#allocation2 + $0x58] sm:$0xf]
        %v1367 = vld [vmem:[#allocation2 + $0x60] sm:$0x8]
        %v1368 = vld [vmem:[#allocation2 + $0x64] sm:$0xf]
        %v1369 = vld [vmem:[#allocation2 + $0x68] sm:$0xf]
        %v1370 = vld [vmem:[#allocation2 + $0x70] sm:$0x8]
        %v1371 = vld [vmem:[#allocation2 + $0x74] sm:$0xf]
        %v1372 = vld [vmem:[#allocation2 + $0x78] sm:$0xf]
        %v1373 = vld [vmem:[#allocation2 + $0x80] sm:$0x8]
        %v1374 = vld [vmem:[#allocation2 + $0x84] sm:$0xf]
        %v1375 = vld [vmem:[#allocation2 + $0x88] sm:$0xf]
        %v1376 = vld [vmem:[#allocation2 + $0x90] sm:$0x8]
        %v1377 = vld [vmem:[#allocation2 + $0x94] sm:$0xf]
        %v1378 = vld [vmem:[#allocation2 + $0x98] sm:$0xf]
        %v1379 = vld [vmem:[#allocation2 + $0xa0] sm:$0x8]
        %v1380 = vld [vmem:[#allocation2 + $0xa4] sm:$0xf]
        %v1381 = vld [vmem:[#allocation2 + $0xa8] sm:$0xf]
        %v1382 = vld [vmem:[#allocation2 + $0xb0] sm:$0x8]
        %v1383 = vld [vmem:[#allocation2 + $0xb4] sm:$0xf]
        %v1384 = vld [vmem:[#allocation2 + $0xb8] sm:$0xf]
        %v1385 = vld [vmem:[#allocation2 + $0xc0] sm:$0x8]
        %v1386 = vld [vmem:[#allocation2 + $0xc4] sm:$0xf]
        %v1387 = vld [vmem:[#allocation2 + $0xc8] sm:$0xf]
        %v1388 = vld [vmem:[#allocation2 + $0xd0] sm:$0x8]
        %v1389 = vld [vmem:[#allocation2 + $0xd4] sm:$0xf]
        %v1390 = vld [vmem:[#allocation2 + $0xd8] sm:$0xf]
        %v1391 = vld [vmem:[#allocation2 + $0xe0] sm:$0x8]
        %v1392 = vld [vmem:[#allocation2 + $0xe4] sm:$0xf]
        %v1393 = vld [vmem:[#allocation2 + $0xe8] sm:$0xf]
        %v1394 = vld [vmem:[#allocation2 + $0xf0] sm:$0x8]
        %v1395 = vld [vmem:[#allocation2 + $0xf4] sm:$0xf]
        %v1396 = vld [vmem:[#allocation2 + $0xf8] sm:$0xf]
        %vm1397 = vsmask.f32 256
        %vm1398 = vsmask.f32 4368
        %vm1399 = vmor %vm1397, %vm1398
        %v1401 = vshrl.u32 %v1349, 16
        %v1403 = vrot.slane %v1401, 7
        %v1404 = vrot.slane %v1403, 4
        %v1406 = vshrl.u32 %v1350, 16
        %v1408 = vrot.slane %v1406, 7
        %v1409 = vshll.u32 %v1350, 16
        %v1411 = vor.u32 %v1408, %v1409
        %v1412 = vsel %vm1399, %v1404, %v1411
        %v1413 = vrot.slane %v1408, 4
        %v1415 = vshrl.u32 %v1351, 16
        %v1417 = vrot.slane %v1415, 7
        %v1418 = vshll.u32 %v1351, 16
        %v1420 = vor.u32 %v1417, %v1418
        %v1421 = vsel %vm1399, %v1413, %v1420
        %v1423 = vshrl.u32 %v1352, 16
        %v1425 = vrot.slane %v1423, 7
        %v1426 = vrot.slane %v1425, 4
        %v1428 = vshrl.u32 %v1353, 16
        %v1430 = vrot.slane %v1428, 7
        %v1431 = vshll.u32 %v1353, 16
        %v1433 = vor.u32 %v1430, %v1431
        %v1434 = vsel %vm1399, %v1426, %v1433
        %v1435 = vrot.slane %v1430, 4
        %v1437 = vshrl.u32 %v1354, 16
        %v1439 = vrot.slane %v1437, 7
        %v1440 = vshll.u32 %v1354, 16
        %v1442 = vor.u32 %v1439, %v1440
        %v1443 = vsel %vm1399, %v1435, %v1442
        %v1445 = vshrl.u32 %v1355, 16
        %v1447 = vrot.slane %v1445, 7
        %v1448 = vrot.slane %v1447, 4
        %v1450 = vshrl.u32 %v1356, 16
        %v1452 = vrot.slane %v1450, 7
        %v1453 = vshll.u32 %v1356, 16
        %v1455 = vor.u32 %v1452, %v1453
        %v1456 = vsel %vm1399, %v1448, %v1455
        %v1457 = vrot.slane %v1452, 4
        %v1459 = vshrl.u32 %v1357, 16
        %v1461 = vrot.slane %v1459, 7
        %v1462 = vshll.u32 %v1357, 16
        %v1464 = vor.u32 %v1461, %v1462
        %v1465 = vsel %vm1399, %v1457, %v1464
        %v1467 = vshrl.u32 %v1358, 16
        %v1469 = vrot.slane %v1467, 7
        %v1470 = vrot.slane %v1469, 4
        %v1472 = vshrl.u32 %v1359, 16
        %v1474 = vrot.slane %v1472, 7
        %v1475 = vshll.u32 %v1359, 16
        %v1477 = vor.u32 %v1474, %v1475
        %v1478 = vsel %vm1399, %v1470, %v1477
        %v1479 = vrot.slane %v1474, 4
        %v1481 = vshrl.u32 %v1360, 16
        %v1483 = vrot.slane %v1481, 7
        %v1484 = vshll.u32 %v1360, 16
        %v1486 = vor.u32 %v1483, %v1484
        %v1487 = vsel %vm1399, %v1479, %v1486
        %v1489 = vshrl.u32 %v1361, 16
        %v1491 = vrot.slane %v1489, 7
        %v1492 = vrot.slane %v1491, 4
        %v1494 = vshrl.u32 %v1362, 16
        %v1496 = vrot.slane %v1494, 7
        %v1497 = vshll.u32 %v1362, 16
        %v1499 = vor.u32 %v1496, %v1497
        %v1500 = vsel %vm1399, %v1492, %v1499
        %v1501 = vrot.slane %v1496, 4
        %v1503 = vshrl.u32 %v1363, 16
        %v1505 = vrot.slane %v1503, 7
        %v1506 = vshll.u32 %v1363, 16
        %v1508 = vor.u32 %v1505, %v1506
        %v1509 = vsel %vm1399, %v1501, %v1508
        %v1511 = vshrl.u32 %v1364, 16
        %v1513 = vrot.slane %v1511, 7
        %v1514 = vrot.slane %v1513, 4
        %v1516 = vshrl.u32 %v1365, 16
        %v1518 = vrot.slane %v1516, 7
        %v1519 = vshll.u32 %v1365, 16
        %v1521 = vor.u32 %v1518, %v1519
        %v1522 = vsel %vm1399, %v1514, %v1521
        %v1523 = vrot.slane %v1518, 4
        %v1525 = vshrl.u32 %v1366, 16
        %v1527 = vrot.slane %v1525, 7
        %v1528 = vshll.u32 %v1366, 16
        %v1530 = vor.u32 %v1527, %v1528
        %v1531 = vsel %vm1399, %v1523, %v1530
        %v1533 = vshrl.u32 %v1367, 16
        %v1535 = vrot.slane %v1533, 7
        %v1536 = vrot.slane %v1535, 4
        %v1538 = vshrl.u32 %v1368, 16
        %v1540 = vrot.slane %v1538, 7
        %v1541 = vshll.u32 %v1368, 16
        %v1543 = vor.u32 %v1540, %v1541
        %v1544 = vsel %vm1399, %v1536, %v1543
        %v1545 = vrot.slane %v1540, 4
        %v1547 = vshrl.u32 %v1369, 16
        %v1549 = vrot.slane %v1547, 7
        %v1550 = vshll.u32 %v1369, 16
        %v1552 = vor.u32 %v1549, %v1550
        %v1553 = vsel %vm1399, %v1545, %v1552
        %v1555 = vshrl.u32 %v1370, 16
        %v1557 = vrot.slane %v1555, 7
        %v1558 = vrot.slane %v1557, 4
        %v1560 = vshrl.u32 %v1371, 16
        %v1562 = vrot.slane %v1560, 7
        %v1563 = vshll.u32 %v1371, 16
        %v1565 = vor.u32 %v1562, %v1563
        %v1566 = vsel %vm1399, %v1558, %v1565
        %v1567 = vrot.slane %v1562, 4
        %v1569 = vshrl.u32 %v1372, 16
        %v1571 = vrot.slane %v1569, 7
        %v1572 = vshll.u32 %v1372, 16
        %v1574 = vor.u32 %v1571, %v1572
        %v1575 = vsel %vm1399, %v1567, %v1574
        %v1577 = vshrl.u32 %v1373, 16
        %v1579 = vrot.slane %v1577, 7
        %v1580 = vrot.slane %v1579, 4
        %v1582 = vshrl.u32 %v1374, 16
        %v1584 = vrot.slane %v1582, 7
        %v1585 = vshll.u32 %v1374, 16
        %v1587 = vor.u32 %v1584, %v1585
        %v1588 = vsel %vm1399, %v1580, %v1587
        %v1589 = vrot.slane %v1584, 4
        %v1591 = vshrl.u32 %v1375, 16
        %v1593 = vrot.slane %v1591, 7
        %v1594 = vshll.u32 %v1375, 16
        %v1596 = vor.u32 %v1593, %v1594
        %v1597 = vsel %vm1399, %v1589, %v1596
        %v1599 = vshrl.u32 %v1376, 16
        %v1601 = vrot.slane %v1599, 7
        %v1602 = vrot.slane %v1601, 4
        %v1604 = vshrl.u32 %v1377, 16
        %v1606 = vrot.slane %v1604, 7
        %v1607 = vshll.u32 %v1377, 16
        %v1609 = vor.u32 %v1606, %v1607
        %v1610 = vsel %vm1399, %v1602, %v1609
        %v1611 = vrot.slane %v1606, 4
        %v1613 = vshrl.u32 %v1378, 16
        %v1615 = vrot.slane %v1613, 7
        %v1616 = vshll.u32 %v1378, 16
        %v1618 = vor.u32 %v1615, %v1616
        %v1619 = vsel %vm1399, %v1611, %v1618
        %v1621 = vshrl.u32 %v1379, 16
        %v1623 = vrot.slane %v1621, 7
        %v1624 = vrot.slane %v1623, 4
        %v1626 = vshrl.u32 %v1380, 16
        %v1628 = vrot.slane %v1626, 7
        %v1629 = vshll.u32 %v1380, 16
        %v1631 = vor.u32 %v1628, %v1629
        %v1632 = vsel %vm1399, %v1624, %v1631
        %v1633 = vrot.slane %v1628, 4
        %v1635 = vshrl.u32 %v1381, 16
        %v1637 = vrot.slane %v1635, 7
        %v1638 = vshll.u32 %v1381, 16
        %v1640 = vor.u32 %v1637, %v1638
        %v1641 = vsel %vm1399, %v1633, %v1640
        %v1643 = vshrl.u32 %v1382, 16
        %v1645 = vrot.slane %v1643, 7
        %v1646 = vrot.slane %v1645, 4
        %v1648 = vshrl.u32 %v1383, 16
        %v1650 = vrot.slane %v1648, 7
        %v1651 = vshll.u32 %v1383, 16
        %v1653 = vor.u32 %v1650, %v1651
        %v1654 = vsel %vm1399, %v1646, %v1653
        %v1655 = vrot.slane %v1650, 4
        %v1657 = vshrl.u32 %v1384, 16
        %v1659 = vrot.slane %v1657, 7
        %v1660 = vshll.u32 %v1384, 16
        %v1662 = vor.u32 %v1659, %v1660
        %v1663 = vsel %vm1399, %v1655, %v1662
        %v1665 = vshrl.u32 %v1385, 16
        %v1667 = vrot.slane %v1665, 7
        %v1668 = vrot.slane %v1667, 4
        %v1670 = vshrl.u32 %v1386, 16
        %v1672 = vrot.slane %v1670, 7
        %v1673 = vshll.u32 %v1386, 16
        %v1675 = vor.u32 %v1672, %v1673
        %v1676 = vsel %vm1399, %v1668, %v1675
        %v1677 = vrot.slane %v1672, 4
        %v1679 = vshrl.u32 %v1387, 16
        %v1681 = vrot.slane %v1679, 7
        %v1682 = vshll.u32 %v1387, 16
        %v1684 = vor.u32 %v1681, %v1682
        %v1685 = vsel %vm1399, %v1677, %v1684
        %v1687 = vshrl.u32 %v1388, 16
        %v1689 = vrot.slane %v1687, 7
        %v1690 = vrot.slane %v1689, 4
        %v1692 = vshrl.u32 %v1389, 16
        %v1694 = vrot.slane %v1692, 7
        %v1695 = vshll.u32 %v1389, 16
        %v1697 = vor.u32 %v1694, %v1695
        %v1698 = vsel %vm1399, %v1690, %v1697
        %v1699 = vrot.slane %v1694, 4
        %v1701 = vshrl.u32 %v1390, 16
        %v1703 = vrot.slane %v1701, 7
        %v1704 = vshll.u32 %v1390, 16
        %v1706 = vor.u32 %v1703, %v1704
        %v1707 = vsel %vm1399, %v1699, %v1706
        %v1709 = vshrl.u32 %v1391, 16
        %v1711 = vrot.slane %v1709, 7
        %v1712 = vrot.slane %v1711, 4
        %v1714 = vshrl.u32 %v1392, 16
        %v1716 = vrot.slane %v1714, 7
        %v1717 = vshll.u32 %v1392, 16
        %v1719 = vor.u32 %v1716, %v1717
        %v1720 = vsel %vm1399, %v1712, %v1719
        %v1721 = vrot.slane %v1716, 4
        %v1723 = vshrl.u32 %v1393, 16
        %v1725 = vrot.slane %v1723, 7
        %v1726 = vshll.u32 %v1393, 16
        %v1728 = vor.u32 %v1725, %v1726
        %v1729 = vsel %vm1399, %v1721, %v1728
        %v1731 = vshrl.u32 %v1394, 16
        %v1733 = vrot.slane %v1731, 7
        %v1734 = vrot.slane %v1733, 4
        %v1736 = vshrl.u32 %v1395, 16
        %v1738 = vrot.slane %v1736, 7
        %v1739 = vshll.u32 %v1395, 16
        %v1741 = vor.u32 %v1738, %v1739
        %v1742 = vsel %vm1399, %v1734, %v1741
        %v1743 = vrot.slane %v1738, 4
        %v1745 = vshrl.u32 %v1396, 16
        %v1747 = vrot.slane %v1745, 7
        %v1748 = vshll.u32 %v1396, 16
        %v1750 = vor.u32 %v1747, %v1748
        %v1751 = vsel %vm1399, %v1743, %v1750
        %v1752 = vld [vmem:[#allocation6] sm:$0xf]
        %v1753 = vld [vmem:[#allocation6 + $0x4] sm:$0xf]
        %v1754 = vld [vmem:[#allocation6 + $0x8] sm:$0xf]
        %v1755 = vld [vmem:[#allocation6 + $0xc] sm:$0xf]
        %v1756 = vld [vmem:[#allocation6 + $0x10] sm:$0xf]
        %v1757 = vld [vmem:[#allocation6 + $0x14] sm:$0xf]
        %v1758 = vld [vmem:[#allocation6 + $0x18] sm:$0xf]
        %v1759 = vld [vmem:[#allocation6 + $0x1c] sm:$0xf]
        %s1760 = scalar_lea.vmem [#allocation6], 32
        %v1761 = vld [vmem:[%s1760] sm:$0xf]
        %v1762 = vld [vmem:[%s1760 + $0x4] sm:$0xf]
        %v1763 = vld [vmem:[%s1760 + $0x8] sm:$0xf]
        %v1764 = vld [vmem:[%s1760 + $0xc] sm:$0xf]
        %v1765 = vld [vmem:[%s1760 + $0x10] sm:$0xf]
        %v1766 = vld [vmem:[%s1760 + $0x14] sm:$0xf]
        %v1767 = vld [vmem:[%s1760 + $0x18] sm:$0xf]
        %v1768 = vld [vmem:[%s1760 + $0x1c] sm:$0xf]
        %v1801 = vunpack.c.l.b16 %v1350
        %v1802 = vunpack.c.l.b16 %v1351
        %v1803 = vunpack.c.l.b16 %v1353
        %v1804 = vunpack.c.l.b16 %v1354
        %v1805 = vunpack.c.l.b16 %v1356
        %v1806 = vunpack.c.l.b16 %v1357
        %v1807 = vunpack.c.l.b16 %v1359
        %v1808 = vunpack.c.l.b16 %v1360
        %v1809 = vunpack.c.l.b16 %v1362
        %v1810 = vunpack.c.l.b16 %v1363
        %v1811 = vunpack.c.l.b16 %v1365
        %v1812 = vunpack.c.l.b16 %v1366
        %v1813 = vunpack.c.l.b16 %v1368
        %v1814 = vunpack.c.l.b16 %v1369
        %v1815 = vunpack.c.l.b16 %v1371
        %v1816 = vunpack.c.l.b16 %v1372
        %v1817 = vunpack.c.l.b16 %v1374
        %v1818 = vunpack.c.l.b16 %v1375
        %v1819 = vunpack.c.l.b16 %v1377
        %v1820 = vunpack.c.l.b16 %v1378
        %v1821 = vunpack.c.l.b16 %v1380
        %v1822 = vunpack.c.l.b16 %v1381
        %v1823 = vunpack.c.l.b16 %v1383
        %v1824 = vunpack.c.l.b16 %v1384
        %v1825 = vunpack.c.l.b16 %v1386
        %v1826 = vunpack.c.l.b16 %v1387
        %v1827 = vunpack.c.l.b16 %v1389
        %v1828 = vunpack.c.l.b16 %v1390
        %v1829 = vunpack.c.l.b16 %v1392
        %v1830 = vunpack.c.l.b16 %v1393
        %v1831 = vunpack.c.l.b16 %v1395
        %v1832 = vunpack.c.l.b16 %v1396
        %v1833 = vpack.c.b16 %v1802, %v1801
        %v1834 = vpack.c.b16 %v1804, %v1803
        %v1835 = vpack.c.b16 %v1806, %v1805
        %v1836 = vpack.c.b16 %v1808, %v1807
        %v1837 = vpack.c.b16 %v1810, %v1809
        %v1838 = vpack.c.b16 %v1812, %v1811
        %v1839 = vpack.c.b16 %v1814, %v1813
        %v1840 = vpack.c.b16 %v1816, %v1815
        %v1841 = vpack.c.b16 %v1818, %v1817
        %v1842 = vpack.c.b16 %v1820, %v1819
        %v1843 = vpack.c.b16 %v1822, %v1821
        %v1844 = vpack.c.b16 %v1824, %v1823
        %v1845 = vpack.c.b16 %v1826, %v1825
        %v1846 = vpack.c.b16 %v1828, %v1827
        %v1847 = vpack.c.b16 %v1830, %v1829
        %v1848 = vpack.c.b16 %v1832, %v1831
        %v1857 = vunpack.c.l.b16 %v1761
        %v1858 = vunpack.c.l.b16 %v1762
        %v1859 = vunpack.c.l.b16 %v1763
        %v1860 = vunpack.c.l.b16 %v1764
        %v1861 = vunpack.c.l.b16 %v1765
        %v1862 = vunpack.c.l.b16 %v1766
        %v1863 = vunpack.c.l.b16 %v1767
        %v1864 = vunpack.c.l.b16 %v1768
        %v1865 = vpack.c.b16 %v1858, %v1857
        %v1866 = vpack.c.b16 %v1860, %v1859
        %v1867 = vpack.c.b16 %v1862, %v1861
        %v1868 = vpack.c.b16 %v1864, %v1863
        %vm1873 = vcmask 523264
        %v1875 = vsel %vm1873, %v1833, 0
        %v1878 = vsel %vm1873, %v1834, 0
        %v1881 = vsel %vm1873, %v1835, 0
        %v1884 = vsel %vm1873, %v1836, 0
        %v1887 = vsel %vm1873, %v1837, 0
        %v1890 = vsel %vm1873, %v1838, 0
        %v1893 = vsel %vm1873, %v1839, 0
        %v1896 = vsel %vm1873, %v1840, 0
        %v1899 = vsel %vm1873, %v1841, 0
        %v1902 = vsel %vm1873, %v1842, 0
        %v1905 = vsel %vm1873, %v1843, 0
        %v1908 = vsel %vm1873, %v1844, 0
        %v1911 = vsel %vm1873, %v1845, 0
        %v1914 = vsel %vm1873, %v1846, 0
        %v1917 = vsel %vm1873, %v1847, 0
        %v1920 = vsel %vm1873, %v1848, 0
        %1922 = vmatpush.bf16.msra.mxu0 0
        %1923 = vmatpush.bf16.msra.mxu0 0
        %1924 = vmatpush.bf16.msra.mxu0 0
        %1925 = vmatpush.bf16.msra.mxu0 0
        %1926 = vmatpush.bf16.msra.mxu0 %v1868
        %1927 = vmatpush.bf16.msra.mxu0 %v1867
        %1928 = vmatpush.bf16.msra.mxu0 %v1866
        %1929 = vmatpush.bf16.msra.mxu0 %v1865
        %1930 = vmatmul.bf16.gmra.mxu0 %v1875
        %v1931 = vpop.f32.mrf.mxu0
        %v1932 = vadd.f32 0.0, %v1931
        %v1933 = vpop.f32.mrf.mxu0
        %v1934 = vadd.f32 0.0, %v1933
        %1935 = vmatmul.bf16.gmra.mxu0 %v1878
        %v1936 = vpop.f32.mrf.mxu0
        %v1937 = vadd.f32 0.0, %v1936
        %v1938 = vpop.f32.mrf.mxu0
        %v1939 = vadd.f32 0.0, %v1938
        %1940 = vmatmul.bf16.gmra.mxu0 %v1881
        %v1941 = vpop.f32.mrf.mxu0
        %v1942 = vadd.f32 0.0, %v1941
        %v1943 = vpop.f32.mrf.mxu0
        %v1944 = vadd.f32 0.0, %v1943
        %1945 = vmatmul.bf16.gmra.mxu0 %v1884
        %v1946 = vpop.f32.mrf.mxu0
        %v1947 = vadd.f32 0.0, %v1946
        %v1948 = vpop.f32.mrf.mxu0
        %v1949 = vadd.f32 0.0, %v1948
        %1950 = vmatmul.bf16.gmra.mxu0 %v1887
        %v1951 = vpop.f32.mrf.mxu0
        %v1952 = vadd.f32 0.0, %v1951
        %v1953 = vpop.f32.mrf.mxu0
        %v1954 = vadd.f32 0.0, %v1953
        %1955 = vmatmul.bf16.gmra.mxu0 %v1890
        %v1956 = vpop.f32.mrf.mxu0
        %v1957 = vadd.f32 0.0, %v1956
        %v1958 = vpop.f32.mrf.mxu0
        %v1959 = vadd.f32 0.0, %v1958
        %1960 = vmatmul.bf16.gmra.mxu0 %v1893
        %v1961 = vpop.f32.mrf.mxu0
        %v1962 = vadd.f32 0.0, %v1961
        %v1963 = vpop.f32.mrf.mxu0
        %v1964 = vadd.f32 0.0, %v1963
        %1965 = vmatmul.bf16.gmra.mxu0 %v1896
        %v1966 = vpop.f32.mrf.mxu0
        %v1967 = vadd.f32 0.0, %v1966
        %v1968 = vpop.f32.mrf.mxu0
        %v1969 = vadd.f32 0.0, %v1968
        %1970 = vmatmul.bf16.gmra.mxu0 %v1899
        %v1971 = vpop.f32.mrf.mxu0
        %v1972 = vadd.f32 0.0, %v1971
        %v1973 = vpop.f32.mrf.mxu0
        %v1974 = vadd.f32 0.0, %v1973
        %1975 = vmatmul.bf16.gmra.mxu0 %v1902
        %v1976 = vpop.f32.mrf.mxu0
        %v1977 = vadd.f32 0.0, %v1976
        %v1978 = vpop.f32.mrf.mxu0
        %v1979 = vadd.f32 0.0, %v1978
        %1980 = vmatmul.bf16.gmra.mxu0 %v1905
        %v1981 = vpop.f32.mrf.mxu0
        %v1982 = vadd.f32 0.0, %v1981
        %v1983 = vpop.f32.mrf.mxu0
        %v1984 = vadd.f32 0.0, %v1983
        %1985 = vmatmul.bf16.gmra.mxu0 %v1908
        %v1986 = vpop.f32.mrf.mxu0
        %v1987 = vadd.f32 0.0, %v1986
        %v1988 = vpop.f32.mrf.mxu0
        %v1989 = vadd.f32 0.0, %v1988
        %1990 = vmatmul.bf16.gmra.mxu0 %v1911
        %v1991 = vpop.f32.mrf.mxu0
        %v1992 = vadd.f32 0.0, %v1991
        %v1993 = vpop.f32.mrf.mxu0
        %v1994 = vadd.f32 0.0, %v1993
        %1995 = vmatmul.bf16.gmra.mxu0 %v1914
        %v1996 = vpop.f32.mrf.mxu0
        %v1997 = vadd.f32 0.0, %v1996
        %v1998 = vpop.f32.mrf.mxu0
        %v1999 = vadd.f32 0.0, %v1998
        %2000 = vmatmul.bf16.gmra.mxu0 %v1917
        %v2001 = vpop.f32.mrf.mxu0
        %v2002 = vadd.f32 0.0, %v2001
        %v2003 = vpop.f32.mrf.mxu0
        %v2004 = vadd.f32 0.0, %v2003
        %2005 = vmatmul.bf16.gmra.mxu0 %v1920
        %v2006 = vpop.f32.mrf.mxu0
        %v2007 = vadd.f32 0.0, %v2006
        %v2008 = vpop.f32.mrf.mxu0
        %v2009 = vadd.f32 0.0, %v2008
        %2010 = vdwg.mxu0
        %v2011 = vunpack.c.l.b16 %v1412
        %v2012 = vunpack.c.l.b16 %v1421
        %v2013 = vunpack.c.l.b16 %v1434
        %v2014 = vunpack.c.l.b16 %v1443
        %v2015 = vunpack.c.l.b16 %v1456
        %v2016 = vunpack.c.l.b16 %v1465
        %v2017 = vunpack.c.l.b16 %v1478
        %v2018 = vunpack.c.l.b16 %v1487
        %v2019 = vunpack.c.l.b16 %v1500
        %v2020 = vunpack.c.l.b16 %v1509
        %v2021 = vunpack.c.l.b16 %v1522
        %v2022 = vunpack.c.l.b16 %v1531
        %v2023 = vunpack.c.l.b16 %v1544
        %v2024 = vunpack.c.l.b16 %v1553
        %v2025 = vunpack.c.l.b16 %v1566
        %v2026 = vunpack.c.l.b16 %v1575
        %v2027 = vunpack.c.l.b16 %v1588
        %v2028 = vunpack.c.l.b16 %v1597
        %v2029 = vunpack.c.l.b16 %v1610
        %v2030 = vunpack.c.l.b16 %v1619
        %v2031 = vunpack.c.l.b16 %v1632
        %v2032 = vunpack.c.l.b16 %v1641
        %v2033 = vunpack.c.l.b16 %v1654
        %v2034 = vunpack.c.l.b16 %v1663
        %v2035 = vunpack.c.l.b16 %v1676
        %v2036 = vunpack.c.l.b16 %v1685
        %v2037 = vunpack.c.l.b16 %v1698
        %v2038 = vunpack.c.l.b16 %v1707
        %v2039 = vunpack.c.l.b16 %v1720
        %v2040 = vunpack.c.l.b16 %v1729
        %v2041 = vunpack.c.l.b16 %v1742
        %v2042 = vunpack.c.l.b16 %v1751
        %v2043 = vpack.c.b16 %v2012, %v2011
        %v2044 = vpack.c.b16 %v2014, %v2013
        %v2045 = vpack.c.b16 %v2016, %v2015
        %v2046 = vpack.c.b16 %v2018, %v2017
        %v2047 = vpack.c.b16 %v2020, %v2019
        %v2048 = vpack.c.b16 %v2022, %v2021
        %v2049 = vpack.c.b16 %v2024, %v2023
        %v2050 = vpack.c.b16 %v2026, %v2025
        %v2051 = vpack.c.b16 %v2028, %v2027
        %v2052 = vpack.c.b16 %v2030, %v2029
        %v2053 = vpack.c.b16 %v2032, %v2031
        %v2054 = vpack.c.b16 %v2034, %v2033
        %v2055 = vpack.c.b16 %v2036, %v2035
        %v2056 = vpack.c.b16 %v2038, %v2037
        %v2057 = vpack.c.b16 %v2040, %v2039
        %v2058 = vpack.c.b16 %v2042, %v2041
        %v2067 = vunpack.c.l.b16 %v1752
        %v2068 = vunpack.c.l.b16 %v1753
        %v2069 = vunpack.c.l.b16 %v1754
        %v2070 = vunpack.c.l.b16 %v1755
        %v2071 = vunpack.c.l.b16 %v1756
        %v2072 = vunpack.c.l.b16 %v1757
        %v2073 = vunpack.c.l.b16 %v1758
        %v2074 = vunpack.c.l.b16 %v1759
        %v2075 = vpack.c.b16 %v2068, %v2067
        %v2076 = vpack.c.b16 %v2070, %v2069
        %v2077 = vpack.c.b16 %v2072, %v2071
        %v2078 = vpack.c.b16 %v2074, %v2073
        %v2084 = vsel %vm1873, %v2043, 0
        %v2087 = vsel %vm1873, %v2044, 0
        %v2090 = vsel %vm1873, %v2045, 0
        %v2093 = vsel %vm1873, %v2046, 0
        %v2096 = vsel %vm1873, %v2047, 0
        %v2099 = vsel %vm1873, %v2048, 0
        %v2102 = vsel %vm1873, %v2049, 0
        %v2105 = vsel %vm1873, %v2050, 0
        %v2108 = vsel %vm1873, %v2051, 0
        %v2111 = vsel %vm1873, %v2052, 0
        %v2114 = vsel %vm1873, %v2053, 0
        %v2117 = vsel %vm1873, %v2054, 0
        %v2120 = vsel %vm1873, %v2055, 0
        %v2123 = vsel %vm1873, %v2056, 0
        %v2126 = vsel %vm1873, %v2057, 0
        %v2129 = vsel %vm1873, %v2058, 0
        %2131 = vmatpush.bf16.msra.mxu0 0
        %2132 = vmatpush.bf16.msra.mxu0 0
        %2133 = vmatpush.bf16.msra.mxu0 0
        %2134 = vmatpush.bf16.msra.mxu0 0
        %2135 = vmatpush.bf16.msra.mxu0 %v2078
        %2136 = vmatpush.bf16.msra.mxu0 %v2077
        %2137 = vmatpush.bf16.msra.mxu0 %v2076
        %2138 = vmatpush.bf16.msra.mxu0 %v2075
        %2139 = vmatmul.bf16.gmra.mxu0 %v2084
        %v2140 = vpop.f32.mrf.mxu0
        %v2141 = vadd.f32 %v1932, %v2140
        %v2142 = vpop.f32.mrf.mxu0
        %v2143 = vadd.f32 %v1934, %v2142
        %2144 = vmatmul.bf16.gmra.mxu0 %v2087
        %v2145 = vpop.f32.mrf.mxu0
        %v2146 = vadd.f32 %v1937, %v2145
        %v2147 = vpop.f32.mrf.mxu0
        %v2148 = vadd.f32 %v1939, %v2147
        %2149 = vmatmul.bf16.gmra.mxu0 %v2090
        %v2150 = vpop.f32.mrf.mxu0
        %v2151 = vadd.f32 %v1942, %v2150
        %v2152 = vpop.f32.mrf.mxu0
        %v2153 = vadd.f32 %v1944, %v2152
        %2154 = vmatmul.bf16.gmra.mxu0 %v2093
        %v2155 = vpop.f32.mrf.mxu0
        %v2156 = vadd.f32 %v1947, %v2155
        %v2157 = vpop.f32.mrf.mxu0
        %v2158 = vadd.f32 %v1949, %v2157
        %2159 = vmatmul.bf16.gmra.mxu0 %v2096
        %v2160 = vpop.f32.mrf.mxu0
        %v2161 = vadd.f32 %v1952, %v2160
        %v2162 = vpop.f32.mrf.mxu0
        %v2163 = vadd.f32 %v1954, %v2162
        %2164 = vmatmul.bf16.gmra.mxu0 %v2099
        %v2165 = vpop.f32.mrf.mxu0
        %v2166 = vadd.f32 %v1957, %v2165
        %v2167 = vpop.f32.mrf.mxu0
        %v2168 = vadd.f32 %v1959, %v2167
        %2169 = vmatmul.bf16.gmra.mxu0 %v2102
        %v2170 = vpop.f32.mrf.mxu0
        %v2171 = vadd.f32 %v1962, %v2170
        %v2172 = vpop.f32.mrf.mxu0
        %v2173 = vadd.f32 %v1964, %v2172
        %2174 = vmatmul.bf16.gmra.mxu0 %v2105
        %v2175 = vpop.f32.mrf.mxu0
        %v2176 = vadd.f32 %v1967, %v2175
        %v2177 = vpop.f32.mrf.mxu0
        %v2178 = vadd.f32 %v1969, %v2177
        %2179 = vmatmul.bf16.gmra.mxu0 %v2108
        %v2180 = vpop.f32.mrf.mxu0
        %v2181 = vadd.f32 %v1972, %v2180
        %v2182 = vpop.f32.mrf.mxu0
        %v2183 = vadd.f32 %v1974, %v2182
        %2184 = vmatmul.bf16.gmra.mxu0 %v2111
        %v2185 = vpop.f32.mrf.mxu0
        %v2186 = vadd.f32 %v1977, %v2185
        %v2187 = vpop.f32.mrf.mxu0
        %v2188 = vadd.f32 %v1979, %v2187
        %2189 = vmatmul.bf16.gmra.mxu0 %v2114
        %v2190 = vpop.f32.mrf.mxu0
        %v2191 = vadd.f32 %v1982, %v2190
        %v2192 = vpop.f32.mrf.mxu0
        %v2193 = vadd.f32 %v1984, %v2192
        %2194 = vmatmul.bf16.gmra.mxu0 %v2117
        %v2195 = vpop.f32.mrf.mxu0
        %v2196 = vadd.f32 %v1987, %v2195
        %v2197 = vpop.f32.mrf.mxu0
        %v2198 = vadd.f32 %v1989, %v2197
        %2199 = vmatmul.bf16.gmra.mxu0 %v2120
        %v2200 = vpop.f32.mrf.mxu0
        %v2201 = vadd.f32 %v1992, %v2200
        %v2202 = vpop.f32.mrf.mxu0
        %v2203 = vadd.f32 %v1994, %v2202
        %2204 = vmatmul.bf16.gmra.mxu0 %v2123
        %v2205 = vpop.f32.mrf.mxu0
        %v2206 = vadd.f32 %v1997, %v2205
        %v2207 = vpop.f32.mrf.mxu0
        %v2208 = vadd.f32 %v1999, %v2207
        %2209 = vmatmul.bf16.gmra.mxu0 %v2126
        %v2210 = vpop.f32.mrf.mxu0
        %v2211 = vadd.f32 %v2002, %v2210
        %v2212 = vpop.f32.mrf.mxu0
        %v2213 = vadd.f32 %v2004, %v2212
        %2214 = vmatmul.bf16.gmra.mxu0 %v2129
        %v2215 = vpop.f32.mrf.mxu0
        %v2216 = vadd.f32 %v2007, %v2215
        %v2217 = vpop.f32.mrf.mxu0
        %v2218 = vadd.f32 %v2009, %v2217
        %2219 = vdwg.mxu0
        %v2220 = vld [vmem:[#allocation2 + $0x4] sm:$0xf]
        %v2221 = vld [vmem:[#allocation2 + $0x8] sm:$0xf]
        %v2222 = vld [vmem:[#allocation2 + $0xc] sm:$0x1]
        %v2223 = vld [vmem:[#allocation2 + $0x14] sm:$0xf]
        %v2224 = vld [vmem:[#allocation2 + $0x18] sm:$0xf]
        %v2225 = vld [vmem:[#allocation2 + $0x1c] sm:$0x1]
        %v2226 = vld [vmem:[#allocation2 + $0x24] sm:$0xf]
        %v2227 = vld [vmem:[#allocation2 + $0x28] sm:$0xf]
        %v2228 = vld [vmem:[#allocation2 + $0x2c] sm:$0x1]
        %v2229 = vld [vmem:[#allocation2 + $0x34] sm:$0xf]
        %v2230 = vld [vmem:[#allocation2 + $0x38] sm:$0xf]
        %v2231 = vld [vmem:[#allocation2 + $0x3c] sm:$0x1]
        %v2232 = vld [vmem:[#allocation2 + $0x44] sm:$0xf]
        %v2233 = vld [vmem:[#allocation2 + $0x48] sm:$0xf]
        %v2234 = vld [vmem:[#allocation2 + $0x4c] sm:$0x1]
        %v2235 = vld [vmem:[#allocation2 + $0x54] sm:$0xf]
        %v2236 = vld [vmem:[#allocation2 + $0x58] sm:$0xf]
        %v2237 = vld [vmem:[#allocation2 + $0x5c] sm:$0x1]
        %v2238 = vld [vmem:[#allocation2 + $0x64] sm:$0xf]
        %v2239 = vld [vmem:[#allocation2 + $0x68] sm:$0xf]
        %v2240 = vld [vmem:[#allocation2 + $0x6c] sm:$0x1]
        %v2241 = vld [vmem:[#allocation2 + $0x74] sm:$0xf]
        %v2242 = vld [vmem:[#allocation2 + $0x78] sm:$0xf]
        %v2243 = vld [vmem:[#allocation2 + $0x7c] sm:$0x1]
        %v2244 = vld [vmem:[#allocation2 + $0x84] sm:$0xf]
        %v2245 = vld [vmem:[#allocation2 + $0x88] sm:$0xf]
        %v2246 = vld [vmem:[#allocation2 + $0x8c] sm:$0x1]
        %v2247 = vld [vmem:[#allocation2 + $0x94] sm:$0xf]
        %v2248 = vld [vmem:[#allocation2 + $0x98] sm:$0xf]
        %v2249 = vld [vmem:[#allocation2 + $0x9c] sm:$0x1]
        %v2250 = vld [vmem:[#allocation2 + $0xa4] sm:$0xf]
        %v2251 = vld [vmem:[#allocation2 + $0xa8] sm:$0xf]
        %v2252 = vld [vmem:[#allocation2 + $0xac] sm:$0x1]
        %v2253 = vld [vmem:[#allocation2 + $0xb4] sm:$0xf]
        %v2254 = vld [vmem:[#allocation2 + $0xb8] sm:$0xf]
        %v2255 = vld [vmem:[#allocation2 + $0xbc] sm:$0x1]
        %v2256 = vld [vmem:[#allocation2 + $0xc4] sm:$0xf]
        %v2257 = vld [vmem:[#allocation2 + $0xc8] sm:$0xf]
        %v2258 = vld [vmem:[#allocation2 + $0xcc] sm:$0x1]
        %v2259 = vld [vmem:[#allocation2 + $0xd4] sm:$0xf]
        %v2260 = vld [vmem:[#allocation2 + $0xd8] sm:$0xf]
        %v2261 = vld [vmem:[#allocation2 + $0xdc] sm:$0x1]
        %v2262 = vld [vmem:[#allocation2 + $0xe4] sm:$0xf]
        %v2263 = vld [vmem:[#allocation2 + $0xe8] sm:$0xf]
        %v2264 = vld [vmem:[#allocation2 + $0xec] sm:$0x1]
        %v2265 = vld [vmem:[#allocation2 + $0xf4] sm:$0xf]
        %v2266 = vld [vmem:[#allocation2 + $0xf8] sm:$0xf]
        %v2267 = vld [vmem:[#allocation2 + $0xfc] sm:$0x1]
        %vm2268 = vsmask.f32 3328
        %vm2269 = vsmask.f32 7440
        %vm2270 = vmor %vm2268, %vm2269
        %v2272 = vshrl.u32 %v2220, 16
        %v2274 = vrot.slane %v2272, 4
        %v2275 = vshll.u32 %v2220, 16
        %v2277 = vrot.slane %v2275, 5
        %v2278 = vor.u32 %v2274, %v2277
        %v2279 = vrot.slane %v2278, 4
        %v2281 = vshll.u32 %v2221, 16
        %v2283 = vrot.slane %v2281, 5
        %v2284 = vsel %vm2270, %v2279, %v2283
        %v2285 = vshrl.u32 %v2221, 16
        %v2287 = vrot.slane %v2285, 4
        %v2288 = vor.u32 %v2287, %v2283
        %v2289 = vrot.slane %v2288, 4
        %v2291 = vshll.u32 %v2222, 16
        %v2293 = vrot.slane %v2291, 5
        %v2294 = vsel %vm2270, %v2289, %v2293
        %v2296 = vshrl.u32 %v2223, 16
        %v2298 = vrot.slane %v2296, 4
        %v2299 = vshll.u32 %v2223, 16
        %v2301 = vrot.slane %v2299, 5
        %v2302 = vor.u32 %v2298, %v2301
        %v2303 = vrot.slane %v2302, 4
        %v2305 = vshll.u32 %v2224, 16
        %v2307 = vrot.slane %v2305, 5
        %v2308 = vsel %vm2270, %v2303, %v2307
        %v2309 = vshrl.u32 %v2224, 16
        %v2311 = vrot.slane %v2309, 4
        %v2312 = vor.u32 %v2311, %v2307
        %v2313 = vrot.slane %v2312, 4
        %v2315 = vshll.u32 %v2225, 16
        %v2317 = vrot.slane %v2315, 5
        %v2318 = vsel %vm2270, %v2313, %v2317
        %v2320 = vshrl.u32 %v2226, 16
        %v2322 = vrot.slane %v2320, 4
        %v2323 = vshll.u32 %v2226, 16
        %v2325 = vrot.slane %v2323, 5
        %v2326 = vor.u32 %v2322, %v2325
        %v2327 = vrot.slane %v2326, 4
        %v2329 = vshll.u32 %v2227, 16
        %v2331 = vrot.slane %v2329, 5
        %v2332 = vsel %vm2270, %v2327, %v2331
        %v2333 = vshrl.u32 %v2227, 16
        %v2335 = vrot.slane %v2333, 4
        %v2336 = vor.u32 %v2335, %v2331
        %v2337 = vrot.slane %v2336, 4
        %v2339 = vshll.u32 %v2228, 16
        %v2341 = vrot.slane %v2339, 5
        %v2342 = vsel %vm2270, %v2337, %v2341
        %v2344 = vshrl.u32 %v2229, 16
        %v2346 = vrot.slane %v2344, 4
        %v2347 = vshll.u32 %v2229, 16
        %v2349 = vrot.slane %v2347, 5
        %v2350 = vor.u32 %v2346, %v2349
        %v2351 = vrot.slane %v2350, 4
        %v2353 = vshll.u32 %v2230, 16
        %v2355 = vrot.slane %v2353, 5
        %v2356 = vsel %vm2270, %v2351, %v2355
        %v2357 = vshrl.u32 %v2230, 16
        %v2359 = vrot.slane %v2357, 4
        %v2360 = vor.u32 %v2359, %v2355
        %v2361 = vrot.slane %v2360, 4
        %v2363 = vshll.u32 %v2231, 16
        %v2365 = vrot.slane %v2363, 5
        %v2366 = vsel %vm2270, %v2361, %v2365
        %v2368 = vshrl.u32 %v2232, 16
        %v2370 = vrot.slane %v2368, 4
        %v2371 = vshll.u32 %v2232, 16
        %v2373 = vrot.slane %v2371, 5
        %v2374 = vor.u32 %v2370, %v2373
        %v2375 = vrot.slane %v2374, 4
        %v2377 = vshll.u32 %v2233, 16
        %v2379 = vrot.slane %v2377, 5
        %v2380 = vsel %vm2270, %v2375, %v2379
        %v2381 = vshrl.u32 %v2233, 16
        %v2383 = vrot.slane %v2381, 4
        %v2384 = vor.u32 %v2383, %v2379
        %v2385 = vrot.slane %v2384, 4
        %v2387 = vshll.u32 %v2234, 16
        %v2389 = vrot.slane %v2387, 5
        %v2390 = vsel %vm2270, %v2385, %v2389
        %v2392 = vshrl.u32 %v2235, 16
        %v2394 = vrot.slane %v2392, 4
        %v2395 = vshll.u32 %v2235, 16
        %v2397 = vrot.slane %v2395, 5
        %v2398 = vor.u32 %v2394, %v2397
        %v2399 = vrot.slane %v2398, 4
        %v2401 = vshll.u32 %v2236, 16
        %v2403 = vrot.slane %v2401, 5
        %v2404 = vsel %vm2270, %v2399, %v2403
        %v2405 = vshrl.u32 %v2236, 16
        %v2407 = vrot.slane %v2405, 4
        %v2408 = vor.u32 %v2407, %v2403
        %v2409 = vrot.slane %v2408, 4
        %v2411 = vshll.u32 %v2237, 16
        %v2413 = vrot.slane %v2411, 5
        %v2414 = vsel %vm2270, %v2409, %v2413
        %v2416 = vshrl.u32 %v2238, 16
        %v2418 = vrot.slane %v2416, 4
        %v2419 = vshll.u32 %v2238, 16
        %v2421 = vrot.slane %v2419, 5
        %v2422 = vor.u32 %v2418, %v2421
        %v2423 = vrot.slane %v2422, 4
        %v2425 = vshll.u32 %v2239, 16
        %v2427 = vrot.slane %v2425, 5
        %v2428 = vsel %vm2270, %v2423, %v2427
        %v2429 = vshrl.u32 %v2239, 16
        %v2431 = vrot.slane %v2429, 4
        %v2432 = vor.u32 %v2431, %v2427
        %v2433 = vrot.slane %v2432, 4
        %v2435 = vshll.u32 %v2240, 16
        %v2437 = vrot.slane %v2435, 5
        %v2438 = vsel %vm2270, %v2433, %v2437
        %v2440 = vshrl.u32 %v2241, 16
        %v2442 = vrot.slane %v2440, 4
        %v2443 = vshll.u32 %v2241, 16
        %v2445 = vrot.slane %v2443, 5
        %v2446 = vor.u32 %v2442, %v2445
        %v2447 = vrot.slane %v2446, 4
        %v2449 = vshll.u32 %v2242, 16
        %v2451 = vrot.slane %v2449, 5
        %v2452 = vsel %vm2270, %v2447, %v2451
        %v2453 = vshrl.u32 %v2242, 16
        %v2455 = vrot.slane %v2453, 4
        %v2456 = vor.u32 %v2455, %v2451
        %v2457 = vrot.slane %v2456, 4
        %v2459 = vshll.u32 %v2243, 16
        %v2461 = vrot.slane %v2459, 5
        %v2462 = vsel %vm2270, %v2457, %v2461
        %v2464 = vshrl.u32 %v2244, 16
        %v2466 = vrot.slane %v2464, 4
        %v2467 = vshll.u32 %v2244, 16
        %v2469 = vrot.slane %v2467, 5
        %v2470 = vor.u32 %v2466, %v2469
        %v2471 = vrot.slane %v2470, 4
        %v2473 = vshll.u32 %v2245, 16
        %v2475 = vrot.slane %v2473, 5
        %v2476 = vsel %vm2270, %v2471, %v2475
        %v2477 = vshrl.u32 %v2245, 16
        %v2479 = vrot.slane %v2477, 4
        %v2480 = vor.u32 %v2479, %v2475
        %v2481 = vrot.slane %v2480, 4
        %v2483 = vshll.u32 %v2246, 16
        %v2485 = vrot.slane %v2483, 5
        %v2486 = vsel %vm2270, %v2481, %v2485
        %v2488 = vshrl.u32 %v2247, 16
        %v2490 = vrot.slane %v2488, 4
        %v2491 = vshll.u32 %v2247, 16
        %v2493 = vrot.slane %v2491, 5
        %v2494 = vor.u32 %v2490, %v2493
        %v2495 = vrot.slane %v2494, 4
        %v2497 = vshll.u32 %v2248, 16
        %v2499 = vrot.slane %v2497, 5
        %v2500 = vsel %vm2270, %v2495, %v2499
        %v2501 = vshrl.u32 %v2248, 16
        %v2503 = vrot.slane %v2501, 4
        %v2504 = vor.u32 %v2503, %v2499
        %v2505 = vrot.slane %v2504, 4
        %v2507 = vshll.u32 %v2249, 16
        %v2509 = vrot.slane %v2507, 5
        %v2510 = vsel %vm2270, %v2505, %v2509
        %v2512 = vshrl.u32 %v2250, 16
        %v2514 = vrot.slane %v2512, 4
        %v2515 = vshll.u32 %v2250, 16
        %v2517 = vrot.slane %v2515, 5
        %v2518 = vor.u32 %v2514, %v2517
        %v2519 = vrot.slane %v2518, 4
        %v2521 = vshll.u32 %v2251, 16
        %v2523 = vrot.slane %v2521, 5
        %v2524 = vsel %vm2270, %v2519, %v2523
        %v2525 = vshrl.u32 %v2251, 16
        %v2527 = vrot.slane %v2525, 4
        %v2528 = vor.u32 %v2527, %v2523
        %v2529 = vrot.slane %v2528, 4
        %v2531 = vshll.u32 %v2252, 16
        %v2533 = vrot.slane %v2531, 5
        %v2534 = vsel %vm2270, %v2529, %v2533
        %v2536 = vshrl.u32 %v2253, 16
        %v2538 = vrot.slane %v2536, 4
        %v2539 = vshll.u32 %v2253, 16
        %v2541 = vrot.slane %v2539, 5
        %v2542 = vor.u32 %v2538, %v2541
        %v2543 = vrot.slane %v2542, 4
        %v2545 = vshll.u32 %v2254, 16
        %v2547 = vrot.slane %v2545, 5
        %v2548 = vsel %vm2270, %v2543, %v2547
        %v2549 = vshrl.u32 %v2254, 16
        %v2551 = vrot.slane %v2549, 4
        %v2552 = vor.u32 %v2551, %v2547
        %v2553 = vrot.slane %v2552, 4
        %v2555 = vshll.u32 %v2255, 16
        %v2557 = vrot.slane %v2555, 5
        %v2558 = vsel %vm2270, %v2553, %v2557
        %v2560 = vshrl.u32 %v2256, 16
        %v2562 = vrot.slane %v2560, 4
        %v2563 = vshll.u32 %v2256, 16
        %v2565 = vrot.slane %v2563, 5
        %v2566 = vor.u32 %v2562, %v2565
        %v2567 = vrot.slane %v2566, 4
        %v2569 = vshll.u32 %v2257, 16
        %v2571 = vrot.slane %v2569, 5
        %v2572 = vsel %vm2270, %v2567, %v2571
        %v2573 = vshrl.u32 %v2257, 16
        %v2575 = vrot.slane %v2573, 4
        %v2576 = vor.u32 %v2575, %v2571
        %v2577 = vrot.slane %v2576, 4
        %v2579 = vshll.u32 %v2258, 16
        %v2581 = vrot.slane %v2579, 5
        %v2582 = vsel %vm2270, %v2577, %v2581
        %v2584 = vshrl.u32 %v2259, 16
        %v2586 = vrot.slane %v2584, 4
        %v2587 = vshll.u32 %v2259, 16
        %v2589 = vrot.slane %v2587, 5
        %v2590 = vor.u32 %v2586, %v2589
        %v2591 = vrot.slane %v2590, 4
        %v2593 = vshll.u32 %v2260, 16
        %v2595 = vrot.slane %v2593, 5
        %v2596 = vsel %vm2270, %v2591, %v2595
        %v2597 = vshrl.u32 %v2260, 16
        %v2599 = vrot.slane %v2597, 4
        %v2600 = vor.u32 %v2599, %v2595
        %v2601 = vrot.slane %v2600, 4
        %v2603 = vshll.u32 %v2261, 16
        %v2605 = vrot.slane %v2603, 5
        %v2606 = vsel %vm2270, %v2601, %v2605
        %v2608 = vshrl.u32 %v2262, 16
        %v2610 = vrot.slane %v2608, 4
        %v2611 = vshll.u32 %v2262, 16
        %v2613 = vrot.slane %v2611, 5
        %v2614 = vor.u32 %v2610, %v2613
        %v2615 = vrot.slane %v2614, 4
        %v2617 = vshll.u32 %v2263, 16
        %v2619 = vrot.slane %v2617, 5
        %v2620 = vsel %vm2270, %v2615, %v2619
        %v2621 = vshrl.u32 %v2263, 16
        %v2623 = vrot.slane %v2621, 4
        %v2624 = vor.u32 %v2623, %v2619
        %v2625 = vrot.slane %v2624, 4
        %v2627 = vshll.u32 %v2264, 16
        %v2629 = vrot.slane %v2627, 5
        %v2630 = vsel %vm2270, %v2625, %v2629
        %v2632 = vshrl.u32 %v2265, 16
        %v2634 = vrot.slane %v2632, 4
        %v2635 = vshll.u32 %v2265, 16
        %v2637 = vrot.slane %v2635, 5
        %v2638 = vor.u32 %v2634, %v2637
        %v2639 = vrot.slane %v2638, 4
        %v2641 = vshll.u32 %v2266, 16
        %v2643 = vrot.slane %v2641, 5
        %v2644 = vsel %vm2270, %v2639, %v2643
        %v2645 = vshrl.u32 %v2266, 16
        %v2647 = vrot.slane %v2645, 4
        %v2648 = vor.u32 %v2647, %v2643
        %v2649 = vrot.slane %v2648, 4
        %v2651 = vshll.u32 %v2267, 16
        %v2653 = vrot.slane %v2651, 5
        %v2654 = vsel %vm2270, %v2649, %v2653
        %s2655 = scalar_lea.vmem [#allocation6], 64
        %v2656 = vld [vmem:[%s2655] sm:$0xf]
        %v2657 = vld [vmem:[%s2655 + $0x4] sm:$0xf]
        %v2658 = vld [vmem:[%s2655 + $0x8] sm:$0xf]
        %v2659 = vld [vmem:[%s2655 + $0xc] sm:$0xf]
        %v2660 = vld [vmem:[%s2655 + $0x10] sm:$0xf]
        %v2661 = vld [vmem:[%s2655 + $0x14] sm:$0xf]
        %v2662 = vld [vmem:[%s2655 + $0x18] sm:$0xf]
        %v2663 = vld [vmem:[%s2655 + $0x1c] sm:$0xf]
        %v2664 = vunpack.c.l.b16 %v2284
        %v2665 = vunpack.c.l.b16 %v2294
        %v2666 = vunpack.c.l.b16 %v2308
        %v2667 = vunpack.c.l.b16 %v2318
        %v2668 = vunpack.c.l.b16 %v2332
        %v2669 = vunpack.c.l.b16 %v2342
        %v2670 = vunpack.c.l.b16 %v2356
        %v2671 = vunpack.c.l.b16 %v2366
        %v2672 = vunpack.c.l.b16 %v2380
        %v2673 = vunpack.c.l.b16 %v2390
        %v2674 = vunpack.c.l.b16 %v2404
        %v2675 = vunpack.c.l.b16 %v2414
        %v2676 = vunpack.c.l.b16 %v2428
        %v2677 = vunpack.c.l.b16 %v2438
        %v2678 = vunpack.c.l.b16 %v2452
        %v2679 = vunpack.c.l.b16 %v2462
        %v2680 = vunpack.c.l.b16 %v2476
        %v2681 = vunpack.c.l.b16 %v2486
        %v2682 = vunpack.c.l.b16 %v2500
        %v2683 = vunpack.c.l.b16 %v2510
        %v2684 = vunpack.c.l.b16 %v2524
        %v2685 = vunpack.c.l.b16 %v2534
        %v2686 = vunpack.c.l.b16 %v2548
        %v2687 = vunpack.c.l.b16 %v2558
        %v2688 = vunpack.c.l.b16 %v2572
        %v2689 = vunpack.c.l.b16 %v2582
        %v2690 = vunpack.c.l.b16 %v2596
        %v2691 = vunpack.c.l.b16 %v2606
        %v2692 = vunpack.c.l.b16 %v2620
        %v2693 = vunpack.c.l.b16 %v2630
        %v2694 = vunpack.c.l.b16 %v2644
        %v2695 = vunpack.c.l.b16 %v2654
        %v2696 = vpack.c.b16 %v2665, %v2664
        %v2697 = vpack.c.b16 %v2667, %v2666
        %v2698 = vpack.c.b16 %v2669, %v2668
        %v2699 = vpack.c.b16 %v2671, %v2670
        %v2700 = vpack.c.b16 %v2673, %v2672
        %v2701 = vpack.c.b16 %v2675, %v2674
        %v2702 = vpack.c.b16 %v2677, %v2676
        %v2703 = vpack.c.b16 %v2679, %v2678
        %v2704 = vpack.c.b16 %v2681, %v2680
        %v2705 = vpack.c.b16 %v2683, %v2682
        %v2706 = vpack.c.b16 %v2685, %v2684
        %v2707 = vpack.c.b16 %v2687, %v2686
        %v2708 = vpack.c.b16 %v2689, %v2688
        %v2709 = vpack.c.b16 %v2691, %v2690
        %v2710 = vpack.c.b16 %v2693, %v2692
        %v2711 = vpack.c.b16 %v2695, %v2694
        %v2720 = vunpack.c.l.b16 %v2656
        %v2721 = vunpack.c.l.b16 %v2657
        %v2722 = vunpack.c.l.b16 %v2658
        %v2723 = vunpack.c.l.b16 %v2659
        %v2724 = vunpack.c.l.b16 %v2660
        %v2725 = vunpack.c.l.b16 %v2661
        %v2726 = vunpack.c.l.b16 %v2662
        %v2727 = vunpack.c.l.b16 %v2663
        %v2728 = vpack.c.b16 %v2721, %v2720
        %v2729 = vpack.c.b16 %v2723, %v2722
        %v2730 = vpack.c.b16 %v2725, %v2724
        %v2731 = vpack.c.b16 %v2727, %v2726
        %v2737 = vsel %vm1873, %v2696, 0
        %v2740 = vsel %vm1873, %v2697, 0
        %v2743 = vsel %vm1873, %v2698, 0
        %v2746 = vsel %vm1873, %v2699, 0
        %v2749 = vsel %vm1873, %v2700, 0
        %v2752 = vsel %vm1873, %v2701, 0
        %v2755 = vsel %vm1873, %v2702, 0
        %v2758 = vsel %vm1873, %v2703, 0
        %v2761 = vsel %vm1873, %v2704, 0
        %v2764 = vsel %vm1873, %v2705, 0
        %v2767 = vsel %vm1873, %v2706, 0
        %v2770 = vsel %vm1873, %v2707, 0
        %v2773 = vsel %vm1873, %v2708, 0
        %v2776 = vsel %vm1873, %v2709, 0
        %v2779 = vsel %vm1873, %v2710, 0
        %v2782 = vsel %vm1873, %v2711, 0
        %2784 = vmatpush.bf16.msra.mxu0 0
        %2785 = vmatpush.bf16.msra.mxu0 0
        %2786 = vmatpush.bf16.msra.mxu0 0
        %2787 = vmatpush.bf16.msra.mxu0 0
        %2788 = vmatpush.bf16.msra.mxu0 %v2731
        %2789 = vmatpush.bf16.msra.mxu0 %v2730
        %2790 = vmatpush.bf16.msra.mxu0 %v2729
        %2791 = vmatpush.bf16.msra.mxu0 %v2728
        %2792 = vmatmul.bf16.gmra.mxu0 %v2737
        %v2793 = vpop.f32.mrf.mxu0
        %v2794 = vadd.f32 0.0, %v2793
        %v2795 = vpop.f32.mrf.mxu0
        %v2796 = vadd.f32 0.0, %v2795
        %2797 = vmatmul.bf16.gmra.mxu0 %v2740
        %v2798 = vpop.f32.mrf.mxu0
        %v2799 = vadd.f32 0.0, %v2798
        %v2800 = vpop.f32.mrf.mxu0
        %v2801 = vadd.f32 0.0, %v2800
        %2802 = vmatmul.bf16.gmra.mxu0 %v2743
        %v2803 = vpop.f32.mrf.mxu0
        %v2804 = vadd.f32 0.0, %v2803
        %v2805 = vpop.f32.mrf.mxu0
        %v2806 = vadd.f32 0.0, %v2805
        %2807 = vmatmul.bf16.gmra.mxu0 %v2746
        %v2808 = vpop.f32.mrf.mxu0
        %v2809 = vadd.f32 0.0, %v2808
        %v2810 = vpop.f32.mrf.mxu0
        %v2811 = vadd.f32 0.0, %v2810
        %2812 = vmatmul.bf16.gmra.mxu0 %v2749
        %v2813 = vpop.f32.mrf.mxu0
        %v2814 = vadd.f32 0.0, %v2813
        %v2815 = vpop.f32.mrf.mxu0
        %v2816 = vadd.f32 0.0, %v2815
        %2817 = vmatmul.bf16.gmra.mxu0 %v2752
        %v2818 = vpop.f32.mrf.mxu0
        %v2819 = vadd.f32 0.0, %v2818
        %v2820 = vpop.f32.mrf.mxu0
        %v2821 = vadd.f32 0.0, %v2820
        %2822 = vmatmul.bf16.gmra.mxu0 %v2755
        %v2823 = vpop.f32.mrf.mxu0
        %v2824 = vadd.f32 0.0, %v2823
        %v2825 = vpop.f32.mrf.mxu0
        %v2826 = vadd.f32 0.0, %v2825
        %2827 = vmatmul.bf16.gmra.mxu0 %v2758
        %v2828 = vpop.f32.mrf.mxu0
        %v2829 = vadd.f32 0.0, %v2828
        %v2830 = vpop.f32.mrf.mxu0
        %v2831 = vadd.f32 0.0, %v2830
        %2832 = vmatmul.bf16.gmra.mxu0 %v2761
        %v2833 = vpop.f32.mrf.mxu0
        %v2834 = vadd.f32 0.0, %v2833
        %v2835 = vpop.f32.mrf.mxu0
        %v2836 = vadd.f32 0.0, %v2835
        %2837 = vmatmul.bf16.gmra.mxu0 %v2764
        %v2838 = vpop.f32.mrf.mxu0
        %v2839 = vadd.f32 0.0, %v2838
        %v2840 = vpop.f32.mrf.mxu0
        %v2841 = vadd.f32 0.0, %v2840
        %2842 = vmatmul.bf16.gmra.mxu0 %v2767
        %v2843 = vpop.f32.mrf.mxu0
        %v2844 = vadd.f32 0.0, %v2843
        %v2845 = vpop.f32.mrf.mxu0
        %v2846 = vadd.f32 0.0, %v2845
        %2847 = vmatmul.bf16.gmra.mxu0 %v2770
        %v2848 = vpop.f32.mrf.mxu0
        %v2849 = vadd.f32 0.0, %v2848
        %v2850 = vpop.f32.mrf.mxu0
        %v2851 = vadd.f32 0.0, %v2850
        %2852 = vmatmul.bf16.gmra.mxu0 %v2773
        %v2853 = vpop.f32.mrf.mxu0
        %v2854 = vadd.f32 0.0, %v2853
        %v2855 = vpop.f32.mrf.mxu0
        %v2856 = vadd.f32 0.0, %v2855
        %2857 = vmatmul.bf16.gmra.mxu0 %v2776
        %v2858 = vpop.f32.mrf.mxu0
        %v2859 = vadd.f32 0.0, %v2858
        %v2860 = vpop.f32.mrf.mxu0
        %v2861 = vadd.f32 0.0, %v2860
        %2862 = vmatmul.bf16.gmra.mxu0 %v2779
        %v2863 = vpop.f32.mrf.mxu0
        %v2864 = vadd.f32 0.0, %v2863
        %v2865 = vpop.f32.mrf.mxu0
        %v2866 = vadd.f32 0.0, %v2865
        %2867 = vmatmul.bf16.gmra.mxu0 %v2782
        %v2868 = vpop.f32.mrf.mxu0
        %v2869 = vadd.f32 0.0, %v2868
        %v2870 = vpop.f32.mrf.mxu0
        %v2871 = vadd.f32 0.0, %v2870
        %2872 = vdwg.mxu0
        %v2873 = vadd.f32 %v2141, %v2794
        %v2874 = vadd.f32 %v2143, %v2796
        %v2875 = vadd.f32 %v2146, %v2799
        %v2876 = vadd.f32 %v2148, %v2801
        %v2877 = vadd.f32 %v2151, %v2804
        %v2878 = vadd.f32 %v2153, %v2806
        %v2879 = vadd.f32 %v2156, %v2809
        %v2880 = vadd.f32 %v2158, %v2811
        %v2881 = vadd.f32 %v2161, %v2814
        %v2882 = vadd.f32 %v2163, %v2816
        %v2883 = vadd.f32 %v2166, %v2819
        %v2884 = vadd.f32 %v2168, %v2821
        %v2885 = vadd.f32 %v2171, %v2824
        %v2886 = vadd.f32 %v2173, %v2826
        %v2887 = vadd.f32 %v2176, %v2829
        %v2888 = vadd.f32 %v2178, %v2831
        %v2889 = vadd.f32 %v2181, %v2834
        %v2890 = vadd.f32 %v2183, %v2836
        %v2891 = vadd.f32 %v2186, %v2839
        %v2892 = vadd.f32 %v2188, %v2841
        %v2893 = vadd.f32 %v2191, %v2844
        %v2894 = vadd.f32 %v2193, %v2846
        %v2895 = vadd.f32 %v2196, %v2849
        %v2896 = vadd.f32 %v2198, %v2851
        %v2897 = vadd.f32 %v2201, %v2854
        %v2898 = vadd.f32 %v2203, %v2856
        %v2899 = vadd.f32 %v2206, %v2859
        %v2900 = vadd.f32 %v2208, %v2861
        %v2901 = vadd.f32 %v2211, %v2864
        %v2902 = vadd.f32 %v2213, %v2866
        %v2903 = vadd.f32 %v2216, %v2869
        %v2904 = vadd.f32 %v2218, %v2871
        %v2905 = vld [vmem:[%s1316] sm:$0x8]
        %v2906 = vld [vmem:[%s1316 + $0x4] sm:$0xf]
        %v2907 = vld [vmem:[%s1316 + $0x8] sm:$0xf]
        %v2908 = vld [vmem:[%s1316 + $0x10] sm:$0x8]
        %v2909 = vld [vmem:[%s1316 + $0x14] sm:$0xf]
        %v2910 = vld [vmem:[%s1316 + $0x18] sm:$0xf]
        %v2911 = vld [vmem:[%s1316 + $0x20] sm:$0x8]
        %v2912 = vld [vmem:[%s1316 + $0x24] sm:$0xf]
        %v2913 = vld [vmem:[%s1316 + $0x28] sm:$0xf]
        %v2914 = vld [vmem:[%s1316 + $0x30] sm:$0x8]
        %v2915 = vld [vmem:[%s1316 + $0x34] sm:$0xf]
        %v2916 = vld [vmem:[%s1316 + $0x38] sm:$0xf]
        %v2917 = vld [vmem:[%s1316 + $0x40] sm:$0x8]
        %v2918 = vld [vmem:[%s1316 + $0x44] sm:$0xf]
        %v2919 = vld [vmem:[%s1316 + $0x48] sm:$0xf]
        %v2920 = vld [vmem:[%s1316 + $0x50] sm:$0x8]
        %v2921 = vld [vmem:[%s1316 + $0x54] sm:$0xf]
        %v2922 = vld [vmem:[%s1316 + $0x58] sm:$0xf]
        %v2923 = vld [vmem:[%s1316 + $0x60] sm:$0x8]
        %v2924 = vld [vmem:[%s1316 + $0x64] sm:$0xf]
        %v2925 = vld [vmem:[%s1316 + $0x68] sm:$0xf]
        %v2926 = vld [vmem:[%s1316 + $0x70] sm:$0x8]
        %v2927 = vld [vmem:[%s1316 + $0x74] sm:$0xf]
        %v2928 = vld [vmem:[%s1316 + $0x78] sm:$0xf]
        %v2929 = vld [vmem:[%s1316 + $0x80] sm:$0x8]
        %v2930 = vld [vmem:[%s1316 + $0x84] sm:$0xf]
        %v2931 = vld [vmem:[%s1316 + $0x88] sm:$0xf]
        %v2932 = vld [vmem:[%s1316 + $0x90] sm:$0x8]
        %v2933 = vld [vmem:[%s1316 + $0x94] sm:$0xf]
        %v2934 = vld [vmem:[%s1316 + $0x98] sm:$0xf]
        %v2935 = vld [vmem:[%s1316 + $0xa0] sm:$0x8]
        %v2936 = vld [vmem:[%s1316 + $0xa4] sm:$0xf]
        %v2937 = vld [vmem:[%s1316 + $0xa8] sm:$0xf]
        %v2938 = vld [vmem:[%s1316 + $0xb0] sm:$0x8]
        %v2939 = vld [vmem:[%s1316 + $0xb4] sm:$0xf]
        %v2940 = vld [vmem:[%s1316 + $0xb8] sm:$0xf]
        %v2941 = vld [vmem:[%s1316 + $0xc0] sm:$0x8]
        %v2942 = vld [vmem:[%s1316 + $0xc4] sm:$0xf]
        %v2943 = vld [vmem:[%s1316 + $0xc8] sm:$0xf]
        %v2944 = vld [vmem:[%s1316 + $0xd0] sm:$0x8]
        %v2945 = vld [vmem:[%s1316 + $0xd4] sm:$0xf]
        %v2946 = vld [vmem:[%s1316 + $0xd8] sm:$0xf]
        %v2947 = vld [vmem:[%s1316 + $0xe0] sm:$0x8]
        %v2948 = vld [vmem:[%s1316 + $0xe4] sm:$0xf]
        %v2949 = vld [vmem:[%s1316 + $0xe8] sm:$0xf]
        %v2950 = vld [vmem:[%s1316 + $0xf0] sm:$0x8]
        %v2951 = vld [vmem:[%s1316 + $0xf4] sm:$0xf]
        %v2952 = vld [vmem:[%s1316 + $0xf8] sm:$0xf]
        %v2954 = vshrl.u32 %v2905, 16
        %v2956 = vrot.slane %v2954, 7
        %v2957 = vrot.slane %v2956, 4
        %v2959 = vshrl.u32 %v2906, 16
        %v2961 = vrot.slane %v2959, 7
        %v2962 = vshll.u32 %v2906, 16
        %v2964 = vor.u32 %v2961, %v2962
        %v2965 = vsel %vm1399, %v2957, %v2964
        %v2966 = vrot.slane %v2961, 4
        %v2968 = vshrl.u32 %v2907, 16
        %v2970 = vrot.slane %v2968, 7
        %v2971 = vshll.u32 %v2907, 16
        %v2973 = vor.u32 %v2970, %v2971
        %v2974 = vsel %vm1399, %v2966, %v2973
        %v2976 = vshrl.u32 %v2908, 16
        %v2978 = vrot.slane %v2976, 7
        %v2979 = vrot.slane %v2978, 4
        %v2981 = vshrl.u32 %v2909, 16
        %v2983 = vrot.slane %v2981, 7
        %v2984 = vshll.u32 %v2909, 16
        %v2986 = vor.u32 %v2983, %v2984
        %v2987 = vsel %vm1399, %v2979, %v2986
        %v2988 = vrot.slane %v2983, 4
        %v2990 = vshrl.u32 %v2910, 16
        %v2992 = vrot.slane %v2990, 7
        %v2993 = vshll.u32 %v2910, 16
        %v2995 = vor.u32 %v2992, %v2993
        %v2996 = vsel %vm1399, %v2988, %v2995
        %v2998 = vshrl.u32 %v2911, 16
        %v3000 = vrot.slane %v2998, 7
        %v3001 = vrot.slane %v3000, 4
        %v3003 = vshrl.u32 %v2912, 16
        %v3005 = vrot.slane %v3003, 7
        %v3006 = vshll.u32 %v2912, 16
        %v3008 = vor.u32 %v3005, %v3006
        %v3009 = vsel %vm1399, %v3001, %v3008
        %v3010 = vrot.slane %v3005, 4
        %v3012 = vshrl.u32 %v2913, 16
        %v3014 = vrot.slane %v3012, 7
        %v3015 = vshll.u32 %v2913, 16
        %v3017 = vor.u32 %v3014, %v3015
        %v3018 = vsel %vm1399, %v3010, %v3017
        %v3020 = vshrl.u32 %v2914, 16
        %v3022 = vrot.slane %v3020, 7
        %v3023 = vrot.slane %v3022, 4
        %v3025 = vshrl.u32 %v2915, 16
        %v3027 = vrot.slane %v3025, 7
        %v3028 = vshll.u32 %v2915, 16
        %v3030 = vor.u32 %v3027, %v3028
        %v3031 = vsel %vm1399, %v3023, %v3030
        %v3032 = vrot.slane %v3027, 4
        %v3034 = vshrl.u32 %v2916, 16
        %v3036 = vrot.slane %v3034, 7
        %v3037 = vshll.u32 %v2916, 16
        %v3039 = vor.u32 %v3036, %v3037
        %v3040 = vsel %vm1399, %v3032, %v3039
        %v3042 = vshrl.u32 %v2917, 16
        %v3044 = vrot.slane %v3042, 7
        %v3045 = vrot.slane %v3044, 4
        %v3047 = vshrl.u32 %v2918, 16
        %v3049 = vrot.slane %v3047, 7
        %v3050 = vshll.u32 %v2918, 16
        %v3052 = vor.u32 %v3049, %v3050
        %v3053 = vsel %vm1399, %v3045, %v3052
        %v3054 = vrot.slane %v3049, 4
        %v3056 = vshrl.u32 %v2919, 16
        %v3058 = vrot.slane %v3056, 7
        %v3059 = vshll.u32 %v2919, 16
        %v3061 = vor.u32 %v3058, %v3059
        %v3062 = vsel %vm1399, %v3054, %v3061
        %v3064 = vshrl.u32 %v2920, 16
        %v3066 = vrot.slane %v3064, 7
        %v3067 = vrot.slane %v3066, 4
        %v3069 = vshrl.u32 %v2921, 16
        %v3071 = vrot.slane %v3069, 7
        %v3072 = vshll.u32 %v2921, 16
        %v3074 = vor.u32 %v3071, %v3072
        %v3075 = vsel %vm1399, %v3067, %v3074
        %v3076 = vrot.slane %v3071, 4
        %v3078 = vshrl.u32 %v2922, 16
        %v3080 = vrot.slane %v3078, 7
        %v3081 = vshll.u32 %v2922, 16
        %v3083 = vor.u32 %v3080, %v3081
        %v3084 = vsel %vm1399, %v3076, %v3083
        %v3086 = vshrl.u32 %v2923, 16
        %v3088 = vrot.slane %v3086, 7
        %v3089 = vrot.slane %v3088, 4
        %v3091 = vshrl.u32 %v2924, 16
        %v3093 = vrot.slane %v3091, 7
        %v3094 = vshll.u32 %v2924, 16
        %v3096 = vor.u32 %v3093, %v3094
        %v3097 = vsel %vm1399, %v3089, %v3096
        %v3098 = vrot.slane %v3093, 4
        %v3100 = vshrl.u32 %v2925, 16
        %v3102 = vrot.slane %v3100, 7
        %v3103 = vshll.u32 %v2925, 16
        %v3105 = vor.u32 %v3102, %v3103
        %v3106 = vsel %vm1399, %v3098, %v3105
        %v3108 = vshrl.u32 %v2926, 16
        %v3110 = vrot.slane %v3108, 7
        %v3111 = vrot.slane %v3110, 4
        %v3113 = vshrl.u32 %v2927, 16
        %v3115 = vrot.slane %v3113, 7
        %v3116 = vshll.u32 %v2927, 16
        %v3118 = vor.u32 %v3115, %v3116
        %v3119 = vsel %vm1399, %v3111, %v3118
        %v3120 = vrot.slane %v3115, 4
        %v3122 = vshrl.u32 %v2928, 16
        %v3124 = vrot.slane %v3122, 7
        %v3125 = vshll.u32 %v2928, 16
        %v3127 = vor.u32 %v3124, %v3125
        %v3128 = vsel %vm1399, %v3120, %v3127
        %v3130 = vshrl.u32 %v2929, 16
        %v3132 = vrot.slane %v3130, 7
        %v3133 = vrot.slane %v3132, 4
        %v3135 = vshrl.u32 %v2930, 16
        %v3137 = vrot.slane %v3135, 7
        %v3138 = vshll.u32 %v2930, 16
        %v3140 = vor.u32 %v3137, %v3138
        %v3141 = vsel %vm1399, %v3133, %v3140
        %v3142 = vrot.slane %v3137, 4
        %v3144 = vshrl.u32 %v2931, 16
        %v3146 = vrot.slane %v3144, 7
        %v3147 = vshll.u32 %v2931, 16
        %v3149 = vor.u32 %v3146, %v3147
        %v3150 = vsel %vm1399, %v3142, %v3149
        %v3152 = vshrl.u32 %v2932, 16
        %v3154 = vrot.slane %v3152, 7
        %v3155 = vrot.slane %v3154, 4
        %v3157 = vshrl.u32 %v2933, 16
        %v3159 = vrot.slane %v3157, 7
        %v3160 = vshll.u32 %v2933, 16
        %v3162 = vor.u32 %v3159, %v3160
        %v3163 = vsel %vm1399, %v3155, %v3162
        %v3164 = vrot.slane %v3159, 4
        %v3166 = vshrl.u32 %v2934, 16
        %v3168 = vrot.slane %v3166, 7
        %v3169 = vshll.u32 %v2934, 16
        %v3171 = vor.u32 %v3168, %v3169
        %v3172 = vsel %vm1399, %v3164, %v3171
        %v3174 = vshrl.u32 %v2935, 16
        %v3176 = vrot.slane %v3174, 7
        %v3177 = vrot.slane %v3176, 4
        %v3179 = vshrl.u32 %v2936, 16
        %v3181 = vrot.slane %v3179, 7
        %v3182 = vshll.u32 %v2936, 16
        %v3184 = vor.u32 %v3181, %v3182
        %v3185 = vsel %vm1399, %v3177, %v3184
        %v3186 = vrot.slane %v3181, 4
        %v3188 = vshrl.u32 %v2937, 16
        %v3190 = vrot.slane %v3188, 7
        %v3191 = vshll.u32 %v2937, 16
        %v3193 = vor.u32 %v3190, %v3191
        %v3194 = vsel %vm1399, %v3186, %v3193
        %v3196 = vshrl.u32 %v2938, 16
        %v3198 = vrot.slane %v3196, 7
        %v3199 = vrot.slane %v3198, 4
        %v3201 = vshrl.u32 %v2939, 16
        %v3203 = vrot.slane %v3201, 7
        %v3204 = vshll.u32 %v2939, 16
        %v3206 = vor.u32 %v3203, %v3204
        %v3207 = vsel %vm1399, %v3199, %v3206
        %v3208 = vrot.slane %v3203, 4
        %v3210 = vshrl.u32 %v2940, 16
        %v3212 = vrot.slane %v3210, 7
        %v3213 = vshll.u32 %v2940, 16
        %v3215 = vor.u32 %v3212, %v3213
        %v3216 = vsel %vm1399, %v3208, %v3215
        %v3218 = vshrl.u32 %v2941, 16
        %v3220 = vrot.slane %v3218, 7
        %v3221 = vrot.slane %v3220, 4
        %v3223 = vshrl.u32 %v2942, 16
        %v3225 = vrot.slane %v3223, 7
        %v3226 = vshll.u32 %v2942, 16
        %v3228 = vor.u32 %v3225, %v3226
        %v3229 = vsel %vm1399, %v3221, %v3228
        %v3230 = vrot.slane %v3225, 4
        %v3232 = vshrl.u32 %v2943, 16
        %v3234 = vrot.slane %v3232, 7
        %v3235 = vshll.u32 %v2943, 16
        %v3237 = vor.u32 %v3234, %v3235
        %v3238 = vsel %vm1399, %v3230, %v3237
        %v3240 = vshrl.u32 %v2944, 16
        %v3242 = vrot.slane %v3240, 7
        %v3243 = vrot.slane %v3242, 4
        %v3245 = vshrl.u32 %v2945, 16
        %v3247 = vrot.slane %v3245, 7
        %v3248 = vshll.u32 %v2945, 16
        %v3250 = vor.u32 %v3247, %v3248
        %v3251 = vsel %vm1399, %v3243, %v3250
        %v3252 = vrot.slane %v3247, 4
        %v3254 = vshrl.u32 %v2946, 16
        %v3256 = vrot.slane %v3254, 7
        %v3257 = vshll.u32 %v2946, 16
        %v3259 = vor.u32 %v3256, %v3257
        %v3260 = vsel %vm1399, %v3252, %v3259
        %v3262 = vshrl.u32 %v2947, 16
        %v3264 = vrot.slane %v3262, 7
        %v3265 = vrot.slane %v3264, 4
        %v3267 = vshrl.u32 %v2948, 16
        %v3269 = vrot.slane %v3267, 7
        %v3270 = vshll.u32 %v2948, 16
        %v3272 = vor.u32 %v3269, %v3270
        %v3273 = vsel %vm1399, %v3265, %v3272
        %v3274 = vrot.slane %v3269, 4
        %v3276 = vshrl.u32 %v2949, 16
        %v3278 = vrot.slane %v3276, 7
        %v3279 = vshll.u32 %v2949, 16
        %v3281 = vor.u32 %v3278, %v3279
        %v3282 = vsel %vm1399, %v3274, %v3281
        %v3284 = vshrl.u32 %v2950, 16
        %v3286 = vrot.slane %v3284, 7
        %v3287 = vrot.slane %v3286, 4
        %v3289 = vshrl.u32 %v2951, 16
        %v3291 = vrot.slane %v3289, 7
        %v3292 = vshll.u32 %v2951, 16
        %v3294 = vor.u32 %v3291, %v3292
        %v3295 = vsel %vm1399, %v3287, %v3294
        %v3296 = vrot.slane %v3291, 4
        %v3298 = vshrl.u32 %v2952, 16
        %v3300 = vrot.slane %v3298, 7
        %v3301 = vshll.u32 %v2952, 16
        %v3303 = vor.u32 %v3300, %v3301
        %v3304 = vsel %vm1399, %v3296, %v3303
        %s3305 = scalar_lea.vmem [#allocation6], 96
        %v3306 = vld [vmem:[%s3305] sm:$0xf]
        %v3307 = vld [vmem:[%s3305 + $0x4] sm:$0xf]
        %v3308 = vld [vmem:[%s3305 + $0x8] sm:$0xf]
        %v3309 = vld [vmem:[%s3305 + $0xc] sm:$0xf]
        %v3310 = vld [vmem:[%s3305 + $0x10] sm:$0xf]
        %v3311 = vld [vmem:[%s3305 + $0x14] sm:$0xf]
        %v3312 = vld [vmem:[%s3305 + $0x18] sm:$0xf]
        %v3313 = vld [vmem:[%s3305 + $0x1c] sm:$0xf]
        %v3314 = vunpack.c.l.b16 %v2965
        %v3315 = vunpack.c.l.b16 %v2974
        %v3316 = vunpack.c.l.b16 %v2987
        %v3317 = vunpack.c.l.b16 %v2996
        %v3318 = vunpack.c.l.b16 %v3009
        %v3319 = vunpack.c.l.b16 %v3018
        %v3320 = vunpack.c.l.b16 %v3031
        %v3321 = vunpack.c.l.b16 %v3040
        %v3322 = vunpack.c.l.b16 %v3053
        %v3323 = vunpack.c.l.b16 %v3062
        %v3324 = vunpack.c.l.b16 %v3075
        %v3325 = vunpack.c.l.b16 %v3084
        %v3326 = vunpack.c.l.b16 %v3097
        %v3327 = vunpack.c.l.b16 %v3106
        %v3328 = vunpack.c.l.b16 %v3119
        %v3329 = vunpack.c.l.b16 %v3128
        %v3330 = vunpack.c.l.b16 %v3141
        %v3331 = vunpack.c.l.b16 %v3150
        %v3332 = vunpack.c.l.b16 %v3163
        %v3333 = vunpack.c.l.b16 %v3172
        %v3334 = vunpack.c.l.b16 %v3185
        %v3335 = vunpack.c.l.b16 %v3194
        %v3336 = vunpack.c.l.b16 %v3207
        %v3337 = vunpack.c.l.b16 %v3216
        %v3338 = vunpack.c.l.b16 %v3229
        %v3339 = vunpack.c.l.b16 %v3238
        %v3340 = vunpack.c.l.b16 %v3251
        %v3341 = vunpack.c.l.b16 %v3260
        %v3342 = vunpack.c.l.b16 %v3273
        %v3343 = vunpack.c.l.b16 %v3282
        %v3344 = vunpack.c.l.b16 %v3295
        %v3345 = vunpack.c.l.b16 %v3304
        %v3346 = vpack.c.b16 %v3315, %v3314
        %v3347 = vpack.c.b16 %v3317, %v3316
        %v3348 = vpack.c.b16 %v3319, %v3318
        %v3349 = vpack.c.b16 %v3321, %v3320
        %v3350 = vpack.c.b16 %v3323, %v3322
        %v3351 = vpack.c.b16 %v3325, %v3324
        %v3352 = vpack.c.b16 %v3327, %v3326
        %v3353 = vpack.c.b16 %v3329, %v3328
        %v3354 = vpack.c.b16 %v3331, %v3330
        %v3355 = vpack.c.b16 %v3333, %v3332
        %v3356 = vpack.c.b16 %v3335, %v3334
        %v3357 = vpack.c.b16 %v3337, %v3336
        %v3358 = vpack.c.b16 %v3339, %v3338
        %v3359 = vpack.c.b16 %v3341, %v3340
        %v3360 = vpack.c.b16 %v3343, %v3342
        %v3361 = vpack.c.b16 %v3345, %v3344
        %v3370 = vunpack.c.l.b16 %v3306
        %v3371 = vunpack.c.l.b16 %v3307
        %v3372 = vunpack.c.l.b16 %v3308
        %v3373 = vunpack.c.l.b16 %v3309
        %v3374 = vunpack.c.l.b16 %v3310
        %v3375 = vunpack.c.l.b16 %v3311
        %v3376 = vunpack.c.l.b16 %v3312
        %v3377 = vunpack.c.l.b16 %v3313
        %v3378 = vpack.c.b16 %v3371, %v3370
        %v3379 = vpack.c.b16 %v3373, %v3372
        %v3380 = vpack.c.b16 %v3375, %v3374
        %v3381 = vpack.c.b16 %v3377, %v3376
        %v3387 = vsel %vm1873, %v3346, 0
        %v3390 = vsel %vm1873, %v3347, 0
        %v3393 = vsel %vm1873, %v3348, 0
        %v3396 = vsel %vm1873, %v3349, 0
        %v3399 = vsel %vm1873, %v3350, 0
        %v3402 = vsel %vm1873, %v3351, 0
        %v3405 = vsel %vm1873, %v3352, 0
        %v3408 = vsel %vm1873, %v3353, 0
        %v3411 = vsel %vm1873, %v3354, 0
        %v3414 = vsel %vm1873, %v3355, 0
        %v3417 = vsel %vm1873, %v3356, 0
        %v3420 = vsel %vm1873, %v3357, 0
        %v3423 = vsel %vm1873, %v3358, 0
        %v3426 = vsel %vm1873, %v3359, 0
        %v3429 = vsel %vm1873, %v3360, 0
        %v3432 = vsel %vm1873, %v3361, 0
        %3434 = vmatpush.bf16.msra.mxu0 0
        %3435 = vmatpush.bf16.msra.mxu0 0
        %3436 = vmatpush.bf16.msra.mxu0 0
        %3437 = vmatpush.bf16.msra.mxu0 0
        %3438 = vmatpush.bf16.msra.mxu0 %v3381
        %3439 = vmatpush.bf16.msra.mxu0 %v3380
        %3440 = vmatpush.bf16.msra.mxu0 %v3379
        %3441 = vmatpush.bf16.msra.mxu0 %v3378
        %3442 = vmatmul.bf16.gmra.mxu0 %v3387
        %v3443 = vpop.f32.mrf.mxu0
        %v3444 = vadd.f32 0.0, %v3443
        %v3445 = vpop.f32.mrf.mxu0
        %v3446 = vadd.f32 0.0, %v3445
        %3447 = vmatmul.bf16.gmra.mxu0 %v3390
        %v3448 = vpop.f32.mrf.mxu0
        %v3449 = vadd.f32 0.0, %v3448
        %v3450 = vpop.f32.mrf.mxu0
        %v3451 = vadd.f32 0.0, %v3450
        %3452 = vmatmul.bf16.gmra.mxu0 %v3393
        %v3453 = vpop.f32.mrf.mxu0
        %v3454 = vadd.f32 0.0, %v3453
        %v3455 = vpop.f32.mrf.mxu0
        %v3456 = vadd.f32 0.0, %v3455
        %3457 = vmatmul.bf16.gmra.mxu0 %v3396
        %v3458 = vpop.f32.mrf.mxu0
        %v3459 = vadd.f32 0.0, %v3458
        %v3460 = vpop.f32.mrf.mxu0
        %v3461 = vadd.f32 0.0, %v3460
        %3462 = vmatmul.bf16.gmra.mxu0 %v3399
        %v3463 = vpop.f32.mrf.mxu0
        %v3464 = vadd.f32 0.0, %v3463
        %v3465 = vpop.f32.mrf.mxu0
        %v3466 = vadd.f32 0.0, %v3465
        %3467 = vmatmul.bf16.gmra.mxu0 %v3402
        %v3468 = vpop.f32.mrf.mxu0
        %v3469 = vadd.f32 0.0, %v3468
        %v3470 = vpop.f32.mrf.mxu0
        %v3471 = vadd.f32 0.0, %v3470
        %3472 = vmatmul.bf16.gmra.mxu0 %v3405
        %v3473 = vpop.f32.mrf.mxu0
        %v3474 = vadd.f32 0.0, %v3473
        %v3475 = vpop.f32.mrf.mxu0
        %v3476 = vadd.f32 0.0, %v3475
        %3477 = vmatmul.bf16.gmra.mxu0 %v3408
        %v3478 = vpop.f32.mrf.mxu0
        %v3479 = vadd.f32 0.0, %v3478
        %v3480 = vpop.f32.mrf.mxu0
        %v3481 = vadd.f32 0.0, %v3480
        %3482 = vmatmul.bf16.gmra.mxu0 %v3411
        %v3483 = vpop.f32.mrf.mxu0
        %v3484 = vadd.f32 0.0, %v3483
        %v3485 = vpop.f32.mrf.mxu0
        %v3486 = vadd.f32 0.0, %v3485
        %3487 = vmatmul.bf16.gmra.mxu0 %v3414
        %v3488 = vpop.f32.mrf.mxu0
        %v3489 = vadd.f32 0.0, %v3488
        %v3490 = vpop.f32.mrf.mxu0
        %v3491 = vadd.f32 0.0, %v3490
        %3492 = vmatmul.bf16.gmra.mxu0 %v3417
        %v3493 = vpop.f32.mrf.mxu0
        %v3494 = vadd.f32 0.0, %v3493
        %v3495 = vpop.f32.mrf.mxu0
        %v3496 = vadd.f32 0.0, %v3495
        %3497 = vmatmul.bf16.gmra.mxu0 %v3420
        %v3498 = vpop.f32.mrf.mxu0
        %v3499 = vadd.f32 0.0, %v3498
        %v3500 = vpop.f32.mrf.mxu0
        %v3501 = vadd.f32 0.0, %v3500
        %3502 = vmatmul.bf16.gmra.mxu0 %v3423
        %v3503 = vpop.f32.mrf.mxu0
        %v3504 = vadd.f32 0.0, %v3503
        %v3505 = vpop.f32.mrf.mxu0
        %v3506 = vadd.f32 0.0, %v3505
        %3507 = vmatmul.bf16.gmra.mxu0 %v3426
        %v3508 = vpop.f32.mrf.mxu0
        %v3509 = vadd.f32 0.0, %v3508
        %v3510 = vpop.f32.mrf.mxu0
        %v3511 = vadd.f32 0.0, %v3510
        %3512 = vmatmul.bf16.gmra.mxu0 %v3429
        %v3513 = vpop.f32.mrf.mxu0
        %v3514 = vadd.f32 0.0, %v3513
        %v3515 = vpop.f32.mrf.mxu0
        %v3516 = vadd.f32 0.0, %v3515
        %3517 = vmatmul.bf16.gmra.mxu0 %v3432
        %v3518 = vpop.f32.mrf.mxu0
        %v3519 = vadd.f32 0.0, %v3518
        %v3520 = vpop.f32.mrf.mxu0
        %v3521 = vadd.f32 0.0, %v3520
        %3522 = vdwg.mxu0
        %v3523 = vadd.f32 %v2873, %v3444
        %v3524 = vadd.f32 %v2874, %v3446
        %v3525 = vadd.f32 %v2875, %v3449
        %v3526 = vadd.f32 %v2876, %v3451
        %v3527 = vadd.f32 %v2877, %v3454
        %v3528 = vadd.f32 %v2878, %v3456
        %v3529 = vadd.f32 %v2879, %v3459
        %v3530 = vadd.f32 %v2880, %v3461
        %v3531 = vadd.f32 %v2881, %v3464
        %v3532 = vadd.f32 %v2882, %v3466
        %v3533 = vadd.f32 %v2883, %v3469
        %v3534 = vadd.f32 %v2884, %v3471
        %v3535 = vadd.f32 %v2885, %v3474
        %v3536 = vadd.f32 %v2886, %v3476
        %v3537 = vadd.f32 %v2887, %v3479
        %v3538 = vadd.f32 %v2888, %v3481
        %v3539 = vadd.f32 %v2889, %v3484
        %v3540 = vadd.f32 %v2890, %v3486
        %v3541 = vadd.f32 %v2891, %v3489
        %v3542 = vadd.f32 %v2892, %v3491
        %v3543 = vadd.f32 %v2893, %v3494
        %v3544 = vadd.f32 %v2894, %v3496
        %v3545 = vadd.f32 %v2895, %v3499
        %v3546 = vadd.f32 %v2896, %v3501
        %v3547 = vadd.f32 %v2897, %v3504
        %v3548 = vadd.f32 %v2898, %v3506
        %v3549 = vadd.f32 %v2899, %v3509
        %v3550 = vadd.f32 %v2900, %v3511
        %v3551 = vadd.f32 %v2901, %v3514
        %v3552 = vadd.f32 %v2902, %v3516
        %v3553 = vadd.f32 %v2903, %v3519
        %v3554 = vadd.f32 %v2904, %v3521
        %s3555 = scalar_lea.vmem [#allocation6], 128
        %v3556 = vld [vmem:[%s3555] sm:$0xf]
        %v3557 = vld [vmem:[%s3555 + $0x4] sm:$0xf]
        %v3558 = vld [vmem:[%s3555 + $0x8] sm:$0xf]
        %v3559 = vld [vmem:[%s3555 + $0xc] sm:$0xf]
        %v3560 = vld [vmem:[%s3555 + $0x10] sm:$0xf]
        %v3561 = vld [vmem:[%s3555 + $0x14] sm:$0xf]
        %v3562 = vld [vmem:[%s3555 + $0x18] sm:$0xf]
        %v3563 = vld [vmem:[%s3555 + $0x1c] sm:$0xf]
        %v3596 = vunpack.c.l.b16 %v2906
        %v3597 = vunpack.c.l.b16 %v2907
        %v3598 = vunpack.c.l.b16 %v2909
        %v3599 = vunpack.c.l.b16 %v2910
        %v3600 = vunpack.c.l.b16 %v2912
        %v3601 = vunpack.c.l.b16 %v2913
        %v3602 = vunpack.c.l.b16 %v2915
        %v3603 = vunpack.c.l.b16 %v2916
        %v3604 = vunpack.c.l.b16 %v2918
        %v3605 = vunpack.c.l.b16 %v2919
        %v3606 = vunpack.c.l.b16 %v2921
        %v3607 = vunpack.c.l.b16 %v2922
        %v3608 = vunpack.c.l.b16 %v2924
        %v3609 = vunpack.c.l.b16 %v2925
        %v3610 = vunpack.c.l.b16 %v2927
        %v3611 = vunpack.c.l.b16 %v2928
        %v3612 = vunpack.c.l.b16 %v2930
        %v3613 = vunpack.c.l.b16 %v2931
        %v3614 = vunpack.c.l.b16 %v2933
        %v3615 = vunpack.c.l.b16 %v2934
        %v3616 = vunpack.c.l.b16 %v2936
        %v3617 = vunpack.c.l.b16 %v2937
        %v3618 = vunpack.c.l.b16 %v2939
        %v3619 = vunpack.c.l.b16 %v2940
        %v3620 = vunpack.c.l.b16 %v2942
        %v3621 = vunpack.c.l.b16 %v2943
        %v3622 = vunpack.c.l.b16 %v2945
        %v3623 = vunpack.c.l.b16 %v2946
        %v3624 = vunpack.c.l.b16 %v2948
        %v3625 = vunpack.c.l.b16 %v2949
        %v3626 = vunpack.c.l.b16 %v2951
        %v3627 = vunpack.c.l.b16 %v2952
        %v3628 = vpack.c.b16 %v3597, %v3596
        %v3629 = vpack.c.b16 %v3599, %v3598
        %v3630 = vpack.c.b16 %v3601, %v3600
        %v3631 = vpack.c.b16 %v3603, %v3602
        %v3632 = vpack.c.b16 %v3605, %v3604
        %v3633 = vpack.c.b16 %v3607, %v3606
        %v3634 = vpack.c.b16 %v3609, %v3608
        %v3635 = vpack.c.b16 %v3611, %v3610
        %v3636 = vpack.c.b16 %v3613, %v3612
        %v3637 = vpack.c.b16 %v3615, %v3614
        %v3638 = vpack.c.b16 %v3617, %v3616
        %v3639 = vpack.c.b16 %v3619, %v3618
        %v3640 = vpack.c.b16 %v3621, %v3620
        %v3641 = vpack.c.b16 %v3623, %v3622
        %v3642 = vpack.c.b16 %v3625, %v3624
        %v3643 = vpack.c.b16 %v3627, %v3626
        %v3652 = vunpack.c.l.b16 %v3556
        %v3653 = vunpack.c.l.b16 %v3557
        %v3654 = vunpack.c.l.b16 %v3558
        %v3655 = vunpack.c.l.b16 %v3559
        %v3656 = vunpack.c.l.b16 %v3560
        %v3657 = vunpack.c.l.b16 %v3561
        %v3658 = vunpack.c.l.b16 %v3562
        %v3659 = vunpack.c.l.b16 %v3563
        %v3660 = vpack.c.b16 %v3653, %v3652
        %v3661 = vpack.c.b16 %v3655, %v3654
        %v3662 = vpack.c.b16 %v3657, %v3656
        %v3663 = vpack.c.b16 %v3659, %v3658
        %v3669 = vsel %vm1873, %v3628, 0
        %v3672 = vsel %vm1873, %v3629, 0
        %v3675 = vsel %vm1873, %v3630, 0
        %v3678 = vsel %vm1873, %v3631, 0
        %v3681 = vsel %vm1873, %v3632, 0
        %v3684 = vsel %vm1873, %v3633, 0
        %v3687 = vsel %vm1873, %v3634, 0
        %v3690 = vsel %vm1873, %v3635, 0
        %v3693 = vsel %vm1873, %v3636, 0
        %v3696 = vsel %vm1873, %v3637, 0
        %v3699 = vsel %vm1873, %v3638, 0
        %v3702 = vsel %vm1873, %v3639, 0
        %v3705 = vsel %vm1873, %v3640, 0
        %v3708 = vsel %vm1873, %v3641, 0
        %v3711 = vsel %vm1873, %v3642, 0
        %v3714 = vsel %vm1873, %v3643, 0
        %3716 = vmatpush.bf16.msra.mxu0 0
        %3717 = vmatpush.bf16.msra.mxu0 0
        %3718 = vmatpush.bf16.msra.mxu0 0
        %3719 = vmatpush.bf16.msra.mxu0 0
        %3720 = vmatpush.bf16.msra.mxu0 %v3663
        %3721 = vmatpush.bf16.msra.mxu0 %v3662
        %3722 = vmatpush.bf16.msra.mxu0 %v3661
        %3723 = vmatpush.bf16.msra.mxu0 %v3660
        %3724 = vmatmul.bf16.gmra.mxu0 %v3669
        %v3725 = vpop.f32.mrf.mxu0
        %v3726 = vadd.f32 0.0, %v3725
        %v3727 = vpop.f32.mrf.mxu0
        %v3728 = vadd.f32 0.0, %v3727
        %3729 = vmatmul.bf16.gmra.mxu0 %v3672
        %v3730 = vpop.f32.mrf.mxu0
        %v3731 = vadd.f32 0.0, %v3730
        %v3732 = vpop.f32.mrf.mxu0
        %v3733 = vadd.f32 0.0, %v3732
        %3734 = vmatmul.bf16.gmra.mxu0 %v3675
        %v3735 = vpop.f32.mrf.mxu0
        %v3736 = vadd.f32 0.0, %v3735
        %v3737 = vpop.f32.mrf.mxu0
        %v3738 = vadd.f32 0.0, %v3737
        %3739 = vmatmul.bf16.gmra.mxu0 %v3678
        %v3740 = vpop.f32.mrf.mxu0
        %v3741 = vadd.f32 0.0, %v3740
        %v3742 = vpop.f32.mrf.mxu0
        %v3743 = vadd.f32 0.0, %v3742
        %3744 = vmatmul.bf16.gmra.mxu0 %v3681
        %v3745 = vpop.f32.mrf.mxu0
        %v3746 = vadd.f32 0.0, %v3745
        %v3747 = vpop.f32.mrf.mxu0
        %v3748 = vadd.f32 0.0, %v3747
        %3749 = vmatmul.bf16.gmra.mxu0 %v3684
        %v3750 = vpop.f32.mrf.mxu0
        %v3751 = vadd.f32 0.0, %v3750
        %v3752 = vpop.f32.mrf.mxu0
        %v3753 = vadd.f32 0.0, %v3752
        %3754 = vmatmul.bf16.gmra.mxu0 %v3687
        %v3755 = vpop.f32.mrf.mxu0
        %v3756 = vadd.f32 0.0, %v3755
        %v3757 = vpop.f32.mrf.mxu0
        %v3758 = vadd.f32 0.0, %v3757
        %3759 = vmatmul.bf16.gmra.mxu0 %v3690
        %v3760 = vpop.f32.mrf.mxu0
        %v3761 = vadd.f32 0.0, %v3760
        %v3762 = vpop.f32.mrf.mxu0
        %v3763 = vadd.f32 0.0, %v3762
        %3764 = vmatmul.bf16.gmra.mxu0 %v3693
        %v3765 = vpop.f32.mrf.mxu0
        %v3766 = vadd.f32 0.0, %v3765
        %v3767 = vpop.f32.mrf.mxu0
        %v3768 = vadd.f32 0.0, %v3767
        %3769 = vmatmul.bf16.gmra.mxu0 %v3696
        %v3770 = vpop.f32.mrf.mxu0
        %v3771 = vadd.f32 0.0, %v3770
        %v3772 = vpop.f32.mrf.mxu0
        %v3773 = vadd.f32 0.0, %v3772
        %3774 = vmatmul.bf16.gmra.mxu0 %v3699
        %v3775 = vpop.f32.mrf.mxu0
        %v3776 = vadd.f32 0.0, %v3775
        %v3777 = vpop.f32.mrf.mxu0
        %v3778 = vadd.f32 0.0, %v3777
        %3779 = vmatmul.bf16.gmra.mxu0 %v3702
        %v3780 = vpop.f32.mrf.mxu0
        %v3781 = vadd.f32 0.0, %v3780
        %v3782 = vpop.f32.mrf.mxu0
        %v3783 = vadd.f32 0.0, %v3782
        %3784 = vmatmul.bf16.gmra.mxu0 %v3705
        %v3785 = vpop.f32.mrf.mxu0
        %v3786 = vadd.f32 0.0, %v3785
        %v3787 = vpop.f32.mrf.mxu0
        %v3788 = vadd.f32 0.0, %v3787
        %3789 = vmatmul.bf16.gmra.mxu0 %v3708
        %v3790 = vpop.f32.mrf.mxu0
        %v3791 = vadd.f32 0.0, %v3790
        %v3792 = vpop.f32.mrf.mxu0
        %v3793 = vadd.f32 0.0, %v3792
        %3794 = vmatmul.bf16.gmra.mxu0 %v3711
        %v3795 = vpop.f32.mrf.mxu0
        %v3796 = vadd.f32 0.0, %v3795
        %v3797 = vpop.f32.mrf.mxu0
        %v3798 = vadd.f32 0.0, %v3797
        %3799 = vmatmul.bf16.gmra.mxu0 %v3714
        %v3800 = vpop.f32.mrf.mxu0
        %v3801 = vadd.f32 0.0, %v3800
        %v3802 = vpop.f32.mrf.mxu0
        %v3803 = vadd.f32 0.0, %v3802
        %3804 = vdwg.mxu0
        %v3805 = vadd.f32 %v3523, %v3726
        %v3806 = vadd.f32 %v3524, %v3728
        %v3807 = vadd.f32 %v3525, %v3731
        %v3808 = vadd.f32 %v3526, %v3733
        %v3809 = vadd.f32 %v3527, %v3736
        %v3810 = vadd.f32 %v3528, %v3738
        %v3811 = vadd.f32 %v3529, %v3741
        %v3812 = vadd.f32 %v3530, %v3743
        %v3813 = vadd.f32 %v3531, %v3746
        %v3814 = vadd.f32 %v3532, %v3748
        %v3815 = vadd.f32 %v3533, %v3751
        %v3816 = vadd.f32 %v3534, %v3753
        %v3817 = vadd.f32 %v3535, %v3756
        %v3818 = vadd.f32 %v3536, %v3758
        %v3819 = vadd.f32 %v3537, %v3761
        %v3820 = vadd.f32 %v3538, %v3763
        %v3821 = vadd.f32 %v3539, %v3766
        %v3822 = vadd.f32 %v3540, %v3768
        %v3823 = vadd.f32 %v3541, %v3771
        %v3824 = vadd.f32 %v3542, %v3773
        %v3825 = vadd.f32 %v3543, %v3776
        %v3826 = vadd.f32 %v3544, %v3778
        %v3827 = vadd.f32 %v3545, %v3781
        %v3828 = vadd.f32 %v3546, %v3783
        %v3829 = vadd.f32 %v3547, %v3786
        %v3830 = vadd.f32 %v3548, %v3788
        %v3831 = vadd.f32 %v3549, %v3791
        %v3832 = vadd.f32 %v3550, %v3793
        %v3833 = vadd.f32 %v3551, %v3796
        %v3834 = vadd.f32 %v3552, %v3798
        %v3835 = vadd.f32 %v3553, %v3801
        %v3836 = vadd.f32 %v3554, %v3803
        %v3837 = vld [vmem:[%s1316 + $0x4] sm:$0xf]
        %v3838 = vld [vmem:[%s1316 + $0x8] sm:$0xf]
        %v3839 = vld [vmem:[%s1316 + $0xc] sm:$0x1]
        %v3840 = vld [vmem:[%s1316 + $0x14] sm:$0xf]
        %v3841 = vld [vmem:[%s1316 + $0x18] sm:$0xf]
        %v3842 = vld [vmem:[%s1316 + $0x1c] sm:$0x1]
        %v3843 = vld [vmem:[%s1316 + $0x24] sm:$0xf]
        %v3844 = vld [vmem:[%s1316 + $0x28] sm:$0xf]
        %v3845 = vld [vmem:[%s1316 + $0x2c] sm:$0x1]
        %v3846 = vld [vmem:[%s1316 + $0x34] sm:$0xf]
        %v3847 = vld [vmem:[%s1316 + $0x38] sm:$0xf]
        %v3848 = vld [vmem:[%s1316 + $0x3c] sm:$0x1]
        %v3849 = vld [vmem:[%s1316 + $0x44] sm:$0xf]
        %v3850 = vld [vmem:[%s1316 + $0x48] sm:$0xf]
        %v3851 = vld [vmem:[%s1316 + $0x4c] sm:$0x1]
        %v3852 = vld [vmem:[%s1316 + $0x54] sm:$0xf]
        %v3853 = vld [vmem:[%s1316 + $0x58] sm:$0xf]
        %v3854 = vld [vmem:[%s1316 + $0x5c] sm:$0x1]
        %v3855 = vld [vmem:[%s1316 + $0x64] sm:$0xf]
        %v3856 = vld [vmem:[%s1316 + $0x68] sm:$0xf]
        %v3857 = vld [vmem:[%s1316 + $0x6c] sm:$0x1]
        %v3858 = vld [vmem:[%s1316 + $0x74] sm:$0xf]
        %v3859 = vld [vmem:[%s1316 + $0x78] sm:$0xf]
        %v3860 = vld [vmem:[%s1316 + $0x7c] sm:$0x1]
        %v3861 = vld [vmem:[%s1316 + $0x84] sm:$0xf]
        %v3862 = vld [vmem:[%s1316 + $0x88] sm:$0xf]
        %v3863 = vld [vmem:[%s1316 + $0x8c] sm:$0x1]
        %v3864 = vld [vmem:[%s1316 + $0x94] sm:$0xf]
        %v3865 = vld [vmem:[%s1316 + $0x98] sm:$0xf]
        %v3866 = vld [vmem:[%s1316 + $0x9c] sm:$0x1]
        %v3867 = vld [vmem:[%s1316 + $0xa4] sm:$0xf]
        %v3868 = vld [vmem:[%s1316 + $0xa8] sm:$0xf]
        %v3869 = vld [vmem:[%s1316 + $0xac] sm:$0x1]
        %v3870 = vld [vmem:[%s1316 + $0xb4] sm:$0xf]
        %v3871 = vld [vmem:[%s1316 + $0xb8] sm:$0xf]
        %v3872 = vld [vmem:[%s1316 + $0xbc] sm:$0x1]
        %v3873 = vld [vmem:[%s1316 + $0xc4] sm:$0xf]
        %v3874 = vld [vmem:[%s1316 + $0xc8] sm:$0xf]
        %v3875 = vld [vmem:[%s1316 + $0xcc] sm:$0x1]
        %v3876 = vld [vmem:[%s1316 + $0xd4] sm:$0xf]
        %v3877 = vld [vmem:[%s1316 + $0xd8] sm:$0xf]
        %v3878 = vld [vmem:[%s1316 + $0xdc] sm:$0x1]
        %v3879 = vld [vmem:[%s1316 + $0xe4] sm:$0xf]
        %v3880 = vld [vmem:[%s1316 + $0xe8] sm:$0xf]
        %v3881 = vld [vmem:[%s1316 + $0xec] sm:$0x1]
        %v3882 = vld [vmem:[%s1316 + $0xf4] sm:$0xf]
        %v3883 = vld [vmem:[%s1316 + $0xf8] sm:$0xf]
        %v3884 = vld [vmem:[%s1316 + $0xfc] sm:$0x1]
        %v3886 = vshrl.u32 %v3837, 16
        %v3888 = vrot.slane %v3886, 4
        %v3889 = vshll.u32 %v3837, 16
        %v3891 = vrot.slane %v3889, 5
        %v3892 = vor.u32 %v3888, %v3891
        %v3893 = vrot.slane %v3892, 4
        %v3895 = vshll.u32 %v3838, 16
        %v3897 = vrot.slane %v3895, 5
        %v3898 = vsel %vm2270, %v3893, %v3897
        %v3899 = vshrl.u32 %v3838, 16
        %v3901 = vrot.slane %v3899, 4
        %v3902 = vor.u32 %v3901, %v3897
        %v3903 = vrot.slane %v3902, 4
        %v3905 = vshll.u32 %v3839, 16
        %v3907 = vrot.slane %v3905, 5
        %v3908 = vsel %vm2270, %v3903, %v3907
        %v3910 = vshrl.u32 %v3840, 16
        %v3912 = vrot.slane %v3910, 4
        %v3913 = vshll.u32 %v3840, 16
        %v3915 = vrot.slane %v3913, 5
        %v3916 = vor.u32 %v3912, %v3915
        %v3917 = vrot.slane %v3916, 4
        %v3919 = vshll.u32 %v3841, 16
        %v3921 = vrot.slane %v3919, 5
        %v3922 = vsel %vm2270, %v3917, %v3921
        %v3923 = vshrl.u32 %v3841, 16
        %v3925 = vrot.slane %v3923, 4
        %v3926 = vor.u32 %v3925, %v3921
        %v3927 = vrot.slane %v3926, 4
        %v3929 = vshll.u32 %v3842, 16
        %v3931 = vrot.slane %v3929, 5
        %v3932 = vsel %vm2270, %v3927, %v3931
        %v3934 = vshrl.u32 %v3843, 16
        %v3936 = vrot.slane %v3934, 4
        %v3937 = vshll.u32 %v3843, 16
        %v3939 = vrot.slane %v3937, 5
        %v3940 = vor.u32 %v3936, %v3939
        %v3941 = vrot.slane %v3940, 4
        %v3943 = vshll.u32 %v3844, 16
        %v3945 = vrot.slane %v3943, 5
        %v3946 = vsel %vm2270, %v3941, %v3945
        %v3947 = vshrl.u32 %v3844, 16
        %v3949 = vrot.slane %v3947, 4
        %v3950 = vor.u32 %v3949, %v3945
        %v3951 = vrot.slane %v3950, 4
        %v3953 = vshll.u32 %v3845, 16
        %v3955 = vrot.slane %v3953, 5
        %v3956 = vsel %vm2270, %v3951, %v3955
        %v3958 = vshrl.u32 %v3846, 16
        %v3960 = vrot.slane %v3958, 4
        %v3961 = vshll.u32 %v3846, 16
        %v3963 = vrot.slane %v3961, 5
        %v3964 = vor.u32 %v3960, %v3963
        %v3965 = vrot.slane %v3964, 4
        %v3967 = vshll.u32 %v3847, 16
        %v3969 = vrot.slane %v3967, 5
        %v3970 = vsel %vm2270, %v3965, %v3969
        %v3971 = vshrl.u32 %v3847, 16
        %v3973 = vrot.slane %v3971, 4
        %v3974 = vor.u32 %v3973, %v3969
        %v3975 = vrot.slane %v3974, 4
        %v3977 = vshll.u32 %v3848, 16
        %v3979 = vrot.slane %v3977, 5
        %v3980 = vsel %vm2270, %v3975, %v3979
        %v3982 = vshrl.u32 %v3849, 16
        %v3984 = vrot.slane %v3982, 4
        %v3985 = vshll.u32 %v3849, 16
        %v3987 = vrot.slane %v3985, 5
        %v3988 = vor.u32 %v3984, %v3987
        %v3989 = vrot.slane %v3988, 4
        %v3991 = vshll.u32 %v3850, 16
        %v3993 = vrot.slane %v3991, 5
        %v3994 = vsel %vm2270, %v3989, %v3993
        %v3995 = vshrl.u32 %v3850, 16
        %v3997 = vrot.slane %v3995, 4
        %v3998 = vor.u32 %v3997, %v3993
        %v3999 = vrot.slane %v3998, 4
        %v4001 = vshll.u32 %v3851, 16
        %v4003 = vrot.slane %v4001, 5
        %v4004 = vsel %vm2270, %v3999, %v4003
        %v4006 = vshrl.u32 %v3852, 16
        %v4008 = vrot.slane %v4006, 4
        %v4009 = vshll.u32 %v3852, 16
        %v4011 = vrot.slane %v4009, 5
        %v4012 = vor.u32 %v4008, %v4011
        %v4013 = vrot.slane %v4012, 4
        %v4015 = vshll.u32 %v3853, 16
        %v4017 = vrot.slane %v4015, 5
        %v4018 = vsel %vm2270, %v4013, %v4017
        %v4019 = vshrl.u32 %v3853, 16
        %v4021 = vrot.slane %v4019, 4
        %v4022 = vor.u32 %v4021, %v4017
        %v4023 = vrot.slane %v4022, 4
        %v4025 = vshll.u32 %v3854, 16
        %v4027 = vrot.slane %v4025, 5
        %v4028 = vsel %vm2270, %v4023, %v4027
        %v4030 = vshrl.u32 %v3855, 16
        %v4032 = vrot.slane %v4030, 4
        %v4033 = vshll.u32 %v3855, 16
        %v4035 = vrot.slane %v4033, 5
        %v4036 = vor.u32 %v4032, %v4035
        %v4037 = vrot.slane %v4036, 4
        %v4039 = vshll.u32 %v3856, 16
        %v4041 = vrot.slane %v4039, 5
        %v4042 = vsel %vm2270, %v4037, %v4041
        %v4043 = vshrl.u32 %v3856, 16
        %v4045 = vrot.slane %v4043, 4
        %v4046 = vor.u32 %v4045, %v4041
        %v4047 = vrot.slane %v4046, 4
        %v4049 = vshll.u32 %v3857, 16
        %v4051 = vrot.slane %v4049, 5
        %v4052 = vsel %vm2270, %v4047, %v4051
        %v4054 = vshrl.u32 %v3858, 16
        %v4056 = vrot.slane %v4054, 4
        %v4057 = vshll.u32 %v3858, 16
        %v4059 = vrot.slane %v4057, 5
        %v4060 = vor.u32 %v4056, %v4059
        %v4061 = vrot.slane %v4060, 4
        %v4063 = vshll.u32 %v3859, 16
        %v4065 = vrot.slane %v4063, 5
        %v4066 = vsel %vm2270, %v4061, %v4065
        %v4067 = vshrl.u32 %v3859, 16
        %v4069 = vrot.slane %v4067, 4
        %v4070 = vor.u32 %v4069, %v4065
        %v4071 = vrot.slane %v4070, 4
        %v4073 = vshll.u32 %v3860, 16
        %v4075 = vrot.slane %v4073, 5
        %v4076 = vsel %vm2270, %v4071, %v4075
        %v4078 = vshrl.u32 %v3861, 16
        %v4080 = vrot.slane %v4078, 4
        %v4081 = vshll.u32 %v3861, 16
        %v4083 = vrot.slane %v4081, 5
        %v4084 = vor.u32 %v4080, %v4083
        %v4085 = vrot.slane %v4084, 4
        %v4087 = vshll.u32 %v3862, 16
        %v4089 = vrot.slane %v4087, 5
        %v4090 = vsel %vm2270, %v4085, %v4089
        %v4091 = vshrl.u32 %v3862, 16
        %v4093 = vrot.slane %v4091, 4
        %v4094 = vor.u32 %v4093, %v4089
        %v4095 = vrot.slane %v4094, 4
        %v4097 = vshll.u32 %v3863, 16
        %v4099 = vrot.slane %v4097, 5
        %v4100 = vsel %vm2270, %v4095, %v4099
        %v4102 = vshrl.u32 %v3864, 16
        %v4104 = vrot.slane %v4102, 4
        %v4105 = vshll.u32 %v3864, 16
        %v4107 = vrot.slane %v4105, 5
        %v4108 = vor.u32 %v4104, %v4107
        %v4109 = vrot.slane %v4108, 4
        %v4111 = vshll.u32 %v3865, 16
        %v4113 = vrot.slane %v4111, 5
        %v4114 = vsel %vm2270, %v4109, %v4113
        %v4115 = vshrl.u32 %v3865, 16
        %v4117 = vrot.slane %v4115, 4
        %v4118 = vor.u32 %v4117, %v4113
        %v4119 = vrot.slane %v4118, 4
        %v4121 = vshll.u32 %v3866, 16
        %v4123 = vrot.slane %v4121, 5
        %v4124 = vsel %vm2270, %v4119, %v4123
        %v4126 = vshrl.u32 %v3867, 16
        %v4128 = vrot.slane %v4126, 4
        %v4129 = vshll.u32 %v3867, 16
        %v4131 = vrot.slane %v4129, 5
        %v4132 = vor.u32 %v4128, %v4131
        %v4133 = vrot.slane %v4132, 4
        %v4135 = vshll.u32 %v3868, 16
        %v4137 = vrot.slane %v4135, 5
        %v4138 = vsel %vm2270, %v4133, %v4137
        %v4139 = vshrl.u32 %v3868, 16
        %v4141 = vrot.slane %v4139, 4
        %v4142 = vor.u32 %v4141, %v4137
        %v4143 = vrot.slane %v4142, 4
        %v4145 = vshll.u32 %v3869, 16
        %v4147 = vrot.slane %v4145, 5
        %v4148 = vsel %vm2270, %v4143, %v4147
        %v4150 = vshrl.u32 %v3870, 16
        %v4152 = vrot.slane %v4150, 4
        %v4153 = vshll.u32 %v3870, 16
        %v4155 = vrot.slane %v4153, 5
        %v4156 = vor.u32 %v4152, %v4155
        %v4157 = vrot.slane %v4156, 4
        %v4159 = vshll.u32 %v3871, 16
        %v4161 = vrot.slane %v4159, 5
        %v4162 = vsel %vm2270, %v4157, %v4161
        %v4163 = vshrl.u32 %v3871, 16
        %v4165 = vrot.slane %v4163, 4
        %v4166 = vor.u32 %v4165, %v4161
        %v4167 = vrot.slane %v4166, 4
        %v4169 = vshll.u32 %v3872, 16
        %v4171 = vrot.slane %v4169, 5
        %v4172 = vsel %vm2270, %v4167, %v4171
        %v4174 = vshrl.u32 %v3873, 16
        %v4176 = vrot.slane %v4174, 4
        %v4177 = vshll.u32 %v3873, 16
        %v4179 = vrot.slane %v4177, 5
        %v4180 = vor.u32 %v4176, %v4179
        %v4181 = vrot.slane %v4180, 4
        %v4183 = vshll.u32 %v3874, 16
        %v4185 = vrot.slane %v4183, 5
        %v4186 = vsel %vm2270, %v4181, %v4185
        %v4187 = vshrl.u32 %v3874, 16
        %v4189 = vrot.slane %v4187, 4
        %v4190 = vor.u32 %v4189, %v4185
        %v4191 = vrot.slane %v4190, 4
        %v4193 = vshll.u32 %v3875, 16
        %v4195 = vrot.slane %v4193, 5
        %v4196 = vsel %vm2270, %v4191, %v4195
        %v4198 = vshrl.u32 %v3876, 16
        %v4200 = vrot.slane %v4198, 4
        %v4201 = vshll.u32 %v3876, 16
        %v4203 = vrot.slane %v4201, 5
        %v4204 = vor.u32 %v4200, %v4203
        %v4205 = vrot.slane %v4204, 4
        %v4207 = vshll.u32 %v3877, 16
        %v4209 = vrot.slane %v4207, 5
        %v4210 = vsel %vm2270, %v4205, %v4209
        %v4211 = vshrl.u32 %v3877, 16
        %v4213 = vrot.slane %v4211, 4
        %v4214 = vor.u32 %v4213, %v4209
        %v4215 = vrot.slane %v4214, 4
        %v4217 = vshll.u32 %v3878, 16
        %v4219 = vrot.slane %v4217, 5
        %v4220 = vsel %vm2270, %v4215, %v4219
        %v4222 = vshrl.u32 %v3879, 16
        %v4224 = vrot.slane %v4222, 4
        %v4225 = vshll.u32 %v3879, 16
        %v4227 = vrot.slane %v4225, 5
        %v4228 = vor.u32 %v4224, %v4227
        %v4229 = vrot.slane %v4228, 4
        %v4231 = vshll.u32 %v3880, 16
        %v4233 = vrot.slane %v4231, 5
        %v4234 = vsel %vm2270, %v4229, %v4233
        %v4235 = vshrl.u32 %v3880, 16
        %v4237 = vrot.slane %v4235, 4
        %v4238 = vor.u32 %v4237, %v4233
        %v4239 = vrot.slane %v4238, 4
        %v4241 = vshll.u32 %v3881, 16
        %v4243 = vrot.slane %v4241, 5
        %v4244 = vsel %vm2270, %v4239, %v4243
        %v4246 = vshrl.u32 %v3882, 16
        %v4248 = vrot.slane %v4246, 4
        %v4249 = vshll.u32 %v3882, 16
        %v4251 = vrot.slane %v4249, 5
        %v4252 = vor.u32 %v4248, %v4251
        %v4253 = vrot.slane %v4252, 4
        %v4255 = vshll.u32 %v3883, 16
        %v4257 = vrot.slane %v4255, 5
        %v4258 = vsel %vm2270, %v4253, %v4257
        %v4259 = vshrl.u32 %v3883, 16
        %v4261 = vrot.slane %v4259, 4
        %v4262 = vor.u32 %v4261, %v4257
        %v4263 = vrot.slane %v4262, 4
        %v4265 = vshll.u32 %v3884, 16
        %v4267 = vrot.slane %v4265, 5
        %v4268 = vsel %vm2270, %v4263, %v4267
        %s4269 = scalar_lea.vmem [#allocation6], 160
        %v4270 = vld [vmem:[%s4269] sm:$0xf]
        %v4271 = vld [vmem:[%s4269 + $0x4] sm:$0xf]
        %v4272 = vld [vmem:[%s4269 + $0x8] sm:$0xf]
        %v4273 = vld [vmem:[%s4269 + $0xc] sm:$0xf]
        %v4274 = vld [vmem:[%s4269 + $0x10] sm:$0xf]
        %v4275 = vld [vmem:[%s4269 + $0x14] sm:$0xf]
        %v4276 = vld [vmem:[%s4269 + $0x18] sm:$0xf]
        %v4277 = vld [vmem:[%s4269 + $0x1c] sm:$0xf]
        %v4278 = vunpack.c.l.b16 %v3898
        %v4279 = vunpack.c.l.b16 %v3908
        %v4280 = vunpack.c.l.b16 %v3922
        %v4281 = vunpack.c.l.b16 %v3932
        %v4282 = vunpack.c.l.b16 %v3946
        %v4283 = vunpack.c.l.b16 %v3956
        %v4284 = vunpack.c.l.b16 %v3970
        %v4285 = vunpack.c.l.b16 %v3980
        %v4286 = vunpack.c.l.b16 %v3994
        %v4287 = vunpack.c.l.b16 %v4004
        %v4288 = vunpack.c.l.b16 %v4018
        %v4289 = vunpack.c.l.b16 %v4028
        %v4290 = vunpack.c.l.b16 %v4042
        %v4291 = vunpack.c.l.b16 %v4052
        %v4292 = vunpack.c.l.b16 %v4066
        %v4293 = vunpack.c.l.b16 %v4076
        %v4294 = vunpack.c.l.b16 %v4090
        %v4295 = vunpack.c.l.b16 %v4100
        %v4296 = vunpack.c.l.b16 %v4114
        %v4297 = vunpack.c.l.b16 %v4124
        %v4298 = vunpack.c.l.b16 %v4138
        %v4299 = vunpack.c.l.b16 %v4148
        %v4300 = vunpack.c.l.b16 %v4162
        %v4301 = vunpack.c.l.b16 %v4172
        %v4302 = vunpack.c.l.b16 %v4186
        %v4303 = vunpack.c.l.b16 %v4196
        %v4304 = vunpack.c.l.b16 %v4210
        %v4305 = vunpack.c.l.b16 %v4220
        %v4306 = vunpack.c.l.b16 %v4234
        %v4307 = vunpack.c.l.b16 %v4244
        %v4308 = vunpack.c.l.b16 %v4258
        %v4309 = vunpack.c.l.b16 %v4268
        %v4310 = vpack.c.b16 %v4279, %v4278
        %v4311 = vpack.c.b16 %v4281, %v4280
        %v4312 = vpack.c.b16 %v4283, %v4282
        %v4313 = vpack.c.b16 %v4285, %v4284
        %v4314 = vpack.c.b16 %v4287, %v4286
        %v4315 = vpack.c.b16 %v4289, %v4288
        %v4316 = vpack.c.b16 %v4291, %v4290
        %v4317 = vpack.c.b16 %v4293, %v4292
        %v4318 = vpack.c.b16 %v4295, %v4294
        %v4319 = vpack.c.b16 %v4297, %v4296
        %v4320 = vpack.c.b16 %v4299, %v4298
        %v4321 = vpack.c.b16 %v4301, %v4300
        %v4322 = vpack.c.b16 %v4303, %v4302
        %v4323 = vpack.c.b16 %v4305, %v4304
        %v4324 = vpack.c.b16 %v4307, %v4306
        %v4325 = vpack.c.b16 %v4309, %v4308
        %v4334 = vunpack.c.l.b16 %v4270
        %v4335 = vunpack.c.l.b16 %v4271
        %v4336 = vunpack.c.l.b16 %v4272
        %v4337 = vunpack.c.l.b16 %v4273
        %v4338 = vunpack.c.l.b16 %v4274
        %v4339 = vunpack.c.l.b16 %v4275
        %v4340 = vunpack.c.l.b16 %v4276
        %v4341 = vunpack.c.l.b16 %v4277
        %v4342 = vpack.c.b16 %v4335, %v4334
        %v4343 = vpack.c.b16 %v4337, %v4336
        %v4344 = vpack.c.b16 %v4339, %v4338
        %v4345 = vpack.c.b16 %v4341, %v4340
        %v4351 = vsel %vm1873, %v4310, 0
        %v4354 = vsel %vm1873, %v4311, 0
        %v4357 = vsel %vm1873, %v4312, 0
        %v4360 = vsel %vm1873, %v4313, 0
        %v4363 = vsel %vm1873, %v4314, 0
        %v4366 = vsel %vm1873, %v4315, 0
        %v4369 = vsel %vm1873, %v4316, 0
        %v4372 = vsel %vm1873, %v4317, 0
        %v4375 = vsel %vm1873, %v4318, 0
        %v4378 = vsel %vm1873, %v4319, 0
        %v4381 = vsel %vm1873, %v4320, 0
        %v4384 = vsel %vm1873, %v4321, 0
        %v4387 = vsel %vm1873, %v4322, 0
        %v4390 = vsel %vm1873, %v4323, 0
        %v4393 = vsel %vm1873, %v4324, 0
        %v4396 = vsel %vm1873, %v4325, 0
        %4398 = vmatpush.bf16.msra.mxu0 0
        %4399 = vmatpush.bf16.msra.mxu0 0
        %4400 = vmatpush.bf16.msra.mxu0 0
        %4401 = vmatpush.bf16.msra.mxu0 0
        %4402 = vmatpush.bf16.msra.mxu0 %v4345
        %4403 = vmatpush.bf16.msra.mxu0 %v4344
        %4404 = vmatpush.bf16.msra.mxu0 %v4343
        %4405 = vmatpush.bf16.msra.mxu0 %v4342
        %4406 = vmatmul.bf16.gmra.mxu0 %v4351
        %v4407 = vpop.f32.mrf.mxu0
        %v4408 = vadd.f32 0.0, %v4407
        %v4409 = vpop.f32.mrf.mxu0
        %v4410 = vadd.f32 0.0, %v4409
        %4411 = vmatmul.bf16.gmra.mxu0 %v4354
        %v4412 = vpop.f32.mrf.mxu0
        %v4413 = vadd.f32 0.0, %v4412
        %v4414 = vpop.f32.mrf.mxu0
        %v4415 = vadd.f32 0.0, %v4414
        %4416 = vmatmul.bf16.gmra.mxu0 %v4357
        %v4417 = vpop.f32.mrf.mxu0
        %v4418 = vadd.f32 0.0, %v4417
        %v4419 = vpop.f32.mrf.mxu0
        %v4420 = vadd.f32 0.0, %v4419
        %4421 = vmatmul.bf16.gmra.mxu0 %v4360
        %v4422 = vpop.f32.mrf.mxu0
        %v4423 = vadd.f32 0.0, %v4422
        %v4424 = vpop.f32.mrf.mxu0
        %v4425 = vadd.f32 0.0, %v4424
        %4426 = vmatmul.bf16.gmra.mxu0 %v4363
        %v4427 = vpop.f32.mrf.mxu0
        %v4428 = vadd.f32 0.0, %v4427
        %v4429 = vpop.f32.mrf.mxu0
        %v4430 = vadd.f32 0.0, %v4429
        %4431 = vmatmul.bf16.gmra.mxu0 %v4366
        %v4432 = vpop.f32.mrf.mxu0
        %v4433 = vadd.f32 0.0, %v4432
        %v4434 = vpop.f32.mrf.mxu0
        %v4435 = vadd.f32 0.0, %v4434
        %4436 = vmatmul.bf16.gmra.mxu0 %v4369
        %v4437 = vpop.f32.mrf.mxu0
        %v4438 = vadd.f32 0.0, %v4437
        %v4439 = vpop.f32.mrf.mxu0
        %v4440 = vadd.f32 0.0, %v4439
        %4441 = vmatmul.bf16.gmra.mxu0 %v4372
        %v4442 = vpop.f32.mrf.mxu0
        %v4443 = vadd.f32 0.0, %v4442
        %v4444 = vpop.f32.mrf.mxu0
        %v4445 = vadd.f32 0.0, %v4444
        %4446 = vmatmul.bf16.gmra.mxu0 %v4375
        %v4447 = vpop.f32.mrf.mxu0
        %v4448 = vadd.f32 0.0, %v4447
        %v4449 = vpop.f32.mrf.mxu0
        %v4450 = vadd.f32 0.0, %v4449
        %4451 = vmatmul.bf16.gmra.mxu0 %v4378
        %v4452 = vpop.f32.mrf.mxu0
        %v4453 = vadd.f32 0.0, %v4452
        %v4454 = vpop.f32.mrf.mxu0
        %v4455 = vadd.f32 0.0, %v4454
        %4456 = vmatmul.bf16.gmra.mxu0 %v4381
        %v4457 = vpop.f32.mrf.mxu0
        %v4458 = vadd.f32 0.0, %v4457
        %v4459 = vpop.f32.mrf.mxu0
        %v4460 = vadd.f32 0.0, %v4459
        %4461 = vmatmul.bf16.gmra.mxu0 %v4384
        %v4462 = vpop.f32.mrf.mxu0
        %v4463 = vadd.f32 0.0, %v4462
        %v4464 = vpop.f32.mrf.mxu0
        %v4465 = vadd.f32 0.0, %v4464
        %4466 = vmatmul.bf16.gmra.mxu0 %v4387
        %v4467 = vpop.f32.mrf.mxu0
        %v4468 = vadd.f32 0.0, %v4467
        %v4469 = vpop.f32.mrf.mxu0
        %v4470 = vadd.f32 0.0, %v4469
        %4471 = vmatmul.bf16.gmra.mxu0 %v4390
        %v4472 = vpop.f32.mrf.mxu0
        %v4473 = vadd.f32 0.0, %v4472
        %v4474 = vpop.f32.mrf.mxu0
        %v4475 = vadd.f32 0.0, %v4474
        %4476 = vmatmul.bf16.gmra.mxu0 %v4393
        %v4477 = vpop.f32.mrf.mxu0
        %v4478 = vadd.f32 0.0, %v4477
        %v4479 = vpop.f32.mrf.mxu0
        %v4480 = vadd.f32 0.0, %v4479
        %4481 = vmatmul.bf16.gmra.mxu0 %v4396
        %v4482 = vpop.f32.mrf.mxu0
        %v4483 = vadd.f32 0.0, %v4482
        %v4484 = vpop.f32.mrf.mxu0
        %v4485 = vadd.f32 0.0, %v4484
        %4486 = vdwg.mxu0
        %v4487 = vadd.f32 %v3805, %v4408
        %v4488 = vadd.f32 %v3806, %v4410
        %v4489 = vadd.f32 %v3807, %v4413
        %v4490 = vadd.f32 %v3808, %v4415
        %v4491 = vadd.f32 %v3809, %v4418
        %v4492 = vadd.f32 %v3810, %v4420
        %v4493 = vadd.f32 %v3811, %v4423
        %v4494 = vadd.f32 %v3812, %v4425
        %v4495 = vadd.f32 %v3813, %v4428
        %v4496 = vadd.f32 %v3814, %v4430
        %v4497 = vadd.f32 %v3815, %v4433
        %v4498 = vadd.f32 %v3816, %v4435
        %v4499 = vadd.f32 %v3817, %v4438
        %v4500 = vadd.f32 %v3818, %v4440
        %v4501 = vadd.f32 %v3819, %v4443
        %v4502 = vadd.f32 %v3820, %v4445
        %v4503 = vadd.f32 %v3821, %v4448
        %v4504 = vadd.f32 %v3822, %v4450
        %v4505 = vadd.f32 %v3823, %v4453
        %v4506 = vadd.f32 %v3824, %v4455
        %v4507 = vadd.f32 %v3825, %v4458
        %v4508 = vadd.f32 %v3826, %v4460
        %v4509 = vadd.f32 %v3827, %v4463
        %v4510 = vadd.f32 %v3828, %v4465
        %v4511 = vadd.f32 %v3829, %v4468
        %v4512 = vadd.f32 %v3830, %v4470
        %v4513 = vadd.f32 %v3831, %v4473
        %v4514 = vadd.f32 %v3832, %v4475
        %v4515 = vadd.f32 %v3833, %v4478
        %v4516 = vadd.f32 %v3834, %v4480
        %v4517 = vadd.f32 %v3835, %v4483
        %v4518 = vadd.f32 %v3836, %v4485
        %s4519 = scalar_lea.vmem [#allocation2], 32
        %v4520 = vld [vmem:[%s4519] sm:$0x8]
        %v4521 = vld [vmem:[%s4519 + $0x4] sm:$0xf]
        %v4522 = vld [vmem:[%s4519 + $0x8] sm:$0xf]
        %v4523 = vld [vmem:[%s4519 + $0x10] sm:$0x8]
        %v4524 = vld [vmem:[%s4519 + $0x14] sm:$0xf]
        %v4525 = vld [vmem:[%s4519 + $0x18] sm:$0xf]
        %v4526 = vld [vmem:[%s4519 + $0x20] sm:$0x8]
        %v4527 = vld [vmem:[%s4519 + $0x24] sm:$0xf]
        %v4528 = vld [vmem:[%s4519 + $0x28] sm:$0xf]
        %v4529 = vld [vmem:[%s4519 + $0x30] sm:$0x8]
        %v4530 = vld [vmem:[%s4519 + $0x34] sm:$0xf]
        %v4531 = vld [vmem:[%s4519 + $0x38] sm:$0xf]
        %v4532 = vld [vmem:[%s4519 + $0x40] sm:$0x8]
        %v4533 = vld [vmem:[%s4519 + $0x44] sm:$0xf]
        %v4534 = vld [vmem:[%s4519 + $0x48] sm:$0xf]
        %v4535 = vld [vmem:[%s4519 + $0x50] sm:$0x8]
        %v4536 = vld [vmem:[%s4519 + $0x54] sm:$0xf]
        %v4537 = vld [vmem:[%s4519 + $0x58] sm:$0xf]
        %v4538 = vld [vmem:[%s4519 + $0x60] sm:$0x8]
        %v4539 = vld [vmem:[%s4519 + $0x64] sm:$0xf]
        %v4540 = vld [vmem:[%s4519 + $0x68] sm:$0xf]
        %v4541 = vld [vmem:[%s4519 + $0x70] sm:$0x8]
        %v4542 = vld [vmem:[%s4519 + $0x74] sm:$0xf]
        %v4543 = vld [vmem:[%s4519 + $0x78] sm:$0xf]
        %v4544 = vld [vmem:[%s4519 + $0x80] sm:$0x8]
        %v4545 = vld [vmem:[%s4519 + $0x84] sm:$0xf]
        %v4546 = vld [vmem:[%s4519 + $0x88] sm:$0xf]
        %v4547 = vld [vmem:[%s4519 + $0x90] sm:$0x8]
        %v4548 = vld [vmem:[%s4519 + $0x94] sm:$0xf]
        %v4549 = vld [vmem:[%s4519 + $0x98] sm:$0xf]
        %v4550 = vld [vmem:[%s4519 + $0xa0] sm:$0x8]
        %v4551 = vld [vmem:[%s4519 + $0xa4] sm:$0xf]
        %v4552 = vld [vmem:[%s4519 + $0xa8] sm:$0xf]
        %v4553 = vld [vmem:[%s4519 + $0xb0] sm:$0x8]
        %v4554 = vld [vmem:[%s4519 + $0xb4] sm:$0xf]
        %v4555 = vld [vmem:[%s4519 + $0xb8] sm:$0xf]
        %v4556 = vld [vmem:[%s4519 + $0xc0] sm:$0x8]
        %v4557 = vld [vmem:[%s4519 + $0xc4] sm:$0xf]
        %v4558 = vld [vmem:[%s4519 + $0xc8] sm:$0xf]
        %v4559 = vld [vmem:[%s4519 + $0xd0] sm:$0x8]
        %v4560 = vld [vmem:[%s4519 + $0xd4] sm:$0xf]
        %v4561 = vld [vmem:[%s4519 + $0xd8] sm:$0xf]
        %v4562 = vld [vmem:[%s4519 + $0xe0] sm:$0x8]
        %v4563 = vld [vmem:[%s4519 + $0xe4] sm:$0xf]
        %v4564 = vld [vmem:[%s4519 + $0xe8] sm:$0xf]
        %v4565 = vld [vmem:[%s4519 + $0xf0] sm:$0x8]
        %v4566 = vld [vmem:[%s4519 + $0xf4] sm:$0xf]
        %v4567 = vld [vmem:[%s4519 + $0xf8] sm:$0xf]
        %v4569 = vshrl.u32 %v4520, 16
        %v4571 = vrot.slane %v4569, 7
        %v4572 = vrot.slane %v4571, 4
        %v4574 = vshrl.u32 %v4521, 16
        %v4576 = vrot.slane %v4574, 7
        %v4577 = vshll.u32 %v4521, 16
        %v4579 = vor.u32 %v4576, %v4577
        %v4580 = vsel %vm1399, %v4572, %v4579
        %v4581 = vrot.slane %v4576, 4
        %v4583 = vshrl.u32 %v4522, 16
        %v4585 = vrot.slane %v4583, 7
        %v4586 = vshll.u32 %v4522, 16
        %v4588 = vor.u32 %v4585, %v4586
        %v4589 = vsel %vm1399, %v4581, %v4588
        %v4591 = vshrl.u32 %v4523, 16
        %v4593 = vrot.slane %v4591, 7
        %v4594 = vrot.slane %v4593, 4
        %v4596 = vshrl.u32 %v4524, 16
        %v4598 = vrot.slane %v4596, 7
        %v4599 = vshll.u32 %v4524, 16
        %v4601 = vor.u32 %v4598, %v4599
        %v4602 = vsel %vm1399, %v4594, %v4601
        %v4603 = vrot.slane %v4598, 4
        %v4605 = vshrl.u32 %v4525, 16
        %v4607 = vrot.slane %v4605, 7
        %v4608 = vshll.u32 %v4525, 16
        %v4610 = vor.u32 %v4607, %v4608
        %v4611 = vsel %vm1399, %v4603, %v4610
        %v4613 = vshrl.u32 %v4526, 16
        %v4615 = vrot.slane %v4613, 7
        %v4616 = vrot.slane %v4615, 4
        %v4618 = vshrl.u32 %v4527, 16
        %v4620 = vrot.slane %v4618, 7
        %v4621 = vshll.u32 %v4527, 16
        %v4623 = vor.u32 %v4620, %v4621
        %v4624 = vsel %vm1399, %v4616, %v4623
        %v4625 = vrot.slane %v4620, 4
        %v4627 = vshrl.u32 %v4528, 16
        %v4629 = vrot.slane %v4627, 7
        %v4630 = vshll.u32 %v4528, 16
        %v4632 = vor.u32 %v4629, %v4630
        %v4633 = vsel %vm1399, %v4625, %v4632
        %v4635 = vshrl.u32 %v4529, 16
        %v4637 = vrot.slane %v4635, 7
        %v4638 = vrot.slane %v4637, 4
        %v4640 = vshrl.u32 %v4530, 16
        %v4642 = vrot.slane %v4640, 7
        %v4643 = vshll.u32 %v4530, 16
        %v4645 = vor.u32 %v4642, %v4643
        %v4646 = vsel %vm1399, %v4638, %v4645
        %v4647 = vrot.slane %v4642, 4
        %v4649 = vshrl.u32 %v4531, 16
        %v4651 = vrot.slane %v4649, 7
        %v4652 = vshll.u32 %v4531, 16
        %v4654 = vor.u32 %v4651, %v4652
        %v4655 = vsel %vm1399, %v4647, %v4654
        %v4657 = vshrl.u32 %v4532, 16
        %v4659 = vrot.slane %v4657, 7
        %v4660 = vrot.slane %v4659, 4
        %v4662 = vshrl.u32 %v4533, 16
        %v4664 = vrot.slane %v4662, 7
        %v4665 = vshll.u32 %v4533, 16
        %v4667 = vor.u32 %v4664, %v4665
        %v4668 = vsel %vm1399, %v4660, %v4667
        %v4669 = vrot.slane %v4664, 4
        %v4671 = vshrl.u32 %v4534, 16
        %v4673 = vrot.slane %v4671, 7
        %v4674 = vshll.u32 %v4534, 16
        %v4676 = vor.u32 %v4673, %v4674
        %v4677 = vsel %vm1399, %v4669, %v4676
        %v4679 = vshrl.u32 %v4535, 16
        %v4681 = vrot.slane %v4679, 7
        %v4682 = vrot.slane %v4681, 4
        %v4684 = vshrl.u32 %v4536, 16
        %v4686 = vrot.slane %v4684, 7
        %v4687 = vshll.u32 %v4536, 16
        %v4689 = vor.u32 %v4686, %v4687
        %v4690 = vsel %vm1399, %v4682, %v4689
        %v4691 = vrot.slane %v4686, 4
        %v4693 = vshrl.u32 %v4537, 16
        %v4695 = vrot.slane %v4693, 7
        %v4696 = vshll.u32 %v4537, 16
        %v4698 = vor.u32 %v4695, %v4696
        %v4699 = vsel %vm1399, %v4691, %v4698
        %v4701 = vshrl.u32 %v4538, 16
        %v4703 = vrot.slane %v4701, 7
        %v4704 = vrot.slane %v4703, 4
        %v4706 = vshrl.u32 %v4539, 16
        %v4708 = vrot.slane %v4706, 7
        %v4709 = vshll.u32 %v4539, 16
        %v4711 = vor.u32 %v4708, %v4709
        %v4712 = vsel %vm1399, %v4704, %v4711
        %v4713 = vrot.slane %v4708, 4
        %v4715 = vshrl.u32 %v4540, 16
        %v4717 = vrot.slane %v4715, 7
        %v4718 = vshll.u32 %v4540, 16
        %v4720 = vor.u32 %v4717, %v4718
        %v4721 = vsel %vm1399, %v4713, %v4720
        %v4723 = vshrl.u32 %v4541, 16
        %v4725 = vrot.slane %v4723, 7
        %v4726 = vrot.slane %v4725, 4
        %v4728 = vshrl.u32 %v4542, 16
        %v4730 = vrot.slane %v4728, 7
        %v4731 = vshll.u32 %v4542, 16
        %v4733 = vor.u32 %v4730, %v4731
        %v4734 = vsel %vm1399, %v4726, %v4733
        %v4735 = vrot.slane %v4730, 4
        %v4737 = vshrl.u32 %v4543, 16
        %v4739 = vrot.slane %v4737, 7
        %v4740 = vshll.u32 %v4543, 16
        %v4742 = vor.u32 %v4739, %v4740
        %v4743 = vsel %vm1399, %v4735, %v4742
        %v4745 = vshrl.u32 %v4544, 16
        %v4747 = vrot.slane %v4745, 7
        %v4748 = vrot.slane %v4747, 4
        %v4750 = vshrl.u32 %v4545, 16
        %v4752 = vrot.slane %v4750, 7
        %v4753 = vshll.u32 %v4545, 16
        %v4755 = vor.u32 %v4752, %v4753
        %v4756 = vsel %vm1399, %v4748, %v4755
        %v4757 = vrot.slane %v4752, 4
        %v4759 = vshrl.u32 %v4546, 16
        %v4761 = vrot.slane %v4759, 7
        %v4762 = vshll.u32 %v4546, 16
        %v4764 = vor.u32 %v4761, %v4762
        %v4765 = vsel %vm1399, %v4757, %v4764
        %v4767 = vshrl.u32 %v4547, 16
        %v4769 = vrot.slane %v4767, 7
        %v4770 = vrot.slane %v4769, 4
        %v4772 = vshrl.u32 %v4548, 16
        %v4774 = vrot.slane %v4772, 7
        %v4775 = vshll.u32 %v4548, 16
        %v4777 = vor.u32 %v4774, %v4775
        %v4778 = vsel %vm1399, %v4770, %v4777
        %v4779 = vrot.slane %v4774, 4
        %v4781 = vshrl.u32 %v4549, 16
        %v4783 = vrot.slane %v4781, 7
        %v4784 = vshll.u32 %v4549, 16
        %v4786 = vor.u32 %v4783, %v4784
        %v4787 = vsel %vm1399, %v4779, %v4786
        %v4789 = vshrl.u32 %v4550, 16
        %v4791 = vrot.slane %v4789, 7
        %v4792 = vrot.slane %v4791, 4
        %v4794 = vshrl.u32 %v4551, 16
        %v4796 = vrot.slane %v4794, 7
        %v4797 = vshll.u32 %v4551, 16
        %v4799 = vor.u32 %v4796, %v4797
        %v4800 = vsel %vm1399, %v4792, %v4799
        %v4801 = vrot.slane %v4796, 4
        %v4803 = vshrl.u32 %v4552, 16
        %v4805 = vrot.slane %v4803, 7
        %v4806 = vshll.u32 %v4552, 16
        %v4808 = vor.u32 %v4805, %v4806
        %v4809 = vsel %vm1399, %v4801, %v4808
        %v4811 = vshrl.u32 %v4553, 16
        %v4813 = vrot.slane %v4811, 7
        %v4814 = vrot.slane %v4813, 4
        %v4816 = vshrl.u32 %v4554, 16
        %v4818 = vrot.slane %v4816, 7
        %v4819 = vshll.u32 %v4554, 16
        %v4821 = vor.u32 %v4818, %v4819
        %v4822 = vsel %vm1399, %v4814, %v4821
        %v4823 = vrot.slane %v4818, 4
        %v4825 = vshrl.u32 %v4555, 16
        %v4827 = vrot.slane %v4825, 7
        %v4828 = vshll.u32 %v4555, 16
        %v4830 = vor.u32 %v4827, %v4828
        %v4831 = vsel %vm1399, %v4823, %v4830
        %v4833 = vshrl.u32 %v4556, 16
        %v4835 = vrot.slane %v4833, 7
        %v4836 = vrot.slane %v4835, 4
        %v4838 = vshrl.u32 %v4557, 16
        %v4840 = vrot.slane %v4838, 7
        %v4841 = vshll.u32 %v4557, 16
        %v4843 = vor.u32 %v4840, %v4841
        %v4844 = vsel %vm1399, %v4836, %v4843
        %v4845 = vrot.slane %v4840, 4
        %v4847 = vshrl.u32 %v4558, 16
        %v4849 = vrot.slane %v4847, 7
        %v4850 = vshll.u32 %v4558, 16
        %v4852 = vor.u32 %v4849, %v4850
        %v4853 = vsel %vm1399, %v4845, %v4852
        %v4855 = vshrl.u32 %v4559, 16
        %v4857 = vrot.slane %v4855, 7
        %v4858 = vrot.slane %v4857, 4
        %v4860 = vshrl.u32 %v4560, 16
        %v4862 = vrot.slane %v4860, 7
        %v4863 = vshll.u32 %v4560, 16
        %v4865 = vor.u32 %v4862, %v4863
        %v4866 = vsel %vm1399, %v4858, %v4865
        %v4867 = vrot.slane %v4862, 4
        %v4869 = vshrl.u32 %v4561, 16
        %v4871 = vrot.slane %v4869, 7
        %v4872 = vshll.u32 %v4561, 16
        %v4874 = vor.u32 %v4871, %v4872
        %v4875 = vsel %vm1399, %v4867, %v4874
        %v4877 = vshrl.u32 %v4562, 16
        %v4879 = vrot.slane %v4877, 7
        %v4880 = vrot.slane %v4879, 4
        %v4882 = vshrl.u32 %v4563, 16
        %v4884 = vrot.slane %v4882, 7
        %v4885 = vshll.u32 %v4563, 16
        %v4887 = vor.u32 %v4884, %v4885
        %v4888 = vsel %vm1399, %v4880, %v4887
        %v4889 = vrot.slane %v4884, 4
        %v4891 = vshrl.u32 %v4564, 16
        %v4893 = vrot.slane %v4891, 7
        %v4894 = vshll.u32 %v4564, 16
        %v4896 = vor.u32 %v4893, %v4894
        %v4897 = vsel %vm1399, %v4889, %v4896
        %v4899 = vshrl.u32 %v4565, 16
        %v4901 = vrot.slane %v4899, 7
        %v4902 = vrot.slane %v4901, 4
        %v4904 = vshrl.u32 %v4566, 16
        %v4906 = vrot.slane %v4904, 7
        %v4907 = vshll.u32 %v4566, 16
        %v4909 = vor.u32 %v4906, %v4907
        %v4910 = vsel %vm1399, %v4902, %v4909
        %v4911 = vrot.slane %v4906, 4
        %v4913 = vshrl.u32 %v4567, 16
        %v4915 = vrot.slane %v4913, 7
        %v4916 = vshll.u32 %v4567, 16
        %v4918 = vor.u32 %v4915, %v4916
        %v4919 = vsel %vm1399, %v4911, %v4918
        %s4920 = scalar_lea.vmem [#allocation6], 192
        %v4921 = vld [vmem:[%s4920] sm:$0xf]
        %v4922 = vld [vmem:[%s4920 + $0x4] sm:$0xf]
        %v4923 = vld [vmem:[%s4920 + $0x8] sm:$0xf]
        %v4924 = vld [vmem:[%s4920 + $0xc] sm:$0xf]
        %v4925 = vld [vmem:[%s4920 + $0x10] sm:$0xf]
        %v4926 = vld [vmem:[%s4920 + $0x14] sm:$0xf]
        %v4927 = vld [vmem:[%s4920 + $0x18] sm:$0xf]
        %v4928 = vld [vmem:[%s4920 + $0x1c] sm:$0xf]
        %v4929 = vunpack.c.l.b16 %v4580
        %v4930 = vunpack.c.l.b16 %v4589
        %v4931 = vunpack.c.l.b16 %v4602
        %v4932 = vunpack.c.l.b16 %v4611
        %v4933 = vunpack.c.l.b16 %v4624
        %v4934 = vunpack.c.l.b16 %v4633
        %v4935 = vunpack.c.l.b16 %v4646
        %v4936 = vunpack.c.l.b16 %v4655
        %v4937 = vunpack.c.l.b16 %v4668
        %v4938 = vunpack.c.l.b16 %v4677
        %v4939 = vunpack.c.l.b16 %v4690
        %v4940 = vunpack.c.l.b16 %v4699
        %v4941 = vunpack.c.l.b16 %v4712
        %v4942 = vunpack.c.l.b16 %v4721
        %v4943 = vunpack.c.l.b16 %v4734
        %v4944 = vunpack.c.l.b16 %v4743
        %v4945 = vunpack.c.l.b16 %v4756
        %v4946 = vunpack.c.l.b16 %v4765
        %v4947 = vunpack.c.l.b16 %v4778
        %v4948 = vunpack.c.l.b16 %v4787
        %v4949 = vunpack.c.l.b16 %v4800
        %v4950 = vunpack.c.l.b16 %v4809
        %v4951 = vunpack.c.l.b16 %v4822
        %v4952 = vunpack.c.l.b16 %v4831
        %v4953 = vunpack.c.l.b16 %v4844
        %v4954 = vunpack.c.l.b16 %v4853
        %v4955 = vunpack.c.l.b16 %v4866
        %v4956 = vunpack.c.l.b16 %v4875
        %v4957 = vunpack.c.l.b16 %v4888
        %v4958 = vunpack.c.l.b16 %v4897
        %v4959 = vunpack.c.l.b16 %v4910
        %v4960 = vunpack.c.l.b16 %v4919
        %v4961 = vpack.c.b16 %v4930, %v4929
        %v4962 = vpack.c.b16 %v4932, %v4931
        %v4963 = vpack.c.b16 %v4934, %v4933
        %v4964 = vpack.c.b16 %v4936, %v4935
        %v4965 = vpack.c.b16 %v4938, %v4937
        %v4966 = vpack.c.b16 %v4940, %v4939
        %v4967 = vpack.c.b16 %v4942, %v4941
        %v4968 = vpack.c.b16 %v4944, %v4943
        %v4969 = vpack.c.b16 %v4946, %v4945
        %v4970 = vpack.c.b16 %v4948, %v4947
        %v4971 = vpack.c.b16 %v4950, %v4949
        %v4972 = vpack.c.b16 %v4952, %v4951
        %v4973 = vpack.c.b16 %v4954, %v4953
        %v4974 = vpack.c.b16 %v4956, %v4955
        %v4975 = vpack.c.b16 %v4958, %v4957
        %v4976 = vpack.c.b16 %v4960, %v4959
        %v4985 = vunpack.c.l.b16 %v4921
        %v4986 = vunpack.c.l.b16 %v4922
        %v4987 = vunpack.c.l.b16 %v4923
        %v4988 = vunpack.c.l.b16 %v4924
        %v4989 = vunpack.c.l.b16 %v4925
        %v4990 = vunpack.c.l.b16 %v4926
        %v4991 = vunpack.c.l.b16 %v4927
        %v4992 = vunpack.c.l.b16 %v4928
        %v4993 = vpack.c.b16 %v4986, %v4985
        %v4994 = vpack.c.b16 %v4988, %v4987
        %v4995 = vpack.c.b16 %v4990, %v4989
        %v4996 = vpack.c.b16 %v4992, %v4991
        %v5002 = vsel %vm1873, %v4961, 0
        %v5005 = vsel %vm1873, %v4962, 0
        %v5008 = vsel %vm1873, %v4963, 0
        %v5011 = vsel %vm1873, %v4964, 0
        %v5014 = vsel %vm1873, %v4965, 0
        %v5017 = vsel %vm1873, %v4966, 0
        %v5020 = vsel %vm1873, %v4967, 0
        %v5023 = vsel %vm1873, %v4968, 0
        %v5026 = vsel %vm1873, %v4969, 0
        %v5029 = vsel %vm1873, %v4970, 0
        %v5032 = vsel %vm1873, %v4971, 0
        %v5035 = vsel %vm1873, %v4972, 0
        %v5038 = vsel %vm1873, %v4973, 0
        %v5041 = vsel %vm1873, %v4974, 0
        %v5044 = vsel %vm1873, %v4975, 0
        %v5047 = vsel %vm1873, %v4976, 0
        %5049 = vmatpush.bf16.msra.mxu0 0
        %5050 = vmatpush.bf16.msra.mxu0 0
        %5051 = vmatpush.bf16.msra.mxu0 0
        %5052 = vmatpush.bf16.msra.mxu0 0
        %5053 = vmatpush.bf16.msra.mxu0 %v4996
        %5054 = vmatpush.bf16.msra.mxu0 %v4995
        %5055 = vmatpush.bf16.msra.mxu0 %v4994
        %5056 = vmatpush.bf16.msra.mxu0 %v4993
        %5057 = vmatmul.bf16.gmra.mxu0 %v5002
        %v5058 = vpop.f32.mrf.mxu0
        %v5059 = vadd.f32 0.0, %v5058
        %v5060 = vpop.f32.mrf.mxu0
        %v5061 = vadd.f32 0.0, %v5060
        %5062 = vmatmul.bf16.gmra.mxu0 %v5005
        %v5063 = vpop.f32.mrf.mxu0
        %v5064 = vadd.f32 0.0, %v5063
        %v5065 = vpop.f32.mrf.mxu0
        %v5066 = vadd.f32 0.0, %v5065
        %5067 = vmatmul.bf16.gmra.mxu0 %v5008
        %v5068 = vpop.f32.mrf.mxu0
        %v5069 = vadd.f32 0.0, %v5068
        %v5070 = vpop.f32.mrf.mxu0
        %v5071 = vadd.f32 0.0, %v5070
        %5072 = vmatmul.bf16.gmra.mxu0 %v5011
        %v5073 = vpop.f32.mrf.mxu0
        %v5074 = vadd.f32 0.0, %v5073
        %v5075 = vpop.f32.mrf.mxu0
        %v5076 = vadd.f32 0.0, %v5075
        %5077 = vmatmul.bf16.gmra.mxu0 %v5014
        %v5078 = vpop.f32.mrf.mxu0
        %v5079 = vadd.f32 0.0, %v5078
        %v5080 = vpop.f32.mrf.mxu0
        %v5081 = vadd.f32 0.0, %v5080
        %5082 = vmatmul.bf16.gmra.mxu0 %v5017
        %v5083 = vpop.f32.mrf.mxu0
        %v5084 = vadd.f32 0.0, %v5083
        %v5085 = vpop.f32.mrf.mxu0
        %v5086 = vadd.f32 0.0, %v5085
        %5087 = vmatmul.bf16.gmra.mxu0 %v5020
        %v5088 = vpop.f32.mrf.mxu0
        %v5089 = vadd.f32 0.0, %v5088
        %v5090 = vpop.f32.mrf.mxu0
        %v5091 = vadd.f32 0.0, %v5090
        %5092 = vmatmul.bf16.gmra.mxu0 %v5023
        %v5093 = vpop.f32.mrf.mxu0
        %v5094 = vadd.f32 0.0, %v5093
        %v5095 = vpop.f32.mrf.mxu0
        %v5096 = vadd.f32 0.0, %v5095
        %5097 = vmatmul.bf16.gmra.mxu0 %v5026
        %v5098 = vpop.f32.mrf.mxu0
        %v5099 = vadd.f32 0.0, %v5098
        %v5100 = vpop.f32.mrf.mxu0
        %v5101 = vadd.f32 0.0, %v5100
        %5102 = vmatmul.bf16.gmra.mxu0 %v5029
        %v5103 = vpop.f32.mrf.mxu0
        %v5104 = vadd.f32 0.0, %v5103
        %v5105 = vpop.f32.mrf.mxu0
        %v5106 = vadd.f32 0.0, %v5105
        %5107 = vmatmul.bf16.gmra.mxu0 %v5032
        %v5108 = vpop.f32.mrf.mxu0
        %v5109 = vadd.f32 0.0, %v5108
        %v5110 = vpop.f32.mrf.mxu0
        %v5111 = vadd.f32 0.0, %v5110
        %5112 = vmatmul.bf16.gmra.mxu0 %v5035
        %v5113 = vpop.f32.mrf.mxu0
        %v5114 = vadd.f32 0.0, %v5113
        %v5115 = vpop.f32.mrf.mxu0
        %v5116 = vadd.f32 0.0, %v5115
        %5117 = vmatmul.bf16.gmra.mxu0 %v5038
        %v5118 = vpop.f32.mrf.mxu0
        %v5119 = vadd.f32 0.0, %v5118
        %v5120 = vpop.f32.mrf.mxu0
        %v5121 = vadd.f32 0.0, %v5120
        %5122 = vmatmul.bf16.gmra.mxu0 %v5041
        %v5123 = vpop.f32.mrf.mxu0
        %v5124 = vadd.f32 0.0, %v5123
        %v5125 = vpop.f32.mrf.mxu0
        %v5126 = vadd.f32 0.0, %v5125
        %5127 = vmatmul.bf16.gmra.mxu0 %v5044
        %v5128 = vpop.f32.mrf.mxu0
        %v5129 = vadd.f32 0.0, %v5128
        %v5130 = vpop.f32.mrf.mxu0
        %v5131 = vadd.f32 0.0, %v5130
        %5132 = vmatmul.bf16.gmra.mxu0 %v5047
        %v5133 = vpop.f32.mrf.mxu0
        %v5134 = vadd.f32 0.0, %v5133
        %v5135 = vpop.f32.mrf.mxu0
        %v5136 = vadd.f32 0.0, %v5135
        %5137 = vdwg.mxu0
        %v5138 = vadd.f32 %v4487, %v5059
        %v5139 = vadd.f32 %v4488, %v5061
        %v5140 = vadd.f32 %v4489, %v5064
        %v5141 = vadd.f32 %v4490, %v5066
        %v5142 = vadd.f32 %v4491, %v5069
        %v5143 = vadd.f32 %v4492, %v5071
        %v5144 = vadd.f32 %v4493, %v5074
        %v5145 = vadd.f32 %v4494, %v5076
        %v5146 = vadd.f32 %v4495, %v5079
        %v5147 = vadd.f32 %v4496, %v5081
        %v5148 = vadd.f32 %v4497, %v5084
        %v5149 = vadd.f32 %v4498, %v5086
        %v5150 = vadd.f32 %v4499, %v5089
        %v5151 = vadd.f32 %v4500, %v5091
        %v5152 = vadd.f32 %v4501, %v5094
        %v5153 = vadd.f32 %v4502, %v5096
        %v5154 = vadd.f32 %v4503, %v5099
        %v5155 = vadd.f32 %v4504, %v5101
        %v5156 = vadd.f32 %v4505, %v5104
        %v5157 = vadd.f32 %v4506, %v5106
        %v5158 = vadd.f32 %v4507, %v5109
        %v5159 = vadd.f32 %v4508, %v5111
        %v5160 = vadd.f32 %v4509, %v5114
        %v5161 = vadd.f32 %v4510, %v5116
        %v5162 = vadd.f32 %v4511, %v5119
        %v5163 = vadd.f32 %v4512, %v5121
        %v5164 = vadd.f32 %v4513, %v5124
        %v5165 = vadd.f32 %v4514, %v5126
        %v5166 = vadd.f32 %v4515, %v5129
        %v5167 = vadd.f32 %v4516, %v5131
        %v5168 = vadd.f32 %v4517, %v5134
        %v5169 = vadd.f32 %v4518, %v5136
        %s5170 = scalar_lea.vmem [#allocation6], 224
        %v5171 = vld [vmem:[%s5170] sm:$0xf]
        %v5172 = vld [vmem:[%s5170 + $0x4] sm:$0xf]
        %v5173 = vld [vmem:[%s5170 + $0x8] sm:$0xf]
        %v5174 = vld [vmem:[%s5170 + $0xc] sm:$0xf]
        %v5175 = vld [vmem:[%s5170 + $0x10] sm:$0xf]
        %v5176 = vld [vmem:[%s5170 + $0x14] sm:$0xf]
        %v5177 = vld [vmem:[%s5170 + $0x18] sm:$0xf]
        %v5178 = vld [vmem:[%s5170 + $0x1c] sm:$0xf]
        %v5211 = vunpack.c.l.b16 %v4521
        %v5212 = vunpack.c.l.b16 %v4522
        %v5213 = vunpack.c.l.b16 %v4524
        %v5214 = vunpack.c.l.b16 %v4525
        %v5215 = vunpack.c.l.b16 %v4527
        %v5216 = vunpack.c.l.b16 %v4528
        %v5217 = vunpack.c.l.b16 %v4530
        %v5218 = vunpack.c.l.b16 %v4531
        %v5219 = vunpack.c.l.b16 %v4533
        %v5220 = vunpack.c.l.b16 %v4534
        %v5221 = vunpack.c.l.b16 %v4536
        %v5222 = vunpack.c.l.b16 %v4537
        %v5223 = vunpack.c.l.b16 %v4539
        %v5224 = vunpack.c.l.b16 %v4540
        %v5225 = vunpack.c.l.b16 %v4542
        %v5226 = vunpack.c.l.b16 %v4543
        %v5227 = vunpack.c.l.b16 %v4545
        %v5228 = vunpack.c.l.b16 %v4546
        %v5229 = vunpack.c.l.b16 %v4548
        %v5230 = vunpack.c.l.b16 %v4549
        %v5231 = vunpack.c.l.b16 %v4551
        %v5232 = vunpack.c.l.b16 %v4552
        %v5233 = vunpack.c.l.b16 %v4554
        %v5234 = vunpack.c.l.b16 %v4555
        %v5235 = vunpack.c.l.b16 %v4557
        %v5236 = vunpack.c.l.b16 %v4558
        %v5237 = vunpack.c.l.b16 %v4560
        %v5238 = vunpack.c.l.b16 %v4561
        %v5239 = vunpack.c.l.b16 %v4563
        %v5240 = vunpack.c.l.b16 %v4564
        %v5241 = vunpack.c.l.b16 %v4566
        %v5242 = vunpack.c.l.b16 %v4567
        %v5243 = vpack.c.b16 %v5212, %v5211
        %v5244 = vpack.c.b16 %v5214, %v5213
        %v5245 = vpack.c.b16 %v5216, %v5215
        %v5246 = vpack.c.b16 %v5218, %v5217
        %v5247 = vpack.c.b16 %v5220, %v5219
        %v5248 = vpack.c.b16 %v5222, %v5221
        %v5249 = vpack.c.b16 %v5224, %v5223
        %v5250 = vpack.c.b16 %v5226, %v5225
        %v5251 = vpack.c.b16 %v5228, %v5227
        %v5252 = vpack.c.b16 %v5230, %v5229
        %v5253 = vpack.c.b16 %v5232, %v5231
        %v5254 = vpack.c.b16 %v5234, %v5233
        %v5255 = vpack.c.b16 %v5236, %v5235
        %v5256 = vpack.c.b16 %v5238, %v5237
        %v5257 = vpack.c.b16 %v5240, %v5239
        %v5258 = vpack.c.b16 %v5242, %v5241
        %v5267 = vunpack.c.l.b16 %v5171
        %v5268 = vunpack.c.l.b16 %v5172
        %v5269 = vunpack.c.l.b16 %v5173
        %v5270 = vunpack.c.l.b16 %v5174
        %v5271 = vunpack.c.l.b16 %v5175
        %v5272 = vunpack.c.l.b16 %v5176
        %v5273 = vunpack.c.l.b16 %v5177
        %v5274 = vunpack.c.l.b16 %v5178
        %v5275 = vpack.c.b16 %v5268, %v5267
        %v5276 = vpack.c.b16 %v5270, %v5269
        %v5277 = vpack.c.b16 %v5272, %v5271
        %v5278 = vpack.c.b16 %v5274, %v5273
        %v5284 = vsel %vm1873, %v5243, 0
        %v5287 = vsel %vm1873, %v5244, 0
        %v5290 = vsel %vm1873, %v5245, 0
        %v5293 = vsel %vm1873, %v5246, 0
        %v5296 = vsel %vm1873, %v5247, 0
        %v5299 = vsel %vm1873, %v5248, 0
        %v5302 = vsel %vm1873, %v5249, 0
        %v5305 = vsel %vm1873, %v5250, 0
        %v5308 = vsel %vm1873, %v5251, 0
        %v5311 = vsel %vm1873, %v5252, 0
        %v5314 = vsel %vm1873, %v5253, 0
        %v5317 = vsel %vm1873, %v5254, 0
        %v5320 = vsel %vm1873, %v5255, 0
        %v5323 = vsel %vm1873, %v5256, 0
        %v5326 = vsel %vm1873, %v5257, 0
        %v5329 = vsel %vm1873, %v5258, 0
        %5331 = vmatpush.bf16.msra.mxu0 0
        %5332 = vmatpush.bf16.msra.mxu0 0
        %5333 = vmatpush.bf16.msra.mxu0 0
        %5334 = vmatpush.bf16.msra.mxu0 0
        %5335 = vmatpush.bf16.msra.mxu0 %v5278
        %5336 = vmatpush.bf16.msra.mxu0 %v5277
        %5337 = vmatpush.bf16.msra.mxu0 %v5276
        %5338 = vmatpush.bf16.msra.mxu0 %v5275
        %5339 = vmatmul.bf16.gmra.mxu0 %v5284
        %v5340 = vpop.f32.mrf.mxu0
        %v5341 = vadd.f32 0.0, %v5340
        %v5342 = vpop.f32.mrf.mxu0
        %v5343 = vadd.f32 0.0, %v5342
        %5344 = vmatmul.bf16.gmra.mxu0 %v5287
        %v5345 = vpop.f32.mrf.mxu0
        %v5346 = vadd.f32 0.0, %v5345
        %v5347 = vpop.f32.mrf.mxu0
        %v5348 = vadd.f32 0.0, %v5347
        %5349 = vmatmul.bf16.gmra.mxu0 %v5290
        %v5350 = vpop.f32.mrf.mxu0
        %v5351 = vadd.f32 0.0, %v5350
        %v5352 = vpop.f32.mrf.mxu0
        %v5353 = vadd.f32 0.0, %v5352
        %5354 = vmatmul.bf16.gmra.mxu0 %v5293
        %v5355 = vpop.f32.mrf.mxu0
        %v5356 = vadd.f32 0.0, %v5355
        %v5357 = vpop.f32.mrf.mxu0
        %v5358 = vadd.f32 0.0, %v5357
        %5359 = vmatmul.bf16.gmra.mxu0 %v5296
        %v5360 = vpop.f32.mrf.mxu0
        %v5361 = vadd.f32 0.0, %v5360
        %v5362 = vpop.f32.mrf.mxu0
        %v5363 = vadd.f32 0.0, %v5362
        %5364 = vmatmul.bf16.gmra.mxu0 %v5299
        %v5365 = vpop.f32.mrf.mxu0
        %v5366 = vadd.f32 0.0, %v5365
        %v5367 = vpop.f32.mrf.mxu0
        %v5368 = vadd.f32 0.0, %v5367
        %5369 = vmatmul.bf16.gmra.mxu0 %v5302
        %v5370 = vpop.f32.mrf.mxu0
        %v5371 = vadd.f32 0.0, %v5370
        %v5372 = vpop.f32.mrf.mxu0
        %v5373 = vadd.f32 0.0, %v5372
        %5374 = vmatmul.bf16.gmra.mxu0 %v5305
        %v5375 = vpop.f32.mrf.mxu0
        %v5376 = vadd.f32 0.0, %v5375
        %v5377 = vpop.f32.mrf.mxu0
        %v5378 = vadd.f32 0.0, %v5377
        %5379 = vmatmul.bf16.gmra.mxu0 %v5308
        %v5380 = vpop.f32.mrf.mxu0
        %v5381 = vadd.f32 0.0, %v5380
        %v5382 = vpop.f32.mrf.mxu0
        %v5383 = vadd.f32 0.0, %v5382
        %5384 = vmatmul.bf16.gmra.mxu0 %v5311
        %v5385 = vpop.f32.mrf.mxu0
        %v5386 = vadd.f32 0.0, %v5385
        %v5387 = vpop.f32.mrf.mxu0
        %v5388 = vadd.f32 0.0, %v5387
        %5389 = vmatmul.bf16.gmra.mxu0 %v5314
        %v5390 = vpop.f32.mrf.mxu0
        %v5391 = vadd.f32 0.0, %v5390
        %v5392 = vpop.f32.mrf.mxu0
        %v5393 = vadd.f32 0.0, %v5392
        %5394 = vmatmul.bf16.gmra.mxu0 %v5317
        %v5395 = vpop.f32.mrf.mxu0
        %v5396 = vadd.f32 0.0, %v5395
        %v5397 = vpop.f32.mrf.mxu0
        %v5398 = vadd.f32 0.0, %v5397
        %5399 = vmatmul.bf16.gmra.mxu0 %v5320
        %v5400 = vpop.f32.mrf.mxu0
        %v5401 = vadd.f32 0.0, %v5400
        %v5402 = vpop.f32.mrf.mxu0
        %v5403 = vadd.f32 0.0, %v5402
        %5404 = vmatmul.bf16.gmra.mxu0 %v5323
        %v5405 = vpop.f32.mrf.mxu0
        %v5406 = vadd.f32 0.0, %v5405
        %v5407 = vpop.f32.mrf.mxu0
        %v5408 = vadd.f32 0.0, %v5407
        %5409 = vmatmul.bf16.gmra.mxu0 %v5326
        %v5410 = vpop.f32.mrf.mxu0
        %v5411 = vadd.f32 0.0, %v5410
        %v5412 = vpop.f32.mrf.mxu0
        %v5413 = vadd.f32 0.0, %v5412
        %5414 = vmatmul.bf16.gmra.mxu0 %v5329
        %v5415 = vpop.f32.mrf.mxu0
        %v5416 = vadd.f32 0.0, %v5415
        %v5417 = vpop.f32.mrf.mxu0
        %v5418 = vadd.f32 0.0, %v5417
        %5419 = vdwg.mxu0
        %v5420 = vadd.f32 %v5138, %v5341
        %v5421 = vadd.f32 %v5139, %v5343
        %v5422 = vadd.f32 %v5140, %v5346
        %v5423 = vadd.f32 %v5141, %v5348
        %v5424 = vadd.f32 %v5142, %v5351
        %v5425 = vadd.f32 %v5143, %v5353
        %v5426 = vadd.f32 %v5144, %v5356
        %v5427 = vadd.f32 %v5145, %v5358
        %v5428 = vadd.f32 %v5146, %v5361
        %v5429 = vadd.f32 %v5147, %v5363
        %v5430 = vadd.f32 %v5148, %v5366
        %v5431 = vadd.f32 %v5149, %v5368
        %v5432 = vadd.f32 %v5150, %v5371
        %v5433 = vadd.f32 %v5151, %v5373
        %v5434 = vadd.f32 %v5152, %v5376
        %v5435 = vadd.f32 %v5153, %v5378
        %v5436 = vadd.f32 %v5154, %v5381
        %v5437 = vadd.f32 %v5155, %v5383
        %v5438 = vadd.f32 %v5156, %v5386
        %v5439 = vadd.f32 %v5157, %v5388
        %v5440 = vadd.f32 %v5158, %v5391
        %v5441 = vadd.f32 %v5159, %v5393
        %v5442 = vadd.f32 %v5160, %v5396
        %v5443 = vadd.f32 %v5161, %v5398
        %v5444 = vadd.f32 %v5162, %v5401
        %v5445 = vadd.f32 %v5163, %v5403
        %v5446 = vadd.f32 %v5164, %v5406
        %v5447 = vadd.f32 %v5165, %v5408
        %v5448 = vadd.f32 %v5166, %v5411
        %v5449 = vadd.f32 %v5167, %v5413
        %v5450 = vadd.f32 %v5168, %v5416
        %v5451 = vadd.f32 %v5169, %v5418
        %v5452 = vld [vmem:[%s4519 + $0x4] sm:$0xf]
        %v5453 = vld [vmem:[%s4519 + $0x8] sm:$0xf]
        %v5454 = vld [vmem:[%s4519 + $0xc] sm:$0x1]
        %v5455 = vld [vmem:[%s4519 + $0x14] sm:$0xf]
        %v5456 = vld [vmem:[%s4519 + $0x18] sm:$0xf]
        %v5457 = vld [vmem:[%s4519 + $0x1c] sm:$0x1]
        %v5458 = vld [vmem:[%s4519 + $0x24] sm:$0xf]
        %v5459 = vld [vmem:[%s4519 + $0x28] sm:$0xf]
        %v5460 = vld [vmem:[%s4519 + $0x2c] sm:$0x1]
        %v5461 = vld [vmem:[%s4519 + $0x34] sm:$0xf]
        %v5462 = vld [vmem:[%s4519 + $0x38] sm:$0xf]
        %v5463 = vld [vmem:[%s4519 + $0x3c] sm:$0x1]
        %v5464 = vld [vmem:[%s4519 + $0x44] sm:$0xf]
        %v5465 = vld [vmem:[%s4519 + $0x48] sm:$0xf]
        %v5466 = vld [vmem:[%s4519 + $0x4c] sm:$0x1]
        %v5467 = vld [vmem:[%s4519 + $0x54] sm:$0xf]
        %v5468 = vld [vmem:[%s4519 + $0x58] sm:$0xf]
        %v5469 = vld [vmem:[%s4519 + $0x5c] sm:$0x1]
        %v5470 = vld [vmem:[%s4519 + $0x64] sm:$0xf]
        %v5471 = vld [vmem:[%s4519 + $0x68] sm:$0xf]
        %v5472 = vld [vmem:[%s4519 + $0x6c] sm:$0x1]
        %v5473 = vld [vmem:[%s4519 + $0x74] sm:$0xf]
        %v5474 = vld [vmem:[%s4519 + $0x78] sm:$0xf]
        %v5475 = vld [vmem:[%s4519 + $0x7c] sm:$0x1]
        %v5476 = vld [vmem:[%s4519 + $0x84] sm:$0xf]
        %v5477 = vld [vmem:[%s4519 + $0x88] sm:$0xf]
        %v5478 = vld [vmem:[%s4519 + $0x8c] sm:$0x1]
        %v5479 = vld [vmem:[%s4519 + $0x94] sm:$0xf]
        %v5480 = vld [vmem:[%s4519 + $0x98] sm:$0xf]
        %v5481 = vld [vmem:[%s4519 + $0x9c] sm:$0x1]
        %v5482 = vld [vmem:[%s4519 + $0xa4] sm:$0xf]
        %v5483 = vld [vmem:[%s4519 + $0xa8] sm:$0xf]
        %v5484 = vld [vmem:[%s4519 + $0xac] sm:$0x1]
        %v5485 = vld [vmem:[%s4519 + $0xb4] sm:$0xf]
        %v5486 = vld [vmem:[%s4519 + $0xb8] sm:$0xf]
        %v5487 = vld [vmem:[%s4519 + $0xbc] sm:$0x1]
        %v5488 = vld [vmem:[%s4519 + $0xc4] sm:$0xf]
        %v5489 = vld [vmem:[%s4519 + $0xc8] sm:$0xf]
        %v5490 = vld [vmem:[%s4519 + $0xcc] sm:$0x1]
        %v5491 = vld [vmem:[%s4519 + $0xd4] sm:$0xf]
        %v5492 = vld [vmem:[%s4519 + $0xd8] sm:$0xf]
        %v5493 = vld [vmem:[%s4519 + $0xdc] sm:$0x1]
        %v5494 = vld [vmem:[%s4519 + $0xe4] sm:$0xf]
        %v5495 = vld [vmem:[%s4519 + $0xe8] sm:$0xf]
        %v5496 = vld [vmem:[%s4519 + $0xec] sm:$0x1]
        %v5497 = vld [vmem:[%s4519 + $0xf4] sm:$0xf]
        %v5498 = vld [vmem:[%s4519 + $0xf8] sm:$0xf]
        %v5499 = vld [vmem:[%s4519 + $0xfc] sm:$0x1]
        %v5501 = vshrl.u32 %v5452, 16
        %v5503 = vrot.slane %v5501, 4
        %v5504 = vshll.u32 %v5452, 16
        %v5506 = vrot.slane %v5504, 5
        %v5507 = vor.u32 %v5503, %v5506
        %v5508 = vrot.slane %v5507, 4
        %v5510 = vshll.u32 %v5453, 16
        %v5512 = vrot.slane %v5510, 5
        %v5513 = vsel %vm2270, %v5508, %v5512
        %v5514 = vshrl.u32 %v5453, 16
        %v5516 = vrot.slane %v5514, 4
        %v5517 = vor.u32 %v5516, %v5512
        %v5518 = vrot.slane %v5517, 4
        %v5520 = vshll.u32 %v5454, 16
        %v5522 = vrot.slane %v5520, 5
        %v5523 = vsel %vm2270, %v5518, %v5522
        %v5525 = vshrl.u32 %v5455, 16
        %v5527 = vrot.slane %v5525, 4
        %v5528 = vshll.u32 %v5455, 16
        %v5530 = vrot.slane %v5528, 5
        %v5531 = vor.u32 %v5527, %v5530
        %v5532 = vrot.slane %v5531, 4
        %v5534 = vshll.u32 %v5456, 16
        %v5536 = vrot.slane %v5534, 5
        %v5537 = vsel %vm2270, %v5532, %v5536
        %v5538 = vshrl.u32 %v5456, 16
        %v5540 = vrot.slane %v5538, 4
        %v5541 = vor.u32 %v5540, %v5536
        %v5542 = vrot.slane %v5541, 4
        %v5544 = vshll.u32 %v5457, 16
        %v5546 = vrot.slane %v5544, 5
        %v5547 = vsel %vm2270, %v5542, %v5546
        %v5549 = vshrl.u32 %v5458, 16
        %v5551 = vrot.slane %v5549, 4
        %v5552 = vshll.u32 %v5458, 16
        %v5554 = vrot.slane %v5552, 5
        %v5555 = vor.u32 %v5551, %v5554
        %v5556 = vrot.slane %v5555, 4
        %v5558 = vshll.u32 %v5459, 16
        %v5560 = vrot.slane %v5558, 5
        %v5561 = vsel %vm2270, %v5556, %v5560
        %v5562 = vshrl.u32 %v5459, 16
        %v5564 = vrot.slane %v5562, 4
        %v5565 = vor.u32 %v5564, %v5560
        %v5566 = vrot.slane %v5565, 4
        %v5568 = vshll.u32 %v5460, 16
        %v5570 = vrot.slane %v5568, 5
        %v5571 = vsel %vm2270, %v5566, %v5570
        %v5573 = vshrl.u32 %v5461, 16
        %v5575 = vrot.slane %v5573, 4
        %v5576 = vshll.u32 %v5461, 16
        %v5578 = vrot.slane %v5576, 5
        %v5579 = vor.u32 %v5575, %v5578
        %v5580 = vrot.slane %v5579, 4
        %v5582 = vshll.u32 %v5462, 16
        %v5584 = vrot.slane %v5582, 5
        %v5585 = vsel %vm2270, %v5580, %v5584
        %v5586 = vshrl.u32 %v5462, 16
        %v5588 = vrot.slane %v5586, 4
        %v5589 = vor.u32 %v5588, %v5584
        %v5590 = vrot.slane %v5589, 4
        %v5592 = vshll.u32 %v5463, 16
        %v5594 = vrot.slane %v5592, 5
        %v5595 = vsel %vm2270, %v5590, %v5594
        %v5597 = vshrl.u32 %v5464, 16
        %v5599 = vrot.slane %v5597, 4
        %v5600 = vshll.u32 %v5464, 16
        %v5602 = vrot.slane %v5600, 5
        %v5603 = vor.u32 %v5599, %v5602
        %v5604 = vrot.slane %v5603, 4
        %v5606 = vshll.u32 %v5465, 16
        %v5608 = vrot.slane %v5606, 5
        %v5609 = vsel %vm2270, %v5604, %v5608
        %v5610 = vshrl.u32 %v5465, 16
        %v5612 = vrot.slane %v5610, 4
        %v5613 = vor.u32 %v5612, %v5608
        %v5614 = vrot.slane %v5613, 4
        %v5616 = vshll.u32 %v5466, 16
        %v5618 = vrot.slane %v5616, 5
        %v5619 = vsel %vm2270, %v5614, %v5618
        %v5621 = vshrl.u32 %v5467, 16
        %v5623 = vrot.slane %v5621, 4
        %v5624 = vshll.u32 %v5467, 16
        %v5626 = vrot.slane %v5624, 5
        %v5627 = vor.u32 %v5623, %v5626
        %v5628 = vrot.slane %v5627, 4
        %v5630 = vshll.u32 %v5468, 16
        %v5632 = vrot.slane %v5630, 5
        %v5633 = vsel %vm2270, %v5628, %v5632
        %v5634 = vshrl.u32 %v5468, 16
        %v5636 = vrot.slane %v5634, 4
        %v5637 = vor.u32 %v5636, %v5632
        %v5638 = vrot.slane %v5637, 4
        %v5640 = vshll.u32 %v5469, 16
        %v5642 = vrot.slane %v5640, 5
        %v5643 = vsel %vm2270, %v5638, %v5642
        %v5645 = vshrl.u32 %v5470, 16
        %v5647 = vrot.slane %v5645, 4
        %v5648 = vshll.u32 %v5470, 16
        %v5650 = vrot.slane %v5648, 5
        %v5651 = vor.u32 %v5647, %v5650
        %v5652 = vrot.slane %v5651, 4
        %v5654 = vshll.u32 %v5471, 16
        %v5656 = vrot.slane %v5654, 5
        %v5657 = vsel %vm2270, %v5652, %v5656
        %v5658 = vshrl.u32 %v5471, 16
        %v5660 = vrot.slane %v5658, 4
        %v5661 = vor.u32 %v5660, %v5656
        %v5662 = vrot.slane %v5661, 4
        %v5664 = vshll.u32 %v5472, 16
        %v5666 = vrot.slane %v5664, 5
        %v5667 = vsel %vm2270, %v5662, %v5666
        %v5669 = vshrl.u32 %v5473, 16
        %v5671 = vrot.slane %v5669, 4
        %v5672 = vshll.u32 %v5473, 16
        %v5674 = vrot.slane %v5672, 5
        %v5675 = vor.u32 %v5671, %v5674
        %v5676 = vrot.slane %v5675, 4
        %v5678 = vshll.u32 %v5474, 16
        %v5680 = vrot.slane %v5678, 5
        %v5681 = vsel %vm2270, %v5676, %v5680
        %v5682 = vshrl.u32 %v5474, 16
        %v5684 = vrot.slane %v5682, 4
        %v5685 = vor.u32 %v5684, %v5680
        %v5686 = vrot.slane %v5685, 4
        %v5688 = vshll.u32 %v5475, 16
        %v5690 = vrot.slane %v5688, 5
        %v5691 = vsel %vm2270, %v5686, %v5690
        %v5693 = vshrl.u32 %v5476, 16
        %v5695 = vrot.slane %v5693, 4
        %v5696 = vshll.u32 %v5476, 16
        %v5698 = vrot.slane %v5696, 5
        %v5699 = vor.u32 %v5695, %v5698
        %v5700 = vrot.slane %v5699, 4
        %v5702 = vshll.u32 %v5477, 16
        %v5704 = vrot.slane %v5702, 5
        %v5705 = vsel %vm2270, %v5700, %v5704
        %v5706 = vshrl.u32 %v5477, 16
        %v5708 = vrot.slane %v5706, 4
        %v5709 = vor.u32 %v5708, %v5704
        %v5710 = vrot.slane %v5709, 4
        %v5712 = vshll.u32 %v5478, 16
        %v5714 = vrot.slane %v5712, 5
        %v5715 = vsel %vm2270, %v5710, %v5714
        %v5717 = vshrl.u32 %v5479, 16
        %v5719 = vrot.slane %v5717, 4
        %v5720 = vshll.u32 %v5479, 16
        %v5722 = vrot.slane %v5720, 5
        %v5723 = vor.u32 %v5719, %v5722
        %v5724 = vrot.slane %v5723, 4
        %v5726 = vshll.u32 %v5480, 16
        %v5728 = vrot.slane %v5726, 5
        %v5729 = vsel %vm2270, %v5724, %v5728
        %v5730 = vshrl.u32 %v5480, 16
        %v5732 = vrot.slane %v5730, 4
        %v5733 = vor.u32 %v5732, %v5728
        %v5734 = vrot.slane %v5733, 4
        %v5736 = vshll.u32 %v5481, 16
        %v5738 = vrot.slane %v5736, 5
        %v5739 = vsel %vm2270, %v5734, %v5738
        %v5741 = vshrl.u32 %v5482, 16
        %v5743 = vrot.slane %v5741, 4
        %v5744 = vshll.u32 %v5482, 16
        %v5746 = vrot.slane %v5744, 5
        %v5747 = vor.u32 %v5743, %v5746
        %v5748 = vrot.slane %v5747, 4
        %v5750 = vshll.u32 %v5483, 16
        %v5752 = vrot.slane %v5750, 5
        %v5753 = vsel %vm2270, %v5748, %v5752
        %v5754 = vshrl.u32 %v5483, 16
        %v5756 = vrot.slane %v5754, 4
        %v5757 = vor.u32 %v5756, %v5752
        %v5758 = vrot.slane %v5757, 4
        %v5760 = vshll.u32 %v5484, 16
        %v5762 = vrot.slane %v5760, 5
        %v5763 = vsel %vm2270, %v5758, %v5762
        %v5765 = vshrl.u32 %v5485, 16
        %v5767 = vrot.slane %v5765, 4
        %v5768 = vshll.u32 %v5485, 16
        %v5770 = vrot.slane %v5768, 5
        %v5771 = vor.u32 %v5767, %v5770
        %v5772 = vrot.slane %v5771, 4
        %v5774 = vshll.u32 %v5486, 16
        %v5776 = vrot.slane %v5774, 5
        %v5777 = vsel %vm2270, %v5772, %v5776
        %v5778 = vshrl.u32 %v5486, 16
        %v5780 = vrot.slane %v5778, 4
        %v5781 = vor.u32 %v5780, %v5776
        %v5782 = vrot.slane %v5781, 4
        %v5784 = vshll.u32 %v5487, 16
        %v5786 = vrot.slane %v5784, 5
        %v5787 = vsel %vm2270, %v5782, %v5786
        %v5789 = vshrl.u32 %v5488, 16
        %v5791 = vrot.slane %v5789, 4
        %v5792 = vshll.u32 %v5488, 16
        %v5794 = vrot.slane %v5792, 5
        %v5795 = vor.u32 %v5791, %v5794
        %v5796 = vrot.slane %v5795, 4
        %v5798 = vshll.u32 %v5489, 16
        %v5800 = vrot.slane %v5798, 5
        %v5801 = vsel %vm2270, %v5796, %v5800
        %v5802 = vshrl.u32 %v5489, 16
        %v5804 = vrot.slane %v5802, 4
        %v5805 = vor.u32 %v5804, %v5800
        %v5806 = vrot.slane %v5805, 4
        %v5808 = vshll.u32 %v5490, 16
        %v5810 = vrot.slane %v5808, 5
        %v5811 = vsel %vm2270, %v5806, %v5810
        %v5813 = vshrl.u32 %v5491, 16
        %v5815 = vrot.slane %v5813, 4
        %v5816 = vshll.u32 %v5491, 16
        %v5818 = vrot.slane %v5816, 5
        %v5819 = vor.u32 %v5815, %v5818
        %v5820 = vrot.slane %v5819, 4
        %v5822 = vshll.u32 %v5492, 16
        %v5824 = vrot.slane %v5822, 5
        %v5825 = vsel %vm2270, %v5820, %v5824
        %v5826 = vshrl.u32 %v5492, 16
        %v5828 = vrot.slane %v5826, 4
        %v5829 = vor.u32 %v5828, %v5824
        %v5830 = vrot.slane %v5829, 4
        %v5832 = vshll.u32 %v5493, 16
        %v5834 = vrot.slane %v5832, 5
        %v5835 = vsel %vm2270, %v5830, %v5834
        %v5837 = vshrl.u32 %v5494, 16
        %v5839 = vrot.slane %v5837, 4
        %v5840 = vshll.u32 %v5494, 16
        %v5842 = vrot.slane %v5840, 5
        %v5843 = vor.u32 %v5839, %v5842
        %v5844 = vrot.slane %v5843, 4
        %v5846 = vshll.u32 %v5495, 16
        %v5848 = vrot.slane %v5846, 5
        %v5849 = vsel %vm2270, %v5844, %v5848
        %v5850 = vshrl.u32 %v5495, 16
        %v5852 = vrot.slane %v5850, 4
        %v5853 = vor.u32 %v5852, %v5848
        %v5854 = vrot.slane %v5853, 4
        %v5856 = vshll.u32 %v5496, 16
        %v5858 = vrot.slane %v5856, 5
        %v5859 = vsel %vm2270, %v5854, %v5858
        %v5861 = vshrl.u32 %v5497, 16
        %v5863 = vrot.slane %v5861, 4
        %v5864 = vshll.u32 %v5497, 16
        %v5866 = vrot.slane %v5864, 5
        %v5867 = vor.u32 %v5863, %v5866
        %v5868 = vrot.slane %v5867, 4
        %v5870 = vshll.u32 %v5498, 16
        %v5872 = vrot.slane %v5870, 5
        %v5873 = vsel %vm2270, %v5868, %v5872
        %v5874 = vshrl.u32 %v5498, 16
        %v5876 = vrot.slane %v5874, 4
        %v5877 = vor.u32 %v5876, %v5872
        %v5878 = vrot.slane %v5877, 4
        %v5880 = vshll.u32 %v5499, 16
        %v5882 = vrot.slane %v5880, 5
        %v5883 = vsel %vm2270, %v5878, %v5882
        %s5884 = scalar_lea.vmem [#allocation6], 256
        %v5885 = vld [vmem:[%s5884] sm:$0xf]
        %v5886 = vld [vmem:[%s5884 + $0x4] sm:$0xf]
        %v5887 = vld [vmem:[%s5884 + $0x8] sm:$0xf]
        %v5888 = vld [vmem:[%s5884 + $0xc] sm:$0xf]
        %v5889 = vld [vmem:[%s5884 + $0x10] sm:$0xf]
        %v5890 = vld [vmem:[%s5884 + $0x14] sm:$0xf]
        %v5891 = vld [vmem:[%s5884 + $0x18] sm:$0xf]
        %v5892 = vld [vmem:[%s5884 + $0x1c] sm:$0xf]
        %v5893 = vunpack.c.l.b16 %v5513
        %v5894 = vunpack.c.l.b16 %v5523
        %v5895 = vunpack.c.l.b16 %v5537
        %v5896 = vunpack.c.l.b16 %v5547
        %v5897 = vunpack.c.l.b16 %v5561
        %v5898 = vunpack.c.l.b16 %v5571
        %v5899 = vunpack.c.l.b16 %v5585
        %v5900 = vunpack.c.l.b16 %v5595
        %v5901 = vunpack.c.l.b16 %v5609
        %v5902 = vunpack.c.l.b16 %v5619
        %v5903 = vunpack.c.l.b16 %v5633
        %v5904 = vunpack.c.l.b16 %v5643
        %v5905 = vunpack.c.l.b16 %v5657
        %v5906 = vunpack.c.l.b16 %v5667
        %v5907 = vunpack.c.l.b16 %v5681
        %v5908 = vunpack.c.l.b16 %v5691
        %v5909 = vunpack.c.l.b16 %v5705
        %v5910 = vunpack.c.l.b16 %v5715
        %v5911 = vunpack.c.l.b16 %v5729
        %v5912 = vunpack.c.l.b16 %v5739
        %v5913 = vunpack.c.l.b16 %v5753
        %v5914 = vunpack.c.l.b16 %v5763
        %v5915 = vunpack.c.l.b16 %v5777
        %v5916 = vunpack.c.l.b16 %v5787
        %v5917 = vunpack.c.l.b16 %v5801
        %v5918 = vunpack.c.l.b16 %v5811
        %v5919 = vunpack.c.l.b16 %v5825
        %v5920 = vunpack.c.l.b16 %v5835
        %v5921 = vunpack.c.l.b16 %v5849
        %v5922 = vunpack.c.l.b16 %v5859
        %v5923 = vunpack.c.l.b16 %v5873
        %v5924 = vunpack.c.l.b16 %v5883
        %v5925 = vpack.c.b16 %v5894, %v5893
        %v5926 = vpack.c.b16 %v5896, %v5895
        %v5927 = vpack.c.b16 %v5898, %v5897
        %v5928 = vpack.c.b16 %v5900, %v5899
        %v5929 = vpack.c.b16 %v5902, %v5901
        %v5930 = vpack.c.b16 %v5904, %v5903
        %v5931 = vpack.c.b16 %v5906, %v5905
        %v5932 = vpack.c.b16 %v5908, %v5907
        %v5933 = vpack.c.b16 %v5910, %v5909
        %v5934 = vpack.c.b16 %v5912, %v5911
        %v5935 = vpack.c.b16 %v5914, %v5913
        %v5936 = vpack.c.b16 %v5916, %v5915
        %v5937 = vpack.c.b16 %v5918, %v5917
        %v5938 = vpack.c.b16 %v5920, %v5919
        %v5939 = vpack.c.b16 %v5922, %v5921
        %v5940 = vpack.c.b16 %v5924, %v5923
        %v5949 = vunpack.c.l.b16 %v5885
        %v5950 = vunpack.c.l.b16 %v5886
        %v5951 = vunpack.c.l.b16 %v5887
        %v5952 = vunpack.c.l.b16 %v5888
        %v5953 = vunpack.c.l.b16 %v5889
        %v5954 = vunpack.c.l.b16 %v5890
        %v5955 = vunpack.c.l.b16 %v5891
        %v5956 = vunpack.c.l.b16 %v5892
        %v5957 = vpack.c.b16 %v5950, %v5949
        %v5958 = vpack.c.b16 %v5952, %v5951
        %v5959 = vpack.c.b16 %v5954, %v5953
        %v5960 = vpack.c.b16 %v5956, %v5955
        %v5966 = vsel %vm1873, %v5925, 0
        %v5969 = vsel %vm1873, %v5926, 0
        %v5972 = vsel %vm1873, %v5927, 0
        %v5975 = vsel %vm1873, %v5928, 0
        %v5978 = vsel %vm1873, %v5929, 0
        %v5981 = vsel %vm1873, %v5930, 0
        %v5984 = vsel %vm1873, %v5931, 0
        %v5987 = vsel %vm1873, %v5932, 0
        %v5990 = vsel %vm1873, %v5933, 0
        %v5993 = vsel %vm1873, %v5934, 0
        %v5996 = vsel %vm1873, %v5935, 0
        %v5999 = vsel %vm1873, %v5936, 0
        %v6002 = vsel %vm1873, %v5937, 0
        %v6005 = vsel %vm1873, %v5938, 0
        %v6008 = vsel %vm1873, %v5939, 0
        %v6011 = vsel %vm1873, %v5940, 0
        %6013 = vmatpush.bf16.msra.mxu0 0
        %6014 = vmatpush.bf16.msra.mxu0 0
        %6015 = vmatpush.bf16.msra.mxu0 0
        %6016 = vmatpush.bf16.msra.mxu0 0
        %6017 = vmatpush.bf16.msra.mxu0 %v5960
        %6018 = vmatpush.bf16.msra.mxu0 %v5959
        %6019 = vmatpush.bf16.msra.mxu0 %v5958
        %6020 = vmatpush.bf16.msra.mxu0 %v5957
        %6021 = vmatmul.bf16.gmra.mxu0 %v5966
        %v6022 = vpop.f32.mrf.mxu0
        %v6023 = vadd.f32 0.0, %v6022
        %v6024 = vpop.f32.mrf.mxu0
        %v6025 = vadd.f32 0.0, %v6024
        %6026 = vmatmul.bf16.gmra.mxu0 %v5969
        %v6027 = vpop.f32.mrf.mxu0
        %v6028 = vadd.f32 0.0, %v6027
        %v6029 = vpop.f32.mrf.mxu0
        %v6030 = vadd.f32 0.0, %v6029
        %6031 = vmatmul.bf16.gmra.mxu0 %v5972
        %v6032 = vpop.f32.mrf.mxu0
        %v6033 = vadd.f32 0.0, %v6032
        %v6034 = vpop.f32.mrf.mxu0
        %v6035 = vadd.f32 0.0, %v6034
        %6036 = vmatmul.bf16.gmra.mxu0 %v5975
        %v6037 = vpop.f32.mrf.mxu0
        %v6038 = vadd.f32 0.0, %v6037
        %v6039 = vpop.f32.mrf.mxu0
        %v6040 = vadd.f32 0.0, %v6039
        %6041 = vmatmul.bf16.gmra.mxu0 %v5978
        %v6042 = vpop.f32.mrf.mxu0
        %v6043 = vadd.f32 0.0, %v6042
        %v6044 = vpop.f32.mrf.mxu0
        %v6045 = vadd.f32 0.0, %v6044
        %6046 = vmatmul.bf16.gmra.mxu0 %v5981
        %v6047 = vpop.f32.mrf.mxu0
        %v6048 = vadd.f32 0.0, %v6047
        %v6049 = vpop.f32.mrf.mxu0
        %v6050 = vadd.f32 0.0, %v6049
        %6051 = vmatmul.bf16.gmra.mxu0 %v5984
        %v6052 = vpop.f32.mrf.mxu0
        %v6053 = vadd.f32 0.0, %v6052
        %v6054 = vpop.f32.mrf.mxu0
        %v6055 = vadd.f32 0.0, %v6054
        %6056 = vmatmul.bf16.gmra.mxu0 %v5987
        %v6057 = vpop.f32.mrf.mxu0
        %v6058 = vadd.f32 0.0, %v6057
        %v6059 = vpop.f32.mrf.mxu0
        %v6060 = vadd.f32 0.0, %v6059
        %6061 = vmatmul.bf16.gmra.mxu0 %v5990
        %v6062 = vpop.f32.mrf.mxu0
        %v6063 = vadd.f32 0.0, %v6062
        %v6064 = vpop.f32.mrf.mxu0
        %v6065 = vadd.f32 0.0, %v6064
        %6066 = vmatmul.bf16.gmra.mxu0 %v5993
        %v6067 = vpop.f32.mrf.mxu0
        %v6068 = vadd.f32 0.0, %v6067
        %v6069 = vpop.f32.mrf.mxu0
        %v6070 = vadd.f32 0.0, %v6069
        %6071 = vmatmul.bf16.gmra.mxu0 %v5996
        %v6072 = vpop.f32.mrf.mxu0
        %v6073 = vadd.f32 0.0, %v6072
        %v6074 = vpop.f32.mrf.mxu0
        %v6075 = vadd.f32 0.0, %v6074
        %6076 = vmatmul.bf16.gmra.mxu0 %v5999
        %v6077 = vpop.f32.mrf.mxu0
        %v6078 = vadd.f32 0.0, %v6077
        %v6079 = vpop.f32.mrf.mxu0
        %v6080 = vadd.f32 0.0, %v6079
        %6081 = vmatmul.bf16.gmra.mxu0 %v6002
        %v6082 = vpop.f32.mrf.mxu0
        %v6083 = vadd.f32 0.0, %v6082
        %v6084 = vpop.f32.mrf.mxu0
        %v6085 = vadd.f32 0.0, %v6084
        %6086 = vmatmul.bf16.gmra.mxu0 %v6005
        %v6087 = vpop.f32.mrf.mxu0
        %v6088 = vadd.f32 0.0, %v6087
        %v6089 = vpop.f32.mrf.mxu0
        %v6090 = vadd.f32 0.0, %v6089
        %6091 = vmatmul.bf16.gmra.mxu0 %v6008
        %v6092 = vpop.f32.mrf.mxu0
        %v6093 = vadd.f32 0.0, %v6092
        %v6094 = vpop.f32.mrf.mxu0
        %v6095 = vadd.f32 0.0, %v6094
        %6096 = vmatmul.bf16.gmra.mxu0 %v6011
        %v6097 = vpop.f32.mrf.mxu0
        %v6098 = vadd.f32 0.0, %v6097
        %v6099 = vpop.f32.mrf.mxu0
        %v6100 = vadd.f32 0.0, %v6099
        %6101 = vdwg.mxu0
        %v6102 = vadd.f32 %v5420, %v6023
        %v6103 = vadd.f32 %v5421, %v6025
        %v6104 = vadd.f32 %v5422, %v6028
        %v6105 = vadd.f32 %v5423, %v6030
        %v6106 = vadd.f32 %v5424, %v6033
        %v6107 = vadd.f32 %v5425, %v6035
        %v6108 = vadd.f32 %v5426, %v6038
        %v6109 = vadd.f32 %v5427, %v6040
        %v6110 = vadd.f32 %v5428, %v6043
        %v6111 = vadd.f32 %v5429, %v6045
        %v6112 = vadd.f32 %v5430, %v6048
        %v6113 = vadd.f32 %v5431, %v6050
        %v6114 = vadd.f32 %v5432, %v6053
        %v6115 = vadd.f32 %v5433, %v6055
        %v6116 = vadd.f32 %v5434, %v6058
        %v6117 = vadd.f32 %v5435, %v6060
        %v6118 = vadd.f32 %v5436, %v6063
        %v6119 = vadd.f32 %v5437, %v6065
        %v6120 = vadd.f32 %v5438, %v6068
        %v6121 = vadd.f32 %v5439, %v6070
        %v6122 = vadd.f32 %v5440, %v6073
        %v6123 = vadd.f32 %v5441, %v6075
        %v6124 = vadd.f32 %v5442, %v6078
        %v6125 = vadd.f32 %v5443, %v6080
        %v6126 = vadd.f32 %v5444, %v6083
        %v6127 = vadd.f32 %v5445, %v6085
        %v6128 = vadd.f32 %v5446, %v6088
        %v6129 = vadd.f32 %v5447, %v6090
        %v6130 = vadd.f32 %v5448, %v6093
        %v6131 = vadd.f32 %v5449, %v6095
        %v6132 = vadd.f32 %v5450, %v6098
        %v6133 = vadd.f32 %v5451, %v6100
        %v6134 = vld [vmem:[%s4] sm:$0x1]
        %v6136 = vperm.slane %v6134, 0
        %v6138 = vadd.f32 %v6102, %v6136
        %v6139 = vadd.f32 %v6103, %v6136
        %v6140 = vadd.f32 %v6104, %v6136
        %v6141 = vadd.f32 %v6105, %v6136
        %v6142 = vadd.f32 %v6106, %v6136
        %v6143 = vadd.f32 %v6107, %v6136
        %v6144 = vadd.f32 %v6108, %v6136
        %v6145 = vadd.f32 %v6109, %v6136
        %v6146 = vadd.f32 %v6110, %v6136
        %v6147 = vadd.f32 %v6111, %v6136
        %v6148 = vadd.f32 %v6112, %v6136
        %v6149 = vadd.f32 %v6113, %v6136
        %v6150 = vadd.f32 %v6114, %v6136
        %v6151 = vadd.f32 %v6115, %v6136
        %v6152 = vadd.f32 %v6116, %v6136
        %v6153 = vadd.f32 %v6117, %v6136
        %v6154 = vadd.f32 %v6118, %v6136
        %v6155 = vadd.f32 %v6119, %v6136
        %v6156 = vadd.f32 %v6120, %v6136
        %v6157 = vadd.f32 %v6121, %v6136
        %v6158 = vadd.f32 %v6122, %v6136
        %v6159 = vadd.f32 %v6123, %v6136
        %v6160 = vadd.f32 %v6124, %v6136
        %v6161 = vadd.f32 %v6125, %v6136
        %v6162 = vadd.f32 %v6126, %v6136
        %v6163 = vadd.f32 %v6127, %v6136
        %v6164 = vadd.f32 %v6128, %v6136
        %v6165 = vadd.f32 %v6129, %v6136
        %v6166 = vadd.f32 %v6130, %v6136
        %v6167 = vadd.f32 %v6131, %v6136
        %v6168 = vadd.f32 %v6132, %v6136
        %v6169 = vadd.f32 %v6133, %v6136
        %v6170 = vxor.u32 %v6138, 2147483648
        %v6171 = vxor.u32 %v6139, 2147483648
        %v6172 = vxor.u32 %v6140, 2147483648
        %v6173 = vxor.u32 %v6141, 2147483648
        %v6174 = vxor.u32 %v6142, 2147483648
        %v6175 = vxor.u32 %v6143, 2147483648
        %v6176 = vxor.u32 %v6144, 2147483648
        %v6177 = vxor.u32 %v6145, 2147483648
        %v6178 = vxor.u32 %v6146, 2147483648
        %v6179 = vxor.u32 %v6147, 2147483648
        %v6180 = vxor.u32 %v6148, 2147483648
        %v6181 = vxor.u32 %v6149, 2147483648
        %v6182 = vxor.u32 %v6150, 2147483648
        %v6183 = vxor.u32 %v6151, 2147483648
        %v6184 = vxor.u32 %v6152, 2147483648
        %v6185 = vxor.u32 %v6153, 2147483648
        %v6186 = vxor.u32 %v6154, 2147483648
        %v6187 = vxor.u32 %v6155, 2147483648
        %v6188 = vxor.u32 %v6156, 2147483648
        %v6189 = vxor.u32 %v6157, 2147483648
        %v6190 = vxor.u32 %v6158, 2147483648
        %v6191 = vxor.u32 %v6159, 2147483648
        %v6192 = vxor.u32 %v6160, 2147483648
        %v6193 = vxor.u32 %v6161, 2147483648
        %v6194 = vxor.u32 %v6162, 2147483648
        %v6195 = vxor.u32 %v6163, 2147483648
        %v6196 = vxor.u32 %v6164, 2147483648
        %v6197 = vxor.u32 %v6165, 2147483648
        %v6198 = vxor.u32 %v6166, 2147483648
        %v6199 = vxor.u32 %v6167, 2147483648
        %v6200 = vxor.u32 %v6168, 2147483648
        %v6201 = vxor.u32 %v6169, 2147483648
        %v6202 = vmul.f32 %v6170, 1.442695
        %v6203 = vpow.pop %v6202
        %v6204 = vmul.f32 %v6171, 1.442695
        %v6205 = vpow.pop %v6204
        %v6206 = vmul.f32 %v6172, 1.442695
        %v6207 = vpow.pop %v6206
        %v6208 = vmul.f32 %v6173, 1.442695
        %v6209 = vpow.pop %v6208
        %v6210 = vmul.f32 %v6174, 1.442695
        %v6211 = vpow.pop %v6210
        %v6212 = vmul.f32 %v6175, 1.442695
        %v6213 = vpow.pop %v6212
        %v6214 = vmul.f32 %v6176, 1.442695
        %v6215 = vpow.pop %v6214
        %v6216 = vmul.f32 %v6177, 1.442695
        %v6217 = vpow.pop %v6216
        %v6218 = vmul.f32 %v6178, 1.442695
        %v6219 = vpow.pop %v6218
        %v6220 = vmul.f32 %v6179, 1.442695
        %v6221 = vpow.pop %v6220
        %v6222 = vmul.f32 %v6180, 1.442695
        %v6223 = vpow.pop %v6222
        %v6224 = vmul.f32 %v6181, 1.442695
        %v6225 = vpow.pop %v6224
        %v6226 = vmul.f32 %v6182, 1.442695
        %v6227 = vpow.pop %v6226
        %v6228 = vmul.f32 %v6183, 1.442695
        %v6229 = vpow.pop %v6228
        %v6230 = vmul.f32 %v6184, 1.442695
        %v6231 = vpow.pop %v6230
        %v6232 = vmul.f32 %v6185, 1.442695
        %v6233 = vpow.pop %v6232
        %v6234 = vmul.f32 %v6186, 1.442695
        %v6235 = vpow.pop %v6234
        %v6236 = vmul.f32 %v6187, 1.442695
        %v6237 = vpow.pop %v6236
        %v6238 = vmul.f32 %v6188, 1.442695
        %v6239 = vpow.pop %v6238
        %v6240 = vmul.f32 %v6189, 1.442695
        %v6241 = vpow.pop %v6240
        %v6242 = vmul.f32 %v6190, 1.442695
        %v6243 = vpow.pop %v6242
        %v6244 = vmul.f32 %v6191, 1.442695
        %v6245 = vpow.pop %v6244
        %v6246 = vmul.f32 %v6192, 1.442695
        %v6247 = vpow.pop %v6246
        %v6248 = vmul.f32 %v6193, 1.442695
        %v6249 = vpow.pop %v6248
        %v6250 = vmul.f32 %v6194, 1.442695
        %v6251 = vpow.pop %v6250
        %v6252 = vmul.f32 %v6195, 1.442695
        %v6253 = vpow.pop %v6252
        %v6254 = vmul.f32 %v6196, 1.442695
        %v6255 = vpow.pop %v6254
        %v6256 = vmul.f32 %v6197, 1.442695
        %v6257 = vpow.pop %v6256
        %v6258 = vmul.f32 %v6198, 1.442695
        %v6259 = vpow.pop %v6258
        %v6260 = vmul.f32 %v6199, 1.442695
        %v6261 = vpow.pop %v6260
        %v6262 = vmul.f32 %v6200, 1.442695
        %v6263 = vpow.pop %v6262
        %v6264 = vmul.f32 %v6201, 1.442695
        %v6265 = vpow.pop %v6264
        %v6266 = vadd.f32 %v6203, 1.0
        %v6267 = vadd.f32 %v6205, 1.0
        %v6268 = vadd.f32 %v6207, 1.0
        %v6269 = vadd.f32 %v6209, 1.0
        %v6270 = vadd.f32 %v6211, 1.0
        %v6271 = vadd.f32 %v6213, 1.0
        %v6272 = vadd.f32 %v6215, 1.0
        %v6273 = vadd.f32 %v6217, 1.0
        %v6274 = vadd.f32 %v6219, 1.0
        %v6275 = vadd.f32 %v6221, 1.0
        %v6276 = vadd.f32 %v6223, 1.0
        %v6277 = vadd.f32 %v6225, 1.0
        %v6278 = vadd.f32 %v6227, 1.0
        %v6279 = vadd.f32 %v6229, 1.0
        %v6280 = vadd.f32 %v6231, 1.0
        %v6281 = vadd.f32 %v6233, 1.0
        %v6282 = vadd.f32 %v6235, 1.0
        %v6283 = vadd.f32 %v6237, 1.0
        %v6284 = vadd.f32 %v6239, 1.0
        %v6285 = vadd.f32 %v6241, 1.0
        %v6286 = vadd.f32 %v6243, 1.0
        %v6287 = vadd.f32 %v6245, 1.0
        %v6288 = vadd.f32 %v6247, 1.0
        %v6289 = vadd.f32 %v6249, 1.0
        %v6290 = vadd.f32 %v6251, 1.0
        %v6291 = vadd.f32 %v6253, 1.0
        %v6292 = vadd.f32 %v6255, 1.0
        %v6293 = vadd.f32 %v6257, 1.0
        %v6294 = vadd.f32 %v6259, 1.0
        %v6295 = vadd.f32 %v6261, 1.0
        %v6296 = vadd.f32 %v6263, 1.0
        %v6297 = vadd.f32 %v6265, 1.0
        %v6298 = vrcp.pop %v6266
        %v6299 = vmul.f32 %v6266, %v6298
        %v6300 = vsub.f32 1.0, %v6299
        %v6301 = vmul.f32 %v6298, %v6300
        %v6302 = vadd.f32 %v6298, %v6301
        %vm6303 = vweird.f32 %v6266
        %vm6304 = vweird.f32 %v6298
        %vm6305 = vmor %vm6303, %vm6304
        %v6306 = vsel %vm6305, %v6298, %v6302
        %v6307 = vand.u32 2147483647, %v6266
        %vm6308 = vcmp.eq.f32.partialorder %v6307, 8.507059e+37
        %v6309 = vand.u32 %v6266, 2147483648
        %v6310 = vor.u32 1.1754944e-38, %v6309
        %v6311 = vsel %vm6308, %v6310, %v6306
        %v6312 = vmul.f32 1.0, %v6311
        %v6313 = vrcp.pop %v6267
        %v6314 = vmul.f32 %v6267, %v6313
        %v6315 = vsub.f32 1.0, %v6314
        %v6316 = vmul.f32 %v6313, %v6315
        %v6317 = vadd.f32 %v6313, %v6316
        %vm6318 = vweird.f32 %v6267
        %vm6319 = vweird.f32 %v6313
        %vm6320 = vmor %vm6318, %vm6319
        %v6321 = vsel %vm6320, %v6313, %v6317
        %v6322 = vand.u32 2147483647, %v6267
        %vm6323 = vcmp.eq.f32.partialorder %v6322, 8.507059e+37
        %v6324 = vand.u32 %v6267, 2147483648
        %v6325 = vor.u32 1.1754944e-38, %v6324
        %v6326 = vsel %vm6323, %v6325, %v6321
        %v6327 = vmul.f32 1.0, %v6326
        %v6328 = vrcp.pop %v6268
        %v6329 = vmul.f32 %v6268, %v6328
        %v6330 = vsub.f32 1.0, %v6329
        %v6331 = vmul.f32 %v6328, %v6330
        %v6332 = vadd.f32 %v6328, %v6331
        %vm6333 = vweird.f32 %v6268
        %vm6334 = vweird.f32 %v6328
        %vm6335 = vmor %vm6333, %vm6334
        %v6336 = vsel %vm6335, %v6328, %v6332
        %v6337 = vand.u32 2147483647, %v6268
        %vm6338 = vcmp.eq.f32.partialorder %v6337, 8.507059e+37
        %v6339 = vand.u32 %v6268, 2147483648
        %v6340 = vor.u32 1.1754944e-38, %v6339
        %v6341 = vsel %vm6338, %v6340, %v6336
        %v6342 = vmul.f32 1.0, %v6341
        %v6343 = vrcp.pop %v6269
        %v6344 = vmul.f32 %v6269, %v6343
        %v6345 = vsub.f32 1.0, %v6344
        %v6346 = vmul.f32 %v6343, %v6345
        %v6347 = vadd.f32 %v6343, %v6346
        %vm6348 = vweird.f32 %v6269
        %vm6349 = vweird.f32 %v6343
        %vm6350 = vmor %vm6348, %vm6349
        %v6351 = vsel %vm6350, %v6343, %v6347
        %v6352 = vand.u32 2147483647, %v6269
        %vm6353 = vcmp.eq.f32.partialorder %v6352, 8.507059e+37
        %v6354 = vand.u32 %v6269, 2147483648
        %v6355 = vor.u32 1.1754944e-38, %v6354
        %v6356 = vsel %vm6353, %v6355, %v6351
        %v6357 = vmul.f32 1.0, %v6356
        %v6358 = vrcp.pop %v6270
        %v6359 = vmul.f32 %v6270, %v6358
        %v6360 = vsub.f32 1.0, %v6359
        %v6361 = vmul.f32 %v6358, %v6360
        %v6362 = vadd.f32 %v6358, %v6361
        %vm6363 = vweird.f32 %v6270
        %vm6364 = vweird.f32 %v6358
        %vm6365 = vmor %vm6363, %vm6364
        %v6366 = vsel %vm6365, %v6358, %v6362
        %v6367 = vand.u32 2147483647, %v6270
        %vm6368 = vcmp.eq.f32.partialorder %v6367, 8.507059e+37
        %v6369 = vand.u32 %v6270, 2147483648
        %v6370 = vor.u32 1.1754944e-38, %v6369
        %v6371 = vsel %vm6368, %v6370, %v6366
        %v6372 = vmul.f32 1.0, %v6371
        %v6373 = vrcp.pop %v6271
        %v6374 = vmul.f32 %v6271, %v6373
        %v6375 = vsub.f32 1.0, %v6374
        %v6376 = vmul.f32 %v6373, %v6375
        %v6377 = vadd.f32 %v6373, %v6376
        %vm6378 = vweird.f32 %v6271
        %vm6379 = vweird.f32 %v6373
        %vm6380 = vmor %vm6378, %vm6379
        %v6381 = vsel %vm6380, %v6373, %v6377
        %v6382 = vand.u32 2147483647, %v6271
        %vm6383 = vcmp.eq.f32.partialorder %v6382, 8.507059e+37
        %v6384 = vand.u32 %v6271, 2147483648
        %v6385 = vor.u32 1.1754944e-38, %v6384
        %v6386 = vsel %vm6383, %v6385, %v6381
        %v6387 = vmul.f32 1.0, %v6386
        %v6388 = vrcp.pop %v6272
        %v6389 = vmul.f32 %v6272, %v6388
        %v6390 = vsub.f32 1.0, %v6389
        %v6391 = vmul.f32 %v6388, %v6390
        %v6392 = vadd.f32 %v6388, %v6391
        %vm6393 = vweird.f32 %v6272
        %vm6394 = vweird.f32 %v6388
        %vm6395 = vmor %vm6393, %vm6394
        %v6396 = vsel %vm6395, %v6388, %v6392
        %v6397 = vand.u32 2147483647, %v6272
        %vm6398 = vcmp.eq.f32.partialorder %v6397, 8.507059e+37
        %v6399 = vand.u32 %v6272, 2147483648
        %v6400 = vor.u32 1.1754944e-38, %v6399
        %v6401 = vsel %vm6398, %v6400, %v6396
        %v6402 = vmul.f32 1.0, %v6401
        %v6403 = vrcp.pop %v6273
        %v6404 = vmul.f32 %v6273, %v6403
        %v6405 = vsub.f32 1.0, %v6404
        %v6406 = vmul.f32 %v6403, %v6405
        %v6407 = vadd.f32 %v6403, %v6406
        %vm6408 = vweird.f32 %v6273
        %vm6409 = vweird.f32 %v6403
        %vm6410 = vmor %vm6408, %vm6409
        %v6411 = vsel %vm6410, %v6403, %v6407
        %v6412 = vand.u32 2147483647, %v6273
        %vm6413 = vcmp.eq.f32.partialorder %v6412, 8.507059e+37
        %v6414 = vand.u32 %v6273, 2147483648
        %v6415 = vor.u32 1.1754944e-38, %v6414
        %v6416 = vsel %vm6413, %v6415, %v6411
        %v6417 = vmul.f32 1.0, %v6416
        %v6418 = vrcp.pop %v6274
        %v6419 = vmul.f32 %v6274, %v6418
        %v6420 = vsub.f32 1.0, %v6419
        %v6421 = vmul.f32 %v6418, %v6420
        %v6422 = vadd.f32 %v6418, %v6421
        %vm6423 = vweird.f32 %v6274
        %vm6424 = vweird.f32 %v6418
        %vm6425 = vmor %vm6423, %vm6424
        %v6426 = vsel %vm6425, %v6418, %v6422
        %v6427 = vand.u32 2147483647, %v6274
        %vm6428 = vcmp.eq.f32.partialorder %v6427, 8.507059e+37
        %v6429 = vand.u32 %v6274, 2147483648
        %v6430 = vor.u32 1.1754944e-38, %v6429
        %v6431 = vsel %vm6428, %v6430, %v6426
        %v6432 = vmul.f32 1.0, %v6431
        %v6433 = vrcp.pop %v6275
        %v6434 = vmul.f32 %v6275, %v6433
        %v6435 = vsub.f32 1.0, %v6434
        %v6436 = vmul.f32 %v6433, %v6435
        %v6437 = vadd.f32 %v6433, %v6436
        %vm6438 = vweird.f32 %v6275
        %vm6439 = vweird.f32 %v6433
        %vm6440 = vmor %vm6438, %vm6439
        %v6441 = vsel %vm6440, %v6433, %v6437
        %v6442 = vand.u32 2147483647, %v6275
        %vm6443 = vcmp.eq.f32.partialorder %v6442, 8.507059e+37
        %v6444 = vand.u32 %v6275, 2147483648
        %v6445 = vor.u32 1.1754944e-38, %v6444
        %v6446 = vsel %vm6443, %v6445, %v6441
        %v6447 = vmul.f32 1.0, %v6446
        %v6448 = vrcp.pop %v6276
        %v6449 = vmul.f32 %v6276, %v6448
        %v6450 = vsub.f32 1.0, %v6449
        %v6451 = vmul.f32 %v6448, %v6450
        %v6452 = vadd.f32 %v6448, %v6451
        %vm6453 = vweird.f32 %v6276
        %vm6454 = vweird.f32 %v6448
        %vm6455 = vmor %vm6453, %vm6454
        %v6456 = vsel %vm6455, %v6448, %v6452
        %v6457 = vand.u32 2147483647, %v6276
        %vm6458 = vcmp.eq.f32.partialorder %v6457, 8.507059e+37
        %v6459 = vand.u32 %v6276, 2147483648
        %v6460 = vor.u32 1.1754944e-38, %v6459
        %v6461 = vsel %vm6458, %v6460, %v6456
        %v6462 = vmul.f32 1.0, %v6461
        %v6463 = vrcp.pop %v6277
        %v6464 = vmul.f32 %v6277, %v6463
        %v6465 = vsub.f32 1.0, %v6464
        %v6466 = vmul.f32 %v6463, %v6465
        %v6467 = vadd.f32 %v6463, %v6466
        %vm6468 = vweird.f32 %v6277
        %vm6469 = vweird.f32 %v6463
        %vm6470 = vmor %vm6468, %vm6469
        %v6471 = vsel %vm6470, %v6463, %v6467
        %v6472 = vand.u32 2147483647, %v6277
        %vm6473 = vcmp.eq.f32.partialorder %v6472, 8.507059e+37
        %v6474 = vand.u32 %v6277, 2147483648
        %v6475 = vor.u32 1.1754944e-38, %v6474
        %v6476 = vsel %vm6473, %v6475, %v6471
        %v6477 = vmul.f32 1.0, %v6476
        %v6478 = vrcp.pop %v6278
        %v6479 = vmul.f32 %v6278, %v6478
        %v6480 = vsub.f32 1.0, %v6479
        %v6481 = vmul.f32 %v6478, %v6480
        %v6482 = vadd.f32 %v6478, %v6481
        %vm6483 = vweird.f32 %v6278
        %vm6484 = vweird.f32 %v6478
        %vm6485 = vmor %vm6483, %vm6484
        %v6486 = vsel %vm6485, %v6478, %v6482
        %v6487 = vand.u32 2147483647, %v6278
        %vm6488 = vcmp.eq.f32.partialorder %v6487, 8.507059e+37
        %v6489 = vand.u32 %v6278, 2147483648
        %v6490 = vor.u32 1.1754944e-38, %v6489
        %v6491 = vsel %vm6488, %v6490, %v6486
        %v6492 = vmul.f32 1.0, %v6491
        %v6493 = vrcp.pop %v6279
        %v6494 = vmul.f32 %v6279, %v6493
        %v6495 = vsub.f32 1.0, %v6494
        %v6496 = vmul.f32 %v6493, %v6495
        %v6497 = vadd.f32 %v6493, %v6496
        %vm6498 = vweird.f32 %v6279
        %vm6499 = vweird.f32 %v6493
        %vm6500 = vmor %vm6498, %vm6499
        %v6501 = vsel %vm6500, %v6493, %v6497
        %v6502 = vand.u32 2147483647, %v6279
        %vm6503 = vcmp.eq.f32.partialorder %v6502, 8.507059e+37
        %v6504 = vand.u32 %v6279, 2147483648
        %v6505 = vor.u32 1.1754944e-38, %v6504
        %v6506 = vsel %vm6503, %v6505, %v6501
        %v6507 = vmul.f32 1.0, %v6506
        %v6508 = vrcp.pop %v6280
        %v6509 = vmul.f32 %v6280, %v6508
        %v6510 = vsub.f32 1.0, %v6509
        %v6511 = vmul.f32 %v6508, %v6510
        %v6512 = vadd.f32 %v6508, %v6511
        %vm6513 = vweird.f32 %v6280
        %vm6514 = vweird.f32 %v6508
        %vm6515 = vmor %vm6513, %vm6514
        %v6516 = vsel %vm6515, %v6508, %v6512
        %v6517 = vand.u32 2147483647, %v6280
        %vm6518 = vcmp.eq.f32.partialorder %v6517, 8.507059e+37
        %v6519 = vand.u32 %v6280, 2147483648
        %v6520 = vor.u32 1.1754944e-38, %v6519
        %v6521 = vsel %vm6518, %v6520, %v6516
        %v6522 = vmul.f32 1.0, %v6521
        %v6523 = vrcp.pop %v6281
        %v6524 = vmul.f32 %v6281, %v6523
        %v6525 = vsub.f32 1.0, %v6524
        %v6526 = vmul.f32 %v6523, %v6525
        %v6527 = vadd.f32 %v6523, %v6526
        %vm6528 = vweird.f32 %v6281
        %vm6529 = vweird.f32 %v6523
        %vm6530 = vmor %vm6528, %vm6529
        %v6531 = vsel %vm6530, %v6523, %v6527
        %v6532 = vand.u32 2147483647, %v6281
        %vm6533 = vcmp.eq.f32.partialorder %v6532, 8.507059e+37
        %v6534 = vand.u32 %v6281, 2147483648
        %v6535 = vor.u32 1.1754944e-38, %v6534
        %v6536 = vsel %vm6533, %v6535, %v6531
        %v6537 = vmul.f32 1.0, %v6536
        %v6538 = vrcp.pop %v6282
        %v6539 = vmul.f32 %v6282, %v6538
        %v6540 = vsub.f32 1.0, %v6539
        %v6541 = vmul.f32 %v6538, %v6540
        %v6542 = vadd.f32 %v6538, %v6541
        %vm6543 = vweird.f32 %v6282
        %vm6544 = vweird.f32 %v6538
        %vm6545 = vmor %vm6543, %vm6544
        %v6546 = vsel %vm6545, %v6538, %v6542
        %v6547 = vand.u32 2147483647, %v6282
        %vm6548 = vcmp.eq.f32.partialorder %v6547, 8.507059e+37
        %v6549 = vand.u32 %v6282, 2147483648
        %v6550 = vor.u32 1.1754944e-38, %v6549
        %v6551 = vsel %vm6548, %v6550, %v6546
        %v6552 = vmul.f32 1.0, %v6551
        %v6553 = vrcp.pop %v6283
        %v6554 = vmul.f32 %v6283, %v6553
        %v6555 = vsub.f32 1.0, %v6554
        %v6556 = vmul.f32 %v6553, %v6555
        %v6557 = vadd.f32 %v6553, %v6556
        %vm6558 = vweird.f32 %v6283
        %vm6559 = vweird.f32 %v6553
        %vm6560 = vmor %vm6558, %vm6559
        %v6561 = vsel %vm6560, %v6553, %v6557
        %v6562 = vand.u32 2147483647, %v6283
        %vm6563 = vcmp.eq.f32.partialorder %v6562, 8.507059e+37
        %v6564 = vand.u32 %v6283, 2147483648
        %v6565 = vor.u32 1.1754944e-38, %v6564
        %v6566 = vsel %vm6563, %v6565, %v6561
        %v6567 = vmul.f32 1.0, %v6566
        %v6568 = vrcp.pop %v6284
        %v6569 = vmul.f32 %v6284, %v6568
        %v6570 = vsub.f32 1.0, %v6569
        %v6571 = vmul.f32 %v6568, %v6570
        %v6572 = vadd.f32 %v6568, %v6571
        %vm6573 = vweird.f32 %v6284
        %vm6574 = vweird.f32 %v6568
        %vm6575 = vmor %vm6573, %vm6574
        %v6576 = vsel %vm6575, %v6568, %v6572
        %v6577 = vand.u32 2147483647, %v6284
        %vm6578 = vcmp.eq.f32.partialorder %v6577, 8.507059e+37
        %v6579 = vand.u32 %v6284, 2147483648
        %v6580 = vor.u32 1.1754944e-38, %v6579
        %v6581 = vsel %vm6578, %v6580, %v6576
        %v6582 = vmul.f32 1.0, %v6581
        %v6583 = vrcp.pop %v6285
        %v6584 = vmul.f32 %v6285, %v6583
        %v6585 = vsub.f32 1.0, %v6584
        %v6586 = vmul.f32 %v6583, %v6585
        %v6587 = vadd.f32 %v6583, %v6586
        %vm6588 = vweird.f32 %v6285
        %vm6589 = vweird.f32 %v6583
        %vm6590 = vmor %vm6588, %vm6589
        %v6591 = vsel %vm6590, %v6583, %v6587
        %v6592 = vand.u32 2147483647, %v6285
        %vm6593 = vcmp.eq.f32.partialorder %v6592, 8.507059e+37
        %v6594 = vand.u32 %v6285, 2147483648
        %v6595 = vor.u32 1.1754944e-38, %v6594
        %v6596 = vsel %vm6593, %v6595, %v6591
        %v6597 = vmul.f32 1.0, %v6596
        %v6598 = vrcp.pop %v6286
        %v6599 = vmul.f32 %v6286, %v6598
        %v6600 = vsub.f32 1.0, %v6599
        %v6601 = vmul.f32 %v6598, %v6600
        %v6602 = vadd.f32 %v6598, %v6601
        %vm6603 = vweird.f32 %v6286
        %vm6604 = vweird.f32 %v6598
        %vm6605 = vmor %vm6603, %vm6604
        %v6606 = vsel %vm6605, %v6598, %v6602
        %v6607 = vand.u32 2147483647, %v6286
        %vm6608 = vcmp.eq.f32.partialorder %v6607, 8.507059e+37
        %v6609 = vand.u32 %v6286, 2147483648
        %v6610 = vor.u32 1.1754944e-38, %v6609
        %v6611 = vsel %vm6608, %v6610, %v6606
        %v6612 = vmul.f32 1.0, %v6611
        %v6613 = vrcp.pop %v6287
        %v6614 = vmul.f32 %v6287, %v6613
        %v6615 = vsub.f32 1.0, %v6614
        %v6616 = vmul.f32 %v6613, %v6615
        %v6617 = vadd.f32 %v6613, %v6616
        %vm6618 = vweird.f32 %v6287
        %vm6619 = vweird.f32 %v6613
        %vm6620 = vmor %vm6618, %vm6619
        %v6621 = vsel %vm6620, %v6613, %v6617
        %v6622 = vand.u32 2147483647, %v6287
        %vm6623 = vcmp.eq.f32.partialorder %v6622, 8.507059e+37
        %v6624 = vand.u32 %v6287, 2147483648
        %v6625 = vor.u32 1.1754944e-38, %v6624
        %v6626 = vsel %vm6623, %v6625, %v6621
        %v6627 = vmul.f32 1.0, %v6626
        %v6628 = vrcp.pop %v6288
        %v6629 = vmul.f32 %v6288, %v6628
        %v6630 = vsub.f32 1.0, %v6629
        %v6631 = vmul.f32 %v6628, %v6630
        %v6632 = vadd.f32 %v6628, %v6631
        %vm6633 = vweird.f32 %v6288
        %vm6634 = vweird.f32 %v6628
        %vm6635 = vmor %vm6633, %vm6634
        %v6636 = vsel %vm6635, %v6628, %v6632
        %v6637 = vand.u32 2147483647, %v6288
        %vm6638 = vcmp.eq.f32.partialorder %v6637, 8.507059e+37
        %v6639 = vand.u32 %v6288, 2147483648
        %v6640 = vor.u32 1.1754944e-38, %v6639
        %v6641 = vsel %vm6638, %v6640, %v6636
        %v6642 = vmul.f32 1.0, %v6641
        %v6643 = vrcp.pop %v6289
        %v6644 = vmul.f32 %v6289, %v6643
        %v6645 = vsub.f32 1.0, %v6644
        %v6646 = vmul.f32 %v6643, %v6645
        %v6647 = vadd.f32 %v6643, %v6646
        %vm6648 = vweird.f32 %v6289
        %vm6649 = vweird.f32 %v6643
        %vm6650 = vmor %vm6648, %vm6649
        %v6651 = vsel %vm6650, %v6643, %v6647
        %v6652 = vand.u32 2147483647, %v6289
        %vm6653 = vcmp.eq.f32.partialorder %v6652, 8.507059e+37
        %v6654 = vand.u32 %v6289, 2147483648
        %v6655 = vor.u32 1.1754944e-38, %v6654
        %v6656 = vsel %vm6653, %v6655, %v6651
        %v6657 = vmul.f32 1.0, %v6656
        %v6658 = vrcp.pop %v6290
        %v6659 = vmul.f32 %v6290, %v6658
        %v6660 = vsub.f32 1.0, %v6659
        %v6661 = vmul.f32 %v6658, %v6660
        %v6662 = vadd.f32 %v6658, %v6661
        %vm6663 = vweird.f32 %v6290
        %vm6664 = vweird.f32 %v6658
        %vm6665 = vmor %vm6663, %vm6664
        %v6666 = vsel %vm6665, %v6658, %v6662
        %v6667 = vand.u32 2147483647, %v6290
        %vm6668 = vcmp.eq.f32.partialorder %v6667, 8.507059e+37
        %v6669 = vand.u32 %v6290, 2147483648
        %v6670 = vor.u32 1.1754944e-38, %v6669
        %v6671 = vsel %vm6668, %v6670, %v6666
        %v6672 = vmul.f32 1.0, %v6671
        %v6673 = vrcp.pop %v6291
        %v6674 = vmul.f32 %v6291, %v6673
        %v6675 = vsub.f32 1.0, %v6674
        %v6676 = vmul.f32 %v6673, %v6675
        %v6677 = vadd.f32 %v6673, %v6676
        %vm6678 = vweird.f32 %v6291
        %vm6679 = vweird.f32 %v6673
        %vm6680 = vmor %vm6678, %vm6679
        %v6681 = vsel %vm6680, %v6673, %v6677
        %v6682 = vand.u32 2147483647, %v6291
        %vm6683 = vcmp.eq.f32.partialorder %v6682, 8.507059e+37
        %v6684 = vand.u32 %v6291, 2147483648
        %v6685 = vor.u32 1.1754944e-38, %v6684
        %v6686 = vsel %vm6683, %v6685, %v6681
        %v6687 = vmul.f32 1.0, %v6686
        %v6688 = vrcp.pop %v6292
        %v6689 = vmul.f32 %v6292, %v6688
        %v6690 = vsub.f32 1.0, %v6689
        %v6691 = vmul.f32 %v6688, %v6690
        %v6692 = vadd.f32 %v6688, %v6691
        %vm6693 = vweird.f32 %v6292
        %vm6694 = vweird.f32 %v6688
        %vm6695 = vmor %vm6693, %vm6694
        %v6696 = vsel %vm6695, %v6688, %v6692
        %v6697 = vand.u32 2147483647, %v6292
        %vm6698 = vcmp.eq.f32.partialorder %v6697, 8.507059e+37
        %v6699 = vand.u32 %v6292, 2147483648
        %v6700 = vor.u32 1.1754944e-38, %v6699
        %v6701 = vsel %vm6698, %v6700, %v6696
        %v6702 = vmul.f32 1.0, %v6701
        %v6703 = vrcp.pop %v6293
        %v6704 = vmul.f32 %v6293, %v6703
        %v6705 = vsub.f32 1.0, %v6704
        %v6706 = vmul.f32 %v6703, %v6705
        %v6707 = vadd.f32 %v6703, %v6706
        %vm6708 = vweird.f32 %v6293
        %vm6709 = vweird.f32 %v6703
        %vm6710 = vmor %vm6708, %vm6709
        %v6711 = vsel %vm6710, %v6703, %v6707
        %v6712 = vand.u32 2147483647, %v6293
        %vm6713 = vcmp.eq.f32.partialorder %v6712, 8.507059e+37
        %v6714 = vand.u32 %v6293, 2147483648
        %v6715 = vor.u32 1.1754944e-38, %v6714
        %v6716 = vsel %vm6713, %v6715, %v6711
        %v6717 = vmul.f32 1.0, %v6716
        %v6718 = vrcp.pop %v6294
        %v6719 = vmul.f32 %v6294, %v6718
        %v6720 = vsub.f32 1.0, %v6719
        %v6721 = vmul.f32 %v6718, %v6720
        %v6722 = vadd.f32 %v6718, %v6721
        %vm6723 = vweird.f32 %v6294
        %vm6724 = vweird.f32 %v6718
        %vm6725 = vmor %vm6723, %vm6724
        %v6726 = vsel %vm6725, %v6718, %v6722
        %v6727 = vand.u32 2147483647, %v6294
        %vm6728 = vcmp.eq.f32.partialorder %v6727, 8.507059e+37
        %v6729 = vand.u32 %v6294, 2147483648
        %v6730 = vor.u32 1.1754944e-38, %v6729
        %v6731 = vsel %vm6728, %v6730, %v6726
        %v6732 = vmul.f32 1.0, %v6731
        %v6733 = vrcp.pop %v6295
        %v6734 = vmul.f32 %v6295, %v6733
        %v6735 = vsub.f32 1.0, %v6734
        %v6736 = vmul.f32 %v6733, %v6735
        %v6737 = vadd.f32 %v6733, %v6736
        %vm6738 = vweird.f32 %v6295
        %vm6739 = vweird.f32 %v6733
        %vm6740 = vmor %vm6738, %vm6739
        %v6741 = vsel %vm6740, %v6733, %v6737
        %v6742 = vand.u32 2147483647, %v6295
        %vm6743 = vcmp.eq.f32.partialorder %v6742, 8.507059e+37
        %v6744 = vand.u32 %v6295, 2147483648
        %v6745 = vor.u32 1.1754944e-38, %v6744
        %v6746 = vsel %vm6743, %v6745, %v6741
        %v6747 = vmul.f32 1.0, %v6746
        %v6748 = vrcp.pop %v6296
        %v6749 = vmul.f32 %v6296, %v6748
        %v6750 = vsub.f32 1.0, %v6749
        %v6751 = vmul.f32 %v6748, %v6750
        %v6752 = vadd.f32 %v6748, %v6751
        %vm6753 = vweird.f32 %v6296
        %vm6754 = vweird.f32 %v6748
        %vm6755 = vmor %vm6753, %vm6754
        %v6756 = vsel %vm6755, %v6748, %v6752
        %v6757 = vand.u32 2147483647, %v6296
        %vm6758 = vcmp.eq.f32.partialorder %v6757, 8.507059e+37
        %v6759 = vand.u32 %v6296, 2147483648
        %v6760 = vor.u32 1.1754944e-38, %v6759
        %v6761 = vsel %vm6758, %v6760, %v6756
        %v6762 = vmul.f32 1.0, %v6761
        %v6763 = vrcp.pop %v6297
        %v6764 = vmul.f32 %v6297, %v6763
        %v6765 = vsub.f32 1.0, %v6764
        %v6766 = vmul.f32 %v6763, %v6765
        %v6767 = vadd.f32 %v6763, %v6766
        %vm6768 = vweird.f32 %v6297
        %vm6769 = vweird.f32 %v6763
        %vm6770 = vmor %vm6768, %vm6769
        %v6771 = vsel %vm6770, %v6763, %v6767
        %v6772 = vand.u32 2147483647, %v6297
        %vm6773 = vcmp.eq.f32.partialorder %v6772, 8.507059e+37
        %v6774 = vand.u32 %v6297, 2147483648
        %v6775 = vor.u32 1.1754944e-38, %v6774
        %v6776 = vsel %vm6773, %v6775, %v6771
        %v6777 = vmul.f32 1.0, %v6776
        %v6778 = vmul.f32 %v6138, %v6312
        %v6779 = vmul.f32 %v6139, %v6327
        %v6780 = vmul.f32 %v6140, %v6342
        %v6781 = vmul.f32 %v6141, %v6357
        %v6782 = vmul.f32 %v6142, %v6372
        %v6783 = vmul.f32 %v6143, %v6387
        %v6784 = vmul.f32 %v6144, %v6402
        %v6785 = vmul.f32 %v6145, %v6417
        %v6786 = vmul.f32 %v6146, %v6432
        %v6787 = vmul.f32 %v6147, %v6447
        %v6788 = vmul.f32 %v6148, %v6462
        %v6789 = vmul.f32 %v6149, %v6477
        %v6790 = vmul.f32 %v6150, %v6492
        %v6791 = vmul.f32 %v6151, %v6507
        %v6792 = vmul.f32 %v6152, %v6522
        %v6793 = vmul.f32 %v6153, %v6537
        %v6794 = vmul.f32 %v6154, %v6552
        %v6795 = vmul.f32 %v6155, %v6567
        %v6796 = vmul.f32 %v6156, %v6582
        %v6797 = vmul.f32 %v6157, %v6597
        %v6798 = vmul.f32 %v6158, %v6612
        %v6799 = vmul.f32 %v6159, %v6627
        %v6800 = vmul.f32 %v6160, %v6642
        %v6801 = vmul.f32 %v6161, %v6657
        %v6802 = vmul.f32 %v6162, %v6672
        %v6803 = vmul.f32 %v6163, %v6687
        %v6804 = vmul.f32 %v6164, %v6702
        %v6805 = vmul.f32 %v6165, %v6717
        %v6806 = vmul.f32 %v6166, %v6732
        %v6807 = vmul.f32 %v6167, %v6747
        %v6808 = vmul.f32 %v6168, %v6762
        %v6809 = vmul.f32 %v6169, %v6777
        %v6810 = vpack.c.bf16 %v6779, %v6778
        %v6811 = vpack.c.bf16 %v6781, %v6780
        %v6812 = vpack.c.bf16 %v6783, %v6782
        %v6813 = vpack.c.bf16 %v6785, %v6784
        %v6814 = vpack.c.bf16 %v6787, %v6786
        %v6815 = vpack.c.bf16 %v6789, %v6788
        %v6816 = vpack.c.bf16 %v6791, %v6790
        %v6817 = vpack.c.bf16 %v6793, %v6792
        %v6818 = vpack.c.bf16 %v6795, %v6794
        %v6819 = vpack.c.bf16 %v6797, %v6796
        %v6820 = vpack.c.bf16 %v6799, %v6798
        %v6821 = vpack.c.bf16 %v6801, %v6800
        %v6822 = vpack.c.bf16 %v6803, %v6802
        %v6823 = vpack.c.bf16 %v6805, %v6804
        %v6824 = vpack.c.bf16 %v6807, %v6806
        %v6825 = vpack.c.bf16 %v6809, %v6808
        %v6826 = vld [vmem:[%s5] sm:$0xf]
        %v6827 = vld [vmem:[%s5 + $0x4] sm:$0xf]
        %v6828 = vld [vmem:[%s5 + $0x8] sm:$0xf]
        %v6829 = vld [vmem:[%s5 + $0xc] sm:$0xf]
        %v6830 = vld [vmem:[%s5 + $0x10] sm:$0xf]
        %v6831 = vld [vmem:[%s5 + $0x14] sm:$0xf]
        %v6832 = vld [vmem:[%s5 + $0x18] sm:$0xf]
        %v6833 = vld [vmem:[%s5 + $0x1c] sm:$0xf]
        %v6834 = vld [vmem:[%s6] sm:$0x1]
        %v6836 = vperm.slane %v6834, 0
        %v6846 = vunpack.c.l.b16 %v6826
        %v6847 = vunpack.c.l.b16 %v6827
        %v6848 = vunpack.c.l.b16 %v6828
        %v6849 = vunpack.c.l.b16 %v6829
        %v6850 = vunpack.c.l.b16 %v6830
        %v6851 = vunpack.c.l.b16 %v6831
        %v6852 = vunpack.c.l.b16 %v6832
        %v6853 = vunpack.c.l.b16 %v6833
        %v6854 = vpack.c.b16 %v6847, %v6846
        %v6855 = vpack.c.b16 %v6849, %v6848
        %v6856 = vpack.c.b16 %v6851, %v6850
        %v6857 = vpack.c.b16 %v6853, %v6852
        %v6863 = vsel %vm1873, %v6810, 0
        %v6866 = vsel %vm1873, %v6811, 0
        %v6869 = vsel %vm1873, %v6812, 0
        %v6872 = vsel %vm1873, %v6813, 0
        %v6875 = vsel %vm1873, %v6814, 0
        %v6878 = vsel %vm1873, %v6815, 0
        %v6881 = vsel %vm1873, %v6816, 0
        %v6884 = vsel %vm1873, %v6817, 0
        %v6887 = vsel %vm1873, %v6818, 0
        %v6890 = vsel %vm1873, %v6819, 0
        %v6893 = vsel %vm1873, %v6820, 0
        %v6896 = vsel %vm1873, %v6821, 0
        %v6899 = vsel %vm1873, %v6822, 0
        %v6902 = vsel %vm1873, %v6823, 0
        %v6905 = vsel %vm1873, %v6824, 0
        %v6908 = vsel %vm1873, %v6825, 0
        %6910 = vmatpush.bf16.msra.mxu0 0
        %6911 = vmatpush.bf16.msra.mxu0 0
        %6912 = vmatpush.bf16.msra.mxu0 0
        %6913 = vmatpush.bf16.msra.mxu0 0
        %6914 = vmatpush.bf16.msra.mxu0 %v6857
        %6915 = vmatpush.bf16.msra.mxu0 %v6856
        %6916 = vmatpush.bf16.msra.mxu0 %v6855
        %6917 = vmatpush.bf16.msra.mxu0 %v6854
        %6918 = vmatmul.bf16.gmra.mxu0 %v6863
        %v6919 = vpop.f32.mrf.mxu0
        %v6920 = vadd.f32 %v6836, %v6919
        %v6921 = vpop.f32.mrf.mxu0
        %v6922 = vadd.f32 %v6836, %v6921
        %6923 = vmatmul.bf16.gmra.mxu0 %v6866
        %v6924 = vpop.f32.mrf.mxu0
        %v6925 = vadd.f32 %v6836, %v6924
        %v6926 = vpop.f32.mrf.mxu0
        %v6927 = vadd.f32 %v6836, %v6926
        %6928 = vmatmul.bf16.gmra.mxu0 %v6869
        %v6929 = vpop.f32.mrf.mxu0
        %v6930 = vadd.f32 %v6836, %v6929
        %v6931 = vpop.f32.mrf.mxu0
        %v6932 = vadd.f32 %v6836, %v6931
        %6933 = vmatmul.bf16.gmra.mxu0 %v6872
        %v6934 = vpop.f32.mrf.mxu0
        %v6935 = vadd.f32 %v6836, %v6934
        %v6936 = vpop.f32.mrf.mxu0
        %v6937 = vadd.f32 %v6836, %v6936
        %6938 = vmatmul.bf16.gmra.mxu0 %v6875
        %v6939 = vpop.f32.mrf.mxu0
        %v6940 = vadd.f32 %v6836, %v6939
        %v6941 = vpop.f32.mrf.mxu0
        %v6942 = vadd.f32 %v6836, %v6941
        %6943 = vmatmul.bf16.gmra.mxu0 %v6878
        %v6944 = vpop.f32.mrf.mxu0
        %v6945 = vadd.f32 %v6836, %v6944
        %v6946 = vpop.f32.mrf.mxu0
        %v6947 = vadd.f32 %v6836, %v6946
        %6948 = vmatmul.bf16.gmra.mxu0 %v6881
        %v6949 = vpop.f32.mrf.mxu0
        %v6950 = vadd.f32 %v6836, %v6949
        %v6951 = vpop.f32.mrf.mxu0
        %v6952 = vadd.f32 %v6836, %v6951
        %6953 = vmatmul.bf16.gmra.mxu0 %v6884
        %v6954 = vpop.f32.mrf.mxu0
        %v6955 = vadd.f32 %v6836, %v6954
        %v6956 = vpop.f32.mrf.mxu0
        %v6957 = vadd.f32 %v6836, %v6956
        %6958 = vmatmul.bf16.gmra.mxu0 %v6887
        %v6959 = vpop.f32.mrf.mxu0
        %v6960 = vadd.f32 %v6836, %v6959
        %v6961 = vpop.f32.mrf.mxu0
        %v6962 = vadd.f32 %v6836, %v6961
        %6963 = vmatmul.bf16.gmra.mxu0 %v6890
        %v6964 = vpop.f32.mrf.mxu0
        %v6965 = vadd.f32 %v6836, %v6964
        %v6966 = vpop.f32.mrf.mxu0
        %v6967 = vadd.f32 %v6836, %v6966
        %6968 = vmatmul.bf16.gmra.mxu0 %v6893
        %v6969 = vpop.f32.mrf.mxu0
        %v6970 = vadd.f32 %v6836, %v6969
        %v6971 = vpop.f32.mrf.mxu0
        %v6972 = vadd.f32 %v6836, %v6971
        %6973 = vmatmul.bf16.gmra.mxu0 %v6896
        %v6974 = vpop.f32.mrf.mxu0
        %v6975 = vadd.f32 %v6836, %v6974
        %v6976 = vpop.f32.mrf.mxu0
        %v6977 = vadd.f32 %v6836, %v6976
        %6978 = vmatmul.bf16.gmra.mxu0 %v6899
        %v6979 = vpop.f32.mrf.mxu0
        %v6980 = vadd.f32 %v6836, %v6979
        %v6981 = vpop.f32.mrf.mxu0
        %v6982 = vadd.f32 %v6836, %v6981
        %6983 = vmatmul.bf16.gmra.mxu0 %v6902
        %v6984 = vpop.f32.mrf.mxu0
        %v6985 = vadd.f32 %v6836, %v6984
        %v6986 = vpop.f32.mrf.mxu0
        %v6987 = vadd.f32 %v6836, %v6986
        %6988 = vmatmul.bf16.gmra.mxu0 %v6905
        %v6989 = vpop.f32.mrf.mxu0
        %v6990 = vadd.f32 %v6836, %v6989
        %v6991 = vpop.f32.mrf.mxu0
        %v6992 = vadd.f32 %v6836, %v6991
        %6993 = vmatmul.bf16.gmra.mxu0 %v6908
        %v6994 = vpop.f32.mrf.mxu0
        %v6995 = vadd.f32 %v6836, %v6994
        %v6996 = vpop.f32.mrf.mxu0
        %v6997 = vadd.f32 %v6836, %v6996
        %6998 = vdwg.mxu0
        %v6999 = vxor.u32 %v6920, 2147483648
        %v7000 = vxor.u32 %v6922, 2147483648
        %v7001 = vxor.u32 %v6925, 2147483648
        %v7002 = vxor.u32 %v6927, 2147483648
        %v7003 = vxor.u32 %v6930, 2147483648
        %v7004 = vxor.u32 %v6932, 2147483648
        %v7005 = vxor.u32 %v6935, 2147483648
        %v7006 = vxor.u32 %v6937, 2147483648
        %v7007 = vxor.u32 %v6940, 2147483648
        %v7008 = vxor.u32 %v6942, 2147483648
        %v7009 = vxor.u32 %v6945, 2147483648
        %v7010 = vxor.u32 %v6947, 2147483648
        %v7011 = vxor.u32 %v6950, 2147483648
        %v7012 = vxor.u32 %v6952, 2147483648
        %v7013 = vxor.u32 %v6955, 2147483648
        %v7014 = vxor.u32 %v6957, 2147483648
        %v7015 = vxor.u32 %v6960, 2147483648
        %v7016 = vxor.u32 %v6962, 2147483648
        %v7017 = vxor.u32 %v6965, 2147483648
        %v7018 = vxor.u32 %v6967, 2147483648
        %v7019 = vxor.u32 %v6970, 2147483648
        %v7020 = vxor.u32 %v6972, 2147483648
        %v7021 = vxor.u32 %v6975, 2147483648
        %v7022 = vxor.u32 %v6977, 2147483648
        %v7023 = vxor.u32 %v6980, 2147483648
        %v7024 = vxor.u32 %v6982, 2147483648
        %v7025 = vxor.u32 %v6985, 2147483648
        %v7026 = vxor.u32 %v6987, 2147483648
        %v7027 = vxor.u32 %v6990, 2147483648
        %v7028 = vxor.u32 %v6992, 2147483648
        %v7029 = vxor.u32 %v6995, 2147483648
        %v7030 = vxor.u32 %v6997, 2147483648
        %v7031 = vmul.f32 %v6999, 1.442695
        %v7032 = vpow.pop %v7031
        %v7033 = vmul.f32 %v7000, 1.442695
        %v7034 = vpow.pop %v7033
        %v7035 = vmul.f32 %v7001, 1.442695
        %v7036 = vpow.pop %v7035
        %v7037 = vmul.f32 %v7002, 1.442695
        %v7038 = vpow.pop %v7037
        %v7039 = vmul.f32 %v7003, 1.442695
        %v7040 = vpow.pop %v7039
        %v7041 = vmul.f32 %v7004, 1.442695
        %v7042 = vpow.pop %v7041
        %v7043 = vmul.f32 %v7005, 1.442695
        %v7044 = vpow.pop %v7043
        %v7045 = vmul.f32 %v7006, 1.442695
        %v7046 = vpow.pop %v7045
        %v7047 = vmul.f32 %v7007, 1.442695
        %v7048 = vpow.pop %v7047
        %v7049 = vmul.f32 %v7008, 1.442695
        %v7050 = vpow.pop %v7049
        %v7051 = vmul.f32 %v7009, 1.442695
        %v7052 = vpow.pop %v7051
        %v7053 = vmul.f32 %v7010, 1.442695
        %v7054 = vpow.pop %v7053
        %v7055 = vmul.f32 %v7011, 1.442695
        %v7056 = vpow.pop %v7055
        %v7057 = vmul.f32 %v7012, 1.442695
        %v7058 = vpow.pop %v7057
        %v7059 = vmul.f32 %v7013, 1.442695
        %v7060 = vpow.pop %v7059
        %v7061 = vmul.f32 %v7014, 1.442695
        %v7062 = vpow.pop %v7061
        %v7063 = vmul.f32 %v7015, 1.442695
        %v7064 = vpow.pop %v7063
        %v7065 = vmul.f32 %v7016, 1.442695
        %v7066 = vpow.pop %v7065
        %v7067 = vmul.f32 %v7017, 1.442695
        %v7068 = vpow.pop %v7067
        %v7069 = vmul.f32 %v7018, 1.442695
        %v7070 = vpow.pop %v7069
        %v7071 = vmul.f32 %v7019, 1.442695
        %v7072 = vpow.pop %v7071
        %v7073 = vmul.f32 %v7020, 1.442695
        %v7074 = vpow.pop %v7073
        %v7075 = vmul.f32 %v7021, 1.442695
        %v7076 = vpow.pop %v7075
        %v7077 = vmul.f32 %v7022, 1.442695
        %v7078 = vpow.pop %v7077
        %v7079 = vmul.f32 %v7023, 1.442695
        %v7080 = vpow.pop %v7079
        %v7081 = vmul.f32 %v7024, 1.442695
        %v7082 = vpow.pop %v7081
        %v7083 = vmul.f32 %v7025, 1.442695
        %v7084 = vpow.pop %v7083
        %v7085 = vmul.f32 %v7026, 1.442695
        %v7086 = vpow.pop %v7085
        %v7087 = vmul.f32 %v7027, 1.442695
        %v7088 = vpow.pop %v7087
        %v7089 = vmul.f32 %v7028, 1.442695
        %v7090 = vpow.pop %v7089
        %v7091 = vmul.f32 %v7029, 1.442695
        %v7092 = vpow.pop %v7091
        %v7093 = vmul.f32 %v7030, 1.442695
        %v7094 = vpow.pop %v7093
        %v7095 = vadd.f32 %v7032, 1.0
        %v7096 = vadd.f32 %v7034, 1.0
        %v7097 = vadd.f32 %v7036, 1.0
        %v7098 = vadd.f32 %v7038, 1.0
        %v7099 = vadd.f32 %v7040, 1.0
        %v7100 = vadd.f32 %v7042, 1.0
        %v7101 = vadd.f32 %v7044, 1.0
        %v7102 = vadd.f32 %v7046, 1.0
        %v7103 = vadd.f32 %v7048, 1.0
        %v7104 = vadd.f32 %v7050, 1.0
        %v7105 = vadd.f32 %v7052, 1.0
        %v7106 = vadd.f32 %v7054, 1.0
        %v7107 = vadd.f32 %v7056, 1.0
        %v7108 = vadd.f32 %v7058, 1.0
        %v7109 = vadd.f32 %v7060, 1.0
        %v7110 = vadd.f32 %v7062, 1.0
        %v7111 = vadd.f32 %v7064, 1.0
        %v7112 = vadd.f32 %v7066, 1.0
        %v7113 = vadd.f32 %v7068, 1.0
        %v7114 = vadd.f32 %v7070, 1.0
        %v7115 = vadd.f32 %v7072, 1.0
        %v7116 = vadd.f32 %v7074, 1.0
        %v7117 = vadd.f32 %v7076, 1.0
        %v7118 = vadd.f32 %v7078, 1.0
        %v7119 = vadd.f32 %v7080, 1.0
        %v7120 = vadd.f32 %v7082, 1.0
        %v7121 = vadd.f32 %v7084, 1.0
        %v7122 = vadd.f32 %v7086, 1.0
        %v7123 = vadd.f32 %v7088, 1.0
        %v7124 = vadd.f32 %v7090, 1.0
        %v7125 = vadd.f32 %v7092, 1.0
        %v7126 = vadd.f32 %v7094, 1.0
        %v7127 = vrcp.pop %v7095
        %v7128 = vmul.f32 %v7095, %v7127
        %v7129 = vsub.f32 1.0, %v7128
        %v7130 = vmul.f32 %v7127, %v7129
        %v7131 = vadd.f32 %v7127, %v7130
        %vm7132 = vweird.f32 %v7095
        %vm7133 = vweird.f32 %v7127
        %vm7134 = vmor %vm7132, %vm7133
        %v7135 = vsel %vm7134, %v7127, %v7131
        %v7136 = vand.u32 2147483647, %v7095
        %vm7137 = vcmp.eq.f32.partialorder %v7136, 8.507059e+37
        %v7138 = vand.u32 %v7095, 2147483648
        %v7139 = vor.u32 1.1754944e-38, %v7138
        %v7140 = vsel %vm7137, %v7139, %v7135
        %v7141 = vmul.f32 1.0, %v7140
        %v7142 = vrcp.pop %v7096
        %v7143 = vmul.f32 %v7096, %v7142
        %v7144 = vsub.f32 1.0, %v7143
        %v7145 = vmul.f32 %v7142, %v7144
        %v7146 = vadd.f32 %v7142, %v7145
        %vm7147 = vweird.f32 %v7096
        %vm7148 = vweird.f32 %v7142
        %vm7149 = vmor %vm7147, %vm7148
        %v7150 = vsel %vm7149, %v7142, %v7146
        %v7151 = vand.u32 2147483647, %v7096
        %vm7152 = vcmp.eq.f32.partialorder %v7151, 8.507059e+37
        %v7153 = vand.u32 %v7096, 2147483648
        %v7154 = vor.u32 1.1754944e-38, %v7153
        %v7155 = vsel %vm7152, %v7154, %v7150
        %v7156 = vmul.f32 1.0, %v7155
        %v7157 = vrcp.pop %v7097
        %v7158 = vmul.f32 %v7097, %v7157
        %v7159 = vsub.f32 1.0, %v7158
        %v7160 = vmul.f32 %v7157, %v7159
        %v7161 = vadd.f32 %v7157, %v7160
        %vm7162 = vweird.f32 %v7097
        %vm7163 = vweird.f32 %v7157
        %vm7164 = vmor %vm7162, %vm7163
        %v7165 = vsel %vm7164, %v7157, %v7161
        %v7166 = vand.u32 2147483647, %v7097
        %vm7167 = vcmp.eq.f32.partialorder %v7166, 8.507059e+37
        %v7168 = vand.u32 %v7097, 2147483648
        %v7169 = vor.u32 1.1754944e-38, %v7168
        %v7170 = vsel %vm7167, %v7169, %v7165
        %v7171 = vmul.f32 1.0, %v7170
        %v7172 = vrcp.pop %v7098
        %v7173 = vmul.f32 %v7098, %v7172
        %v7174 = vsub.f32 1.0, %v7173
        %v7175 = vmul.f32 %v7172, %v7174
        %v7176 = vadd.f32 %v7172, %v7175
        %vm7177 = vweird.f32 %v7098
        %vm7178 = vweird.f32 %v7172
        %vm7179 = vmor %vm7177, %vm7178
        %v7180 = vsel %vm7179, %v7172, %v7176
        %v7181 = vand.u32 2147483647, %v7098
        %vm7182 = vcmp.eq.f32.partialorder %v7181, 8.507059e+37
        %v7183 = vand.u32 %v7098, 2147483648
        %v7184 = vor.u32 1.1754944e-38, %v7183
        %v7185 = vsel %vm7182, %v7184, %v7180
        %v7186 = vmul.f32 1.0, %v7185
        %v7187 = vrcp.pop %v7099
        %v7188 = vmul.f32 %v7099, %v7187
        %v7189 = vsub.f32 1.0, %v7188
        %v7190 = vmul.f32 %v7187, %v7189
        %v7191 = vadd.f32 %v7187, %v7190
        %vm7192 = vweird.f32 %v7099
        %vm7193 = vweird.f32 %v7187
        %vm7194 = vmor %vm7192, %vm7193
        %v7195 = vsel %vm7194, %v7187, %v7191
        %v7196 = vand.u32 2147483647, %v7099
        %vm7197 = vcmp.eq.f32.partialorder %v7196, 8.507059e+37
        %v7198 = vand.u32 %v7099, 2147483648
        %v7199 = vor.u32 1.1754944e-38, %v7198
        %v7200 = vsel %vm7197, %v7199, %v7195
        %v7201 = vmul.f32 1.0, %v7200
        %v7202 = vrcp.pop %v7100
        %v7203 = vmul.f32 %v7100, %v7202
        %v7204 = vsub.f32 1.0, %v7203
        %v7205 = vmul.f32 %v7202, %v7204
        %v7206 = vadd.f32 %v7202, %v7205
        %vm7207 = vweird.f32 %v7100
        %vm7208 = vweird.f32 %v7202
        %vm7209 = vmor %vm7207, %vm7208
        %v7210 = vsel %vm7209, %v7202, %v7206
        %v7211 = vand.u32 2147483647, %v7100
        %vm7212 = vcmp.eq.f32.partialorder %v7211, 8.507059e+37
        %v7213 = vand.u32 %v7100, 2147483648
        %v7214 = vor.u32 1.1754944e-38, %v7213
        %v7215 = vsel %vm7212, %v7214, %v7210
        %v7216 = vmul.f32 1.0, %v7215
        %v7217 = vrcp.pop %v7101
        %v7218 = vmul.f32 %v7101, %v7217
        %v7219 = vsub.f32 1.0, %v7218
        %v7220 = vmul.f32 %v7217, %v7219
        %v7221 = vadd.f32 %v7217, %v7220
        %vm7222 = vweird.f32 %v7101
        %vm7223 = vweird.f32 %v7217
        %vm7224 = vmor %vm7222, %vm7223
        %v7225 = vsel %vm7224, %v7217, %v7221
        %v7226 = vand.u32 2147483647, %v7101
        %vm7227 = vcmp.eq.f32.partialorder %v7226, 8.507059e+37
        %v7228 = vand.u32 %v7101, 2147483648
        %v7229 = vor.u32 1.1754944e-38, %v7228
        %v7230 = vsel %vm7227, %v7229, %v7225
        %v7231 = vmul.f32 1.0, %v7230
        %v7232 = vrcp.pop %v7102
        %v7233 = vmul.f32 %v7102, %v7232
        %v7234 = vsub.f32 1.0, %v7233
        %v7235 = vmul.f32 %v7232, %v7234
        %v7236 = vadd.f32 %v7232, %v7235
        %vm7237 = vweird.f32 %v7102
        %vm7238 = vweird.f32 %v7232
        %vm7239 = vmor %vm7237, %vm7238
        %v7240 = vsel %vm7239, %v7232, %v7236
        %v7241 = vand.u32 2147483647, %v7102
        %vm7242 = vcmp.eq.f32.partialorder %v7241, 8.507059e+37
        %v7243 = vand.u32 %v7102, 2147483648
        %v7244 = vor.u32 1.1754944e-38, %v7243
        %v7245 = vsel %vm7242, %v7244, %v7240
        %v7246 = vmul.f32 1.0, %v7245
        %v7247 = vrcp.pop %v7103
        %v7248 = vmul.f32 %v7103, %v7247
        %v7249 = vsub.f32 1.0, %v7248
        %v7250 = vmul.f32 %v7247, %v7249
        %v7251 = vadd.f32 %v7247, %v7250
        %vm7252 = vweird.f32 %v7103
        %vm7253 = vweird.f32 %v7247
        %vm7254 = vmor %vm7252, %vm7253
        %v7255 = vsel %vm7254, %v7247, %v7251
        %v7256 = vand.u32 2147483647, %v7103
        %vm7257 = vcmp.eq.f32.partialorder %v7256, 8.507059e+37
        %v7258 = vand.u32 %v7103, 2147483648
        %v7259 = vor.u32 1.1754944e-38, %v7258
        %v7260 = vsel %vm7257, %v7259, %v7255
        %v7261 = vmul.f32 1.0, %v7260
        %v7262 = vrcp.pop %v7104
        %v7263 = vmul.f32 %v7104, %v7262
        %v7264 = vsub.f32 1.0, %v7263
        %v7265 = vmul.f32 %v7262, %v7264
        %v7266 = vadd.f32 %v7262, %v7265
        %vm7267 = vweird.f32 %v7104
        %vm7268 = vweird.f32 %v7262
        %vm7269 = vmor %vm7267, %vm7268
        %v7270 = vsel %vm7269, %v7262, %v7266
        %v7271 = vand.u32 2147483647, %v7104
        %vm7272 = vcmp.eq.f32.partialorder %v7271, 8.507059e+37
        %v7273 = vand.u32 %v7104, 2147483648
        %v7274 = vor.u32 1.1754944e-38, %v7273
        %v7275 = vsel %vm7272, %v7274, %v7270
        %v7276 = vmul.f32 1.0, %v7275
        %v7277 = vrcp.pop %v7105
        %v7278 = vmul.f32 %v7105, %v7277
        %v7279 = vsub.f32 1.0, %v7278
        %v7280 = vmul.f32 %v7277, %v7279
        %v7281 = vadd.f32 %v7277, %v7280
        %vm7282 = vweird.f32 %v7105
        %vm7283 = vweird.f32 %v7277
        %vm7284 = vmor %vm7282, %vm7283
        %v7285 = vsel %vm7284, %v7277, %v7281
        %v7286 = vand.u32 2147483647, %v7105
        %vm7287 = vcmp.eq.f32.partialorder %v7286, 8.507059e+37
        %v7288 = vand.u32 %v7105, 2147483648
        %v7289 = vor.u32 1.1754944e-38, %v7288
        %v7290 = vsel %vm7287, %v7289, %v7285
        %v7291 = vmul.f32 1.0, %v7290
        %v7292 = vrcp.pop %v7106
        %v7293 = vmul.f32 %v7106, %v7292
        %v7294 = vsub.f32 1.0, %v7293
        %v7295 = vmul.f32 %v7292, %v7294
        %v7296 = vadd.f32 %v7292, %v7295
        %vm7297 = vweird.f32 %v7106
        %vm7298 = vweird.f32 %v7292
        %vm7299 = vmor %vm7297, %vm7298
        %v7300 = vsel %vm7299, %v7292, %v7296
        %v7301 = vand.u32 2147483647, %v7106
        %vm7302 = vcmp.eq.f32.partialorder %v7301, 8.507059e+37
        %v7303 = vand.u32 %v7106, 2147483648
        %v7304 = vor.u32 1.1754944e-38, %v7303
        %v7305 = vsel %vm7302, %v7304, %v7300
        %v7306 = vmul.f32 1.0, %v7305
        %v7307 = vrcp.pop %v7107
        %v7308 = vmul.f32 %v7107, %v7307
        %v7309 = vsub.f32 1.0, %v7308
        %v7310 = vmul.f32 %v7307, %v7309
        %v7311 = vadd.f32 %v7307, %v7310
        %vm7312 = vweird.f32 %v7107
        %vm7313 = vweird.f32 %v7307
        %vm7314 = vmor %vm7312, %vm7313
        %v7315 = vsel %vm7314, %v7307, %v7311
        %v7316 = vand.u32 2147483647, %v7107
        %vm7317 = vcmp.eq.f32.partialorder %v7316, 8.507059e+37
        %v7318 = vand.u32 %v7107, 2147483648
        %v7319 = vor.u32 1.1754944e-38, %v7318
        %v7320 = vsel %vm7317, %v7319, %v7315
        %v7321 = vmul.f32 1.0, %v7320
        %v7322 = vrcp.pop %v7108
        %v7323 = vmul.f32 %v7108, %v7322
        %v7324 = vsub.f32 1.0, %v7323
        %v7325 = vmul.f32 %v7322, %v7324
        %v7326 = vadd.f32 %v7322, %v7325
        %vm7327 = vweird.f32 %v7108
        %vm7328 = vweird.f32 %v7322
        %vm7329 = vmor %vm7327, %vm7328
        %v7330 = vsel %vm7329, %v7322, %v7326
        %v7331 = vand.u32 2147483647, %v7108
        %vm7332 = vcmp.eq.f32.partialorder %v7331, 8.507059e+37
        %v7333 = vand.u32 %v7108, 2147483648
        %v7334 = vor.u32 1.1754944e-38, %v7333
        %v7335 = vsel %vm7332, %v7334, %v7330
        %v7336 = vmul.f32 1.0, %v7335
        %v7337 = vrcp.pop %v7109
        %v7338 = vmul.f32 %v7109, %v7337
        %v7339 = vsub.f32 1.0, %v7338
        %v7340 = vmul.f32 %v7337, %v7339
        %v7341 = vadd.f32 %v7337, %v7340
        %vm7342 = vweird.f32 %v7109
        %vm7343 = vweird.f32 %v7337
        %vm7344 = vmor %vm7342, %vm7343
        %v7345 = vsel %vm7344, %v7337, %v7341
        %v7346 = vand.u32 2147483647, %v7109
        %vm7347 = vcmp.eq.f32.partialorder %v7346, 8.507059e+37
        %v7348 = vand.u32 %v7109, 2147483648
        %v7349 = vor.u32 1.1754944e-38, %v7348
        %v7350 = vsel %vm7347, %v7349, %v7345
        %v7351 = vmul.f32 1.0, %v7350
        %v7352 = vrcp.pop %v7110
        %v7353 = vmul.f32 %v7110, %v7352
        %v7354 = vsub.f32 1.0, %v7353
        %v7355 = vmul.f32 %v7352, %v7354
        %v7356 = vadd.f32 %v7352, %v7355
        %vm7357 = vweird.f32 %v7110
        %vm7358 = vweird.f32 %v7352
        %vm7359 = vmor %vm7357, %vm7358
        %v7360 = vsel %vm7359, %v7352, %v7356
        %v7361 = vand.u32 2147483647, %v7110
        %vm7362 = vcmp.eq.f32.partialorder %v7361, 8.507059e+37
        %v7363 = vand.u32 %v7110, 2147483648
        %v7364 = vor.u32 1.1754944e-38, %v7363
        %v7365 = vsel %vm7362, %v7364, %v7360
        %v7366 = vmul.f32 1.0, %v7365
        %v7367 = vrcp.pop %v7111
        %v7368 = vmul.f32 %v7111, %v7367
        %v7369 = vsub.f32 1.0, %v7368
        %v7370 = vmul.f32 %v7367, %v7369
        %v7371 = vadd.f32 %v7367, %v7370
        %vm7372 = vweird.f32 %v7111
        %vm7373 = vweird.f32 %v7367
        %vm7374 = vmor %vm7372, %vm7373
        %v7375 = vsel %vm7374, %v7367, %v7371
        %v7376 = vand.u32 2147483647, %v7111
        %vm7377 = vcmp.eq.f32.partialorder %v7376, 8.507059e+37
        %v7378 = vand.u32 %v7111, 2147483648
        %v7379 = vor.u32 1.1754944e-38, %v7378
        %v7380 = vsel %vm7377, %v7379, %v7375
        %v7381 = vmul.f32 1.0, %v7380
        %v7382 = vrcp.pop %v7112
        %v7383 = vmul.f32 %v7112, %v7382
        %v7384 = vsub.f32 1.0, %v7383
        %v7385 = vmul.f32 %v7382, %v7384
        %v7386 = vadd.f32 %v7382, %v7385
        %vm7387 = vweird.f32 %v7112
        %vm7388 = vweird.f32 %v7382
        %vm7389 = vmor %vm7387, %vm7388
        %v7390 = vsel %vm7389, %v7382, %v7386
        %v7391 = vand.u32 2147483647, %v7112
        %vm7392 = vcmp.eq.f32.partialorder %v7391, 8.507059e+37
        %v7393 = vand.u32 %v7112, 2147483648
        %v7394 = vor.u32 1.1754944e-38, %v7393
        %v7395 = vsel %vm7392, %v7394, %v7390
        %v7396 = vmul.f32 1.0, %v7395
        %v7397 = vrcp.pop %v7113
        %v7398 = vmul.f32 %v7113, %v7397
        %v7399 = vsub.f32 1.0, %v7398
        %v7400 = vmul.f32 %v7397, %v7399
        %v7401 = vadd.f32 %v7397, %v7400
        %vm7402 = vweird.f32 %v7113
        %vm7403 = vweird.f32 %v7397
        %vm7404 = vmor %vm7402, %vm7403
        %v7405 = vsel %vm7404, %v7397, %v7401
        %v7406 = vand.u32 2147483647, %v7113
        %vm7407 = vcmp.eq.f32.partialorder %v7406, 8.507059e+37
        %v7408 = vand.u32 %v7113, 2147483648
        %v7409 = vor.u32 1.1754944e-38, %v7408
        %v7410 = vsel %vm7407, %v7409, %v7405
        %v7411 = vmul.f32 1.0, %v7410
        %v7412 = vrcp.pop %v7114
        %v7413 = vmul.f32 %v7114, %v7412
        %v7414 = vsub.f32 1.0, %v7413
        %v7415 = vmul.f32 %v7412, %v7414
        %v7416 = vadd.f32 %v7412, %v7415
        %vm7417 = vweird.f32 %v7114
        %vm7418 = vweird.f32 %v7412
        %vm7419 = vmor %vm7417, %vm7418
        %v7420 = vsel %vm7419, %v7412, %v7416
        %v7421 = vand.u32 2147483647, %v7114
        %vm7422 = vcmp.eq.f32.partialorder %v7421, 8.507059e+37
        %v7423 = vand.u32 %v7114, 2147483648
        %v7424 = vor.u32 1.1754944e-38, %v7423
        %v7425 = vsel %vm7422, %v7424, %v7420
        %v7426 = vmul.f32 1.0, %v7425
        %v7427 = vrcp.pop %v7115
        %v7428 = vmul.f32 %v7115, %v7427
        %v7429 = vsub.f32 1.0, %v7428
        %v7430 = vmul.f32 %v7427, %v7429
        %v7431 = vadd.f32 %v7427, %v7430
        %vm7432 = vweird.f32 %v7115
        %vm7433 = vweird.f32 %v7427
        %vm7434 = vmor %vm7432, %vm7433
        %v7435 = vsel %vm7434, %v7427, %v7431
        %v7436 = vand.u32 2147483647, %v7115
        %vm7437 = vcmp.eq.f32.partialorder %v7436, 8.507059e+37
        %v7438 = vand.u32 %v7115, 2147483648
        %v7439 = vor.u32 1.1754944e-38, %v7438
        %v7440 = vsel %vm7437, %v7439, %v7435
        %v7441 = vmul.f32 1.0, %v7440
        %v7442 = vrcp.pop %v7116
        %v7443 = vmul.f32 %v7116, %v7442
        %v7444 = vsub.f32 1.0, %v7443
        %v7445 = vmul.f32 %v7442, %v7444
        %v7446 = vadd.f32 %v7442, %v7445
        %vm7447 = vweird.f32 %v7116
        %vm7448 = vweird.f32 %v7442
        %vm7449 = vmor %vm7447, %vm7448
        %v7450 = vsel %vm7449, %v7442, %v7446
        %v7451 = vand.u32 2147483647, %v7116
        %vm7452 = vcmp.eq.f32.partialorder %v7451, 8.507059e+37
        %v7453 = vand.u32 %v7116, 2147483648
        %v7454 = vor.u32 1.1754944e-38, %v7453
        %v7455 = vsel %vm7452, %v7454, %v7450
        %v7456 = vmul.f32 1.0, %v7455
        %v7457 = vrcp.pop %v7117
        %v7458 = vmul.f32 %v7117, %v7457
        %v7459 = vsub.f32 1.0, %v7458
        %v7460 = vmul.f32 %v7457, %v7459
        %v7461 = vadd.f32 %v7457, %v7460
        %vm7462 = vweird.f32 %v7117
        %vm7463 = vweird.f32 %v7457
        %vm7464 = vmor %vm7462, %vm7463
        %v7465 = vsel %vm7464, %v7457, %v7461
        %v7466 = vand.u32 2147483647, %v7117
        %vm7467 = vcmp.eq.f32.partialorder %v7466, 8.507059e+37
        %v7468 = vand.u32 %v7117, 2147483648
        %v7469 = vor.u32 1.1754944e-38, %v7468
        %v7470 = vsel %vm7467, %v7469, %v7465
        %v7471 = vmul.f32 1.0, %v7470
        %v7472 = vrcp.pop %v7118
        %v7473 = vmul.f32 %v7118, %v7472
        %v7474 = vsub.f32 1.0, %v7473
        %v7475 = vmul.f32 %v7472, %v7474
        %v7476 = vadd.f32 %v7472, %v7475
        %vm7477 = vweird.f32 %v7118
        %vm7478 = vweird.f32 %v7472
        %vm7479 = vmor %vm7477, %vm7478
        %v7480 = vsel %vm7479, %v7472, %v7476
        %v7481 = vand.u32 2147483647, %v7118
        %vm7482 = vcmp.eq.f32.partialorder %v7481, 8.507059e+37
        %v7483 = vand.u32 %v7118, 2147483648
        %v7484 = vor.u32 1.1754944e-38, %v7483
        %v7485 = vsel %vm7482, %v7484, %v7480
        %v7486 = vmul.f32 1.0, %v7485
        %v7487 = vrcp.pop %v7119
        %v7488 = vmul.f32 %v7119, %v7487
        %v7489 = vsub.f32 1.0, %v7488
        %v7490 = vmul.f32 %v7487, %v7489
        %v7491 = vadd.f32 %v7487, %v7490
        %vm7492 = vweird.f32 %v7119
        %vm7493 = vweird.f32 %v7487
        %vm7494 = vmor %vm7492, %vm7493
        %v7495 = vsel %vm7494, %v7487, %v7491
        %v7496 = vand.u32 2147483647, %v7119
        %vm7497 = vcmp.eq.f32.partialorder %v7496, 8.507059e+37
        %v7498 = vand.u32 %v7119, 2147483648
        %v7499 = vor.u32 1.1754944e-38, %v7498
        %v7500 = vsel %vm7497, %v7499, %v7495
        %v7501 = vmul.f32 1.0, %v7500
        %v7502 = vrcp.pop %v7120
        %v7503 = vmul.f32 %v7120, %v7502
        %v7504 = vsub.f32 1.0, %v7503
        %v7505 = vmul.f32 %v7502, %v7504
        %v7506 = vadd.f32 %v7502, %v7505
        %vm7507 = vweird.f32 %v7120
        %vm7508 = vweird.f32 %v7502
        %vm7509 = vmor %vm7507, %vm7508
        %v7510 = vsel %vm7509, %v7502, %v7506
        %v7511 = vand.u32 2147483647, %v7120
        %vm7512 = vcmp.eq.f32.partialorder %v7511, 8.507059e+37
        %v7513 = vand.u32 %v7120, 2147483648
        %v7514 = vor.u32 1.1754944e-38, %v7513
        %v7515 = vsel %vm7512, %v7514, %v7510
        %v7516 = vmul.f32 1.0, %v7515
        %v7517 = vrcp.pop %v7121
        %v7518 = vmul.f32 %v7121, %v7517
        %v7519 = vsub.f32 1.0, %v7518
        %v7520 = vmul.f32 %v7517, %v7519
        %v7521 = vadd.f32 %v7517, %v7520
        %vm7522 = vweird.f32 %v7121
        %vm7523 = vweird.f32 %v7517
        %vm7524 = vmor %vm7522, %vm7523
        %v7525 = vsel %vm7524, %v7517, %v7521
        %v7526 = vand.u32 2147483647, %v7121
        %vm7527 = vcmp.eq.f32.partialorder %v7526, 8.507059e+37
        %v7528 = vand.u32 %v7121, 2147483648
        %v7529 = vor.u32 1.1754944e-38, %v7528
        %v7530 = vsel %vm7527, %v7529, %v7525
        %v7531 = vmul.f32 1.0, %v7530
        %v7532 = vrcp.pop %v7122
        %v7533 = vmul.f32 %v7122, %v7532
        %v7534 = vsub.f32 1.0, %v7533
        %v7535 = vmul.f32 %v7532, %v7534
        %v7536 = vadd.f32 %v7532, %v7535
        %vm7537 = vweird.f32 %v7122
        %vm7538 = vweird.f32 %v7532
        %vm7539 = vmor %vm7537, %vm7538
        %v7540 = vsel %vm7539, %v7532, %v7536
        %v7541 = vand.u32 2147483647, %v7122
        %vm7542 = vcmp.eq.f32.partialorder %v7541, 8.507059e+37
        %v7543 = vand.u32 %v7122, 2147483648
        %v7544 = vor.u32 1.1754944e-38, %v7543
        %v7545 = vsel %vm7542, %v7544, %v7540
        %v7546 = vmul.f32 1.0, %v7545
        %v7547 = vrcp.pop %v7123
        %v7548 = vmul.f32 %v7123, %v7547
        %v7549 = vsub.f32 1.0, %v7548
        %v7550 = vmul.f32 %v7547, %v7549
        %v7551 = vadd.f32 %v7547, %v7550
        %vm7552 = vweird.f32 %v7123
        %vm7553 = vweird.f32 %v7547
        %vm7554 = vmor %vm7552, %vm7553
        %v7555 = vsel %vm7554, %v7547, %v7551
        %v7556 = vand.u32 2147483647, %v7123
        %vm7557 = vcmp.eq.f32.partialorder %v7556, 8.507059e+37
        %v7558 = vand.u32 %v7123, 2147483648
        %v7559 = vor.u32 1.1754944e-38, %v7558
        %v7560 = vsel %vm7557, %v7559, %v7555
        %v7561 = vmul.f32 1.0, %v7560
        %v7562 = vrcp.pop %v7124
        %v7563 = vmul.f32 %v7124, %v7562
        %v7564 = vsub.f32 1.0, %v7563
        %v7565 = vmul.f32 %v7562, %v7564
        %v7566 = vadd.f32 %v7562, %v7565
        %vm7567 = vweird.f32 %v7124
        %vm7568 = vweird.f32 %v7562
        %vm7569 = vmor %vm7567, %vm7568
        %v7570 = vsel %vm7569, %v7562, %v7566
        %v7571 = vand.u32 2147483647, %v7124
        %vm7572 = vcmp.eq.f32.partialorder %v7571, 8.507059e+37
        %v7573 = vand.u32 %v7124, 2147483648
        %v7574 = vor.u32 1.1754944e-38, %v7573
        %v7575 = vsel %vm7572, %v7574, %v7570
        %v7576 = vmul.f32 1.0, %v7575
        %v7577 = vrcp.pop %v7125
        %v7578 = vmul.f32 %v7125, %v7577
        %v7579 = vsub.f32 1.0, %v7578
        %v7580 = vmul.f32 %v7577, %v7579
        %v7581 = vadd.f32 %v7577, %v7580
        %vm7582 = vweird.f32 %v7125
        %vm7583 = vweird.f32 %v7577
        %vm7584 = vmor %vm7582, %vm7583
        %v7585 = vsel %vm7584, %v7577, %v7581
        %v7586 = vand.u32 2147483647, %v7125
        %vm7587 = vcmp.eq.f32.partialorder %v7586, 8.507059e+37
        %v7588 = vand.u32 %v7125, 2147483648
        %v7589 = vor.u32 1.1754944e-38, %v7588
        %v7590 = vsel %vm7587, %v7589, %v7585
        %v7591 = vmul.f32 1.0, %v7590
        %v7592 = vrcp.pop %v7126
        %v7593 = vmul.f32 %v7126, %v7592
        %v7594 = vsub.f32 1.0, %v7593
        %v7595 = vmul.f32 %v7592, %v7594
        %v7596 = vadd.f32 %v7592, %v7595
        %vm7597 = vweird.f32 %v7126
        %vm7598 = vweird.f32 %v7592
        %vm7599 = vmor %vm7597, %vm7598
        %v7600 = vsel %vm7599, %v7592, %v7596
        %v7601 = vand.u32 2147483647, %v7126
        %vm7602 = vcmp.eq.f32.partialorder %v7601, 8.507059e+37
        %v7603 = vand.u32 %v7126, 2147483648
        %v7604 = vor.u32 1.1754944e-38, %v7603
        %v7605 = vsel %vm7602, %v7604, %v7600
        %v7606 = vmul.f32 1.0, %v7605
        %v7607 = vmul.f32 %v6920, %v7141
        %v7608 = vmul.f32 %v6922, %v7156
        %v7609 = vmul.f32 %v6925, %v7171
        %v7610 = vmul.f32 %v6927, %v7186
        %v7611 = vmul.f32 %v6930, %v7201
        %v7612 = vmul.f32 %v6932, %v7216
        %v7613 = vmul.f32 %v6935, %v7231
        %v7614 = vmul.f32 %v6937, %v7246
        %v7615 = vmul.f32 %v6940, %v7261
        %v7616 = vmul.f32 %v6942, %v7276
        %v7617 = vmul.f32 %v6945, %v7291
        %v7618 = vmul.f32 %v6947, %v7306
        %v7619 = vmul.f32 %v6950, %v7321
        %v7620 = vmul.f32 %v6952, %v7336
        %v7621 = vmul.f32 %v6955, %v7351
        %v7622 = vmul.f32 %v6957, %v7366
        %v7623 = vmul.f32 %v6960, %v7381
        %v7624 = vmul.f32 %v6962, %v7396
        %v7625 = vmul.f32 %v6965, %v7411
        %v7626 = vmul.f32 %v6967, %v7426
        %v7627 = vmul.f32 %v6970, %v7441
        %v7628 = vmul.f32 %v6972, %v7456
        %v7629 = vmul.f32 %v6975, %v7471
        %v7630 = vmul.f32 %v6977, %v7486
        %v7631 = vmul.f32 %v6980, %v7501
        %v7632 = vmul.f32 %v6982, %v7516
        %v7633 = vmul.f32 %v6985, %v7531
        %v7634 = vmul.f32 %v6987, %v7546
        %v7635 = vmul.f32 %v6990, %v7561
        %v7636 = vmul.f32 %v6992, %v7576
        %v7637 = vmul.f32 %v6995, %v7591
        %v7638 = vmul.f32 %v6997, %v7606
        %v7639 = vld [vmem:[%s279] sm:$0xf]
        %v7640 = vld [vmem:[%s279 + $0x4] sm:$0xf]
        %v7641 = vld [vmem:[%s279 + $0x8] sm:$0xf]
        %v7642 = vld [vmem:[%s279 + $0xc] sm:$0xf]
        %v7643 = vld [vmem:[%s279 + $0x10] sm:$0xf]
        %v7644 = vld [vmem:[%s279 + $0x14] sm:$0xf]
        %v7645 = vld [vmem:[%s279 + $0x18] sm:$0xf]
        %v7646 = vld [vmem:[%s279 + $0x1c] sm:$0xf]
        %v7647 = vld [vmem:[%s279 + $0x20] sm:$0xf]
        %v7648 = vld [vmem:[%s279 + $0x24] sm:$0xf]
        %v7649 = vld [vmem:[%s279 + $0x28] sm:$0xf]
        %v7650 = vld [vmem:[%s279 + $0x2c] sm:$0xf]
        %v7651 = vld [vmem:[%s279 + $0x30] sm:$0xf]
        %v7652 = vld [vmem:[%s279 + $0x34] sm:$0xf]
        %v7653 = vld [vmem:[%s279 + $0x38] sm:$0xf]
        %v7654 = vld [vmem:[%s279 + $0x3c] sm:$0xf]
        %v7655 = vld [vmem:[%s279 + $0x40] sm:$0xf]
        %v7656 = vld [vmem:[%s279 + $0x44] sm:$0xf]
        %v7657 = vld [vmem:[%s279 + $0x48] sm:$0xf]
        %v7658 = vld [vmem:[%s279 + $0x4c] sm:$0xf]
        %v7659 = vld [vmem:[%s279 + $0x50] sm:$0xf]
        %v7660 = vld [vmem:[%s279 + $0x54] sm:$0xf]
        %v7661 = vld [vmem:[%s279 + $0x58] sm:$0xf]
        %v7662 = vld [vmem:[%s279 + $0x5c] sm:$0xf]
        %v7663 = vld [vmem:[%s279 + $0x60] sm:$0xf]
        %v7664 = vld [vmem:[%s279 + $0x64] sm:$0xf]
        %v7665 = vld [vmem:[%s279 + $0x68] sm:$0xf]
        %v7666 = vld [vmem:[%s279 + $0x6c] sm:$0xf]
        %v7667 = vld [vmem:[%s279 + $0x70] sm:$0xf]
        %v7668 = vld [vmem:[%s279 + $0x74] sm:$0xf]
        %v7669 = vld [vmem:[%s279 + $0x78] sm:$0xf]
        %v7670 = vld [vmem:[%s279 + $0x7c] sm:$0xf]
        %v7671 = vunpack.c.l.bf16 %v7639
        %v7672 = vunpack.c.l.bf16 %v7640
        %v7673 = vunpack.c.l.bf16 %v7641
        %v7674 = vunpack.c.l.bf16 %v7642
        %v7675 = vunpack.c.l.bf16 %v7643
        %v7676 = vunpack.c.l.bf16 %v7644
        %v7677 = vunpack.c.l.bf16 %v7645
        %v7678 = vunpack.c.l.bf16 %v7646
        %v7679 = vunpack.c.l.bf16 %v7647
        %v7680 = vunpack.c.l.bf16 %v7648
        %v7681 = vunpack.c.l.bf16 %v7649
        %v7682 = vunpack.c.l.bf16 %v7650
        %v7683 = vunpack.c.l.bf16 %v7651
        %v7684 = vunpack.c.l.bf16 %v7652
        %v7685 = vunpack.c.l.bf16 %v7653
        %v7686 = vunpack.c.l.bf16 %v7654
        %v7687 = vunpack.c.l.bf16 %v7655
        %v7688 = vunpack.c.l.bf16 %v7656
        %v7689 = vunpack.c.l.bf16 %v7657
        %v7690 = vunpack.c.l.bf16 %v7658
        %v7691 = vunpack.c.l.bf16 %v7659
        %v7692 = vunpack.c.l.bf16 %v7660
        %v7693 = vunpack.c.l.bf16 %v7661
        %v7694 = vunpack.c.l.bf16 %v7662
        %v7695 = vunpack.c.l.bf16 %v7663
        %v7696 = vunpack.c.l.bf16 %v7664
        %v7697 = vunpack.c.l.bf16 %v7665
        %v7698 = vunpack.c.l.bf16 %v7666
        %v7699 = vunpack.c.l.bf16 %v7667
        %v7700 = vunpack.c.l.bf16 %v7668
        %v7701 = vunpack.c.l.bf16 %v7669
        %v7702 = vunpack.c.l.bf16 %v7670
        %v7703 = vadd.f32 %v7607, %v7671
        %v7704 = vadd.f32 %v7608, %v7672
        %v7705 = vadd.f32 %v7609, %v7673
        %v7706 = vadd.f32 %v7610, %v7674
        %v7707 = vadd.f32 %v7611, %v7675
        %v7708 = vadd.f32 %v7612, %v7676
        %v7709 = vadd.f32 %v7613, %v7677
        %v7710 = vadd.f32 %v7614, %v7678
        %v7711 = vadd.f32 %v7615, %v7679
        %v7712 = vadd.f32 %v7616, %v7680
        %v7713 = vadd.f32 %v7617, %v7681
        %v7714 = vadd.f32 %v7618, %v7682
        %v7715 = vadd.f32 %v7619, %v7683
        %v7716 = vadd.f32 %v7620, %v7684
        %v7717 = vadd.f32 %v7621, %v7685
        %v7718 = vadd.f32 %v7622, %v7686
        %v7719 = vadd.f32 %v7623, %v7687
        %v7720 = vadd.f32 %v7624, %v7688
        %v7721 = vadd.f32 %v7625, %v7689
        %v7722 = vadd.f32 %v7626, %v7690
        %v7723 = vadd.f32 %v7627, %v7691
        %v7724 = vadd.f32 %v7628, %v7692
        %v7725 = vadd.f32 %v7629, %v7693
        %v7726 = vadd.f32 %v7630, %v7694
        %v7727 = vadd.f32 %v7631, %v7695
        %v7728 = vadd.f32 %v7632, %v7696
        %v7729 = vadd.f32 %v7633, %v7697
        %v7730 = vadd.f32 %v7634, %v7698
        %v7731 = vadd.f32 %v7635, %v7699
        %v7732 = vadd.f32 %v7636, %v7700
        %v7733 = vadd.f32 %v7637, %v7701
        %v7734 = vadd.f32 %v7638, %v7702
        %v7735 = vpack.c.bf16 %v7703, %v7703
        %v7736 = vpack.c.bf16 %v7704, %v7704
        %v7737 = vpack.c.bf16 %v7705, %v7705
        %v7738 = vpack.c.bf16 %v7706, %v7706
        %v7739 = vpack.c.bf16 %v7707, %v7707
        %v7740 = vpack.c.bf16 %v7708, %v7708
        %v7741 = vpack.c.bf16 %v7709, %v7709
        %v7742 = vpack.c.bf16 %v7710, %v7710
        %v7743 = vpack.c.bf16 %v7711, %v7711
        %v7744 = vpack.c.bf16 %v7712, %v7712
        %v7745 = vpack.c.bf16 %v7713, %v7713
        %v7746 = vpack.c.bf16 %v7714, %v7714
        %v7747 = vpack.c.bf16 %v7715, %v7715
        %v7748 = vpack.c.bf16 %v7716, %v7716
        %v7749 = vpack.c.bf16 %v7717, %v7717
        %v7750 = vpack.c.bf16 %v7718, %v7718
        %v7751 = vpack.c.bf16 %v7719, %v7719
        %v7752 = vpack.c.bf16 %v7720, %v7720
        %v7753 = vpack.c.bf16 %v7721, %v7721
        %v7754 = vpack.c.bf16 %v7722, %v7722
        %v7755 = vpack.c.bf16 %v7723, %v7723
        %v7756 = vpack.c.bf16 %v7724, %v7724
        %v7757 = vpack.c.bf16 %v7725, %v7725
        %v7758 = vpack.c.bf16 %v7726, %v7726
        %v7759 = vpack.c.bf16 %v7727, %v7727
        %v7760 = vpack.c.bf16 %v7728, %v7728
        %v7761 = vpack.c.bf16 %v7729, %v7729
        %v7762 = vpack.c.bf16 %v7730, %v7730
        %v7763 = vpack.c.bf16 %v7731, %v7731
        %v7764 = vpack.c.bf16 %v7732, %v7732
        %v7765 = vpack.c.bf16 %v7733, %v7733
        %v7766 = vpack.c.bf16 %v7734, %v7734
        %7767 = vst [vmem:[%s315] sm:$0xf] %v7735
        %7768 = vst [vmem:[%s315 + $0x4] sm:$0xf] %v7736
        %7769 = vst [vmem:[%s315 + $0x8] sm:$0xf] %v7737
        %7770 = vst [vmem:[%s315 + $0xc] sm:$0xf] %v7738
        %7771 = vst [vmem:[%s315 + $0x10] sm:$0xf] %v7739
        %7772 = vst [vmem:[%s315 + $0x14] sm:$0xf] %v7740
        %7773 = vst [vmem:[%s315 + $0x18] sm:$0xf] %v7741
        %7774 = vst [vmem:[%s315 + $0x1c] sm:$0xf] %v7742
        %7775 = vst [vmem:[%s315 + $0x20] sm:$0xf] %v7743
        %7776 = vst [vmem:[%s315 + $0x24] sm:$0xf] %v7744
        %7777 = vst [vmem:[%s315 + $0x28] sm:$0xf] %v7745
        %7778 = vst [vmem:[%s315 + $0x2c] sm:$0xf] %v7746
        %7779 = vst [vmem:[%s315 + $0x30] sm:$0xf] %v7747
        %7780 = vst [vmem:[%s315 + $0x34] sm:$0xf] %v7748
        %7781 = vst [vmem:[%s315 + $0x38] sm:$0xf] %v7749
        %7782 = vst [vmem:[%s315 + $0x3c] sm:$0xf] %v7750
        %7783 = vst [vmem:[%s315 + $0x40] sm:$0xf] %v7751
        %7784 = vst [vmem:[%s315 + $0x44] sm:$0xf] %v7752
        %7785 = vst [vmem:[%s315 + $0x48] sm:$0xf] %v7753
        %7786 = vst [vmem:[%s315 + $0x4c] sm:$0xf] %v7754
        %7787 = vst [vmem:[%s315 + $0x50] sm:$0xf] %v7755
        %7788 = vst [vmem:[%s315 + $0x54] sm:$0xf] %v7756
        %7789 = vst [vmem:[%s315 + $0x58] sm:$0xf] %v7757
        %7790 = vst [vmem:[%s315 + $0x5c] sm:$0xf] %v7758
        %7791 = vst [vmem:[%s315 + $0x60] sm:$0xf] %v7759
        %7792 = vst [vmem:[%s315 + $0x64] sm:$0xf] %v7760
        %7793 = vst [vmem:[%s315 + $0x68] sm:$0xf] %v7761
        %7794 = vst [vmem:[%s315 + $0x6c] sm:$0xf] %v7762
        %7795 = vst [vmem:[%s315 + $0x70] sm:$0xf] %v7763
        %7796 = vst [vmem:[%s315 + $0x74] sm:$0xf] %v7764
        %7797 = vst [vmem:[%s315 + $0x78] sm:$0xf] %v7765
        %7798 = vst [vmem:[%s315 + $0x7c] sm:$0xf] %v7766
        %s7799 = sand.u32 %s185, 1
        %s7800 = scalar_lea.sflag [#allocation5], %s7799
        %s7801 = sand.u32 %s185, 1
        %s7802 = smul.addr %s7801, 128
        %s7803 = scalar_lea.vmem [#allocation8], %s7802
        // Predicated region
        $region57: #{tpu_custom_call.1} parent=47 // pred_check
          %p7804 = pneg %p195
        $region58: #{tpu_custom_call.1} parent=47 // pred_check_branch
          %7806 = sbr.rel (%p7804) target = $region60
        $region59: #{tpu_custom_call.1} parent=47 // pred_region
          %7808 = vsyncadd %s7800, 0
          %s7809 = smul.addr %s25, 32
          %s7810 = smul.addr %s7809, 4
          %s7811 = scalar_lea.hbm %s7, %s7810
          %s7812 = sshll.u32 %s7803, 4
          %s7813 = int_to_ptr.vmem [resolvable:$true] %s7812
          %s7814 = sshll.u32 %s7811, 4
          %s7815 = int_to_ptr.hbm [resolvable:$true] %s7814
          %7820 = dma.vmem_to_hbm [thread:$0]  %s7813, 2048, %s7815, %s7800, 64, 64, 4
        $region60: #{tpu_custom_call.1} parent=47 // pred_fallthru
          _
      $region48: #{tpu_custom_call.1} parent=5 // pred_fallthru
        _
      %p7821 = scmp.le.s32.totalorder 2, %s20
      // Predicated region
      $region61: #{tpu_custom_call.1} parent=5 // pred_check
        %p7822 = pneg %p7821
      $region62: #{tpu_custom_call.1} parent=5 // pred_check_branch
        %7824 = sbr.rel (%p7822) target = $region64
      $region63: #{tpu_custom_call.1} parent=5 // pred_region
        %s7825 = ssub.s32 %s20, 2
        // Predicated region
        $region65: #{tpu_custom_call.1} parent=63 // pred_check
          %p7826 = pneg %p201
        $region66: #{tpu_custom_call.1} parent=63 // pred_check_branch
          %7828 = sbr.rel (%p7826) target = $region68
        $region67: #{tpu_custom_call.1} parent=63 // pred_region
          %s7829 = sand.u32 %s186, 1
          %s7830 = scalar_lea.sflag [#allocation5], %s7829
          %s7831 = sand.u32 %s186, 1
          %s7832 = smul.addr %s7831, 128
          %s7833 = scalar_lea.vmem [#allocation8], %s7832
          %7835 = dma.done %s7830, 2048
        $region68: #{tpu_custom_call.1} parent=63 // pred_fallthru
          _
      $region64: #{tpu_custom_call.1} parent=5 // pred_fallthru
        _
    $region6: #{tpu_custom_call.1} parent=1 // loop_footer
      %s24 = sadd.s32 1, %s20
    $region7: #{tpu_custom_call.1} parent=1 // loop_footer_branch
      %19 = sbr.rel target = $region3
    $region8: #{tpu_custom_call.1} parent=1 // loop_exit
      _
    %7836 = vsyncpa [#allocation4], 1
    %s7837 = scalar_lea.sflag [#allocation4], 1
    %7838 = vsyncpa %s7837, 1
    %7839 = vsyncpa [#allocation7], 1
    %7840 = vsyncpa [#allocation5], 1
    %s7841 = scalar_lea.sflag [#allocation5], 1
    %7842 = vsyncpa %s7841, 1

</llo_original>
